<compile_context>
chip_gen: v6e
topology: v6e:2x2x1
jax: 0.10.0
libtpu: 0.0.40
codegen_flags: <defaults>
</compile_context>

<pallas_src>
import functools
import math

import jax
import jax.numpy as jnp
from jax import lax
from jax.experimental import pallas as pl
from jax.experimental.pallas import tpu as pltpu

INPUT = 36                  # module default input_size
HIDDEN = 128                # module default hidden_size
NUM_LAYERS = 2
B_TILE = 8                  # batch tile = one full sublane tile (grid axis)
HEAD_PAD = 128              # lane-dense padded width of the merged head projection
HEAD_DIMS = (2, 2, 3, 4)    # gender, handed, play_years, level


# ----------------------------------------------------------------------------
# Fully fused forward kernel (one batch tile of Bt rows per grid step).
#
#   x_ref     : (T*Bt, F)   bf16, per-tile time-major flat input (row = t*Bt+b)
#   wih0_ref  : (F, 8H)     bf16, [fwd i|f|o|g (4H) | bwd i|f|o|g (4H)]
#   b0_ref    : (1, 8H)     f32,  combined b_ih + b_hh, same layout
#   whh0_ref  : (H, 8H)     bf16, [fwd 4H | bwd 4H]
#   b1_ref    : (1, 8H)     f32
#   wa_ref    : (1, 2H)     f32   attention weight (bias omitted: softmax-invariant)
#   lng/lnb   : (1, 2H)     f32   LayerNorm gamma/beta
#   bh_ref    : (1, 128)    f32   merged head bias (zero padded)
#   wih1_hbm  : (2H, 8H)    bf16  HBM (pl.ANY), prefetched manually
#   whh1_hbm  : (H, 8H)     bf16  HBM (pl.ANY), prefetched manually
#   wh_hbm    : (2H, 128)   bf16  HBM (pl.ANY), prefetched manually
#   out_ref   : (Bt, 128)   f32   lane-dense merged logits
# ----------------------------------------------------------------------------
def _fused_kernel(x_ref, wih0_ref, b0_ref, whh0_ref,
                  b1_ref, wa_ref, lng_ref, lnb_ref, bh_ref,
                  wih1_hbm, whh1_hbm, wh_hbm,
                  out_ref,
                  gx_ref, h0_ref, h1_ref,
                  wih1_v, whh1_v, wh_v, sem,
                  *, T, Bt, H):
    G = 4 * H

    # ---- prefetch late-use weights; overlap their DMA with the layer-0 work
    cp_wih1 = pltpu.make_async_copy(wih1_hbm, wih1_v, sem.at[0])
    cp_whh1 = pltpu.make_async_copy(whh1_hbm, whh1_v, sem.at[1])
    cp_wh = pltpu.make_async_copy(wh_hbm, wh_v, sem.at[2])
    cp_wih1.start()
    cp_whh1.start()
    cp_wh.start()

    # per-layer output stores (VMEM scratch bounds live ranges of the unroll)
    def store0_f(t, v32, vbf):
        h0_ref[t * Bt:(t + 1) * Bt, 0:H] = vbf          # fwd hidden at time t
    def store0_b(t, v32, vbf):
        h0_ref[t * Bt:(t + 1) * Bt, H:2 * H] = vbf      # bwd hidden at time t
    def store1_f(t, v32, vbf):
        h1_ref[t, :, 0:H] = v32
    def store1_b(t, v32, vbf):
        h1_ref[t, :, H:2 * H] = v32

    def run_layer(whh_f, whh_b, store_f, store_b):
        # gx_ref holds the hoisted input projection: cols [:4H] fwd, [4H:] bwd.
        h_f = jnp.zeros((Bt, H), jnp.bfloat16)
        h_b = jnp.zeros((Bt, H), jnp.bfloat16)
        c_f = jnp.zeros((Bt, H), jnp.float32)
        c_b = jnp.zeros((Bt, H), jnp.float32)
        for t in range(T):                              # fully unrolled (T small)
            tb = T - 1 - t                              # bwd direction time index
            gates_f = gx_ref[t * Bt:(t + 1) * Bt, 0:G] + jnp.dot(
                h_f, whh_f, preferred_element_type=jnp.float32)
            gates_b = gx_ref[tb * Bt:(tb + 1) * Bt, G:2 * G] + jnp.dot(
                h_b, whh_b, preferred_element_type=jnp.float32)
            # gate layout [i | f | o | g]: one contiguous sigmoid + one tanh
            ifo_f = jax.nn.sigmoid(gates_f[:, 0:3 * H])
            ifo_b = jax.nn.sigmoid(gates_b[:, 0:3 * H])
            g_f = jnp.tanh(gates_f[:, 3 * H:4 * H])
            g_b = jnp.tanh(gates_b[:, 3 * H:4 * H])
            c_f = ifo_f[:, H:2 * H] * c_f + ifo_f[:, 0:H] * g_f
            c_b = ifo_b[:, H:2 * H] * c_b + ifo_b[:, 0:H] * g_b
            hf32 = ifo_f[:, 2 * H:3 * H] * jnp.tanh(c_f)
            hb32 = ifo_b[:, 2 * H:3 * H] * jnp.tanh(c_b)
            h_f = hf32.astype(jnp.bfloat16)             # MXU operand for next step
            h_b = hb32.astype(jnp.bfloat16)
            store_f(t, hf32, h_f)
            store_b(tb, hb32, h_b)

    # ================= LSTM layer 0 =================
    # Hoisted, recurrence-independent input projection for BOTH directions.
    gx_ref[...] = jnp.dot(x_ref[...], wih0_ref[...],
                          preferred_element_type=jnp.float32) + b0_ref[...]
    run_layer(whh0_ref[:, 0:G], whh0_ref[:, G:2 * G], store0_f, store0_b)
    # TODO(synk): inter-layer LSTM dropout (p=0.5) omitted — eval mode.

    # ================= LSTM layer 1 =================
    cp_wih1.wait()
    cp_whh1.wait()
    gx_ref[...] = jnp.dot(h0_ref[...], wih1_v[...],
                          preferred_element_type=jnp.float32) + b1_ref[...]
    run_layer(whh1_v[:, 0:G], whh1_v[:, G:2 * G], store1_f, store1_b)

    # ---- attention over time (softmax over T), f32 ----
    # The scalar attention bias adds a constant to every time step's logit and
    # is therefore invariant under softmax -> omitted.
    h1 = h1_ref[...]                                            # (T, Bt, 2H)
    scores = jnp.sum(h1 * wa_ref[...], axis=-1, keepdims=True)  # (T, Bt, 1)
    scores = scores - jnp.max(scores, axis=0, keepdims=True)
    e = jnp.exp(scores)
    attn = e / jnp.sum(e, axis=0, keepdims=True)
    context = jnp.sum(attn * h1, axis=0)                        # (Bt, 2H)

    # TODO(synk): nn.Dropout(0.5) on context omitted — eval/inference mode.

    # ---- LayerNorm (eps = 1e-5, biased variance), f32 ----
    mean = jnp.mean(context, axis=-1, keepdims=True)
    var = jnp.mean((context - mean) ** 2, axis=-1, keepdims=True)
    normed = (context - mean) * lax.rsqrt(var + 1e-5)
    normed = normed * lng_ref[...] + lnb_ref[...]               # (Bt, 2H)

    # ---- merged, lane-dense head projection ----
    cp_wh.wait()
    out_ref[...] = jnp.dot(normed.astype(jnp.bfloat16), wh_v[...],
                           preferred_element_type=jnp.float32) + bh_ref[...]


def _fused_call(x_tiled, p, *, T, nt):
    H = HIDDEN
    Bt = B_TILE
    F = x_tiled.shape[-1]
    kernel = functools.partial(_fused_kernel, T=T, Bt=Bt, H=H)

    operands = (x_tiled,
                p['wih0'], p['b0'], p['whh0'],
                p['b1'],
                p['attn_w'], p['ln_g'], p['ln_b'],
                p['b_heads'],
                p['wih1'], p['whh1'], p['w_heads'])

    vmem = pl.BlockSpec(memory_space=pltpu.MemorySpace.VMEM)
    hbm = pl.BlockSpec(memory_space=pl.ANY)
    in_specs = [
        pl.BlockSpec((None, T * Bt, F), lambda i: (i, 0, 0)),   # x (batch tile)
        vmem, vmem, vmem,                                       # wih0, b0, whh0
        vmem,                                                   # b1
        vmem, vmem, vmem,                                       # attn_w, ln_g, ln_b
        vmem,                                                   # b_heads
        hbm, hbm, hbm,                                          # wih1, whh1, w_heads
    ]
    out_specs = pl.BlockSpec((Bt, HEAD_PAD), lambda i: (i, 0))

    scratch_shapes = [
        pltpu.VMEM((T * Bt, 8 * H), jnp.float32),       # gx (reused by both layers)
        pltpu.VMEM((T * Bt, 2 * H), jnp.bfloat16),      # layer-0 outputs
        pltpu.VMEM((T, Bt, 2 * H), jnp.float32),        # layer-1 outputs
        pltpu.VMEM((2 * H, 8 * H), jnp.bfloat16),       # prefetched wih1
        pltpu.VMEM((H, 8 * H), jnp.bfloat16),           # prefetched whh1
        pltpu.VMEM((2 * H, HEAD_PAD), jnp.bfloat16),    # prefetched head weights
        pltpu.SemaphoreType.DMA((3,)),
    ]

    flops = nt * (
        2 * T * Bt * F * 8 * H                          # layer-0 input projection
        + 2 * T * Bt * (2 * H) * 8 * H                  # layer-1 input projection
        + NUM_LAYERS * T * 2 * (2 * Bt * H * 4 * H)     # per-direction recurrent dots
        + 2 * Bt * (2 * H) * HEAD_PAD                   # merged heads
        + 6 * T * Bt * 2 * H)                           # attention score + context
    transcendentals = nt * (NUM_LAYERS * T * 2 * Bt * 5 * H + T * Bt + Bt)
    bytes_accessed = (sum(int(o.size) * o.dtype.itemsize for o in operands)
                      + nt * Bt * HEAD_PAD * 4)

    grid_spec = pltpu.PrefetchScalarGridSpec(
        num_scalar_prefetch=0,
        grid=(nt,),
        in_specs=in_specs,
        out_specs=out_specs,
        scratch_shapes=scratch_shapes)

    return pl.pallas_call(
        kernel,
        out_shape=jax.ShapeDtypeStruct((nt * Bt, HEAD_PAD), jnp.float32),
        grid_spec=grid_spec,
        compiler_params=pltpu.CompilerParams(
            dimension_semantics=("parallel",)),          # batch tiles -> v7x megacore
        cost_estimate=pl.CostEstimate(flops=flops,
                                      transcendentals=transcendentals,
                                      bytes_accessed=bytes_accessed),
    )(*operands)


# ----------------------------------------------------------------------------
# Public forward pass: batch-first (B, T, F) input, dict of 4 logit tensors.
# ----------------------------------------------------------------------------
def lstm_classifier_forward(x, params):
    B, T, F = x.shape
    nt = -(-B // B_TILE)
    B_pad = nt * B_TILE
    # pad batch to full 8-row sublane tiles; pad rows are computed and discarded
    xp = jnp.pad(x, ((0, B_pad - B), (0, 0), (0, 0)))
    # per-tile time-major flat layout: row within tile = t*B_TILE + b_local
    x_tiled = (xp.reshape(nt, B_TILE, T, F)
                 .transpose(0, 2, 1, 3)
                 .reshape(nt, T * B_TILE, F)
                 .astype(jnp.bfloat16))                   # bf16 MXU operand
    logits = _fused_call(x_tiled, params, T=T, nt=nt)     # (B_pad, 128)
    out = {}
    start = 0
    for name, n in zip(('gender', 'handed', 'play_years', 'level'), HEAD_DIMS):
        out[name] = logits[:B, start:start + n]
        start += n
    return out


# ----------------------------------------------------------------------------
# Deterministic parameter init (PyTorch-style uniform ranges), pre-packed for
# the fused kernel:
#   * per-layer [fwd|bwd] weight columns, combined b_ih + b_hh,
#   * gate columns repacked from PyTorch [i|f|g|o] to [i|f|o|g],
#   * MXU-side weights stored bf16 (bias / VPU parameters stay f32),
#   * merged + zero-padded (lane-dense) head projection.
# NOTE: real PyTorch checkpoints must be transposed to (Din,4H)/(H,4H) and
# repacked into this layout before use.
# ----------------------------------------------------------------------------
def init_params(key):
    params = {}
    keys = iter(jax.random.split(key, 64))
    H = HIDDEN
    k = 1.0 / math.sqrt(H)

    def repack_gates(w):
        # PyTorch gate order [i|f|g|o] (last axis) -> kernel order [i|f|o|g]
        return jnp.concatenate(
            [w[..., 0:2 * H], w[..., 3 * H:4 * H], w[..., 2 * H:3 * H]], axis=-1)

    for layer in range(NUM_LAYERS):
        in_dim = INPUT if layer == 0 else 2 * H
        wih_dirs, whh_dirs, b_dirs = [], [], []
        for _ in range(2):  # forward, reverse
            w_ih = jax.random.uniform(next(keys), (in_dim, 4 * H), jnp.float32, -k, k)
            w_hh = jax.random.uniform(next(keys), (H, 4 * H), jnp.float32, -k, k)
            b_ih = jax.random.uniform(next(keys), (1, 4 * H), jnp.float32, -k, k)
            b_hh = jax.random.uniform(next(keys), (1, 4 * H), jnp.float32, -k, k)
            wih_dirs.append(repack_gates(w_ih))
            whh_dirs.append(repack_gates(w_hh))
            b_dirs.append(repack_gates(b_ih + b_hh))
        params[f'wih{layer}'] = jnp.concatenate(wih_dirs, axis=1).astype(jnp.bfloat16)
        params[f'whh{layer}'] = jnp.concatenate(whh_dirs, axis=1).astype(jnp.bfloat16)
        params[f'b{layer}'] = jnp.concatenate(b_dirs, axis=1)          # f32

    D = 2 * H
    kd = 1.0 / math.sqrt(D)
    params['attn_w'] = jax.random.uniform(next(keys), (1, D), jnp.float32, -kd, kd)
    # attn bias exists in the module but is softmax-invariant -> unused in-kernel
    params['attn_b'] = jax.random.uniform(next(keys), (1,), jnp.float32, -kd, kd)
    params['ln_g'] = jnp.ones((1, D), jnp.float32)
    params['ln_b'] = jnp.zeros((1, D), jnp.float32)

    w_cols, b_cols = [], []
    for n in HEAD_DIMS:
        w_cols.append(jax.random.uniform(next(keys), (D, n), jnp.float32, -kd, kd))
        b_cols.append(jax.random.uniform(next(keys), (1, n), jnp.float32, -kd, kd))
    w_all = jnp.concatenate(w_cols, axis=1)          # (D, 11)
    b_all = jnp.concatenate(b_cols, axis=1)          # (1, 11)
    pad = HEAD_PAD - w_all.shape[1]
    params['w_heads'] = jnp.pad(w_all, ((0, 0), (0, pad))).astype(jnp.bfloat16)
    params['b_heads'] = jnp.pad(b_all, ((0, 0), (0, pad)))             # f32
    return params


if __name__ == "__main__":
    key = jax.random.PRNGKey(0)
    pkey, xkey = jax.random.split(key)
    params = init_params(pkey)

    B, T = 2, 8
    x = jax.random.normal(xkey, (B, T, INPUT), jnp.float32)

    out = jax.jit(lstm_classifier_forward)(x, params)
    jax.block_until_ready(out)

    assert out['gender'].shape == (B, 2)
    assert out['handed'].shape == (B, 2)
    assert out['play_years'].shape == (B, 3)
    assert out['level'].shape == (B, 4)
    for v in out.values():
        assert bool(jnp.all(jnp.isfinite(v)))
    print("KERNEL_OK")
</pallas_src>

<mosaic_0001>
module attributes {stable_mosaic.version = 11 : i64} {
  func.func @_fused_kernel(%arg0: i32, %arg1: memref<1x64x36xbf16, #tpu.memory_space<vmem>>, %arg2: memref<36x1024xbf16, #tpu.memory_space<vmem>>, %arg3: memref<1x1024xf32, #tpu.memory_space<vmem>>, %arg4: memref<128x1024xbf16, #tpu.memory_space<vmem>>, %arg5: memref<1x1024xf32, #tpu.memory_space<vmem>>, %arg6: memref<1x256xf32, #tpu.memory_space<vmem>>, %arg7: memref<1x256xf32, #tpu.memory_space<vmem>>, %arg8: memref<1x256xf32, #tpu.memory_space<vmem>>, %arg9: memref<1x128xf32, #tpu.memory_space<vmem>>, %arg10: memref<256x1024xbf16, #tpu.memory_space<any>>, %arg11: memref<128x1024xbf16, #tpu.memory_space<any>>, %arg12: memref<256x128xbf16, #tpu.memory_space<any>>, %arg13: memref<8x128xf32, #tpu.memory_space<vmem>>, %arg14: memref<64x1024xf32, #tpu.memory_space<vmem>>, %arg15: memref<64x256xbf16, #tpu.memory_space<vmem>>, %arg16: memref<8x8x256xf32, #tpu.memory_space<vmem>>, %arg17: memref<256x1024xbf16, #tpu.memory_space<vmem>>, %arg18: memref<128x1024xbf16, #tpu.memory_space<vmem>>, %arg19: memref<256x128xbf16, #tpu.memory_space<vmem>>, %arg20: memref<3x!tpu.dma_semaphore, #tpu.memory_space<semaphore_mem>>) attributes {dimension_semantics = [#tpu.dimension_semantics<parallel>], iteration_bounds = array<i64: 1>, scalar_prefetch = 0 : i64, scratch_operands = 7 : i64, tpu.core_type = #tpu.core_type<tc>, window_params = [{transform_indices = @transform_0, window_bounds = array<i64: 1, 64, 36>}, {pipeline_mode = #tpu.pipeline_mode<synchronous>, transform_indices = @transform_1, window_bounds = array<i64: 36, 1024>}, {pipeline_mode = #tpu.pipeline_mode<synchronous>, transform_indices = @transform_2, window_bounds = array<i64: 1, 1024>}, {pipeline_mode = #tpu.pipeline_mode<synchronous>, transform_indices = @transform_3, window_bounds = array<i64: 128, 1024>}, {pipeline_mode = #tpu.pipeline_mode<synchronous>, transform_indices = @transform_4, window_bounds = array<i64: 1, 1024>}, {pipeline_mode = #tpu.pipeline_mode<synchronous>, transform_indices = @transform_5, window_bounds = array<i64: 1, 256>}, {pipeline_mode = #tpu.pipeline_mode<synchronous>, transform_indices = @transform_6, window_bounds = array<i64: 1, 256>}, {pipeline_mode = #tpu.pipeline_mode<synchronous>, transform_indices = @transform_7, window_bounds = array<i64: 1, 256>}, {pipeline_mode = #tpu.pipeline_mode<synchronous>, transform_indices = @transform_8, window_bounds = array<i64: 1, 128>}, {}, {}, {}, {transform_indices = @transform_12, window_bounds = array<i64: 8, 128>}]} {
    %c0_i32 = arith.constant 0 : i32
    %0 = tpu.memref_slice %arg20[%c0_i32] : memref<3x!tpu.dma_semaphore, #tpu.memory_space<semaphore_mem>> -> memref<1x!tpu.dma_semaphore, #tpu.memory_space<semaphore_mem>>
    %1 = tpu.memref_squeeze %0 : memref<1x!tpu.dma_semaphore, #tpu.memory_space<semaphore_mem>> -> memref<!tpu.dma_semaphore, #tpu.memory_space<semaphore_mem>>
    tpu.enqueue_dma source(%arg10 : memref<256x1024xbf16, #tpu.memory_space<any>>) target(%arg17 : memref<256x1024xbf16, #tpu.memory_space<vmem>>) target_semaphore(%1 : memref<!tpu.dma_semaphore, #tpu.memory_space<semaphore_mem>>)
    %c1_i32 = arith.constant 1 : i32
    %2 = tpu.memref_slice %arg20[%c1_i32] : memref<3x!tpu.dma_semaphore, #tpu.memory_space<semaphore_mem>> -> memref<1x!tpu.dma_semaphore, #tpu.memory_space<semaphore_mem>>
    %3 = tpu.memref_squeeze %2 : memref<1x!tpu.dma_semaphore, #tpu.memory_space<semaphore_mem>> -> memref<!tpu.dma_semaphore, #tpu.memory_space<semaphore_mem>>
    tpu.enqueue_dma source(%arg11 : memref<128x1024xbf16, #tpu.memory_space<any>>) target(%arg18 : memref<128x1024xbf16, #tpu.memory_space<vmem>>) target_semaphore(%3 : memref<!tpu.dma_semaphore, #tpu.memory_space<semaphore_mem>>)
    %c2_i32 = arith.constant 2 : i32
    %4 = tpu.memref_slice %arg20[%c2_i32] : memref<3x!tpu.dma_semaphore, #tpu.memory_space<semaphore_mem>> -> memref<1x!tpu.dma_semaphore, #tpu.memory_space<semaphore_mem>>
    %5 = tpu.memref_squeeze %4 : memref<1x!tpu.dma_semaphore, #tpu.memory_space<semaphore_mem>> -> memref<!tpu.dma_semaphore, #tpu.memory_space<semaphore_mem>>
    tpu.enqueue_dma source(%arg12 : memref<256x128xbf16, #tpu.memory_space<any>>) target(%arg19 : memref<256x128xbf16, #tpu.memory_space<vmem>>) target_semaphore(%5 : memref<!tpu.dma_semaphore, #tpu.memory_space<semaphore_mem>>)
    %c0 = arith.constant 0 : index
    %c0_0 = arith.constant 0 : index
    %c0_1 = arith.constant 0 : index
    %6 = vector.load %arg1[%c0, %c0_0, %c0_1] : memref<1x64x36xbf16, #tpu.memory_space<vmem>>, vector<1x64x36xbf16>
    %7 = vector.shape_cast %6 : vector<1x64x36xbf16> to vector<64x36xbf16>
    %c0_2 = arith.constant 0 : index
    %c0_3 = arith.constant 0 : index
    %8 = vector.load %arg2[%c0_2, %c0_3] : memref<36x1024xbf16, #tpu.memory_space<vmem>>, vector<36x1024xbf16>
    %cst = arith.constant dense<0.000000e+00> : vector<64x1024xf32>
    %9 = tpu.matmul %7, %8, %cst {dimension_numbers = #tpu.dot_dimension_numbers<[1], [0], [0], [1], [0, 0, 1, 1], [], []>} : vector<64x36xbf16>, vector<36x1024xbf16>, vector<64x1024xf32> -> vector<64x1024xf32>
    %c0_4 = arith.constant 0 : index
    %c0_5 = arith.constant 0 : index
    %10 = vector.load %arg3[%c0_4, %c0_5] : memref<1x1024xf32, #tpu.memory_space<vmem>>, vector<1x1024xf32>
    %11 = vector.broadcast %10 : vector<1x1024xf32> to vector<64x1024xf32>
    %12 = arith.addf %9, %11 : vector<64x1024xf32>
    %c0_6 = arith.constant 0 : index
    %c0_7 = arith.constant 0 : index
    %13 = vector.load %arg14[%c0_6, %c0_7] : memref<64x1024xf32, #tpu.memory_space<vmem>>, vector<64x1024xf32>
    tpu.vector_store %arg14[%c0_6, %c0_7], %12 {strides = array<i32>} : memref<64x1024xf32, #tpu.memory_space<vmem>>, vector<64x1024xf32>,
    %c0_8 = arith.constant 0 : index
    %c0_9 = arith.constant 0 : index
    %14 = vector.load %arg4[%c0_8, %c0_9] : memref<128x1024xbf16, #tpu.memory_space<vmem>>, vector<128x512xbf16>
    %c0_10 = arith.constant 0 : index
    %c512 = arith.constant 512 : index
    %15 = vector.load %arg4[%c0_10, %c512] : memref<128x1024xbf16, #tpu.memory_space<vmem>>, vector<128x512xbf16>
    %cst_11 = arith.constant 0.000000e+00 : bf16
    %16 = vector.broadcast %cst_11 : bf16 to vector<8x128xbf16>
    %cst_12 = arith.constant 0.000000e+00 : bf16
    %17 = vector.broadcast %cst_12 : bf16 to vector<8x128xbf16>
    %cst_13 = arith.constant 0.000000e+00 : f32
    %18 = vector.broadcast %cst_13 : f32 to vector<8x128xf32>
    %cst_14 = arith.constant 0.000000e+00 : f32
    %19 = vector.broadcast %cst_14 : f32 to vector<8x128xf32>
    %c0_15 = arith.constant 0 : index
    %c0_16 = arith.constant 0 : index
    %20 = vector.load %arg14[%c0_15, %c0_16] : memref<64x1024xf32, #tpu.memory_space<vmem>>, vector<8x512xf32>
    %cst_17 = arith.constant dense<0.000000e+00> : vector<8x512xf32>
    %21 = tpu.matmul %16, %14, %cst_17 {dimension_numbers = #tpu.dot_dimension_numbers<[1], [0], [0], [1], [0, 0, 1, 1], [], []>} : vector<8x128xbf16>, vector<128x512xbf16>, vector<8x512xf32> -> vector<8x512xf32>
    %22 = arith.addf %20, %21 : vector<8x512xf32>
    %c56 = arith.constant 56 : index
    %c512_18 = arith.constant 512 : index
    %23 = vector.load %arg14[%c56, %c512_18] : memref<64x1024xf32, #tpu.memory_space<vmem>>, vector<8x512xf32>
    %cst_19 = arith.constant dense<0.000000e+00> : vector<8x512xf32>
    %24 = tpu.matmul %17, %15, %cst_19 {dimension_numbers = #tpu.dot_dimension_numbers<[1], [0], [0], [1], [0, 0, 1, 1], [], []>} : vector<8x128xbf16>, vector<128x512xbf16>, vector<8x512xf32> -> vector<8x512xf32>
    %25 = arith.addf %23, %24 : vector<8x512xf32>
    %26 = vector.extract_strided_slice %22 {offsets = [0, 0], sizes = [8, 384], strides = [1, 1]} : vector<8x512xf32> to vector<8x384xf32>
    %27 = arith.negf %26 : vector<8x384xf32>
    %28 = math.exp %27 : vector<8x384xf32>
    %cst_20 = arith.constant 1.000000e+00 : f32
    %29 = vector.broadcast %cst_20 : f32 to vector<8x384xf32>
    %30 = arith.addf %29, %28 : vector<8x384xf32>
    %31 = arith.divf %29, %30 : vector<8x384xf32>
    %32 = vector.extract_strided_slice %25 {offsets = [0, 0], sizes = [8, 384], strides = [1, 1]} : vector<8x512xf32> to vector<8x384xf32>
    %33 = arith.negf %32 : vector<8x384xf32>
    %34 = math.exp %33 : vector<8x384xf32>
    %cst_21 = arith.constant 1.000000e+00 : f32
    %35 = vector.broadcast %cst_21 : f32 to vector<8x384xf32>
    %36 = arith.addf %35, %34 : vector<8x384xf32>
    %37 = arith.divf %35, %36 : vector<8x384xf32>
    %38 = vector.extract_strided_slice %22 {offsets = [0, 384], sizes = [8, 128], strides = [1, 1]} : vector<8x512xf32> to vector<8x128xf32>
    %39 = math.tanh %38 : vector<8x128xf32>
    %40 = vector.extract_strided_slice %25 {offsets = [0, 384], sizes = [8, 128], strides = [1, 1]} : vector<8x512xf32> to vector<8x128xf32>
    %41 = math.tanh %40 : vector<8x128xf32>
    %42 = vector.extract_strided_slice %31 {offsets = [0, 128], sizes = [8, 128], strides = [1, 1]} : vector<8x384xf32> to vector<8x128xf32>
    %43 = arith.mulf %42, %18 : vector<8x128xf32>
    %44 = vector.extract_strided_slice %31 {offsets = [0, 0], sizes = [8, 128], strides = [1, 1]} : vector<8x384xf32> to vector<8x128xf32>
    %45 = arith.mulf %44, %39 : vector<8x128xf32>
    %46 = arith.addf %43, %45 : vector<8x128xf32>
    %47 = vector.extract_strided_slice %37 {offsets = [0, 128], sizes = [8, 128], strides = [1, 1]} : vector<8x384xf32> to vector<8x128xf32>
    %48 = arith.mulf %47, %19 : vector<8x128xf32>
    %49 = vector.extract_strided_slice %37 {offsets = [0, 0], sizes = [8, 128], strides = [1, 1]} : vector<8x384xf32> to vector<8x128xf32>
    %50 = arith.mulf %49, %41 : vector<8x128xf32>
    %51 = arith.addf %48, %50 : vector<8x128xf32>
    %52 = vector.extract_strided_slice %31 {offsets = [0, 256], sizes = [8, 128], strides = [1, 1]} : vector<8x384xf32> to vector<8x128xf32>
    %53 = math.tanh %46 : vector<8x128xf32>
    %54 = arith.mulf %52, %53 : vector<8x128xf32>
    %55 = vector.extract_strided_slice %37 {offsets = [0, 256], sizes = [8, 128], strides = [1, 1]} : vector<8x384xf32> to vector<8x128xf32>
    %56 = math.tanh %51 : vector<8x128xf32>
    %57 = arith.mulf %55, %56 : vector<8x128xf32>
    %58 = arith.truncf %54 : vector<8x128xf32> to vector<8x128xbf16>
    %59 = arith.truncf %57 : vector<8x128xf32> to vector<8x128xbf16>
    %c0_22 = arith.constant 0 : index
    %c0_23 = arith.constant 0 : index
    %60 = vector.load %arg15[%c0_22, %c0_23] : memref<64x256xbf16, #tpu.memory_space<vmem>>, vector<8x128xbf16>
    tpu.vector_store %arg15[%c0_22, %c0_23], %58 {strides = array<i32>} : memref<64x256xbf16, #tpu.memory_space<vmem>>, vector<8x128xbf16>,
    %c56_24 = arith.constant 56 : index
    %c128 = arith.constant 128 : index
    %61 = vector.load %arg15[%c56_24, %c128] : memref<64x256xbf16, #tpu.memory_space<vmem>>, vector<8x128xbf16>
    tpu.vector_store %arg15[%c56_24, %c128], %59 {strides = array<i32>} : memref<64x256xbf16, #tpu.memory_space<vmem>>, vector<8x128xbf16>,
    %c8 = arith.constant 8 : index
    %c0_25 = arith.constant 0 : index
    %62 = vector.load %arg14[%c8, %c0_25] : memref<64x1024xf32, #tpu.memory_space<vmem>>, vector<8x512xf32>
    %cst_26 = arith.constant dense<0.000000e+00> : vector<8x512xf32>
    %63 = tpu.matmul %58, %14, %cst_26 {dimension_numbers = #tpu.dot_dimension_numbers<[1], [0], [0], [1], [0, 0, 1, 1], [], []>} : vector<8x128xbf16>, vector<128x512xbf16>, vector<8x512xf32> -> vector<8x512xf32>
    %64 = arith.addf %62, %63 : vector<8x512xf32>
    %c48 = arith.constant 48 : index
    %c512_27 = arith.constant 512 : index
    %65 = vector.load %arg14[%c48, %c512_27] : memref<64x1024xf32, #tpu.memory_space<vmem>>, vector<8x512xf32>
    %cst_28 = arith.constant dense<0.000000e+00> : vector<8x512xf32>
    %66 = tpu.matmul %59, %15, %cst_28 {dimension_numbers = #tpu.dot_dimension_numbers<[1], [0], [0], [1], [0, 0, 1, 1], [], []>} : vector<8x128xbf16>, vector<128x512xbf16>, vector<8x512xf32> -> vector<8x512xf32>
    %67 = arith.addf %65, %66 : vector<8x512xf32>
    %68 = vector.extract_strided_slice %64 {offsets = [0, 0], sizes = [8, 384], strides = [1, 1]} : vector<8x512xf32> to vector<8x384xf32>
    %69 = arith.negf %68 : vector<8x384xf32>
    %70 = math.exp %69 : vector<8x384xf32>
    %cst_29 = arith.constant 1.000000e+00 : f32
    %71 = vector.broadcast %cst_29 : f32 to vector<8x384xf32>
    %72 = arith.addf %71, %70 : vector<8x384xf32>
    %73 = arith.divf %71, %72 : vector<8x384xf32>
    %74 = vector.extract_strided_slice %67 {offsets = [0, 0], sizes = [8, 384], strides = [1, 1]} : vector<8x512xf32> to vector<8x384xf32>
    %75 = arith.negf %74 : vector<8x384xf32>
    %76 = math.exp %75 : vector<8x384xf32>
    %cst_30 = arith.constant 1.000000e+00 : f32
    %77 = vector.broadcast %cst_30 : f32 to vector<8x384xf32>
    %78 = arith.addf %77, %76 : vector<8x384xf32>
    %79 = arith.divf %77, %78 : vector<8x384xf32>
    %80 = vector.extract_strided_slice %64 {offsets = [0, 384], sizes = [8, 128], strides = [1, 1]} : vector<8x512xf32> to vector<8x128xf32>
    %81 = math.tanh %80 : vector<8x128xf32>
    %82 = vector.extract_strided_slice %67 {offsets = [0, 384], sizes = [8, 128], strides = [1, 1]} : vector<8x512xf32> to vector<8x128xf32>
    %83 = math.tanh %82 : vector<8x128xf32>
    %84 = vector.extract_strided_slice %73 {offsets = [0, 128], sizes = [8, 128], strides = [1, 1]} : vector<8x384xf32> to vector<8x128xf32>
    %85 = arith.mulf %84, %46 : vector<8x128xf32>
    %86 = vector.extract_strided_slice %73 {offsets = [0, 0], sizes = [8, 128], strides = [1, 1]} : vector<8x384xf32> to vector<8x128xf32>
    %87 = arith.mulf %86, %81 : vector<8x128xf32>
    %88 = arith.addf %85, %87 : vector<8x128xf32>
    %89 = vector.extract_strided_slice %79 {offsets = [0, 128], sizes = [8, 128], strides = [1, 1]} : vector<8x384xf32> to vector<8x128xf32>
    %90 = arith.mulf %89, %51 : vector<8x128xf32>
    %91 = vector.extract_strided_slice %79 {offsets = [0, 0], sizes = [8, 128], strides = [1, 1]} : vector<8x384xf32> to vector<8x128xf32>
    %92 = arith.mulf %91, %83 : vector<8x128xf32>
    %93 = arith.addf %90, %92 : vector<8x128xf32>
    %94 = vector.extract_strided_slice %73 {offsets = [0, 256], sizes = [8, 128], strides = [1, 1]} : vector<8x384xf32> to vector<8x128xf32>
    %95 = math.tanh %88 : vector<8x128xf32>
    %96 = arith.mulf %94, %95 : vector<8x128xf32>
    %97 = vector.extract_strided_slice %79 {offsets = [0, 256], sizes = [8, 128], strides = [1, 1]} : vector<8x384xf32> to vector<8x128xf32>
    %98 = math.tanh %93 : vector<8x128xf32>
    %99 = arith.mulf %97, %98 : vector<8x128xf32>
    %100 = arith.truncf %96 : vector<8x128xf32> to vector<8x128xbf16>
    %101 = arith.truncf %99 : vector<8x128xf32> to vector<8x128xbf16>
    %c8_31 = arith.constant 8 : index
    %c0_32 = arith.constant 0 : index
    %102 = vector.load %arg15[%c8_31, %c0_32] : memref<64x256xbf16, #tpu.memory_space<vmem>>, vector<8x128xbf16>
    tpu.vector_store %arg15[%c8_31, %c0_32], %100 {strides = array<i32>} : memref<64x256xbf16, #tpu.memory_space<vmem>>, vector<8x128xbf16>,
    %c48_33 = arith.constant 48 : index
    %c128_34 = arith.constant 128 : index
    %103 = vector.load %arg15[%c48_33, %c128_34] : memref<64x256xbf16, #tpu.memory_space<vmem>>, vector<8x128xbf16>
    tpu.vector_store %arg15[%c48_33, %c128_34], %101 {strides = array<i32>} : memref<64x256xbf16, #tpu.memory_space<vmem>>, vector<8x128xbf16>,
    %c16 = arith.constant 16 : index
    %c0_35 = arith.constant 0 : index
    %104 = vector.load %arg14[%c16, %c0_35] : memref<64x1024xf32, #tpu.memory_space<vmem>>, vector<8x512xf32>
    %cst_36 = arith.constant dense<0.000000e+00> : vector<8x512xf32>
    %105 = tpu.matmul %100, %14, %cst_36 {dimension_numbers = #tpu.dot_dimension_numbers<[1], [0], [0], [1], [0, 0, 1, 1], [], []>} : vector<8x128xbf16>, vector<128x512xbf16>, vector<8x512xf32> -> vector<8x512xf32>
    %106 = arith.addf %104, %105 : vector<8x512xf32>
    %c40 = arith.constant 40 : index
    %c512_37 = arith.constant 512 : index
    %107 = vector.load %arg14[%c40, %c512_37] : memref<64x1024xf32, #tpu.memory_space<vmem>>, vector<8x512xf32>
    %cst_38 = arith.constant dense<0.000000e+00> : vector<8x512xf32>
    %108 = tpu.matmul %101, %15, %cst_38 {dimension_numbers = #tpu.dot_dimension_numbers<[1], [0], [0], [1], [0, 0, 1, 1], [], []>} : vector<8x128xbf16>, vector<128x512xbf16>, vector<8x512xf32> -> vector<8x512xf32>
    %109 = arith.addf %107, %108 : vector<8x512xf32>
    %110 = vector.extract_strided_slice %106 {offsets = [0, 0], sizes = [8, 384], strides = [1, 1]} : vector<8x512xf32> to vector<8x384xf32>
    %111 = arith.negf %110 : vector<8x384xf32>
    %112 = math.exp %111 : vector<8x384xf32>
    %cst_39 = arith.constant 1.000000e+00 : f32
    %113 = vector.broadcast %cst_39 : f32 to vector<8x384xf32>
    %114 = arith.addf %113, %112 : vector<8x384xf32>
    %115 = arith.divf %113, %114 : vector<8x384xf32>
    %116 = vector.extract_strided_slice %109 {offsets = [0, 0], sizes = [8, 384], strides = [1, 1]} : vector<8x512xf32> to vector<8x384xf32>
    %117 = arith.negf %116 : vector<8x384xf32>
    %118 = math.exp %117 : vector<8x384xf32>
    %cst_40 = arith.constant 1.000000e+00 : f32
    %119 = vector.broadcast %cst_40 : f32 to vector<8x384xf32>
    %120 = arith.addf %119, %118 : vector<8x384xf32>
    %121 = arith.divf %119, %120 : vector<8x384xf32>
    %122 = vector.extract_strided_slice %106 {offsets = [0, 384], sizes = [8, 128], strides = [1, 1]} : vector<8x512xf32> to vector<8x128xf32>
    %123 = math.tanh %122 : vector<8x128xf32>
    %124 = vector.extract_strided_slice %109 {offsets = [0, 384], sizes = [8, 128], strides = [1, 1]} : vector<8x512xf32> to vector<8x128xf32>
    %125 = math.tanh %124 : vector<8x128xf32>
    %126 = vector.extract_strided_slice %115 {offsets = [0, 128], sizes = [8, 128], strides = [1, 1]} : vector<8x384xf32> to vector<8x128xf32>
    %127 = arith.mulf %126, %88 : vector<8x128xf32>
    %128 = vector.extract_strided_slice %115 {offsets = [0, 0], sizes = [8, 128], strides = [1, 1]} : vector<8x384xf32> to vector<8x128xf32>
    %129 = arith.mulf %128, %123 : vector<8x128xf32>
    %130 = arith.addf %127, %129 : vector<8x128xf32>
    %131 = vector.extract_strided_slice %121 {offsets = [0, 128], sizes = [8, 128], strides = [1, 1]} : vector<8x384xf32> to vector<8x128xf32>
    %132 = arith.mulf %131, %93 : vector<8x128xf32>
    %133 = vector.extract_strided_slice %121 {offsets = [0, 0], sizes = [8, 128], strides = [1, 1]} : vector<8x384xf32> to vector<8x128xf32>
    %134 = arith.mulf %133, %125 : vector<8x128xf32>
    %135 = arith.addf %132, %134 : vector<8x128xf32>
    %136 = vector.extract_strided_slice %115 {offsets = [0, 256], sizes = [8, 128], strides = [1, 1]} : vector<8x384xf32> to vector<8x128xf32>
    %137 = math.tanh %130 : vector<8x128xf32>
    %138 = arith.mulf %136, %137 : vector<8x128xf32>
    %139 = vector.extract_strided_slice %121 {offsets = [0, 256], sizes = [8, 128], strides = [1, 1]} : vector<8x384xf32> to vector<8x128xf32>
    %140 = math.tanh %135 : vector<8x128xf32>
    %141 = arith.mulf %139, %140 : vector<8x128xf32>
    %142 = arith.truncf %138 : vector<8x128xf32> to vector<8x128xbf16>
    %143 = arith.truncf %141 : vector<8x128xf32> to vector<8x128xbf16>
    %c16_41 = arith.constant 16 : index
    %c0_42 = arith.constant 0 : index
    %144 = vector.load %arg15[%c16_41, %c0_42] : memref<64x256xbf16, #tpu.memory_space<vmem>>, vector<8x128xbf16>
    tpu.vector_store %arg15[%c16_41, %c0_42], %142 {strides = array<i32>} : memref<64x256xbf16, #tpu.memory_space<vmem>>, vector<8x128xbf16>,
    %c40_43 = arith.constant 40 : index
    %c128_44 = arith.constant 128 : index
    %145 = vector.load %arg15[%c40_43, %c128_44] : memref<64x256xbf16, #tpu.memory_space<vmem>>, vector<8x128xbf16>
    tpu.vector_store %arg15[%c40_43, %c128_44], %143 {strides = array<i32>} : memref<64x256xbf16, #tpu.memory_space<vmem>>, vector<8x128xbf16>,
    %c24 = arith.constant 24 : index
    %c0_45 = arith.constant 0 : index
    %146 = vector.load %arg14[%c24, %c0_45] : memref<64x1024xf32, #tpu.memory_space<vmem>>, vector<8x512xf32>
    %cst_46 = arith.constant dense<0.000000e+00> : vector<8x512xf32>
    %147 = tpu.matmul %142, %14, %cst_46 {dimension_numbers = #tpu.dot_dimension_numbers<[1], [0], [0], [1], [0, 0, 1, 1], [], []>} : vector<8x128xbf16>, vector<128x512xbf16>, vector<8x512xf32> -> vector<8x512xf32>
    %148 = arith.addf %146, %147 : vector<8x512xf32>
    %c32 = arith.constant 32 : index
    %c512_47 = arith.constant 512 : index
    %149 = vector.load %arg14[%c32, %c512_47] : memref<64x1024xf32, #tpu.memory_space<vmem>>, vector<8x512xf32>
    %cst_48 = arith.constant dense<0.000000e+00> : vector<8x512xf32>
    %150 = tpu.matmul %143, %15, %cst_48 {dimension_numbers = #tpu.dot_dimension_numbers<[1], [0], [0], [1], [0, 0, 1, 1], [], []>} : vector<8x128xbf16>, vector<128x512xbf16>, vector<8x512xf32> -> vector<8x512xf32>
    %151 = arith.addf %149, %150 : vector<8x512xf32>
    %152 = vector.extract_strided_slice %148 {offsets = [0, 0], sizes = [8, 384], strides = [1, 1]} : vector<8x512xf32> to vector<8x384xf32>
    %153 = arith.negf %152 : vector<8x384xf32>
    %154 = math.exp %153 : vector<8x384xf32>
    %cst_49 = arith.constant 1.000000e+00 : f32
    %155 = vector.broadcast %cst_49 : f32 to vector<8x384xf32>
    %156 = arith.addf %155, %154 : vector<8x384xf32>
    %157 = arith.divf %155, %156 : vector<8x384xf32>
    %158 = vector.extract_strided_slice %151 {offsets = [0, 0], sizes = [8, 384], strides = [1, 1]} : vector<8x512xf32> to vector<8x384xf32>
    %159 = arith.negf %158 : vector<8x384xf32>
    %160 = math.exp %159 : vector<8x384xf32>
    %cst_50 = arith.constant 1.000000e+00 : f32
    %161 = vector.broadcast %cst_50 : f32 to vector<8x384xf32>
    %162 = arith.addf %161, %160 : vector<8x384xf32>
    %163 = arith.divf %161, %162 : vector<8x384xf32>
    %164 = vector.extract_strided_slice %148 {offsets = [0, 384], sizes = [8, 128], strides = [1, 1]} : vector<8x512xf32> to vector<8x128xf32>
    %165 = math.tanh %164 : vector<8x128xf32>
    %166 = vector.extract_strided_slice %151 {offsets = [0, 384], sizes = [8, 128], strides = [1, 1]} : vector<8x512xf32> to vector<8x128xf32>
    %167 = math.tanh %166 : vector<8x128xf32>
    %168 = vector.extract_strided_slice %157 {offsets = [0, 128], sizes = [8, 128], strides = [1, 1]} : vector<8x384xf32> to vector<8x128xf32>
    %169 = arith.mulf %168, %130 : vector<8x128xf32>
    %170 = vector.extract_strided_slice %157 {offsets = [0, 0], sizes = [8, 128], strides = [1, 1]} : vector<8x384xf32> to vector<8x128xf32>
    %171 = arith.mulf %170, %165 : vector<8x128xf32>
    %172 = arith.addf %169, %171 : vector<8x128xf32>
    %173 = vector.extract_strided_slice %163 {offsets = [0, 128], sizes = [8, 128], strides = [1, 1]} : vector<8x384xf32> to vector<8x128xf32>
    %174 = arith.mulf %173, %135 : vector<8x128xf32>
    %175 = vector.extract_strided_slice %163 {offsets = [0, 0], sizes = [8, 128], strides = [1, 1]} : vector<8x384xf32> to vector<8x128xf32>
    %176 = arith.mulf %175, %167 : vector<8x128xf32>
    %177 = arith.addf %174, %176 : vector<8x128xf32>
    %178 = vector.extract_strided_slice %157 {offsets = [0, 256], sizes = [8, 128], strides = [1, 1]} : vector<8x384xf32> to vector<8x128xf32>
    %179 = math.tanh %172 : vector<8x128xf32>
    %180 = arith.mulf %178, %179 : vector<8x128xf32>
    %181 = vector.extract_strided_slice %163 {offsets = [0, 256], sizes = [8, 128], strides = [1, 1]} : vector<8x384xf32> to vector<8x128xf32>
    %182 = math.tanh %177 : vector<8x128xf32>
    %183 = arith.mulf %181, %182 : vector<8x128xf32>
    %184 = arith.truncf %180 : vector<8x128xf32> to vector<8x128xbf16>
    %185 = arith.truncf %183 : vector<8x128xf32> to vector<8x128xbf16>
    %c24_51 = arith.constant 24 : index
    %c0_52 = arith.constant 0 : index
    %186 = vector.load %arg15[%c24_51, %c0_52] : memref<64x256xbf16, #tpu.memory_space<vmem>>, vector<8x128xbf16>
    tpu.vector_store %arg15[%c24_51, %c0_52], %184 {strides = array<i32>} : memref<64x256xbf16, #tpu.memory_space<vmem>>, vector<8x128xbf16>,
    %c32_53 = arith.constant 32 : index
    %c128_54 = arith.constant 128 : index
    %187 = vector.load %arg15[%c32_53, %c128_54] : memref<64x256xbf16, #tpu.memory_space<vmem>>, vector<8x128xbf16>
    tpu.vector_store %arg15[%c32_53, %c128_54], %185 {strides = array<i32>} : memref<64x256xbf16, #tpu.memory_space<vmem>>, vector<8x128xbf16>,
    %c32_55 = arith.constant 32 : index
    %c0_56 = arith.constant 0 : index
    %188 = vector.load %arg14[%c32_55, %c0_56] : memref<64x1024xf32, #tpu.memory_space<vmem>>, vector<8x512xf32>
    %cst_57 = arith.constant dense<0.000000e+00> : vector<8x512xf32>
    %189 = tpu.matmul %184, %14, %cst_57 {dimension_numbers = #tpu.dot_dimension_numbers<[1], [0], [0], [1], [0, 0, 1, 1], [], []>} : vector<8x128xbf16>, vector<128x512xbf16>, vector<8x512xf32> -> vector<8x512xf32>
    %190 = arith.addf %188, %189 : vector<8x512xf32>
    %c24_58 = arith.constant 24 : index
    %c512_59 = arith.constant 512 : index
    %191 = vector.load %arg14[%c24_58, %c512_59] : memref<64x1024xf32, #tpu.memory_space<vmem>>, vector<8x512xf32>
    %cst_60 = arith.constant dense<0.000000e+00> : vector<8x512xf32>
    %192 = tpu.matmul %185, %15, %cst_60 {dimension_numbers = #tpu.dot_dimension_numbers<[1], [0], [0], [1], [0, 0, 1, 1], [], []>} : vector<8x128xbf16>, vector<128x512xbf16>, vector<8x512xf32> -> vector<8x512xf32>
    %193 = arith.addf %191, %192 : vector<8x512xf32>
    %194 = vector.extract_strided_slice %190 {offsets = [0, 0], sizes = [8, 384], strides = [1, 1]} : vector<8x512xf32> to vector<8x384xf32>
    %195 = arith.negf %194 : vector<8x384xf32>
    %196 = math.exp %195 : vector<8x384xf32>
    %cst_61 = arith.constant 1.000000e+00 : f32
    %197 = vector.broadcast %cst_61 : f32 to vector<8x384xf32>
    %198 = arith.addf %197, %196 : vector<8x384xf32>
    %199 = arith.divf %197, %198 : vector<8x384xf32>
    %200 = vector.extract_strided_slice %193 {offsets = [0, 0], sizes = [8, 384], strides = [1, 1]} : vector<8x512xf32> to vector<8x384xf32>
    %201 = arith.negf %200 : vector<8x384xf32>
    %202 = math.exp %201 : vector<8x384xf32>
    %cst_62 = arith.constant 1.000000e+00 : f32
    %203 = vector.broadcast %cst_62 : f32 to vector<8x384xf32>
    %204 = arith.addf %203, %202 : vector<8x384xf32>
    %205 = arith.divf %203, %204 : vector<8x384xf32>
    %206 = vector.extract_strided_slice %190 {offsets = [0, 384], sizes = [8, 128], strides = [1, 1]} : vector<8x512xf32> to vector<8x128xf32>
    %207 = math.tanh %206 : vector<8x128xf32>
    %208 = vector.extract_strided_slice %193 {offsets = [0, 384], sizes = [8, 128], strides = [1, 1]} : vector<8x512xf32> to vector<8x128xf32>
    %209 = math.tanh %208 : vector<8x128xf32>
    %210 = vector.extract_strided_slice %199 {offsets = [0, 128], sizes = [8, 128], strides = [1, 1]} : vector<8x384xf32> to vector<8x128xf32>
    %211 = arith.mulf %210, %172 : vector<8x128xf32>
    %212 = vector.extract_strided_slice %199 {offsets = [0, 0], sizes = [8, 128], strides = [1, 1]} : vector<8x384xf32> to vector<8x128xf32>
    %213 = arith.mulf %212, %207 : vector<8x128xf32>
    %214 = arith.addf %211, %213 : vector<8x128xf32>
    %215 = vector.extract_strided_slice %205 {offsets = [0, 128], sizes = [8, 128], strides = [1, 1]} : vector<8x384xf32> to vector<8x128xf32>
    %216 = arith.mulf %215, %177 : vector<8x128xf32>
    %217 = vector.extract_strided_slice %205 {offsets = [0, 0], sizes = [8, 128], strides = [1, 1]} : vector<8x384xf32> to vector<8x128xf32>
    %218 = arith.mulf %217, %209 : vector<8x128xf32>
    %219 = arith.addf %216, %218 : vector<8x128xf32>
    %220 = vector.extract_strided_slice %199 {offsets = [0, 256], sizes = [8, 128], strides = [1, 1]} : vector<8x384xf32> to vector<8x128xf32>
    %221 = math.tanh %214 : vector<8x128xf32>
    %222 = arith.mulf %220, %221 : vector<8x128xf32>
    %223 = vector.extract_strided_slice %205 {offsets = [0, 256], sizes = [8, 128], strides = [1, 1]} : vector<8x384xf32> to vector<8x128xf32>
    %224 = math.tanh %219 : vector<8x128xf32>
    %225 = arith.mulf %223, %224 : vector<8x128xf32>
    %226 = arith.truncf %222 : vector<8x128xf32> to vector<8x128xbf16>
    %227 = arith.truncf %225 : vector<8x128xf32> to vector<8x128xbf16>
    %c32_63 = arith.constant 32 : index
    %c0_64 = arith.constant 0 : index
    %228 = vector.load %arg15[%c32_63, %c0_64] : memref<64x256xbf16, #tpu.memory_space<vmem>>, vector<8x128xbf16>
    tpu.vector_store %arg15[%c32_63, %c0_64], %226 {strides = array<i32>} : memref<64x256xbf16, #tpu.memory_space<vmem>>, vector<8x128xbf16>,
    %c24_65 = arith.constant 24 : index
    %c128_66 = arith.constant 128 : index
    %229 = vector.load %arg15[%c24_65, %c128_66] : memref<64x256xbf16, #tpu.memory_space<vmem>>, vector<8x128xbf16>
    tpu.vector_store %arg15[%c24_65, %c128_66], %227 {strides = array<i32>} : memref<64x256xbf16, #tpu.memory_space<vmem>>, vector<8x128xbf16>,
    %c40_67 = arith.constant 40 : index
    %c0_68 = arith.constant 0 : index
    %230 = vector.load %arg14[%c40_67, %c0_68] : memref<64x1024xf32, #tpu.memory_space<vmem>>, vector<8x512xf32>
    %cst_69 = arith.constant dense<0.000000e+00> : vector<8x512xf32>
    %231 = tpu.matmul %226, %14, %cst_69 {dimension_numbers = #tpu.dot_dimension_numbers<[1], [0], [0], [1], [0, 0, 1, 1], [], []>} : vector<8x128xbf16>, vector<128x512xbf16>, vector<8x512xf32> -> vector<8x512xf32>
    %232 = arith.addf %230, %231 : vector<8x512xf32>
    %c16_70 = arith.constant 16 : index
    %c512_71 = arith.constant 512 : index
    %233 = vector.load %arg14[%c16_70, %c512_71] : memref<64x1024xf32, #tpu.memory_space<vmem>>, vector<8x512xf32>
    %cst_72 = arith.constant dense<0.000000e+00> : vector<8x512xf32>
    %234 = tpu.matmul %227, %15, %cst_72 {dimension_numbers = #tpu.dot_dimension_numbers<[1], [0], [0], [1], [0, 0, 1, 1], [], []>} : vector<8x128xbf16>, vector<128x512xbf16>, vector<8x512xf32> -> vector<8x512xf32>
    %235 = arith.addf %233, %234 : vector<8x512xf32>
    %236 = vector.extract_strided_slice %232 {offsets = [0, 0], sizes = [8, 384], strides = [1, 1]} : vector<8x512xf32> to vector<8x384xf32>
    %237 = arith.negf %236 : vector<8x384xf32>
    %238 = math.exp %237 : vector<8x384xf32>
    %cst_73 = arith.constant 1.000000e+00 : f32
    %239 = vector.broadcast %cst_73 : f32 to vector<8x384xf32>
    %240 = arith.addf %239, %238 : vector<8x384xf32>
    %241 = arith.divf %239, %240 : vector<8x384xf32>
    %242 = vector.extract_strided_slice %235 {offsets = [0, 0], sizes = [8, 384], strides = [1, 1]} : vector<8x512xf32> to vector<8x384xf32>
    %243 = arith.negf %242 : vector<8x384xf32>
    %244 = math.exp %243 : vector<8x384xf32>
    %cst_74 = arith.constant 1.000000e+00 : f32
    %245 = vector.broadcast %cst_74 : f32 to vector<8x384xf32>
    %246 = arith.addf %245, %244 : vector<8x384xf32>
    %247 = arith.divf %245, %246 : vector<8x384xf32>
    %248 = vector.extract_strided_slice %232 {offsets = [0, 384], sizes = [8, 128], strides = [1, 1]} : vector<8x512xf32> to vector<8x128xf32>
    %249 = math.tanh %248 : vector<8x128xf32>
    %250 = vector.extract_strided_slice %235 {offsets = [0, 384], sizes = [8, 128], strides = [1, 1]} : vector<8x512xf32> to vector<8x128xf32>
    %251 = math.tanh %250 : vector<8x128xf32>
    %252 = vector.extract_strided_slice %241 {offsets = [0, 128], sizes = [8, 128], strides = [1, 1]} : vector<8x384xf32> to vector<8x128xf32>
    %253 = arith.mulf %252, %214 : vector<8x128xf32>
    %254 = vector.extract_strided_slice %241 {offsets = [0, 0], sizes = [8, 128], strides = [1, 1]} : vector<8x384xf32> to vector<8x128xf32>
    %255 = arith.mulf %254, %249 : vector<8x128xf32>
    %256 = arith.addf %253, %255 : vector<8x128xf32>
    %257 = vector.extract_strided_slice %247 {offsets = [0, 128], sizes = [8, 128], strides = [1, 1]} : vector<8x384xf32> to vector<8x128xf32>
    %258 = arith.mulf %257, %219 : vector<8x128xf32>
    %259 = vector.extract_strided_slice %247 {offsets = [0, 0], sizes = [8, 128], strides = [1, 1]} : vector<8x384xf32> to vector<8x128xf32>
    %260 = arith.mulf %259, %251 : vector<8x128xf32>
    %261 = arith.addf %258, %260 : vector<8x128xf32>
    %262 = vector.extract_strided_slice %241 {offsets = [0, 256], sizes = [8, 128], strides = [1, 1]} : vector<8x384xf32> to vector<8x128xf32>
    %263 = math.tanh %256 : vector<8x128xf32>
    %264 = arith.mulf %262, %263 : vector<8x128xf32>
    %265 = vector.extract_strided_slice %247 {offsets = [0, 256], sizes = [8, 128], strides = [1, 1]} : vector<8x384xf32> to vector<8x128xf32>
    %266 = math.tanh %261 : vector<8x128xf32>
    %267 = arith.mulf %265, %266 : vector<8x128xf32>
    %268 = arith.truncf %264 : vector<8x128xf32> to vector<8x128xbf16>
    %269 = arith.truncf %267 : vector<8x128xf32> to vector<8x128xbf16>
    %c40_75 = arith.constant 40 : index
    %c0_76 = arith.constant 0 : index
    %270 = vector.load %arg15[%c40_75, %c0_76] : memref<64x256xbf16, #tpu.memory_space<vmem>>, vector<8x128xbf16>
    tpu.vector_store %arg15[%c40_75, %c0_76], %268 {strides = array<i32>} : memref<64x256xbf16, #tpu.memory_space<vmem>>, vector<8x128xbf16>,
    %c16_77 = arith.constant 16 : index
    %c128_78 = arith.constant 128 : index
    %271 = vector.load %arg15[%c16_77, %c128_78] : memref<64x256xbf16, #tpu.memory_space<vmem>>, vector<8x128xbf16>
    tpu.vector_store %arg15[%c16_77, %c128_78], %269 {strides = array<i32>} : memref<64x256xbf16, #tpu.memory_space<vmem>>, vector<8x128xbf16>,
    %c48_79 = arith.constant 48 : index
    %c0_80 = arith.constant 0 : index
    %272 = vector.load %arg14[%c48_79, %c0_80] : memref<64x1024xf32, #tpu.memory_space<vmem>>, vector<8x512xf32>
    %cst_81 = arith.constant dense<0.000000e+00> : vector<8x512xf32>
    %273 = tpu.matmul %268, %14, %cst_81 {dimension_numbers = #tpu.dot_dimension_numbers<[1], [0], [0], [1], [0, 0, 1, 1], [], []>} : vector<8x128xbf16>, vector<128x512xbf16>, vector<8x512xf32> -> vector<8x512xf32>
    %274 = arith.addf %272, %273 : vector<8x512xf32>
    %c8_82 = arith.constant 8 : index
    %c512_83 = arith.constant 512 : index
    %275 = vector.load %arg14[%c8_82, %c512_83] : memref<64x1024xf32, #tpu.memory_space<vmem>>, vector<8x512xf32>
    %cst_84 = arith.constant dense<0.000000e+00> : vector<8x512xf32>
    %276 = tpu.matmul %269, %15, %cst_84 {dimension_numbers = #tpu.dot_dimension_numbers<[1], [0], [0], [1], [0, 0, 1, 1], [], []>} : vector<8x128xbf16>, vector<128x512xbf16>, vector<8x512xf32> -> vector<8x512xf32>
    %277 = arith.addf %275, %276 : vector<8x512xf32>
    %278 = vector.extract_strided_slice %274 {offsets = [0, 0], sizes = [8, 384], strides = [1, 1]} : vector<8x512xf32> to vector<8x384xf32>
    %279 = arith.negf %278 : vector<8x384xf32>
    %280 = math.exp %279 : vector<8x384xf32>
    %cst_85 = arith.constant 1.000000e+00 : f32
    %281 = vector.broadcast %cst_85 : f32 to vector<8x384xf32>
    %282 = arith.addf %281, %280 : vector<8x384xf32>
    %283 = arith.divf %281, %282 : vector<8x384xf32>
    %284 = vector.extract_strided_slice %277 {offsets = [0, 0], sizes = [8, 384], strides = [1, 1]} : vector<8x512xf32> to vector<8x384xf32>
    %285 = arith.negf %284 : vector<8x384xf32>
    %286 = math.exp %285 : vector<8x384xf32>
    %cst_86 = arith.constant 1.000000e+00 : f32
    %287 = vector.broadcast %cst_86 : f32 to vector<8x384xf32>
    %288 = arith.addf %287, %286 : vector<8x384xf32>
    %289 = arith.divf %287, %288 : vector<8x384xf32>
    %290 = vector.extract_strided_slice %274 {offsets = [0, 384], sizes = [8, 128], strides = [1, 1]} : vector<8x512xf32> to vector<8x128xf32>
    %291 = math.tanh %290 : vector<8x128xf32>
    %292 = vector.extract_strided_slice %277 {offsets = [0, 384], sizes = [8, 128], strides = [1, 1]} : vector<8x512xf32> to vector<8x128xf32>
    %293 = math.tanh %292 : vector<8x128xf32>
    %294 = vector.extract_strided_slice %283 {offsets = [0, 128], sizes = [8, 128], strides = [1, 1]} : vector<8x384xf32> to vector<8x128xf32>
    %295 = arith.mulf %294, %256 : vector<8x128xf32>
    %296 = vector.extract_strided_slice %283 {offsets = [0, 0], sizes = [8, 128], strides = [1, 1]} : vector<8x384xf32> to vector<8x128xf32>
    %297 = arith.mulf %296, %291 : vector<8x128xf32>
    %298 = arith.addf %295, %297 : vector<8x128xf32>
    %299 = vector.extract_strided_slice %289 {offsets = [0, 128], sizes = [8, 128], strides = [1, 1]} : vector<8x384xf32> to vector<8x128xf32>
    %300 = arith.mulf %299, %261 : vector<8x128xf32>
    %301 = vector.extract_strided_slice %289 {offsets = [0, 0], sizes = [8, 128], strides = [1, 1]} : vector<8x384xf32> to vector<8x128xf32>
    %302 = arith.mulf %301, %293 : vector<8x128xf32>
    %303 = arith.addf %300, %302 : vector<8x128xf32>
    %304 = vector.extract_strided_slice %283 {offsets = [0, 256], sizes = [8, 128], strides = [1, 1]} : vector<8x384xf32> to vector<8x128xf32>
    %305 = math.tanh %298 : vector<8x128xf32>
    %306 = arith.mulf %304, %305 : vector<8x128xf32>
    %307 = vector.extract_strided_slice %289 {offsets = [0, 256], sizes = [8, 128], strides = [1, 1]} : vector<8x384xf32> to vector<8x128xf32>
    %308 = math.tanh %303 : vector<8x128xf32>
    %309 = arith.mulf %307, %308 : vector<8x128xf32>
    %310 = arith.truncf %306 : vector<8x128xf32> to vector<8x128xbf16>
    %311 = arith.truncf %309 : vector<8x128xf32> to vector<8x128xbf16>
    %c48_87 = arith.constant 48 : index
    %c0_88 = arith.constant 0 : index
    %312 = vector.load %arg15[%c48_87, %c0_88] : memref<64x256xbf16, #tpu.memory_space<vmem>>, vector<8x128xbf16>
    tpu.vector_store %arg15[%c48_87, %c0_88], %310 {strides = array<i32>} : memref<64x256xbf16, #tpu.memory_space<vmem>>, vector<8x128xbf16>,
    %c8_89 = arith.constant 8 : index
    %c128_90 = arith.constant 128 : index
    %313 = vector.load %arg15[%c8_89, %c128_90] : memref<64x256xbf16, #tpu.memory_space<vmem>>, vector<8x128xbf16>
    tpu.vector_store %arg15[%c8_89, %c128_90], %311 {strides = array<i32>} : memref<64x256xbf16, #tpu.memory_space<vmem>>, vector<8x128xbf16>,
    %c56_91 = arith.constant 56 : index
    %c0_92 = arith.constant 0 : index
    %314 = vector.load %arg14[%c56_91, %c0_92] : memref<64x1024xf32, #tpu.memory_space<vmem>>, vector<8x512xf32>
    %cst_93 = arith.constant dense<0.000000e+00> : vector<8x512xf32>
    %315 = tpu.matmul %310, %14, %cst_93 {dimension_numbers = #tpu.dot_dimension_numbers<[1], [0], [0], [1], [0, 0, 1, 1], [], []>} : vector<8x128xbf16>, vector<128x512xbf16>, vector<8x512xf32> -> vector<8x512xf32>
    %316 = arith.addf %314, %315 : vector<8x512xf32>
    %c0_94 = arith.constant 0 : index
    %c512_95 = arith.constant 512 : index
    %317 = vector.load %arg14[%c0_94, %c512_95] : memref<64x1024xf32, #tpu.memory_space<vmem>>, vector<8x512xf32>
    %cst_96 = arith.constant dense<0.000000e+00> : vector<8x512xf32>
    %318 = tpu.matmul %311, %15, %cst_96 {dimension_numbers = #tpu.dot_dimension_numbers<[1], [0], [0], [1], [0, 0, 1, 1], [], []>} : vector<8x128xbf16>, vector<128x512xbf16>, vector<8x512xf32> -> vector<8x512xf32>
    %319 = arith.addf %317, %318 : vector<8x512xf32>
    %320 = vector.extract_strided_slice %316 {offsets = [0, 0], sizes = [8, 384], strides = [1, 1]} : vector<8x512xf32> to vector<8x384xf32>
    %321 = arith.negf %320 : vector<8x384xf32>
    %322 = math.exp %321 : vector<8x384xf32>
    %cst_97 = arith.constant 1.000000e+00 : f32
    %323 = vector.broadcast %cst_97 : f32 to vector<8x384xf32>
    %324 = arith.addf %323, %322 : vector<8x384xf32>
    %325 = arith.divf %323, %324 : vector<8x384xf32>
    %326 = vector.extract_strided_slice %319 {offsets = [0, 0], sizes = [8, 384], strides = [1, 1]} : vector<8x512xf32> to vector<8x384xf32>
    %327 = arith.negf %326 : vector<8x384xf32>
    %328 = math.exp %327 : vector<8x384xf32>
    %cst_98 = arith.constant 1.000000e+00 : f32
    %329 = vector.broadcast %cst_98 : f32 to vector<8x384xf32>
    %330 = arith.addf %329, %328 : vector<8x384xf32>
    %331 = arith.divf %329, %330 : vector<8x384xf32>
    %332 = vector.extract_strided_slice %316 {offsets = [0, 384], sizes = [8, 128], strides = [1, 1]} : vector<8x512xf32> to vector<8x128xf32>
    %333 = math.tanh %332 : vector<8x128xf32>
    %334 = vector.extract_strided_slice %319 {offsets = [0, 384], sizes = [8, 128], strides = [1, 1]} : vector<8x512xf32> to vector<8x128xf32>
    %335 = math.tanh %334 : vector<8x128xf32>
    %336 = vector.extract_strided_slice %325 {offsets = [0, 128], sizes = [8, 128], strides = [1, 1]} : vector<8x384xf32> to vector<8x128xf32>
    %337 = arith.mulf %336, %298 : vector<8x128xf32>
    %338 = vector.extract_strided_slice %325 {offsets = [0, 0], sizes = [8, 128], strides = [1, 1]} : vector<8x384xf32> to vector<8x128xf32>
    %339 = arith.mulf %338, %333 : vector<8x128xf32>
    %340 = arith.addf %337, %339 : vector<8x128xf32>
    %341 = vector.extract_strided_slice %331 {offsets = [0, 128], sizes = [8, 128], strides = [1, 1]} : vector<8x384xf32> to vector<8x128xf32>
    %342 = arith.mulf %341, %303 : vector<8x128xf32>
    %343 = vector.extract_strided_slice %331 {offsets = [0, 0], sizes = [8, 128], strides = [1, 1]} : vector<8x384xf32> to vector<8x128xf32>
    %344 = arith.mulf %343, %335 : vector<8x128xf32>
    %345 = arith.addf %342, %344 : vector<8x128xf32>
    %346 = vector.extract_strided_slice %325 {offsets = [0, 256], sizes = [8, 128], strides = [1, 1]} : vector<8x384xf32> to vector<8x128xf32>
    %347 = math.tanh %340 : vector<8x128xf32>
    %348 = arith.mulf %346, %347 : vector<8x128xf32>
    %349 = vector.extract_strided_slice %331 {offsets = [0, 256], sizes = [8, 128], strides = [1, 1]} : vector<8x384xf32> to vector<8x128xf32>
    %350 = math.tanh %345 : vector<8x128xf32>
    %351 = arith.mulf %349, %350 : vector<8x128xf32>
    %352 = arith.truncf %348 : vector<8x128xf32> to vector<8x128xbf16>
    %353 = arith.truncf %351 : vector<8x128xf32> to vector<8x128xbf16>
    %c56_99 = arith.constant 56 : index
    %c0_100 = arith.constant 0 : index
    %354 = vector.load %arg15[%c56_99, %c0_100] : memref<64x256xbf16, #tpu.memory_space<vmem>>, vector<8x128xbf16>
    tpu.vector_store %arg15[%c56_99, %c0_100], %352 {strides = array<i32>} : memref<64x256xbf16, #tpu.memory_space<vmem>>, vector<8x128xbf16>,
    %c0_101 = arith.constant 0 : index
    %c128_102 = arith.constant 128 : index
    %355 = vector.load %arg15[%c0_101, %c128_102] : memref<64x256xbf16, #tpu.memory_space<vmem>>, vector<8x128xbf16>
    tpu.vector_store %arg15[%c0_101, %c128_102], %353 {strides = array<i32>} : memref<64x256xbf16, #tpu.memory_space<vmem>>, vector<8x128xbf16>,
    %c0_i32_103 = arith.constant 0 : i32
    %356 = tpu.memref_slice %arg20[%c0_i32_103] : memref<3x!tpu.dma_semaphore, #tpu.memory_space<semaphore_mem>> -> memref<1x!tpu.dma_semaphore, #tpu.memory_space<semaphore_mem>>
    %357 = tpu.memref_squeeze %356 : memref<1x!tpu.dma_semaphore, #tpu.memory_space<semaphore_mem>> -> memref<!tpu.dma_semaphore, #tpu.memory_space<semaphore_mem>>
    tpu.wait_dma2 semaphore(%357 : memref<!tpu.dma_semaphore, #tpu.memory_space<semaphore_mem>>) src(%arg10 : memref<256x1024xbf16, #tpu.memory_space<any>>) dst(%arg17 : memref<256x1024xbf16, #tpu.memory_space<vmem>>)
    %c1_i32_104 = arith.constant 1 : i32
    %358 = tpu.memref_slice %arg20[%c1_i32_104] : memref<3x!tpu.dma_semaphore, #tpu.memory_space<semaphore_mem>> -> memref<1x!tpu.dma_semaphore, #tpu.memory_space<semaphore_mem>>
    %359 = tpu.memref_squeeze %358 : memref<1x!tpu.dma_semaphore, #tpu.memory_space<semaphore_mem>> -> memref<!tpu.dma_semaphore, #tpu.memory_space<semaphore_mem>>
    tpu.wait_dma2 semaphore(%359 : memref<!tpu.dma_semaphore, #tpu.memory_space<semaphore_mem>>) src(%arg11 : memref<128x1024xbf16, #tpu.memory_space<any>>) dst(%arg18 : memref<128x1024xbf16, #tpu.memory_space<vmem>>)
    %c0_105 = arith.constant 0 : index
    %c0_106 = arith.constant 0 : index
    %360 = vector.load %arg15[%c0_105, %c0_106] : memref<64x256xbf16, #tpu.memory_space<vmem>>, vector<64x256xbf16>
    %c0_107 = arith.constant 0 : index
    %c0_108 = arith.constant 0 : index
    %361 = vector.load %arg17[%c0_107, %c0_108] : memref<256x1024xbf16, #tpu.memory_space<vmem>>, vector<256x1024xbf16>
    %cst_109 = arith.constant dense<0.000000e+00> : vector<64x1024xf32>
    %362 = tpu.matmul %360, %361, %cst_109 {dimension_numbers = #tpu.dot_dimension_numbers<[1], [0], [0], [1], [0, 0, 1, 1], [], []>} : vector<64x256xbf16>, vector<256x1024xbf16>, vector<64x1024xf32> -> vector<64x1024xf32>
    %c0_110 = arith.constant 0 : index
    %c0_111 = arith.constant 0 : index
    %363 = vector.load %arg5[%c0_110, %c0_111] : memref<1x1024xf32, #tpu.memory_space<vmem>>, vector<1x1024xf32>
    %364 = vector.broadcast %363 : vector<1x1024xf32> to vector<64x1024xf32>
    %365 = arith.addf %362, %364 : vector<64x1024xf32>
    %c0_112 = arith.constant 0 : index
    %c0_113 = arith.constant 0 : index
    %366 = vector.load %arg14[%c0_112, %c0_113] : memref<64x1024xf32, #tpu.memory_space<vmem>>, vector<64x1024xf32>
    tpu.vector_store %arg14[%c0_112, %c0_113], %365 {strides = array<i32>} : memref<64x1024xf32, #tpu.memory_space<vmem>>, vector<64x1024xf32>,
    %c0_114 = arith.constant 0 : index
    %c0_115 = arith.constant 0 : index
    %367 = vector.load %arg18[%c0_114, %c0_115] : memref<128x1024xbf16, #tpu.memory_space<vmem>>, vector<128x512xbf16>
    %c0_116 = arith.constant 0 : index
    %c512_117 = arith.constant 512 : index
    %368 = vector.load %arg18[%c0_116, %c512_117] : memref<128x1024xbf16, #tpu.memory_space<vmem>>, vector<128x512xbf16>
    %cst_118 = arith.constant 0.000000e+00 : bf16
    %369 = vector.broadcast %cst_118 : bf16 to vector<8x128xbf16>
    %cst_119 = arith.constant 0.000000e+00 : bf16
    %370 = vector.broadcast %cst_119 : bf16 to vector<8x128xbf16>
    %cst_120 = arith.constant 0.000000e+00 : f32
    %371 = vector.broadcast %cst_120 : f32 to vector<8x128xf32>
    %cst_121 = arith.constant 0.000000e+00 : f32
    %372 = vector.broadcast %cst_121 : f32 to vector<8x128xf32>
    %c0_122 = arith.constant 0 : index
    %c0_123 = arith.constant 0 : index
    %373 = vector.load %arg14[%c0_122, %c0_123] : memref<64x1024xf32, #tpu.memory_space<vmem>>, vector<8x512xf32>
    %cst_124 = arith.constant dense<0.000000e+00> : vector<8x512xf32>
    %374 = tpu.matmul %369, %367, %cst_124 {dimension_numbers = #tpu.dot_dimension_numbers<[1], [0], [0], [1], [0, 0, 1, 1], [], []>} : vector<8x128xbf16>, vector<128x512xbf16>, vector<8x512xf32> -> vector<8x512xf32>
    %375 = arith.addf %373, %374 : vector<8x512xf32>
    %c56_125 = arith.constant 56 : index
    %c512_126 = arith.constant 512 : index
    %376 = vector.load %arg14[%c56_125, %c512_126] : memref<64x1024xf32, #tpu.memory_space<vmem>>, vector<8x512xf32>
    %cst_127 = arith.constant dense<0.000000e+00> : vector<8x512xf32>
    %377 = tpu.matmul %370, %368, %cst_127 {dimension_numbers = #tpu.dot_dimension_numbers<[1], [0], [0], [1], [0, 0, 1, 1], [], []>} : vector<8x128xbf16>, vector<128x512xbf16>, vector<8x512xf32> -> vector<8x512xf32>
    %378 = arith.addf %376, %377 : vector<8x512xf32>
    %379 = vector.extract_strided_slice %375 {offsets = [0, 0], sizes = [8, 384], strides = [1, 1]} : vector<8x512xf32> to vector<8x384xf32>
    %380 = arith.negf %379 : vector<8x384xf32>
    %381 = math.exp %380 : vector<8x384xf32>
    %cst_128 = arith.constant 1.000000e+00 : f32
    %382 = vector.broadcast %cst_128 : f32 to vector<8x384xf32>
    %383 = arith.addf %382, %381 : vector<8x384xf32>
    %384 = arith.divf %382, %383 : vector<8x384xf32>
    %385 = vector.extract_strided_slice %378 {offsets = [0, 0], sizes = [8, 384], strides = [1, 1]} : vector<8x512xf32> to vector<8x384xf32>
    %386 = arith.negf %385 : vector<8x384xf32>
    %387 = math.exp %386 : vector<8x384xf32>
    %cst_129 = arith.constant 1.000000e+00 : f32
    %388 = vector.broadcast %cst_129 : f32 to vector<8x384xf32>
    %389 = arith.addf %388, %387 : vector<8x384xf32>
    %390 = arith.divf %388, %389 : vector<8x384xf32>
    %391 = vector.extract_strided_slice %375 {offsets = [0, 384], sizes = [8, 128], strides = [1, 1]} : vector<8x512xf32> to vector<8x128xf32>
    %392 = math.tanh %391 : vector<8x128xf32>
    %393 = vector.extract_strided_slice %378 {offsets = [0, 384], sizes = [8, 128], strides = [1, 1]} : vector<8x512xf32> to vector<8x128xf32>
    %394 = math.tanh %393 : vector<8x128xf32>
    %395 = vector.extract_strided_slice %384 {offsets = [0, 128], sizes = [8, 128], strides = [1, 1]} : vector<8x384xf32> to vector<8x128xf32>
    %396 = arith.mulf %395, %371 : vector<8x128xf32>
    %397 = vector.extract_strided_slice %384 {offsets = [0, 0], sizes = [8, 128], strides = [1, 1]} : vector<8x384xf32> to vector<8x128xf32>
    %398 = arith.mulf %397, %392 : vector<8x128xf32>
    %399 = arith.addf %396, %398 : vector<8x128xf32>
    %400 = vector.extract_strided_slice %390 {offsets = [0, 128], sizes = [8, 128], strides = [1, 1]} : vector<8x384xf32> to vector<8x128xf32>
    %401 = arith.mulf %400, %372 : vector<8x128xf32>
    %402 = vector.extract_strided_slice %390 {offsets = [0, 0], sizes = [8, 128], strides = [1, 1]} : vector<8x384xf32> to vector<8x128xf32>
    %403 = arith.mulf %402, %394 : vector<8x128xf32>
    %404 = arith.addf %401, %403 : vector<8x128xf32>
    %405 = vector.extract_strided_slice %384 {offsets = [0, 256], sizes = [8, 128], strides = [1, 1]} : vector<8x384xf32> to vector<8x128xf32>
    %406 = math.tanh %399 : vector<8x128xf32>
    %407 = arith.mulf %405, %406 : vector<8x128xf32>
    %408 = vector.extract_strided_slice %390 {offsets = [0, 256], sizes = [8, 128], strides = [1, 1]} : vector<8x384xf32> to vector<8x128xf32>
    %409 = math.tanh %404 : vector<8x128xf32>
    %410 = arith.mulf %408, %409 : vector<8x128xf32>
    %411 = arith.truncf %407 : vector<8x128xf32> to vector<8x128xbf16>
    %412 = arith.truncf %410 : vector<8x128xf32> to vector<8x128xbf16>
    %c0_130 = arith.constant 0 : index
    %c0_131 = arith.constant 0 : index
    %c0_132 = arith.constant 0 : index
    %413 = vector.load %arg16[%c0_130, %c0_131, %c0_132] : memref<8x8x256xf32, #tpu.memory_space<vmem>>, vector<1x8x128xf32>
    %414 = vector.shape_cast %413 : vector<1x8x128xf32> to vector<8x128xf32>
    %415 = vector.shape_cast %407 : vector<8x128xf32> to vector<1x8x128xf32>
    tpu.vector_store %arg16[%c0_130, %c0_131, %c0_132], %415 {strides = array<i32>} : memref<8x8x256xf32, #tpu.memory_space<vmem>>, vector<1x8x128xf32>,
    %c7 = arith.constant 7 : index
    %c0_133 = arith.constant 0 : index
    %c128_134 = arith.constant 128 : index
    %416 = vector.load %arg16[%c7, %c0_133, %c128_134] : memref<8x8x256xf32, #tpu.memory_space<vmem>>, vector<1x8x128xf32>
    %417 = vector.shape_cast %416 : vector<1x8x128xf32> to vector<8x128xf32>
    %418 = vector.shape_cast %410 : vector<8x128xf32> to vector<1x8x128xf32>
    tpu.vector_store %arg16[%c7, %c0_133, %c128_134], %418 {strides = array<i32>} : memref<8x8x256xf32, #tpu.memory_space<vmem>>, vector<1x8x128xf32>,
    %c8_135 = arith.constant 8 : index
    %c0_136 = arith.constant 0 : index
    %419 = vector.load %arg14[%c8_135, %c0_136] : memref<64x1024xf32, #tpu.memory_space<vmem>>, vector<8x512xf32>
    %cst_137 = arith.constant dense<0.000000e+00> : vector<8x512xf32>
    %420 = tpu.matmul %411, %367, %cst_137 {dimension_numbers = #tpu.dot_dimension_numbers<[1], [0], [0], [1], [0, 0, 1, 1], [], []>} : vector<8x128xbf16>, vector<128x512xbf16>, vector<8x512xf32> -> vector<8x512xf32>
    %421 = arith.addf %419, %420 : vector<8x512xf32>
    %c48_138 = arith.constant 48 : index
    %c512_139 = arith.constant 512 : index
    %422 = vector.load %arg14[%c48_138, %c512_139] : memref<64x1024xf32, #tpu.memory_space<vmem>>, vector<8x512xf32>
    %cst_140 = arith.constant dense<0.000000e+00> : vector<8x512xf32>
    %423 = tpu.matmul %412, %368, %cst_140 {dimension_numbers = #tpu.dot_dimension_numbers<[1], [0], [0], [1], [0, 0, 1, 1], [], []>} : vector<8x128xbf16>, vector<128x512xbf16>, vector<8x512xf32> -> vector<8x512xf32>
    %424 = arith.addf %422, %423 : vector<8x512xf32>
    %425 = vector.extract_strided_slice %421 {offsets = [0, 0], sizes = [8, 384], strides = [1, 1]} : vector<8x512xf32> to vector<8x384xf32>
    %426 = arith.negf %425 : vector<8x384xf32>
    %427 = math.exp %426 : vector<8x384xf32>
    %cst_141 = arith.constant 1.000000e+00 : f32
    %428 = vector.broadcast %cst_141 : f32 to vector<8x384xf32>
    %429 = arith.addf %428, %427 : vector<8x384xf32>
    %430 = arith.divf %428, %429 : vector<8x384xf32>
    %431 = vector.extract_strided_slice %424 {offsets = [0, 0], sizes = [8, 384], strides = [1, 1]} : vector<8x512xf32> to vector<8x384xf32>
    %432 = arith.negf %431 : vector<8x384xf32>
    %433 = math.exp %432 : vector<8x384xf32>
    %cst_142 = arith.constant 1.000000e+00 : f32
    %434 = vector.broadcast %cst_142 : f32 to vector<8x384xf32>
    %435 = arith.addf %434, %433 : vector<8x384xf32>
    %436 = arith.divf %434, %435 : vector<8x384xf32>
    %437 = vector.extract_strided_slice %421 {offsets = [0, 384], sizes = [8, 128], strides = [1, 1]} : vector<8x512xf32> to vector<8x128xf32>
    %438 = math.tanh %437 : vector<8x128xf32>
    %439 = vector.extract_strided_slice %424 {offsets = [0, 384], sizes = [8, 128], strides = [1, 1]} : vector<8x512xf32> to vector<8x128xf32>
    %440 = math.tanh %439 : vector<8x128xf32>
    %441 = vector.extract_strided_slice %430 {offsets = [0, 128], sizes = [8, 128], strides = [1, 1]} : vector<8x384xf32> to vector<8x128xf32>
    %442 = arith.mulf %441, %399 : vector<8x128xf32>
    %443 = vector.extract_strided_slice %430 {offsets = [0, 0], sizes = [8, 128], strides = [1, 1]} : vector<8x384xf32> to vector<8x128xf32>
    %444 = arith.mulf %443, %438 : vector<8x128xf32>
    %445 = arith.addf %442, %444 : vector<8x128xf32>
    %446 = vector.extract_strided_slice %436 {offsets = [0, 128], sizes = [8, 128], strides = [1, 1]} : vector<8x384xf32> to vector<8x128xf32>
    %447 = arith.mulf %446, %404 : vector<8x128xf32>
    %448 = vector.extract_strided_slice %436 {offsets = [0, 0], sizes = [8, 128], strides = [1, 1]} : vector<8x384xf32> to vector<8x128xf32>
    %449 = arith.mulf %448, %440 : vector<8x128xf32>
    %450 = arith.addf %447, %449 : vector<8x128xf32>
    %451 = vector.extract_strided_slice %430 {offsets = [0, 256], sizes = [8, 128], strides = [1, 1]} : vector<8x384xf32> to vector<8x128xf32>
    %452 = math.tanh %445 : vector<8x128xf32>
    %453 = arith.mulf %451, %452 : vector<8x128xf32>
    %454 = vector.extract_strided_slice %436 {offsets = [0, 256], sizes = [8, 128], strides = [1, 1]} : vector<8x384xf32> to vector<8x128xf32>
    %455 = math.tanh %450 : vector<8x128xf32>
    %456 = arith.mulf %454, %455 : vector<8x128xf32>
    %457 = arith.truncf %453 : vector<8x128xf32> to vector<8x128xbf16>
    %458 = arith.truncf %456 : vector<8x128xf32> to vector<8x128xbf16>
    %c1 = arith.constant 1 : index
    %c0_143 = arith.constant 0 : index
    %c0_144 = arith.constant 0 : index
    %459 = vector.load %arg16[%c1, %c0_143, %c0_144] : memref<8x8x256xf32, #tpu.memory_space<vmem>>, vector<1x8x128xf32>
    %460 = vector.shape_cast %459 : vector<1x8x128xf32> to vector<8x128xf32>
    %461 = vector.shape_cast %453 : vector<8x128xf32> to vector<1x8x128xf32>
    tpu.vector_store %arg16[%c1, %c0_143, %c0_144], %461 {strides = array<i32>} : memref<8x8x256xf32, #tpu.memory_space<vmem>>, vector<1x8x128xf32>,
    %c6 = arith.constant 6 : index
    %c0_145 = arith.constant 0 : index
    %c128_146 = arith.constant 128 : index
    %462 = vector.load %arg16[%c6, %c0_145, %c128_146] : memref<8x8x256xf32, #tpu.memory_space<vmem>>, vector<1x8x128xf32>
    %463 = vector.shape_cast %462 : vector<1x8x128xf32> to vector<8x128xf32>
    %464 = vector.shape_cast %456 : vector<8x128xf32> to vector<1x8x128xf32>
    tpu.vector_store %arg16[%c6, %c0_145, %c128_146], %464 {strides = array<i32>} : memref<8x8x256xf32, #tpu.memory_space<vmem>>, vector<1x8x128xf32>,
    %c16_147 = arith.constant 16 : index
    %c0_148 = arith.constant 0 : index
    %465 = vector.load %arg14[%c16_147, %c0_148] : memref<64x1024xf32, #tpu.memory_space<vmem>>, vector<8x512xf32>
    %cst_149 = arith.constant dense<0.000000e+00> : vector<8x512xf32>
    %466 = tpu.matmul %457, %367, %cst_149 {dimension_numbers = #tpu.dot_dimension_numbers<[1], [0], [0], [1], [0, 0, 1, 1], [], []>} : vector<8x128xbf16>, vector<128x512xbf16>, vector<8x512xf32> -> vector<8x512xf32>
    %467 = arith.addf %465, %466 : vector<8x512xf32>
    %c40_150 = arith.constant 40 : index
    %c512_151 = arith.constant 512 : index
    %468 = vector.load %arg14[%c40_150, %c512_151] : memref<64x1024xf32, #tpu.memory_space<vmem>>, vector<8x512xf32>
    %cst_152 = arith.constant dense<0.000000e+00> : vector<8x512xf32>
    %469 = tpu.matmul %458, %368, %cst_152 {dimension_numbers = #tpu.dot_dimension_numbers<[1], [0], [0], [1], [0, 0, 1, 1], [], []>} : vector<8x128xbf16>, vector<128x512xbf16>, vector<8x512xf32> -> vector<8x512xf32>
    %470 = arith.addf %468, %469 : vector<8x512xf32>
    %471 = vector.extract_strided_slice %467 {offsets = [0, 0], sizes = [8, 384], strides = [1, 1]} : vector<8x512xf32> to vector<8x384xf32>
    %472 = arith.negf %471 : vector<8x384xf32>
    %473 = math.exp %472 : vector<8x384xf32>
    %cst_153 = arith.constant 1.000000e+00 : f32
    %474 = vector.broadcast %cst_153 : f32 to vector<8x384xf32>
    %475 = arith.addf %474, %473 : vector<8x384xf32>
    %476 = arith.divf %474, %475 : vector<8x384xf32>
    %477 = vector.extract_strided_slice %470 {offsets = [0, 0], sizes = [8, 384], strides = [1, 1]} : vector<8x512xf32> to vector<8x384xf32>
    %478 = arith.negf %477 : vector<8x384xf32>
    %479 = math.exp %478 : vector<8x384xf32>
    %cst_154 = arith.constant 1.000000e+00 : f32
    %480 = vector.broadcast %cst_154 : f32 to vector<8x384xf32>
    %481 = arith.addf %480, %479 : vector<8x384xf32>
    %482 = arith.divf %480, %481 : vector<8x384xf32>
    %483 = vector.extract_strided_slice %467 {offsets = [0, 384], sizes = [8, 128], strides = [1, 1]} : vector<8x512xf32> to vector<8x128xf32>
    %484 = math.tanh %483 : vector<8x128xf32>
    %485 = vector.extract_strided_slice %470 {offsets = [0, 384], sizes = [8, 128], strides = [1, 1]} : vector<8x512xf32> to vector<8x128xf32>
    %486 = math.tanh %485 : vector<8x128xf32>
    %487 = vector.extract_strided_slice %476 {offsets = [0, 128], sizes = [8, 128], strides = [1, 1]} : vector<8x384xf32> to vector<8x128xf32>
    %488 = arith.mulf %487, %445 : vector<8x128xf32>
    %489 = vector.extract_strided_slice %476 {offsets = [0, 0], sizes = [8, 128], strides = [1, 1]} : vector<8x384xf32> to vector<8x128xf32>
    %490 = arith.mulf %489, %484 : vector<8x128xf32>
    %491 = arith.addf %488, %490 : vector<8x128xf32>
    %492 = vector.extract_strided_slice %482 {offsets = [0, 128], sizes = [8, 128], strides = [1, 1]} : vector<8x384xf32> to vector<8x128xf32>
    %493 = arith.mulf %492, %450 : vector<8x128xf32>
    %494 = vector.extract_strided_slice %482 {offsets = [0, 0], sizes = [8, 128], strides = [1, 1]} : vector<8x384xf32> to vector<8x128xf32>
    %495 = arith.mulf %494, %486 : vector<8x128xf32>
    %496 = arith.addf %493, %495 : vector<8x128xf32>
    %497 = vector.extract_strided_slice %476 {offsets = [0, 256], sizes = [8, 128], strides = [1, 1]} : vector<8x384xf32> to vector<8x128xf32>
    %498 = math.tanh %491 : vector<8x128xf32>
    %499 = arith.mulf %497, %498 : vector<8x128xf32>
    %500 = vector.extract_strided_slice %482 {offsets = [0, 256], sizes = [8, 128], strides = [1, 1]} : vector<8x384xf32> to vector<8x128xf32>
    %501 = math.tanh %496 : vector<8x128xf32>
    %502 = arith.mulf %500, %501 : vector<8x128xf32>
    %503 = arith.truncf %499 : vector<8x128xf32> to vector<8x128xbf16>
    %504 = arith.truncf %502 : vector<8x128xf32> to vector<8x128xbf16>
    %c2 = arith.constant 2 : index
    %c0_155 = arith.constant 0 : index
    %c0_156 = arith.constant 0 : index
    %505 = vector.load %arg16[%c2, %c0_155, %c0_156] : memref<8x8x256xf32, #tpu.memory_space<vmem>>, vector<1x8x128xf32>
    %506 = vector.shape_cast %505 : vector<1x8x128xf32> to vector<8x128xf32>
    %507 = vector.shape_cast %499 : vector<8x128xf32> to vector<1x8x128xf32>
    tpu.vector_store %arg16[%c2, %c0_155, %c0_156], %507 {strides = array<i32>} : memref<8x8x256xf32, #tpu.memory_space<vmem>>, vector<1x8x128xf32>,
    %c5 = arith.constant 5 : index
    %c0_157 = arith.constant 0 : index
    %c128_158 = arith.constant 128 : index
    %508 = vector.load %arg16[%c5, %c0_157, %c128_158] : memref<8x8x256xf32, #tpu.memory_space<vmem>>, vector<1x8x128xf32>
    %509 = vector.shape_cast %508 : vector<1x8x128xf32> to vector<8x128xf32>
    %510 = vector.shape_cast %502 : vector<8x128xf32> to vector<1x8x128xf32>
    tpu.vector_store %arg16[%c5, %c0_157, %c128_158], %510 {strides = array<i32>} : memref<8x8x256xf32, #tpu.memory_space<vmem>>, vector<1x8x128xf32>,
    %c24_159 = arith.constant 24 : index
    %c0_160 = arith.constant 0 : index
    %511 = vector.load %arg14[%c24_159, %c0_160] : memref<64x1024xf32, #tpu.memory_space<vmem>>, vector<8x512xf32>
    %cst_161 = arith.constant dense<0.000000e+00> : vector<8x512xf32>
    %512 = tpu.matmul %503, %367, %cst_161 {dimension_numbers = #tpu.dot_dimension_numbers<[1], [0], [0], [1], [0, 0, 1, 1], [], []>} : vector<8x128xbf16>, vector<128x512xbf16>, vector<8x512xf32> -> vector<8x512xf32>
    %513 = arith.addf %511, %512 : vector<8x512xf32>
    %c32_162 = arith.constant 32 : index
    %c512_163 = arith.constant 512 : index
    %514 = vector.load %arg14[%c32_162, %c512_163] : memref<64x1024xf32, #tpu.memory_space<vmem>>, vector<8x512xf32>
    %cst_164 = arith.constant dense<0.000000e+00> : vector<8x512xf32>
    %515 = tpu.matmul %504, %368, %cst_164 {dimension_numbers = #tpu.dot_dimension_numbers<[1], [0], [0], [1], [0, 0, 1, 1], [], []>} : vector<8x128xbf16>, vector<128x512xbf16>, vector<8x512xf32> -> vector<8x512xf32>
    %516 = arith.addf %514, %515 : vector<8x512xf32>
    %517 = vector.extract_strided_slice %513 {offsets = [0, 0], sizes = [8, 384], strides = [1, 1]} : vector<8x512xf32> to vector<8x384xf32>
    %518 = arith.negf %517 : vector<8x384xf32>
    %519 = math.exp %518 : vector<8x384xf32>
    %cst_165 = arith.constant 1.000000e+00 : f32
    %520 = vector.broadcast %cst_165 : f32 to vector<8x384xf32>
    %521 = arith.addf %520, %519 : vector<8x384xf32>
    %522 = arith.divf %520, %521 : vector<8x384xf32>
    %523 = vector.extract_strided_slice %516 {offsets = [0, 0], sizes = [8, 384], strides = [1, 1]} : vector<8x512xf32> to vector<8x384xf32>
    %524 = arith.negf %523 : vector<8x384xf32>
    %525 = math.exp %524 : vector<8x384xf32>
    %cst_166 = arith.constant 1.000000e+00 : f32
    %526 = vector.broadcast %cst_166 : f32 to vector<8x384xf32>
    %527 = arith.addf %526, %525 : vector<8x384xf32>
    %528 = arith.divf %526, %527 : vector<8x384xf32>
    %529 = vector.extract_strided_slice %513 {offsets = [0, 384], sizes = [8, 128], strides = [1, 1]} : vector<8x512xf32> to vector<8x128xf32>
    %530 = math.tanh %529 : vector<8x128xf32>
    %531 = vector.extract_strided_slice %516 {offsets = [0, 384], sizes = [8, 128], strides = [1, 1]} : vector<8x512xf32> to vector<8x128xf32>
    %532 = math.tanh %531 : vector<8x128xf32>
    %533 = vector.extract_strided_slice %522 {offsets = [0, 128], sizes = [8, 128], strides = [1, 1]} : vector<8x384xf32> to vector<8x128xf32>
    %534 = arith.mulf %533, %491 : vector<8x128xf32>
    %535 = vector.extract_strided_slice %522 {offsets = [0, 0], sizes = [8, 128], strides = [1, 1]} : vector<8x384xf32> to vector<8x128xf32>
    %536 = arith.mulf %535, %530 : vector<8x128xf32>
    %537 = arith.addf %534, %536 : vector<8x128xf32>
    %538 = vector.extract_strided_slice %528 {offsets = [0, 128], sizes = [8, 128], strides = [1, 1]} : vector<8x384xf32> to vector<8x128xf32>
    %539 = arith.mulf %538, %496 : vector<8x128xf32>
    %540 = vector.extract_strided_slice %528 {offsets = [0, 0], sizes = [8, 128], strides = [1, 1]} : vector<8x384xf32> to vector<8x128xf32>
    %541 = arith.mulf %540, %532 : vector<8x128xf32>
    %542 = arith.addf %539, %541 : vector<8x128xf32>
    %543 = vector.extract_strided_slice %522 {offsets = [0, 256], sizes = [8, 128], strides = [1, 1]} : vector<8x384xf32> to vector<8x128xf32>
    %544 = math.tanh %537 : vector<8x128xf32>
    %545 = arith.mulf %543, %544 : vector<8x128xf32>
    %546 = vector.extract_strided_slice %528 {offsets = [0, 256], sizes = [8, 128], strides = [1, 1]} : vector<8x384xf32> to vector<8x128xf32>
    %547 = math.tanh %542 : vector<8x128xf32>
    %548 = arith.mulf %546, %547 : vector<8x128xf32>
    %549 = arith.truncf %545 : vector<8x128xf32> to vector<8x128xbf16>
    %550 = arith.truncf %548 : vector<8x128xf32> to vector<8x128xbf16>
    %c3 = arith.constant 3 : index
    %c0_167 = arith.constant 0 : index
    %c0_168 = arith.constant 0 : index
    %551 = vector.load %arg16[%c3, %c0_167, %c0_168] : memref<8x8x256xf32, #tpu.memory_space<vmem>>, vector<1x8x128xf32>
    %552 = vector.shape_cast %551 : vector<1x8x128xf32> to vector<8x128xf32>
    %553 = vector.shape_cast %545 : vector<8x128xf32> to vector<1x8x128xf32>
    tpu.vector_store %arg16[%c3, %c0_167, %c0_168], %553 {strides = array<i32>} : memref<8x8x256xf32, #tpu.memory_space<vmem>>, vector<1x8x128xf32>,
    %c4 = arith.constant 4 : index
    %c0_169 = arith.constant 0 : index
    %c128_170 = arith.constant 128 : index
    %554 = vector.load %arg16[%c4, %c0_169, %c128_170] : memref<8x8x256xf32, #tpu.memory_space<vmem>>, vector<1x8x128xf32>
    %555 = vector.shape_cast %554 : vector<1x8x128xf32> to vector<8x128xf32>
    %556 = vector.shape_cast %548 : vector<8x128xf32> to vector<1x8x128xf32>
    tpu.vector_store %arg16[%c4, %c0_169, %c128_170], %556 {strides = array<i32>} : memref<8x8x256xf32, #tpu.memory_space<vmem>>, vector<1x8x128xf32>,
    %c32_171 = arith.constant 32 : index
    %c0_172 = arith.constant 0 : index
    %557 = vector.load %arg14[%c32_171, %c0_172] : memref<64x1024xf32, #tpu.memory_space<vmem>>, vector<8x512xf32>
    %cst_173 = arith.constant dense<0.000000e+00> : vector<8x512xf32>
    %558 = tpu.matmul %549, %367, %cst_173 {dimension_numbers = #tpu.dot_dimension_numbers<[1], [0], [0], [1], [0, 0, 1, 1], [], []>} : vector<8x128xbf16>, vector<128x512xbf16>, vector<8x512xf32> -> vector<8x512xf32>
    %559 = arith.addf %557, %558 : vector<8x512xf32>
    %c24_174 = arith.constant 24 : index
    %c512_175 = arith.constant 512 : index
    %560 = vector.load %arg14[%c24_174, %c512_175] : memref<64x1024xf32, #tpu.memory_space<vmem>>, vector<8x512xf32>
    %cst_176 = arith.constant dense<0.000000e+00> : vector<8x512xf32>
    %561 = tpu.matmul %550, %368, %cst_176 {dimension_numbers = #tpu.dot_dimension_numbers<[1], [0], [0], [1], [0, 0, 1, 1], [], []>} : vector<8x128xbf16>, vector<128x512xbf16>, vector<8x512xf32> -> vector<8x512xf32>
    %562 = arith.addf %560, %561 : vector<8x512xf32>
    %563 = vector.extract_strided_slice %559 {offsets = [0, 0], sizes = [8, 384], strides = [1, 1]} : vector<8x512xf32> to vector<8x384xf32>
    %564 = arith.negf %563 : vector<8x384xf32>
    %565 = math.exp %564 : vector<8x384xf32>
    %cst_177 = arith.constant 1.000000e+00 : f32
    %566 = vector.broadcast %cst_177 : f32 to vector<8x384xf32>
    %567 = arith.addf %566, %565 : vector<8x384xf32>
    %568 = arith.divf %566, %567 : vector<8x384xf32>
    %569 = vector.extract_strided_slice %562 {offsets = [0, 0], sizes = [8, 384], strides = [1, 1]} : vector<8x512xf32> to vector<8x384xf32>
    %570 = arith.negf %569 : vector<8x384xf32>
    %571 = math.exp %570 : vector<8x384xf32>
    %cst_178 = arith.constant 1.000000e+00 : f32
    %572 = vector.broadcast %cst_178 : f32 to vector<8x384xf32>
    %573 = arith.addf %572, %571 : vector<8x384xf32>
    %574 = arith.divf %572, %573 : vector<8x384xf32>
    %575 = vector.extract_strided_slice %559 {offsets = [0, 384], sizes = [8, 128], strides = [1, 1]} : vector<8x512xf32> to vector<8x128xf32>
    %576 = math.tanh %575 : vector<8x128xf32>
    %577 = vector.extract_strided_slice %562 {offsets = [0, 384], sizes = [8, 128], strides = [1, 1]} : vector<8x512xf32> to vector<8x128xf32>
    %578 = math.tanh %577 : vector<8x128xf32>
    %579 = vector.extract_strided_slice %568 {offsets = [0, 128], sizes = [8, 128], strides = [1, 1]} : vector<8x384xf32> to vector<8x128xf32>
    %580 = arith.mulf %579, %537 : vector<8x128xf32>
    %581 = vector.extract_strided_slice %568 {offsets = [0, 0], sizes = [8, 128], strides = [1, 1]} : vector<8x384xf32> to vector<8x128xf32>
    %582 = arith.mulf %581, %576 : vector<8x128xf32>
    %583 = arith.addf %580, %582 : vector<8x128xf32>
    %584 = vector.extract_strided_slice %574 {offsets = [0, 128], sizes = [8, 128], strides = [1, 1]} : vector<8x384xf32> to vector<8x128xf32>
    %585 = arith.mulf %584, %542 : vector<8x128xf32>
    %586 = vector.extract_strided_slice %574 {offsets = [0, 0], sizes = [8, 128], strides = [1, 1]} : vector<8x384xf32> to vector<8x128xf32>
    %587 = arith.mulf %586, %578 : vector<8x128xf32>
    %588 = arith.addf %585, %587 : vector<8x128xf32>
    %589 = vector.extract_strided_slice %568 {offsets = [0, 256], sizes = [8, 128], strides = [1, 1]} : vector<8x384xf32> to vector<8x128xf32>
    %590 = math.tanh %583 : vector<8x128xf32>
    %591 = arith.mulf %589, %590 : vector<8x128xf32>
    %592 = vector.extract_strided_slice %574 {offsets = [0, 256], sizes = [8, 128], strides = [1, 1]} : vector<8x384xf32> to vector<8x128xf32>
    %593 = math.tanh %588 : vector<8x128xf32>
    %594 = arith.mulf %592, %593 : vector<8x128xf32>
    %595 = arith.truncf %591 : vector<8x128xf32> to vector<8x128xbf16>
    %596 = arith.truncf %594 : vector<8x128xf32> to vector<8x128xbf16>
    %c4_179 = arith.constant 4 : index
    %c0_180 = arith.constant 0 : index
    %c0_181 = arith.constant 0 : index
    %597 = vector.load %arg16[%c4_179, %c0_180, %c0_181] : memref<8x8x256xf32, #tpu.memory_space<vmem>>, vector<1x8x128xf32>
    %598 = vector.shape_cast %597 : vector<1x8x128xf32> to vector<8x128xf32>
    %599 = vector.shape_cast %591 : vector<8x128xf32> to vector<1x8x128xf32>
    tpu.vector_store %arg16[%c4_179, %c0_180, %c0_181], %599 {strides = array<i32>} : memref<8x8x256xf32, #tpu.memory_space<vmem>>, vector<1x8x128xf32>,
    %c3_182 = arith.constant 3 : index
    %c0_183 = arith.constant 0 : index
    %c128_184 = arith.constant 128 : index
    %600 = vector.load %arg16[%c3_182, %c0_183, %c128_184] : memref<8x8x256xf32, #tpu.memory_space<vmem>>, vector<1x8x128xf32>
    %601 = vector.shape_cast %600 : vector<1x8x128xf32> to vector<8x128xf32>
    %602 = vector.shape_cast %594 : vector<8x128xf32> to vector<1x8x128xf32>
    tpu.vector_store %arg16[%c3_182, %c0_183, %c128_184], %602 {strides = array<i32>} : memref<8x8x256xf32, #tpu.memory_space<vmem>>, vector<1x8x128xf32>,
    %c40_185 = arith.constant 40 : index
    %c0_186 = arith.constant 0 : index
    %603 = vector.load %arg14[%c40_185, %c0_186] : memref<64x1024xf32, #tpu.memory_space<vmem>>, vector<8x512xf32>
    %cst_187 = arith.constant dense<0.000000e+00> : vector<8x512xf32>
    %604 = tpu.matmul %595, %367, %cst_187 {dimension_numbers = #tpu.dot_dimension_numbers<[1], [0], [0], [1], [0, 0, 1, 1], [], []>} : vector<8x128xbf16>, vector<128x512xbf16>, vector<8x512xf32> -> vector<8x512xf32>
    %605 = arith.addf %603, %604 : vector<8x512xf32>
    %c16_188 = arith.constant 16 : index
    %c512_189 = arith.constant 512 : index
    %606 = vector.load %arg14[%c16_188, %c512_189] : memref<64x1024xf32, #tpu.memory_space<vmem>>, vector<8x512xf32>
    %cst_190 = arith.constant dense<0.000000e+00> : vector<8x512xf32>
    %607 = tpu.matmul %596, %368, %cst_190 {dimension_numbers = #tpu.dot_dimension_numbers<[1], [0], [0], [1], [0, 0, 1, 1], [], []>} : vector<8x128xbf16>, vector<128x512xbf16>, vector<8x512xf32> -> vector<8x512xf32>
    %608 = arith.addf %606, %607 : vector<8x512xf32>
    %609 = vector.extract_strided_slice %605 {offsets = [0, 0], sizes = [8, 384], strides = [1, 1]} : vector<8x512xf32> to vector<8x384xf32>
    %610 = arith.negf %609 : vector<8x384xf32>
    %611 = math.exp %610 : vector<8x384xf32>
    %cst_191 = arith.constant 1.000000e+00 : f32
    %612 = vector.broadcast %cst_191 : f32 to vector<8x384xf32>
    %613 = arith.addf %612, %611 : vector<8x384xf32>
    %614 = arith.divf %612, %613 : vector<8x384xf32>
    %615 = vector.extract_strided_slice %608 {offsets = [0, 0], sizes = [8, 384], strides = [1, 1]} : vector<8x512xf32> to vector<8x384xf32>
    %616 = arith.negf %615 : vector<8x384xf32>
    %617 = math.exp %616 : vector<8x384xf32>
    %cst_192 = arith.constant 1.000000e+00 : f32
    %618 = vector.broadcast %cst_192 : f32 to vector<8x384xf32>
    %619 = arith.addf %618, %617 : vector<8x384xf32>
    %620 = arith.divf %618, %619 : vector<8x384xf32>
    %621 = vector.extract_strided_slice %605 {offsets = [0, 384], sizes = [8, 128], strides = [1, 1]} : vector<8x512xf32> to vector<8x128xf32>
    %622 = math.tanh %621 : vector<8x128xf32>
    %623 = vector.extract_strided_slice %608 {offsets = [0, 384], sizes = [8, 128], strides = [1, 1]} : vector<8x512xf32> to vector<8x128xf32>
    %624 = math.tanh %623 : vector<8x128xf32>
    %625 = vector.extract_strided_slice %614 {offsets = [0, 128], sizes = [8, 128], strides = [1, 1]} : vector<8x384xf32> to vector<8x128xf32>
    %626 = arith.mulf %625, %583 : vector<8x128xf32>
    %627 = vector.extract_strided_slice %614 {offsets = [0, 0], sizes = [8, 128], strides = [1, 1]} : vector<8x384xf32> to vector<8x128xf32>
    %628 = arith.mulf %627, %622 : vector<8x128xf32>
    %629 = arith.addf %626, %628 : vector<8x128xf32>
    %630 = vector.extract_strided_slice %620 {offsets = [0, 128], sizes = [8, 128], strides = [1, 1]} : vector<8x384xf32> to vector<8x128xf32>
    %631 = arith.mulf %630, %588 : vector<8x128xf32>
    %632 = vector.extract_strided_slice %620 {offsets = [0, 0], sizes = [8, 128], strides = [1, 1]} : vector<8x384xf32> to vector<8x128xf32>
    %633 = arith.mulf %632, %624 : vector<8x128xf32>
    %634 = arith.addf %631, %633 : vector<8x128xf32>
    %635 = vector.extract_strided_slice %614 {offsets = [0, 256], sizes = [8, 128], strides = [1, 1]} : vector<8x384xf32> to vector<8x128xf32>
    %636 = math.tanh %629 : vector<8x128xf32>
    %637 = arith.mulf %635, %636 : vector<8x128xf32>
    %638 = vector.extract_strided_slice %620 {offsets = [0, 256], sizes = [8, 128], strides = [1, 1]} : vector<8x384xf32> to vector<8x128xf32>
    %639 = math.tanh %634 : vector<8x128xf32>
    %640 = arith.mulf %638, %639 : vector<8x128xf32>
    %641 = arith.truncf %637 : vector<8x128xf32> to vector<8x128xbf16>
    %642 = arith.truncf %640 : vector<8x128xf32> to vector<8x128xbf16>
    %c5_193 = arith.constant 5 : index
    %c0_194 = arith.constant 0 : index
    %c0_195 = arith.constant 0 : index
    %643 = vector.load %arg16[%c5_193, %c0_194, %c0_195] : memref<8x8x256xf32, #tpu.memory_space<vmem>>, vector<1x8x128xf32>
    %644 = vector.shape_cast %643 : vector<1x8x128xf32> to vector<8x128xf32>
    %645 = vector.shape_cast %637 : vector<8x128xf32> to vector<1x8x128xf32>
    tpu.vector_store %arg16[%c5_193, %c0_194, %c0_195], %645 {strides = array<i32>} : memref<8x8x256xf32, #tpu.memory_space<vmem>>, vector<1x8x128xf32>,
    %c2_196 = arith.constant 2 : index
    %c0_197 = arith.constant 0 : index
    %c128_198 = arith.constant 128 : index
    %646 = vector.load %arg16[%c2_196, %c0_197, %c128_198] : memref<8x8x256xf32, #tpu.memory_space<vmem>>, vector<1x8x128xf32>
    %647 = vector.shape_cast %646 : vector<1x8x128xf32> to vector<8x128xf32>
    %648 = vector.shape_cast %640 : vector<8x128xf32> to vector<1x8x128xf32>
    tpu.vector_store %arg16[%c2_196, %c0_197, %c128_198], %648 {strides = array<i32>} : memref<8x8x256xf32, #tpu.memory_space<vmem>>, vector<1x8x128xf32>,
    %c48_199 = arith.constant 48 : index
    %c0_200 = arith.constant 0 : index
    %649 = vector.load %arg14[%c48_199, %c0_200] : memref<64x1024xf32, #tpu.memory_space<vmem>>, vector<8x512xf32>
    %cst_201 = arith.constant dense<0.000000e+00> : vector<8x512xf32>
    %650 = tpu.matmul %641, %367, %cst_201 {dimension_numbers = #tpu.dot_dimension_numbers<[1], [0], [0], [1], [0, 0, 1, 1], [], []>} : vector<8x128xbf16>, vector<128x512xbf16>, vector<8x512xf32> -> vector<8x512xf32>
    %651 = arith.addf %649, %650 : vector<8x512xf32>
    %c8_202 = arith.constant 8 : index
    %c512_203 = arith.constant 512 : index
    %652 = vector.load %arg14[%c8_202, %c512_203] : memref<64x1024xf32, #tpu.memory_space<vmem>>, vector<8x512xf32>
    %cst_204 = arith.constant dense<0.000000e+00> : vector<8x512xf32>
    %653 = tpu.matmul %642, %368, %cst_204 {dimension_numbers = #tpu.dot_dimension_numbers<[1], [0], [0], [1], [0, 0, 1, 1], [], []>} : vector<8x128xbf16>, vector<128x512xbf16>, vector<8x512xf32> -> vector<8x512xf32>
    %654 = arith.addf %652, %653 : vector<8x512xf32>
    %655 = vector.extract_strided_slice %651 {offsets = [0, 0], sizes = [8, 384], strides = [1, 1]} : vector<8x512xf32> to vector<8x384xf32>
    %656 = arith.negf %655 : vector<8x384xf32>
    %657 = math.exp %656 : vector<8x384xf32>
    %cst_205 = arith.constant 1.000000e+00 : f32
    %658 = vector.broadcast %cst_205 : f32 to vector<8x384xf32>
    %659 = arith.addf %658, %657 : vector<8x384xf32>
    %660 = arith.divf %658, %659 : vector<8x384xf32>
    %661 = vector.extract_strided_slice %654 {offsets = [0, 0], sizes = [8, 384], strides = [1, 1]} : vector<8x512xf32> to vector<8x384xf32>
    %662 = arith.negf %661 : vector<8x384xf32>
    %663 = math.exp %662 : vector<8x384xf32>
    %cst_206 = arith.constant 1.000000e+00 : f32
    %664 = vector.broadcast %cst_206 : f32 to vector<8x384xf32>
    %665 = arith.addf %664, %663 : vector<8x384xf32>
    %666 = arith.divf %664, %665 : vector<8x384xf32>
    %667 = vector.extract_strided_slice %651 {offsets = [0, 384], sizes = [8, 128], strides = [1, 1]} : vector<8x512xf32> to vector<8x128xf32>
    %668 = math.tanh %667 : vector<8x128xf32>
    %669 = vector.extract_strided_slice %654 {offsets = [0, 384], sizes = [8, 128], strides = [1, 1]} : vector<8x512xf32> to vector<8x128xf32>
    %670 = math.tanh %669 : vector<8x128xf32>
    %671 = vector.extract_strided_slice %660 {offsets = [0, 128], sizes = [8, 128], strides = [1, 1]} : vector<8x384xf32> to vector<8x128xf32>
    %672 = arith.mulf %671, %629 : vector<8x128xf32>
    %673 = vector.extract_strided_slice %660 {offsets = [0, 0], sizes = [8, 128], strides = [1, 1]} : vector<8x384xf32> to vector<8x128xf32>
    %674 = arith.mulf %673, %668 : vector<8x128xf32>
    %675 = arith.addf %672, %674 : vector<8x128xf32>
    %676 = vector.extract_strided_slice %666 {offsets = [0, 128], sizes = [8, 128], strides = [1, 1]} : vector<8x384xf32> to vector<8x128xf32>
    %677 = arith.mulf %676, %634 : vector<8x128xf32>
    %678 = vector.extract_strided_slice %666 {offsets = [0, 0], sizes = [8, 128], strides = [1, 1]} : vector<8x384xf32> to vector<8x128xf32>
    %679 = arith.mulf %678, %670 : vector<8x128xf32>
    %680 = arith.addf %677, %679 : vector<8x128xf32>
    %681 = vector.extract_strided_slice %660 {offsets = [0, 256], sizes = [8, 128], strides = [1, 1]} : vector<8x384xf32> to vector<8x128xf32>
    %682 = math.tanh %675 : vector<8x128xf32>
    %683 = arith.mulf %681, %682 : vector<8x128xf32>
    %684 = vector.extract_strided_slice %666 {offsets = [0, 256], sizes = [8, 128], strides = [1, 1]} : vector<8x384xf32> to vector<8x128xf32>
    %685 = math.tanh %680 : vector<8x128xf32>
    %686 = arith.mulf %684, %685 : vector<8x128xf32>
    %687 = arith.truncf %683 : vector<8x128xf32> to vector<8x128xbf16>
    %688 = arith.truncf %686 : vector<8x128xf32> to vector<8x128xbf16>
    %c6_207 = arith.constant 6 : index
    %c0_208 = arith.constant 0 : index
    %c0_209 = arith.constant 0 : index
    %689 = vector.load %arg16[%c6_207, %c0_208, %c0_209] : memref<8x8x256xf32, #tpu.memory_space<vmem>>, vector<1x8x128xf32>
    %690 = vector.shape_cast %689 : vector<1x8x128xf32> to vector<8x128xf32>
    %691 = vector.shape_cast %683 : vector<8x128xf32> to vector<1x8x128xf32>
    tpu.vector_store %arg16[%c6_207, %c0_208, %c0_209], %691 {strides = array<i32>} : memref<8x8x256xf32, #tpu.memory_space<vmem>>, vector<1x8x128xf32>,
    %c1_210 = arith.constant 1 : index
    %c0_211 = arith.constant 0 : index
    %c128_212 = arith.constant 128 : index
    %692 = vector.load %arg16[%c1_210, %c0_211, %c128_212] : memref<8x8x256xf32, #tpu.memory_space<vmem>>, vector<1x8x128xf32>
    %693 = vector.shape_cast %692 : vector<1x8x128xf32> to vector<8x128xf32>
    %694 = vector.shape_cast %686 : vector<8x128xf32> to vector<1x8x128xf32>
    tpu.vector_store %arg16[%c1_210, %c0_211, %c128_212], %694 {strides = array<i32>} : memref<8x8x256xf32, #tpu.memory_space<vmem>>, vector<1x8x128xf32>,
    %c56_213 = arith.constant 56 : index
    %c0_214 = arith.constant 0 : index
    %695 = vector.load %arg14[%c56_213, %c0_214] : memref<64x1024xf32, #tpu.memory_space<vmem>>, vector<8x512xf32>
    %cst_215 = arith.constant dense<0.000000e+00> : vector<8x512xf32>
    %696 = tpu.matmul %687, %367, %cst_215 {dimension_numbers = #tpu.dot_dimension_numbers<[1], [0], [0], [1], [0, 0, 1, 1], [], []>} : vector<8x128xbf16>, vector<128x512xbf16>, vector<8x512xf32> -> vector<8x512xf32>
    %697 = arith.addf %695, %696 : vector<8x512xf32>
    %c0_216 = arith.constant 0 : index
    %c512_217 = arith.constant 512 : index
    %698 = vector.load %arg14[%c0_216, %c512_217] : memref<64x1024xf32, #tpu.memory_space<vmem>>, vector<8x512xf32>
    %cst_218 = arith.constant dense<0.000000e+00> : vector<8x512xf32>
    %699 = tpu.matmul %688, %368, %cst_218 {dimension_numbers = #tpu.dot_dimension_numbers<[1], [0], [0], [1], [0, 0, 1, 1], [], []>} : vector<8x128xbf16>, vector<128x512xbf16>, vector<8x512xf32> -> vector<8x512xf32>
    %700 = arith.addf %698, %699 : vector<8x512xf32>
    %701 = vector.extract_strided_slice %697 {offsets = [0, 0], sizes = [8, 384], strides = [1, 1]} : vector<8x512xf32> to vector<8x384xf32>
    %702 = arith.negf %701 : vector<8x384xf32>
    %703 = math.exp %702 : vector<8x384xf32>
    %cst_219 = arith.constant 1.000000e+00 : f32
    %704 = vector.broadcast %cst_219 : f32 to vector<8x384xf32>
    %705 = arith.addf %704, %703 : vector<8x384xf32>
    %706 = arith.divf %704, %705 : vector<8x384xf32>
    %707 = vector.extract_strided_slice %700 {offsets = [0, 0], sizes = [8, 384], strides = [1, 1]} : vector<8x512xf32> to vector<8x384xf32>
    %708 = arith.negf %707 : vector<8x384xf32>
    %709 = math.exp %708 : vector<8x384xf32>
    %cst_220 = arith.constant 1.000000e+00 : f32
    %710 = vector.broadcast %cst_220 : f32 to vector<8x384xf32>
    %711 = arith.addf %710, %709 : vector<8x384xf32>
    %712 = arith.divf %710, %711 : vector<8x384xf32>
    %713 = vector.extract_strided_slice %697 {offsets = [0, 384], sizes = [8, 128], strides = [1, 1]} : vector<8x512xf32> to vector<8x128xf32>
    %714 = math.tanh %713 : vector<8x128xf32>
    %715 = vector.extract_strided_slice %700 {offsets = [0, 384], sizes = [8, 128], strides = [1, 1]} : vector<8x512xf32> to vector<8x128xf32>
    %716 = math.tanh %715 : vector<8x128xf32>
    %717 = vector.extract_strided_slice %706 {offsets = [0, 128], sizes = [8, 128], strides = [1, 1]} : vector<8x384xf32> to vector<8x128xf32>
    %718 = arith.mulf %717, %675 : vector<8x128xf32>
    %719 = vector.extract_strided_slice %706 {offsets = [0, 0], sizes = [8, 128], strides = [1, 1]} : vector<8x384xf32> to vector<8x128xf32>
    %720 = arith.mulf %719, %714 : vector<8x128xf32>
    %721 = arith.addf %718, %720 : vector<8x128xf32>
    %722 = vector.extract_strided_slice %712 {offsets = [0, 128], sizes = [8, 128], strides = [1, 1]} : vector<8x384xf32> to vector<8x128xf32>
    %723 = arith.mulf %722, %680 : vector<8x128xf32>
    %724 = vector.extract_strided_slice %712 {offsets = [0, 0], sizes = [8, 128], strides = [1, 1]} : vector<8x384xf32> to vector<8x128xf32>
    %725 = arith.mulf %724, %716 : vector<8x128xf32>
    %726 = arith.addf %723, %725 : vector<8x128xf32>
    %727 = vector.extract_strided_slice %706 {offsets = [0, 256], sizes = [8, 128], strides = [1, 1]} : vector<8x384xf32> to vector<8x128xf32>
    %728 = math.tanh %721 : vector<8x128xf32>
    %729 = arith.mulf %727, %728 : vector<8x128xf32>
    %730 = vector.extract_strided_slice %712 {offsets = [0, 256], sizes = [8, 128], strides = [1, 1]} : vector<8x384xf32> to vector<8x128xf32>
    %731 = math.tanh %726 : vector<8x128xf32>
    %732 = arith.mulf %730, %731 : vector<8x128xf32>
    %c7_221 = arith.constant 7 : index
    %c0_222 = arith.constant 0 : index
    %c0_223 = arith.constant 0 : index
    %733 = vector.load %arg16[%c7_221, %c0_222, %c0_223] : memref<8x8x256xf32, #tpu.memory_space<vmem>>, vector<1x8x128xf32>
    %734 = vector.shape_cast %733 : vector<1x8x128xf32> to vector<8x128xf32>
    %735 = vector.shape_cast %729 : vector<8x128xf32> to vector<1x8x128xf32>
    tpu.vector_store %arg16[%c7_221, %c0_222, %c0_223], %735 {strides = array<i32>} : memref<8x8x256xf32, #tpu.memory_space<vmem>>, vector<1x8x128xf32>,
    %c0_224 = arith.constant 0 : index
    %c0_225 = arith.constant 0 : index
    %c128_226 = arith.constant 128 : index
    %736 = vector.load %arg16[%c0_224, %c0_225, %c128_226] : memref<8x8x256xf32, #tpu.memory_space<vmem>>, vector<1x8x128xf32>
    %737 = vector.shape_cast %736 : vector<1x8x128xf32> to vector<8x128xf32>
    %738 = vector.shape_cast %732 : vector<8x128xf32> to vector<1x8x128xf32>
    tpu.vector_store %arg16[%c0_224, %c0_225, %c128_226], %738 {strides = array<i32>} : memref<8x8x256xf32, #tpu.memory_space<vmem>>, vector<1x8x128xf32>,
    %c0_227 = arith.constant 0 : index
    %c0_228 = arith.constant 0 : index
    %c0_229 = arith.constant 0 : index
    %739 = vector.load %arg16[%c0_227, %c0_228, %c0_229] : memref<8x8x256xf32, #tpu.memory_space<vmem>>, vector<8x8x256xf32>
    %c0_230 = arith.constant 0 : index
    %c0_231 = arith.constant 0 : index
    %740 = vector.load %arg6[%c0_230, %c0_231] : memref<1x256xf32, #tpu.memory_space<vmem>>, vector<1x256xf32>
    %741 = vector.shape_cast %740 : vector<1x256xf32> to vector<1x1x256xf32>
    %742 = vector.broadcast %741 : vector<1x1x256xf32> to vector<8x8x256xf32>
    %743 = arith.mulf %739, %742 : vector<8x8x256xf32>
    %cst_232 = arith.constant dense<0.000000e+00> : vector<8x8xf32>
    %744 = vector.multi_reduction <add>, %743, %cst_232 [2] : vector<8x8x256xf32> to vector<8x8xf32>
    %745 = vector.shape_cast %744 : vector<8x8xf32> to vector<8x8x1xf32>
    %cst_233 = arith.constant dense<0xFF800000> : vector<8x1xf32>
    %746 = vector.multi_reduction <maximumf>, %745, %cst_233 [0] : vector<8x8x1xf32> to vector<8x1xf32>
    %747 = vector.shape_cast %746 : vector<8x1xf32> to vector<1x8x1xf32>
    %748 = vector.broadcast %747 : vector<1x8x1xf32> to vector<8x8x1xf32>
    %749 = arith.subf %745, %748 : vector<8x8x1xf32>
    %750 = math.exp %749 : vector<8x8x1xf32>
    %cst_234 = arith.constant dense<0.000000e+00> : vector<8x1xf32>
    %751 = vector.multi_reduction <add>, %750, %cst_234 [0] : vector<8x8x1xf32> to vector<8x1xf32>
    %752 = vector.shape_cast %751 : vector<8x1xf32> to vector<1x8x1xf32>
    %753 = vector.broadcast %752 : vector<1x8x1xf32> to vector<8x8x1xf32>
    %754 = arith.divf %750, %753 : vector<8x8x1xf32>
    %755 = vector.broadcast %754 : vector<8x8x1xf32> to vector<8x8x256xf32>
    %756 = arith.mulf %755, %739 : vector<8x8x256xf32>
    %cst_235 = arith.constant dense<0.000000e+00> : vector<8x256xf32>
    %757 = vector.multi_reduction <add>, %756, %cst_235 [0] : vector<8x8x256xf32> to vector<8x256xf32>
    %cst_236 = arith.constant dense<0.000000e+00> : vector<8xf32>
    %758 = vector.multi_reduction <add>, %757, %cst_236 [1] : vector<8x256xf32> to vector<8xf32>
    %759 = vector.shape_cast %758 : vector<8xf32> to vector<8x1xf32>
    %cst_237 = arith.constant 2.560000e+02 : f32
    %760 = vector.broadcast %cst_237 : f32 to vector<8x1xf32>
    %761 = arith.divf %759, %760 : vector<8x1xf32>
    %762 = vector.broadcast %761 : vector<8x1xf32> to vector<8x256xf32>
    %763 = arith.subf %757, %762 : vector<8x256xf32>
    %764 = arith.mulf %763, %763 : vector<8x256xf32>
    %cst_238 = arith.constant dense<0.000000e+00> : vector<8xf32>
    %765 = vector.multi_reduction <add>, %764, %cst_238 [1] : vector<8x256xf32> to vector<8xf32>
    %766 = vector.shape_cast %765 : vector<8xf32> to vector<8x1xf32>
    %cst_239 = arith.constant 2.560000e+02 : f32
    %767 = vector.broadcast %cst_239 : f32 to vector<8x1xf32>
    %768 = arith.divf %766, %767 : vector<8x1xf32>
    %769 = vector.broadcast %761 : vector<8x1xf32> to vector<8x256xf32>
    %770 = arith.subf %757, %769 : vector<8x256xf32>
    %cst_240 = arith.constant 9.99999974E-6 : f32
    %771 = vector.broadcast %cst_240 : f32 to vector<8x1xf32>
    %772 = arith.addf %768, %771 : vector<8x1xf32>
    %773 = math.rsqrt %772 : vector<8x1xf32>
    %774 = vector.broadcast %773 : vector<8x1xf32> to vector<8x256xf32>
    %775 = arith.mulf %770, %774 : vector<8x256xf32>
    %c0_241 = arith.constant 0 : index
    %c0_242 = arith.constant 0 : index
    %776 = vector.load %arg7[%c0_241, %c0_242] : memref<1x256xf32, #tpu.memory_space<vmem>>, vector<1x256xf32>
    %777 = vector.broadcast %776 : vector<1x256xf32> to vector<8x256xf32>
    %778 = arith.mulf %775, %777 : vector<8x256xf32>
    %c0_243 = arith.constant 0 : index
    %c0_244 = arith.constant 0 : index
    %779 = vector.load %arg8[%c0_243, %c0_244] : memref<1x256xf32, #tpu.memory_space<vmem>>, vector<1x256xf32>
    %780 = vector.broadcast %779 : vector<1x256xf32> to vector<8x256xf32>
    %781 = arith.addf %778, %780 : vector<8x256xf32>
    %c2_i32_245 = arith.constant 2 : i32
    %782 = tpu.memref_slice %arg20[%c2_i32_245] : memref<3x!tpu.dma_semaphore, #tpu.memory_space<semaphore_mem>> -> memref<1x!tpu.dma_semaphore, #tpu.memory_space<semaphore_mem>>
    %783 = tpu.memref_squeeze %782 : memref<1x!tpu.dma_semaphore, #tpu.memory_space<semaphore_mem>> -> memref<!tpu.dma_semaphore, #tpu.memory_space<semaphore_mem>>
    tpu.wait_dma2 semaphore(%783 : memref<!tpu.dma_semaphore, #tpu.memory_space<semaphore_mem>>) src(%arg12 : memref<256x128xbf16, #tpu.memory_space<any>>) dst(%arg19 : memref<256x128xbf16, #tpu.memory_space<vmem>>)
    %784 = arith.truncf %781 : vector<8x256xf32> to vector<8x256xbf16>
    %c0_246 = arith.constant 0 : index
    %c0_247 = arith.constant 0 : index
    %785 = vector.load %arg19[%c0_246, %c0_247] : memref<256x128xbf16, #tpu.memory_space<vmem>>, vector<256x128xbf16>
    %cst_248 = arith.constant dense<0.000000e+00> : vector<8x128xf32>
    %786 = tpu.matmul %784, %785, %cst_248 {dimension_numbers = #tpu.dot_dimension_numbers<[1], [0], [0], [1], [0, 0, 1, 1], [], []>} : vector<8x256xbf16>, vector<256x128xbf16>, vector<8x128xf32> -> vector<8x128xf32>
    %c0_249 = arith.constant 0 : index
    %c0_250 = arith.constant 0 : index
    %787 = vector.load %arg9[%c0_249, %c0_250] : memref<1x128xf32, #tpu.memory_space<vmem>>, vector<1x128xf32>
    %788 = vector.broadcast %787 : vector<1x128xf32> to vector<8x128xf32>
    %789 = arith.addf %786, %788 : vector<8x128xf32>
    %c0_251 = arith.constant 0 : index
    %c0_252 = arith.constant 0 : index
    %790 = vector.load %arg13[%c0_251, %c0_252] : memref<8x128xf32, #tpu.memory_space<vmem>>, vector<8x128xf32>
    tpu.vector_store %arg13[%c0_251, %c0_252], %789 {strides = array<i32>} : memref<8x128xf32, #tpu.memory_space<vmem>>, vector<8x128xf32>,
    return
  }
  func.func @transform_0(%arg0: i32) -> (i32, i32, i32) {
    %c0_i32 = arith.constant 0 : i32
    %c0_i32_0 = arith.constant 0 : i32
    %c0_i32_1 = arith.constant 0 : i32
    return %arg0, %c0_i32, %c0_i32_0 : i32, i32, i32
  }
  func.func @transform_1(%arg0: i32) -> (i32, i32) {
    %c0_i32 = arith.constant 0 : i32
    %c0_i32_0 = arith.constant 0 : i32
    %c0_i32_1 = arith.constant 0 : i32
    return %c0_i32, %c0_i32_0 : i32, i32
  }
  func.func @transform_2(%arg0: i32) -> (i32, i32) {
    %c0_i32 = arith.constant 0 : i32
    %c0_i32_0 = arith.constant 0 : i32
    %c0_i32_1 = arith.constant 0 : i32
    return %c0_i32, %c0_i32_0 : i32, i32
  }
  func.func @transform_3(%arg0: i32) -> (i32, i32) {
    %c0_i32 = arith.constant 0 : i32
    %c0_i32_0 = arith.constant 0 : i32
    %c0_i32_1 = arith.constant 0 : i32
    return %c0_i32, %c0_i32_0 : i32, i32
  }
  func.func @transform_4(%arg0: i32) -> (i32, i32) {
    %c0_i32 = arith.constant 0 : i32
    %c0_i32_0 = arith.constant 0 : i32
    %c0_i32_1 = arith.constant 0 : i32
    return %c0_i32, %c0_i32_0 : i32, i32
  }
  func.func @transform_5(%arg0: i32) -> (i32, i32) {
    %c0_i32 = arith.constant 0 : i32
    %c0_i32_0 = arith.constant 0 : i32
    %c0_i32_1 = arith.constant 0 : i32
    return %c0_i32, %c0_i32_0 : i32, i32
  }
  func.func @transform_6(%arg0: i32) -> (i32, i32) {
    %c0_i32 = arith.constant 0 : i32
    %c0_i32_0 = arith.constant 0 : i32
    %c0_i32_1 = arith.constant 0 : i32
    return %c0_i32, %c0_i32_0 : i32, i32
  }
  func.func @transform_7(%arg0: i32) -> (i32, i32) {
    %c0_i32 = arith.constant 0 : i32
    %c0_i32_0 = arith.constant 0 : i32
    %c0_i32_1 = arith.constant 0 : i32
    return %c0_i32, %c0_i32_0 : i32, i32
  }
  func.func @transform_8(%arg0: i32) -> (i32, i32) {
    %c0_i32 = arith.constant 0 : i32
    %c0_i32_0 = arith.constant 0 : i32
    %c0_i32_1 = arith.constant 0 : i32
    return %c0_i32, %c0_i32_0 : i32, i32
  }
  func.func @transform_12(%arg0: i32) -> (i32, i32) {
    %c0_i32 = arith.constant 0 : i32
    %c0_i32_0 = arith.constant 0 : i32
    return %arg0, %c0_i32 : i32, i32
  }
}

</mosaic_0001>

<llo_original>
// kernel: lstm_classifier_forward.1
$region0: #{lstm_classifier_forward.1}
  #allocation0 [shape = 'u32[]', space=smem, size = 0x4, offset = 0x4, fixed_abs, tag = 'smem constant byte address 0x4 - core index']
  #allocation1 [shape = 'u32[144,128]{1,0:T(1,128)}', space=vmem, size = 0x12000, scoped, tag = 'internal scratch']
  #allocation2 [shape = 'f32[64,1024]{1,0:T(8,128)}', space=vmem, size = 0x40000, scoped, tag = 'scratch operand']
  #allocation3 [shape = 'bf16[64,256]{1,0:T(8,128)(2,1)}', space=vmem, size = 0x8000, scoped, tag = 'scratch operand']
  #allocation4 [shape = 'f32[8,8,256]{2,1,0:T(8,128)}', space=vmem, size = 0x10000, scoped, tag = 'scratch operand']
  #allocation5 [shape = 'bf16[256,1024]{1,0:T(8,128)(2,1)}', space=vmem, size = 0x80000, scoped, tag = 'scratch operand']
  #allocation6 [shape = 'bf16[128,1024]{1,0:T(8,128)(2,1)}', space=vmem, size = 0x40000, scoped, tag = 'scratch operand']
  #allocation7 [shape = 'bf16[256,128]{1,0:T(8,128)(2,1)}', space=vmem, size = 0x10000, scoped, tag = 'scratch operand']
  #allocation8 [shape = 's32[3]{0}', space=sflag, size = 0xc, scoped, tag = 'scratch operand']
  #allocation17 [shape = 's32[]', space=sflag, size = 0x4, offset = 0, fixed_abs, tag = 'sflag constant byte address 0x0 - dummy sync flag']
  #allocation18 [shape = 's32[]', space=sflag, size = 0x4, offset = 0, fixed_abs, tag = 'sflag constant byte address 0x0 - dummy sync flag']
  #allocation19 [shape = 'u32[]', space=smem, size = 0x4, offset = 0x44, fixed_abs, tag = 'smem constant byte address 0x44 - assertion arg 0']
  #allocation20 [shape = 'u32[]', space=smem, size = 0x4, offset = 0x48, fixed_abs, tag = 'smem constant byte address 0x48 - assertion arg 1']
  #allocation21 [shape = 's32[]', space=sflag, size = 0x4, offset = 0, fixed_abs, tag = 'sflag constant byte address 0x0 - dummy sync flag']
  #allocation22 [shape = 's32[]', space=sflag, size = 0x4, offset = 0, fixed_abs, tag = 'sflag constant byte address 0x0 - dummy sync flag']
  #allocation23 [shape = 's32[]', space=sflag, size = 0x4, offset = 0, fixed_abs, tag = 'sflag constant byte address 0x0 - dummy sync flag']
  %s0 = inlined_call_operand.vmem [shape: bf16[1,64,36], index: 0, kind: input, shape index: {}]
  %s1 = inlined_call_operand.hbm [shape: bf16[36,1024], index: 1, kind: input, shape index: {}]
  %s2 = inlined_call_operand.vmem [shape: f32[1,1024], index: 2, kind: input, shape index: {}]
  %s3 = inlined_call_operand.hbm [shape: bf16[128,1024], index: 3, kind: input, shape index: {}]
  %s4 = inlined_call_operand.hbm [shape: f32[1,1024], index: 4, kind: input, shape index: {}]
  %s5 = inlined_call_operand.vmem [shape: f32[1,256], index: 5, kind: input, shape index: {}]
  %s6 = inlined_call_operand.vmem [shape: f32[1,256], index: 6, kind: input, shape index: {}]
  %s7 = inlined_call_operand.hbm [shape: f32[1,256], index: 7, kind: input, shape index: {}]
  %s8 = inlined_call_operand.hbm [shape: f32[1,128], index: 8, kind: input, shape index: {}]
  %s9 = inlined_call_operand.hbm [shape: bf16[256,1024], index: 9, kind: input, shape index: {}]
  %s10 = inlined_call_operand.hbm [shape: bf16[128,1024], index: 10, kind: input, shape index: {}]
  %s11 = inlined_call_operand.vmem [shape: bf16[256,128], index: 11, kind: input, shape index: {}]
  %s12 = inlined_call_operand.vmem [shape: f32[8,128], index: 12, kind: output, shape index: {}]
  %s13 = sld [smem:[#allocation0]]
  $region108: #{lstm_classifier_forward.1} parent=0
    _
  %s15 = ssub.s32 1, %s13
  %s16 = scalar_select 0, %s15, %s13
  $region1: #{lstm_classifier_forward.1} parent=0
    #allocation9 [shape = 'u8[81920]{0}', space=vmem, size = 0x14000, scoped, tag = 'input window, operand 1, single buffered']
    #allocation10 [shape = 's32[1]{0}', space=sflag, size = 0x4, scoped, tag = 'scoped memory for lstm_classifier_forward.1']
    #allocation11 [shape = 'u8[262144]{0}', space=vmem, size = 0x40000, scoped, tag = 'input window, operand 3, single buffered']
    #allocation12 [shape = 's32[1]{0}', space=sflag, size = 0x4, scoped, tag = 'scoped memory for lstm_classifier_forward.1']
    #allocation13 [shape = 'u8[4096]{0}', space=vmem, size = 0x1000, scoped, tag = 'input window, operand 4, single buffered']
    #allocation14 [shape = 'u8[1024]{0}', space=vmem, size = 0x400, scoped, tag = 'input window, operand 7, single buffered']
    #allocation15 [shape = 's32[1]{0}', space=sflag, size = 0x4, scoped, tag = 'scoped memory for lstm_classifier_forward.1']
    #allocation16 [shape = 'u8[512]{0}', space=vmem, size = 0x400, scoped, tag = 'input window, operand 8, single buffered']
    %17 = vsyncpa [#allocation10], 0
    %18 = vsyncpa [#allocation12], 0
    %19 = vsyncpa [#allocation15], 0
    // Predicated region
    $region2: #{lstm_classifier_forward.1} parent=1 // pred_check
      _
    $region3: #{lstm_classifier_forward.1} parent=1 // pred_check_branch
      %21 = sbr.rel (0) target = $region5
    $region4: #{lstm_classifier_forward.1} parent=1 // pred_region
      _
    $region5: #{lstm_classifier_forward.1} parent=1 // pred_fallthru
      _
    // Predicated region
    $region6: #{lstm_classifier_forward.1} parent=1 // pred_check
      _
    $region7: #{lstm_classifier_forward.1} parent=1 // pred_check_branch
      %23 = sbr.rel (0) target = $region9
    $region8: #{lstm_classifier_forward.1} parent=1 // pred_region
      %s25 = ssub.s32 2560, 2560
      %26 = vsyncadd [#allocation10], %s25
      %s27 = sshll.u32 [#allocation9], 4
      %s28 = int_to_ptr.vmem [resolvable:$true] %s27
      %33 = dma.hbm_to_vmem [thread:$0]  %s1, 2560, %s28, [#allocation10], 512, 512, 32
    $region9: #{lstm_classifier_forward.1} parent=1 // pred_fallthru
      _
    // Predicated region
    $region10: #{lstm_classifier_forward.1} parent=1 // pred_check
      _
    $region11: #{lstm_classifier_forward.1} parent=1 // pred_check_branch
      %35 = sbr.rel (0) target = $region13
    $region12: #{lstm_classifier_forward.1} parent=1 // pred_region
      _
    $region13: #{lstm_classifier_forward.1} parent=1 // pred_fallthru
      _
    // Predicated region
    $region14: #{lstm_classifier_forward.1} parent=1 // pred_check
      _
    $region15: #{lstm_classifier_forward.1} parent=1 // pred_check_branch
      %37 = sbr.rel (0) target = $region17
    $region16: #{lstm_classifier_forward.1} parent=1 // pred_region
      %s39 = ssub.s32 8192, 8192
      %40 = vsyncadd [#allocation12], %s39
      %s41 = sshll.u32 [#allocation11], 4
      %s42 = int_to_ptr.vmem [resolvable:$true] %s41
      %47 = dma.hbm_to_vmem [thread:$0]  %s3, 8192, %s42, [#allocation12], 512, 512, 32
    $region17: #{lstm_classifier_forward.1} parent=1 // pred_fallthru
      _
    // Predicated region
    $region18: #{lstm_classifier_forward.1} parent=1 // pred_check
      _
    $region19: #{lstm_classifier_forward.1} parent=1 // pred_check_branch
      %49 = sbr.rel (0) target = $region21
    $region20: #{lstm_classifier_forward.1} parent=1 // pred_region
      %s51 = ssub.s32 128, 128
      %52 = vsyncadd [#allocation12], %s51
      %s54 = sshll.u32 [#allocation13], 4
      %s55 = int_to_ptr.vmem [resolvable:$true] %s54
      %57 = dma.hbm_to_vmem [thread:$0]  %s4, 128, %s55, [#allocation12]
    $region21: #{lstm_classifier_forward.1} parent=1 // pred_fallthru
      _
    // Predicated region
    $region22: #{lstm_classifier_forward.1} parent=1 // pred_check
      _
    $region23: #{lstm_classifier_forward.1} parent=1 // pred_check_branch
      %59 = sbr.rel (0) target = $region25
    $region24: #{lstm_classifier_forward.1} parent=1 // pred_region
      _
    $region25: #{lstm_classifier_forward.1} parent=1 // pred_fallthru
      _
    // Predicated region
    $region26: #{lstm_classifier_forward.1} parent=1 // pred_check
      _
    $region27: #{lstm_classifier_forward.1} parent=1 // pred_check_branch
      %61 = sbr.rel (0) target = $region29
    $region28: #{lstm_classifier_forward.1} parent=1 // pred_region
      _
    $region29: #{lstm_classifier_forward.1} parent=1 // pred_fallthru
      _
    // Predicated region
    $region30: #{lstm_classifier_forward.1} parent=1 // pred_check
      _
    $region31: #{lstm_classifier_forward.1} parent=1 // pred_check_branch
      %63 = sbr.rel (0) target = $region33
    $region32: #{lstm_classifier_forward.1} parent=1 // pred_region
      %s65 = ssub.s32 32, 32
      %66 = vsyncadd [#allocation15], %s65
      %s68 = sshll.u32 [#allocation14], 4
      %s69 = int_to_ptr.vmem [resolvable:$true] %s68
      %71 = dma.hbm_to_vmem [thread:$0]  %s7, 32, %s69, [#allocation15]
    $region33: #{lstm_classifier_forward.1} parent=1 // pred_fallthru
      _
    // Predicated region
    $region34: #{lstm_classifier_forward.1} parent=1 // pred_check
      _
    $region35: #{lstm_classifier_forward.1} parent=1 // pred_check_branch
      %73 = sbr.rel (0) target = $region37
    $region36: #{lstm_classifier_forward.1} parent=1 // pred_region
      %s75 = ssub.s32 16, 16
      %76 = vsyncadd [#allocation15], %s75
      %s78 = sshll.u32 [#allocation16], 4
      %s79 = int_to_ptr.vmem [resolvable:$true] %s78
      %81 = dma.hbm_to_vmem [thread:$0]  %s8, 16, %s79, [#allocation15]
    $region37: #{lstm_classifier_forward.1} parent=1 // pred_fallthru
      _
    // Predicated region
    $region38: #{lstm_classifier_forward.1} parent=1 // pred_check
      _
    $region39: #{lstm_classifier_forward.1} parent=1 // pred_check_branch
      %83 = sbr.rel (0) target = $region41
    $region40: #{lstm_classifier_forward.1} parent=1 // pred_region
      %84 = dma.done [#allocation10], 2560
    $region41: #{lstm_classifier_forward.1} parent=1 // pred_fallthru
      _
    // Predicated region
    $region42: #{lstm_classifier_forward.1} parent=1 // pred_check
      _
    $region43: #{lstm_classifier_forward.1} parent=1 // pred_check_branch
      %86 = sbr.rel (0) target = $region45
    $region44: #{lstm_classifier_forward.1} parent=1 // pred_region
      %87 = dma.done [#allocation12], 8192
    $region45: #{lstm_classifier_forward.1} parent=1 // pred_fallthru
      _
    // Predicated region
    $region46: #{lstm_classifier_forward.1} parent=1 // pred_check
      _
    $region47: #{lstm_classifier_forward.1} parent=1 // pred_check_branch
      %89 = sbr.rel (0) target = $region49
    $region48: #{lstm_classifier_forward.1} parent=1 // pred_region
      %90 = dma.done [#allocation12], 128
    $region49: #{lstm_classifier_forward.1} parent=1 // pred_fallthru
      _
    // Predicated region
    $region50: #{lstm_classifier_forward.1} parent=1 // pred_check
      _
    $region51: #{lstm_classifier_forward.1} parent=1 // pred_check_branch
      %92 = sbr.rel (0) target = $region53
    $region52: #{lstm_classifier_forward.1} parent=1 // pred_region
      %93 = dma.done [#allocation15], 32
    $region53: #{lstm_classifier_forward.1} parent=1 // pred_fallthru
      _
    // Predicated region
    $region54: #{lstm_classifier_forward.1} parent=1 // pred_check
      _
    $region55: #{lstm_classifier_forward.1} parent=1 // pred_check_branch
      %95 = sbr.rel (0) target = $region57
    $region56: #{lstm_classifier_forward.1} parent=1 // pred_region
      %96 = dma.done [#allocation15], 16
    $region57: #{lstm_classifier_forward.1} parent=1 // pred_fallthru
      _
    // Predicated region
    $region58: #{lstm_classifier_forward.1} parent=1 // pred_check
      _
    $region59: #{lstm_classifier_forward.1} parent=1 // pred_check_branch
      %99 = sbr.rel target = $region61
    $region60: #{lstm_classifier_forward.1} parent=1 // pred_region
      %100 = sst [smem:[#allocation19]] [#allocation18]
      %101 = sst [smem:[#allocation20]] [#allocation17]
    $region61: #{lstm_classifier_forward.1} parent=1 // pred_fallthru
      _
    %103 = shalt.err (0)
    %s105 = sshll.u32 [#allocation5], 4
    %s106 = int_to_ptr.vmem [resolvable:$true] %s105
    %108 = dma.hbm_to_vmem [thread:$0]  %s9, 16384, %s106, [#allocation8]
    %s109 = scalar_lea.sflag [#allocation8], 1
    // Predicated region
    $region62: #{lstm_classifier_forward.1} parent=1 // pred_check
      _
    $region63: #{lstm_classifier_forward.1} parent=1 // pred_check_branch
      %111 = sbr.rel target = $region65
    $region64: #{lstm_classifier_forward.1} parent=1 // pred_region
      %112 = sst [smem:[#allocation19]] [#allocation22]
      %113 = sst [smem:[#allocation20]] [#allocation21]
    $region65: #{lstm_classifier_forward.1} parent=1 // pred_fallthru
      _
    %115 = shalt.err (0)
    %s117 = sshll.u32 [#allocation6], 4
    %s118 = int_to_ptr.vmem [resolvable:$true] %s117
    %120 = dma.hbm_to_vmem [thread:$0]  %s10, 8192, %s118, %s109
    %s121 = scalar_lea.sflag [#allocation8], 2
    %p123 = scmp.lt.u32.totalorder 128, 8
    %p124 = pneg %p123
    // Predicated region
    $region66: #{lstm_classifier_forward.1} parent=1 // pred_check
      _
    $region67: #{lstm_classifier_forward.1} parent=1 // pred_check_branch
      %126 = sbr.rel (%p123) target = $region69
    $region68: #{lstm_classifier_forward.1} parent=1 // pred_region
      %s142 = sand.u32 128, 7
      %p143 = scmp.eq.s32.totalorder %s142, 0
      // Predicated region
      $region81: #{lstm_classifier_forward.1} parent=68 // pred_check
        %p144 = pneg %p143
      $region82: #{lstm_classifier_forward.1} parent=68 // pred_check_branch
        %146 = sbr.rel (%p144) target = $region84
      $region83: #{lstm_classifier_forward.1} parent=68 // pred_region
        loop: start=0, step=1, limit=1
        $region85: #{lstm_classifier_forward.1} parent=83 // loop_pre_header
          _
        $region86: #{lstm_classifier_forward.1} parent=83 // loop_header
          %s148 = sphi 0, %s152
          %p149 = scmp.ge.s32.totalorder %s148, 1
          %s153 = sphi %s11, %s11
          %s154 = sphi [#allocation7], [#allocation7]
        $region87: #{lstm_classifier_forward.1} parent=83 // loop_header_branch
          %151 = sbr.rel (%p149) target = $region91
        $region88: #{lstm_classifier_forward.1} parent=83 // loop_body
          %v155 = vld [vmem:[%s153] sm:$0xff]
          %156 = vst [vmem:[%s154] sm:$0xff] %v155
          %v157 = vld [vmem:[%s153 + $0x8] sm:$0xff]
          %158 = vst [vmem:[%s154 + $0x8] sm:$0xff] %v157
          %v159 = vld [vmem:[%s153 + $0x10] sm:$0xff]
          %160 = vst [vmem:[%s154 + $0x10] sm:$0xff] %v159
          %v161 = vld [vmem:[%s153 + $0x18] sm:$0xff]
          %162 = vst [vmem:[%s154 + $0x18] sm:$0xff] %v161
          %v163 = vld [vmem:[%s153 + $0x20] sm:$0xff]
          %164 = vst [vmem:[%s154 + $0x20] sm:$0xff] %v163
          %v165 = vld [vmem:[%s153 + $0x28] sm:$0xff]
          %166 = vst [vmem:[%s154 + $0x28] sm:$0xff] %v165
          %v167 = vld [vmem:[%s153 + $0x30] sm:$0xff]
          %168 = vst [vmem:[%s154 + $0x30] sm:$0xff] %v167
          %v169 = vld [vmem:[%s153 + $0x38] sm:$0xff]
          %170 = vst [vmem:[%s154 + $0x38] sm:$0xff] %v169
          %v171 = vld [vmem:[%s153 + $0x40] sm:$0xff]
          %172 = vst [vmem:[%s154 + $0x40] sm:$0xff] %v171
          %v173 = vld [vmem:[%s153 + $0x48] sm:$0xff]
          %174 = vst [vmem:[%s154 + $0x48] sm:$0xff] %v173
          %v175 = vld [vmem:[%s153 + $0x50] sm:$0xff]
          %176 = vst [vmem:[%s154 + $0x50] sm:$0xff] %v175
          %v177 = vld [vmem:[%s153 + $0x58] sm:$0xff]
          %178 = vst [vmem:[%s154 + $0x58] sm:$0xff] %v177
          %v179 = vld [vmem:[%s153 + $0x60] sm:$0xff]
          %180 = vst [vmem:[%s154 + $0x60] sm:$0xff] %v179
          %v181 = vld [vmem:[%s153 + $0x68] sm:$0xff]
          %182 = vst [vmem:[%s154 + $0x68] sm:$0xff] %v181
          %v183 = vld [vmem:[%s153 + $0x70] sm:$0xff]
          %184 = vst [vmem:[%s154 + $0x70] sm:$0xff] %v183
          %v185 = vld [vmem:[%s153 + $0x78] sm:$0xff]
          %186 = vst [vmem:[%s154 + $0x78] sm:$0xff] %v185
        $region89: #{lstm_classifier_forward.1} parent=83 // loop_footer
          %s152 = sadd.s32 1, %s148
        $region90: #{lstm_classifier_forward.1} parent=83 // loop_footer_branch
          %147 = sbr.rel target = $region86
        $region91: #{lstm_classifier_forward.1} parent=83 // loop_exit
          _
      $region84: #{lstm_classifier_forward.1} parent=68 // pred_fallthru
        _
      %p187 = pneg %p143
      // Predicated region
      $region92: #{lstm_classifier_forward.1} parent=68 // pred_check
        _
      $region93: #{lstm_classifier_forward.1} parent=68 // pred_check_branch
        %189 = sbr.rel (%p143) target = $region95
      $region94: #{lstm_classifier_forward.1} parent=68 // pred_region
        %s190 = sand.u32 128, 7
      $region95: #{lstm_classifier_forward.1} parent=68 // pred_fallthru
        _
    $region69: #{lstm_classifier_forward.1} parent=1 // pred_fallthru
      _
    // Predicated region
    $region70: #{lstm_classifier_forward.1} parent=1 // pred_check
      %p127 = pneg %p123
    $region71: #{lstm_classifier_forward.1} parent=1 // pred_check_branch
      %129 = sbr.rel (%p127) target = $region73
    $region72: #{lstm_classifier_forward.1} parent=1 // pred_region
      %s130 = sshll.u32 1, 128
      %s131 = ssub.s32 %s130, 1
      loop: start=0, step=1, limit=1
      $region74: #{lstm_classifier_forward.1} parent=72 // loop_pre_header
        _
      $region75: #{lstm_classifier_forward.1} parent=72 // loop_header
        %s133 = sphi 0, %s137
        %p134 = scmp.ge.s32.totalorder %s133, 1
        %s138 = sphi %s11, %s11
        %s139 = sphi [#allocation7], [#allocation7]
      $region76: #{lstm_classifier_forward.1} parent=72 // loop_header_branch
        %136 = sbr.rel (%p134) target = $region80
      $region77: #{lstm_classifier_forward.1} parent=72 // loop_body
        %v140 = vld [vmem:[%s138] sm:%s131]
        %141 = vst [vmem:[%s139] sm:%s131] %v140
      $region78: #{lstm_classifier_forward.1} parent=72 // loop_footer
        %s137 = sadd.s32 1, %s133
      $region79: #{lstm_classifier_forward.1} parent=72 // loop_footer_branch
        %132 = sbr.rel target = $region75
      $region80: #{lstm_classifier_forward.1} parent=72 // loop_exit
        _
    $region73: #{lstm_classifier_forward.1} parent=1 // pred_fallthru
      _
    // Predicated region
    $region96: #{lstm_classifier_forward.1} parent=1 // pred_check
      _
    $region97: #{lstm_classifier_forward.1} parent=1 // pred_check_branch
      %193 = sbr.rel (0) target = $region99
    $region98: #{lstm_classifier_forward.1} parent=1 // pred_region
      %194 = vsyncadd %s121, 2048
    $region99: #{lstm_classifier_forward.1} parent=1 // pred_fallthru
      _
    %v195 = vld [vmem:[%s0] sm:$0xf]
    %v196 = vld [vmem:[%s0 + $0x4] sm:$0xf]
    %v197 = vld [vmem:[%s0 + $0x8] sm:$0xf]
    %v198 = vld [vmem:[%s0 + $0xc] sm:$0xf]
    %v199 = vld [vmem:[%s0 + $0x10] sm:$0xf]
    %v200 = vld [vmem:[%s0 + $0x14] sm:$0xf]
    %v201 = vld [vmem:[%s0 + $0x18] sm:$0xf]
    %v202 = vld [vmem:[%s0 + $0x1c] sm:$0xf]
    %v203 = vld [vmem:[#allocation9] sm:$0xff]
    %v204 = vld [vmem:[#allocation9 + $0x8] sm:$0xff]
    %v205 = vld [vmem:[#allocation9 + $0x10] sm:$0xff]
    %v206 = vld [vmem:[#allocation9 + $0x18] sm:$0xff]
    %v207 = vld [vmem:[#allocation9 + $0x20] sm:$0xff]
    %v208 = vld [vmem:[#allocation9 + $0x28] sm:$0xff]
    %v209 = vld [vmem:[#allocation9 + $0x30] sm:$0xff]
    %v210 = vld [vmem:[#allocation9 + $0x38] sm:$0xff]
    %v211 = vld [vmem:[#allocation9 + $0x40] sm:$0xff]
    %v212 = vld [vmem:[#allocation9 + $0x48] sm:$0xff]
    %v213 = vld [vmem:[#allocation9 + $0x50] sm:$0xff]
    %v214 = vld [vmem:[#allocation9 + $0x58] sm:$0xff]
    %v215 = vld [vmem:[#allocation9 + $0x60] sm:$0xff]
    %v216 = vld [vmem:[#allocation9 + $0x68] sm:$0xff]
    %v217 = vld [vmem:[#allocation9 + $0x70] sm:$0xff]
    %v218 = vld [vmem:[#allocation9 + $0x78] sm:$0xff]
    %v219 = vld [vmem:[#allocation9 + $0x80] sm:$0x33]
    %v220 = vld [vmem:[#allocation9 + $0x88] sm:$0x33]
    %v221 = vld [vmem:[#allocation9 + $0x90] sm:$0x33]
    %v222 = vld [vmem:[#allocation9 + $0x98] sm:$0x33]
    %v223 = vld [vmem:[%s2] sm:$0xff]
    %v225 = vlaneseq
    %v226 = vshrl.u32 %v225, 7
    %v227 = vsub.s32 0, %v226
    %v228 = vrot.slane %v223, %v227
    %v229 = vlaneseq
    %v230 = vshrl.u32 %v229, 7
    %v231 = vsub.s32 1, %v230
    %v232 = vrot.slane %v223, %v231
    %v233 = vlaneseq
    %v234 = vshrl.u32 %v233, 7
    %v235 = vsub.s32 2, %v234
    %v236 = vrot.slane %v223, %v235
    %v237 = vlaneseq
    %v238 = vshrl.u32 %v237, 7
    %v239 = vsub.s32 3, %v238
    %v240 = vrot.slane %v223, %v239
    %v241 = vlaneseq
    %v242 = vshrl.u32 %v241, 7
    %v243 = vsub.s32 4, %v242
    %v244 = vrot.slane %v223, %v243
    %v245 = vlaneseq
    %v246 = vshrl.u32 %v245, 7
    %v247 = vsub.s32 5, %v246
    %v248 = vrot.slane %v223, %v247
    %v249 = vlaneseq
    %v250 = vshrl.u32 %v249, 7
    %v251 = vsub.s32 6, %v250
    %v252 = vrot.slane %v223, %v251
    %v253 = vlaneseq
    %v254 = vshrl.u32 %v253, 7
    %v255 = vsub.s32 7, %v254
    %v256 = vrot.slane %v223, %v255
    %v273 = vunpack.c.l.b16 %v195
    %v274 = vunpack.c.l.b16 %v196
    %v275 = vunpack.c.l.b16 %v197
    %v276 = vunpack.c.l.b16 %v198
    %v277 = vunpack.c.l.b16 %v199
    %v278 = vunpack.c.l.b16 %v200
    %v279 = vunpack.c.l.b16 %v201
    %v280 = vunpack.c.l.b16 %v202
    %v281 = vpack.c.b16 %v274, %v273
    %v282 = vpack.c.b16 %v276, %v275
    %v283 = vpack.c.b16 %v278, %v277
    %v284 = vpack.c.b16 %v280, %v279
    %v305 = vunpack.c.l.b16 %v203
    %v306 = vunpack.c.h.b16 %v203
    %v307 = vunpack.c.l.b16 %v204
    %v308 = vunpack.c.h.b16 %v204
    %v309 = vunpack.c.l.b16 %v205
    %v310 = vunpack.c.h.b16 %v205
    %v311 = vunpack.c.l.b16 %v206
    %v312 = vunpack.c.h.b16 %v206
    %v313 = vunpack.c.l.b16 %v207
    %v314 = vunpack.c.h.b16 %v207
    %v315 = vunpack.c.l.b16 %v208
    %v316 = vunpack.c.h.b16 %v208
    %v317 = vunpack.c.l.b16 %v209
    %v318 = vunpack.c.h.b16 %v209
    %v319 = vunpack.c.l.b16 %v210
    %v320 = vunpack.c.h.b16 %v210
    %v321 = vunpack.c.l.b16 %v211
    %v322 = vunpack.c.h.b16 %v211
    %v323 = vunpack.c.l.b16 %v212
    %v324 = vunpack.c.h.b16 %v212
    %v325 = vunpack.c.l.b16 %v213
    %v326 = vunpack.c.h.b16 %v213
    %v327 = vunpack.c.l.b16 %v214
    %v328 = vunpack.c.h.b16 %v214
    %v329 = vunpack.c.l.b16 %v215
    %v330 = vunpack.c.h.b16 %v215
    %v331 = vunpack.c.l.b16 %v216
    %v332 = vunpack.c.h.b16 %v216
    %v333 = vunpack.c.l.b16 %v217
    %v334 = vunpack.c.h.b16 %v217
    %v335 = vunpack.c.l.b16 %v218
    %v336 = vunpack.c.h.b16 %v218
    %v337 = vunpack.c.l.b16 %v219
    %v338 = vunpack.c.h.b16 %v219
    %v339 = vunpack.c.l.b16 %v220
    %v340 = vunpack.c.h.b16 %v220
    %v341 = vunpack.c.l.b16 %v221
    %v342 = vunpack.c.h.b16 %v221
    %v343 = vunpack.c.l.b16 %v222
    %v344 = vunpack.c.h.b16 %v222
    %v345 = vpack.c.b16 %v313, %v305
    %v346 = vpack.c.b16 %v314, %v306
    %v347 = vpack.c.b16 %v315, %v307
    %v348 = vpack.c.b16 %v316, %v308
    %v349 = vpack.c.b16 %v317, %v309
    %v350 = vpack.c.b16 %v318, %v310
    %v351 = vpack.c.b16 %v319, %v311
    %v352 = vpack.c.b16 %v320, %v312
    %v353 = vpack.c.b16 %v329, %v321
    %v354 = vpack.c.b16 %v330, %v322
    %v355 = vpack.c.b16 %v331, %v323
    %v356 = vpack.c.b16 %v332, %v324
    %v357 = vpack.c.b16 %v333, %v325
    %v358 = vpack.c.b16 %v334, %v326
    %v359 = vpack.c.b16 %v335, %v327
    %v360 = vpack.c.b16 %v336, %v328
    %v361 = vpack.c.b16 %v337, %v337
    %v362 = vpack.c.b16 %v338, %v338
    %v363 = vpack.c.b16 %v339, %v339
    %v364 = vpack.c.b16 %v340, %v340
    %v365 = vpack.c.b16 %v341, %v341
    %v366 = vpack.c.b16 %v342, %v342
    %v367 = vpack.c.b16 %v343, %v343
    %v368 = vpack.c.b16 %v344, %v344
    %vm385 = vcmask 293888
    %v387 = vsel %vm385, %v281, 0
    %v390 = vsel %vm385, %v282, 0
    %v393 = vsel %vm385, %v283, 0
    %v396 = vsel %vm385, %v284, 0
    %vm398 = vcmask 1041408
    %v400 = vsel %vm398, %v361, 0
    %v403 = vsel %vm398, %v362, 0
    %v406 = vsel %vm398, %v363, 0
    %v409 = vsel %vm398, %v364, 0
    %v412 = vsel %vm398, %v365, 0
    %v415 = vsel %vm398, %v366, 0
    %v418 = vsel %vm398, %v367, 0
    %v421 = vsel %vm398, %v368, 0
    %423 = vmatprep.subr.bf16.mxu0 0
    %424 = vmatpush1.bf16.msra.mxu0 0
    %425 = vmatprep.subr.bf16.mxu0 0
    %426 = vmatpush1.bf16.msra.mxu0 0
    %427 = vmatprep.subr.bf16.mxu0 0
    %428 = vmatpush1.bf16.msra.mxu0 0
    %429 = vmatprep.subr.bf16.mxu0 0
    %430 = vmatpush1.bf16.msra.mxu0 0
    %431 = vmatprep.subr.bf16.mxu0 0
    %432 = vmatpush1.bf16.msra.mxu0 0
    %433 = vmatprep.subr.bf16.mxu0 %v403
    %434 = vmatpush1.bf16.msra.mxu0 %v400
    %435 = vmatprep.subr.bf16.mxu0 %v354
    %436 = vmatpush1.bf16.msra.mxu0 %v353
    %437 = vmatprep.subr.bf16.mxu0 %v346
    %438 = vmatpush1.bf16.msra.mxu0 %v345
    %439 = vmatprep.subr.bf16.mxu0 0
    %440 = vmatpush2.bf16.msra.mxu0 0
    %441 = vmatprep.subr.bf16.mxu0 0
    %442 = vmatpush2.bf16.msra.mxu0 0
    %443 = vmatprep.subr.bf16.mxu0 0
    %444 = vmatpush2.bf16.msra.mxu0 0
    %445 = vmatprep.subr.bf16.mxu0 0
    %446 = vmatpush2.bf16.msra.mxu0 0
    %447 = vmatprep.subr.bf16.mxu0 0
    %448 = vmatpush2.bf16.msra.mxu0 0
    %449 = vmatprep.subr.bf16.mxu0 0
    %450 = vmatpush2.bf16.msra.mxu0 0
    %451 = vmatprep.subr.bf16.mxu0 0
    %452 = vmatpush2.bf16.msra.mxu0 0
    %453 = vmatprep.subr.bf16.mxu0 0
    %454 = vmatpush2.bf16.msra.mxu0 0
    %455 = vmatprep.mubr.bf16.mxu0 0
    %456 = vmatmul.mubr.bf16.gmra.mxu0 %v387
    %v457 = vpop.f32.mrf.mxu0
    %v458 = vadd.f32 %v228, %v457
    %v459 = vpop.f32.mrf.mxu0
    %v460 = vadd.f32 %v232, %v459
    %v461 = vpop.f32.mrf.mxu0
    %v462 = vadd.f32 %v228, %v461
    %v463 = vpop.f32.mrf.mxu0
    %v464 = vadd.f32 %v232, %v463
    %465 = vmatprep.mubr.bf16.mxu0 0
    %466 = vmatmul.mubr.bf16.gmra.mxu0 %v390
    %v467 = vpop.f32.mrf.mxu0
    %v468 = vadd.f32 %v228, %v467
    %v469 = vpop.f32.mrf.mxu0
    %v470 = vadd.f32 %v232, %v469
    %v471 = vpop.f32.mrf.mxu0
    %v472 = vadd.f32 %v228, %v471
    %v473 = vpop.f32.mrf.mxu0
    %v474 = vadd.f32 %v232, %v473
    %475 = vmatprep.mubr.bf16.mxu0 0
    %476 = vmatmul.mubr.bf16.gmra.mxu0 %v393
    %v477 = vpop.f32.mrf.mxu0
    %v478 = vadd.f32 %v228, %v477
    %v479 = vpop.f32.mrf.mxu0
    %v480 = vadd.f32 %v232, %v479
    %v481 = vpop.f32.mrf.mxu0
    %v482 = vadd.f32 %v228, %v481
    %v483 = vpop.f32.mrf.mxu0
    %v484 = vadd.f32 %v232, %v483
    %485 = vmatprep.mubr.bf16.mxu0 0
    %486 = vmatmul.mubr.bf16.gmra.mxu0 %v396
    %v487 = vpop.f32.mrf.mxu0
    %v488 = vadd.f32 %v228, %v487
    %v489 = vpop.f32.mrf.mxu0
    %v490 = vadd.f32 %v232, %v489
    %v491 = vpop.f32.mrf.mxu0
    %v492 = vadd.f32 %v228, %v491
    %v493 = vpop.f32.mrf.mxu0
    %v494 = vadd.f32 %v232, %v493
    %495 = vdwg.mxu0
    %496 = vmatprep.subr.bf16.mxu0 0
    %497 = vmatpush1.bf16.msra.mxu0 0
    %498 = vmatprep.subr.bf16.mxu0 0
    %499 = vmatpush1.bf16.msra.mxu0 0
    %500 = vmatprep.subr.bf16.mxu0 0
    %501 = vmatpush1.bf16.msra.mxu0 0
    %502 = vmatprep.subr.bf16.mxu0 0
    %503 = vmatpush1.bf16.msra.mxu0 0
    %504 = vmatprep.subr.bf16.mxu0 0
    %505 = vmatpush1.bf16.msra.mxu0 0
    %506 = vmatprep.subr.bf16.mxu0 %v409
    %507 = vmatpush1.bf16.msra.mxu0 %v406
    %508 = vmatprep.subr.bf16.mxu0 %v356
    %509 = vmatpush1.bf16.msra.mxu0 %v355
    %510 = vmatprep.subr.bf16.mxu0 %v348
    %511 = vmatpush1.bf16.msra.mxu0 %v347
    %512 = vmatprep.subr.bf16.mxu0 0
    %513 = vmatpush2.bf16.msra.mxu0 0
    %514 = vmatprep.subr.bf16.mxu0 0
    %515 = vmatpush2.bf16.msra.mxu0 0
    %516 = vmatprep.subr.bf16.mxu0 0
    %517 = vmatpush2.bf16.msra.mxu0 0
    %518 = vmatprep.subr.bf16.mxu0 0
    %519 = vmatpush2.bf16.msra.mxu0 0
    %520 = vmatprep.subr.bf16.mxu0 0
    %521 = vmatpush2.bf16.msra.mxu0 0
    %522 = vmatprep.subr.bf16.mxu0 0
    %523 = vmatpush2.bf16.msra.mxu0 0
    %524 = vmatprep.subr.bf16.mxu0 0
    %525 = vmatpush2.bf16.msra.mxu0 0
    %526 = vmatprep.subr.bf16.mxu0 0
    %527 = vmatpush2.bf16.msra.mxu0 0
    %528 = vmatprep.mubr.bf16.mxu0 0
    %529 = vmatmul.mubr.bf16.gmra.mxu0 %v387
    %v530 = vpop.f32.mrf.mxu0
    %v531 = vadd.f32 %v236, %v530
    %v532 = vpop.f32.mrf.mxu0
    %v533 = vadd.f32 %v240, %v532
    %v534 = vpop.f32.mrf.mxu0
    %v535 = vadd.f32 %v236, %v534
    %v536 = vpop.f32.mrf.mxu0
    %v537 = vadd.f32 %v240, %v536
    %538 = vmatprep.mubr.bf16.mxu0 0
    %539 = vmatmul.mubr.bf16.gmra.mxu0 %v390
    %v540 = vpop.f32.mrf.mxu0
    %v541 = vadd.f32 %v236, %v540
    %v542 = vpop.f32.mrf.mxu0
    %v543 = vadd.f32 %v240, %v542
    %v544 = vpop.f32.mrf.mxu0
    %v545 = vadd.f32 %v236, %v544
    %v546 = vpop.f32.mrf.mxu0
    %v547 = vadd.f32 %v240, %v546
    %548 = vmatprep.mubr.bf16.mxu0 0
    %549 = vmatmul.mubr.bf16.gmra.mxu0 %v393
    %v550 = vpop.f32.mrf.mxu0
    %v551 = vadd.f32 %v236, %v550
    %v552 = vpop.f32.mrf.mxu0
    %v553 = vadd.f32 %v240, %v552
    %v554 = vpop.f32.mrf.mxu0
    %v555 = vadd.f32 %v236, %v554
    %v556 = vpop.f32.mrf.mxu0
    %v557 = vadd.f32 %v240, %v556
    %558 = vmatprep.mubr.bf16.mxu0 0
    %559 = vmatmul.mubr.bf16.gmra.mxu0 %v396
    %v560 = vpop.f32.mrf.mxu0
    %v561 = vadd.f32 %v236, %v560
    %v562 = vpop.f32.mrf.mxu0
    %v563 = vadd.f32 %v240, %v562
    %v564 = vpop.f32.mrf.mxu0
    %v565 = vadd.f32 %v236, %v564
    %v566 = vpop.f32.mrf.mxu0
    %v567 = vadd.f32 %v240, %v566
    %568 = vdwg.mxu0
    %569 = vmatprep.subr.bf16.mxu0 0
    %570 = vmatpush1.bf16.msra.mxu0 0
    %571 = vmatprep.subr.bf16.mxu0 0
    %572 = vmatpush1.bf16.msra.mxu0 0
    %573 = vmatprep.subr.bf16.mxu0 0
    %574 = vmatpush1.bf16.msra.mxu0 0
    %575 = vmatprep.subr.bf16.mxu0 0
    %576 = vmatpush1.bf16.msra.mxu0 0
    %577 = vmatprep.subr.bf16.mxu0 0
    %578 = vmatpush1.bf16.msra.mxu0 0
    %579 = vmatprep.subr.bf16.mxu0 %v415
    %580 = vmatpush1.bf16.msra.mxu0 %v412
    %581 = vmatprep.subr.bf16.mxu0 %v358
    %582 = vmatpush1.bf16.msra.mxu0 %v357
    %583 = vmatprep.subr.bf16.mxu0 %v350
    %584 = vmatpush1.bf16.msra.mxu0 %v349
    %585 = vmatprep.subr.bf16.mxu0 0
    %586 = vmatpush2.bf16.msra.mxu0 0
    %587 = vmatprep.subr.bf16.mxu0 0
    %588 = vmatpush2.bf16.msra.mxu0 0
    %589 = vmatprep.subr.bf16.mxu0 0
    %590 = vmatpush2.bf16.msra.mxu0 0
    %591 = vmatprep.subr.bf16.mxu0 0
    %592 = vmatpush2.bf16.msra.mxu0 0
    %593 = vmatprep.subr.bf16.mxu0 0
    %594 = vmatpush2.bf16.msra.mxu0 0
    %595 = vmatprep.subr.bf16.mxu0 0
    %596 = vmatpush2.bf16.msra.mxu0 0
    %597 = vmatprep.subr.bf16.mxu0 0
    %598 = vmatpush2.bf16.msra.mxu0 0
    %599 = vmatprep.subr.bf16.mxu0 0
    %600 = vmatpush2.bf16.msra.mxu0 0
    %601 = vmatprep.mubr.bf16.mxu0 0
    %602 = vmatmul.mubr.bf16.gmra.mxu0 %v387
    %v603 = vpop.f32.mrf.mxu0
    %v604 = vadd.f32 %v244, %v603
    %v605 = vpop.f32.mrf.mxu0
    %v606 = vadd.f32 %v248, %v605
    %v607 = vpop.f32.mrf.mxu0
    %v608 = vadd.f32 %v244, %v607
    %v609 = vpop.f32.mrf.mxu0
    %v610 = vadd.f32 %v248, %v609
    %611 = vmatprep.mubr.bf16.mxu0 0
    %612 = vmatmul.mubr.bf16.gmra.mxu0 %v390
    %v613 = vpop.f32.mrf.mxu0
    %v614 = vadd.f32 %v244, %v613
    %v615 = vpop.f32.mrf.mxu0
    %v616 = vadd.f32 %v248, %v615
    %v617 = vpop.f32.mrf.mxu0
    %v618 = vadd.f32 %v244, %v617
    %v619 = vpop.f32.mrf.mxu0
    %v620 = vadd.f32 %v248, %v619
    %621 = vmatprep.mubr.bf16.mxu0 0
    %622 = vmatmul.mubr.bf16.gmra.mxu0 %v393
    %v623 = vpop.f32.mrf.mxu0
    %v624 = vadd.f32 %v244, %v623
    %v625 = vpop.f32.mrf.mxu0
    %v626 = vadd.f32 %v248, %v625
    %v627 = vpop.f32.mrf.mxu0
    %v628 = vadd.f32 %v244, %v627
    %v629 = vpop.f32.mrf.mxu0
    %v630 = vadd.f32 %v248, %v629
    %631 = vmatprep.mubr.bf16.mxu0 0
    %632 = vmatmul.mubr.bf16.gmra.mxu0 %v396
    %v633 = vpop.f32.mrf.mxu0
    %v634 = vadd.f32 %v244, %v633
    %v635 = vpop.f32.mrf.mxu0
    %v636 = vadd.f32 %v248, %v635
    %v637 = vpop.f32.mrf.mxu0
    %v638 = vadd.f32 %v244, %v637
    %v639 = vpop.f32.mrf.mxu0
    %v640 = vadd.f32 %v248, %v639
    %641 = vdwg.mxu0
    %642 = vmatprep.subr.bf16.mxu0 0
    %643 = vmatpush1.bf16.msra.mxu0 0
    %644 = vmatprep.subr.bf16.mxu0 0
    %645 = vmatpush1.bf16.msra.mxu0 0
    %646 = vmatprep.subr.bf16.mxu0 0
    %647 = vmatpush1.bf16.msra.mxu0 0
    %648 = vmatprep.subr.bf16.mxu0 0
    %649 = vmatpush1.bf16.msra.mxu0 0
    %650 = vmatprep.subr.bf16.mxu0 0
    %651 = vmatpush1.bf16.msra.mxu0 0
    %652 = vmatprep.subr.bf16.mxu0 %v421
    %653 = vmatpush1.bf16.msra.mxu0 %v418
    %654 = vmatprep.subr.bf16.mxu0 %v360
    %655 = vmatpush1.bf16.msra.mxu0 %v359
    %656 = vmatprep.subr.bf16.mxu0 %v352
    %657 = vmatpush1.bf16.msra.mxu0 %v351
    %658 = vmatprep.subr.bf16.mxu0 0
    %659 = vmatpush2.bf16.msra.mxu0 0
    %660 = vmatprep.subr.bf16.mxu0 0
    %661 = vmatpush2.bf16.msra.mxu0 0
    %662 = vmatprep.subr.bf16.mxu0 0
    %663 = vmatpush2.bf16.msra.mxu0 0
    %664 = vmatprep.subr.bf16.mxu0 0
    %665 = vmatpush2.bf16.msra.mxu0 0
    %666 = vmatprep.subr.bf16.mxu0 0
    %667 = vmatpush2.bf16.msra.mxu0 0
    %668 = vmatprep.subr.bf16.mxu0 0
    %669 = vmatpush2.bf16.msra.mxu0 0
    %670 = vmatprep.subr.bf16.mxu0 0
    %671 = vmatpush2.bf16.msra.mxu0 0
    %672 = vmatprep.subr.bf16.mxu0 0
    %673 = vmatpush2.bf16.msra.mxu0 0
    %674 = vmatprep.mubr.bf16.mxu0 0
    %675 = vmatmul.mubr.bf16.gmra.mxu0 %v387
    %v676 = vpop.f32.mrf.mxu0
    %v677 = vadd.f32 %v252, %v676
    %v678 = vpop.f32.mrf.mxu0
    %v679 = vadd.f32 %v256, %v678
    %v680 = vpop.f32.mrf.mxu0
    %v681 = vadd.f32 %v252, %v680
    %v682 = vpop.f32.mrf.mxu0
    %v683 = vadd.f32 %v256, %v682
    %684 = vmatprep.mubr.bf16.mxu0 0
    %685 = vmatmul.mubr.bf16.gmra.mxu0 %v390
    %v686 = vpop.f32.mrf.mxu0
    %v687 = vadd.f32 %v252, %v686
    %v688 = vpop.f32.mrf.mxu0
    %v689 = vadd.f32 %v256, %v688
    %v690 = vpop.f32.mrf.mxu0
    %v691 = vadd.f32 %v252, %v690
    %v692 = vpop.f32.mrf.mxu0
    %v693 = vadd.f32 %v256, %v692
    %694 = vmatprep.mubr.bf16.mxu0 0
    %695 = vmatmul.mubr.bf16.gmra.mxu0 %v393
    %v696 = vpop.f32.mrf.mxu0
    %v697 = vadd.f32 %v252, %v696
    %v698 = vpop.f32.mrf.mxu0
    %v699 = vadd.f32 %v256, %v698
    %v700 = vpop.f32.mrf.mxu0
    %v701 = vadd.f32 %v252, %v700
    %v702 = vpop.f32.mrf.mxu0
    %v703 = vadd.f32 %v256, %v702
    %704 = vmatprep.mubr.bf16.mxu0 0
    %705 = vmatmul.mubr.bf16.gmra.mxu0 %v396
    %v706 = vpop.f32.mrf.mxu0
    %v707 = vadd.f32 %v252, %v706
    %v708 = vpop.f32.mrf.mxu0
    %v709 = vadd.f32 %v256, %v708
    %v710 = vpop.f32.mrf.mxu0
    %v711 = vadd.f32 %v252, %v710
    %v712 = vpop.f32.mrf.mxu0
    %v713 = vadd.f32 %v256, %v712
    %714 = vdwg.mxu0
    %715 = vst [vmem:[#allocation2] sm:$0xff] %v458
    %716 = vst [vmem:[#allocation2 + $0x8] sm:$0xff] %v460
    %717 = vst [vmem:[#allocation2 + $0x10] sm:$0xff] %v531
    %718 = vst [vmem:[#allocation2 + $0x18] sm:$0xff] %v533
    %719 = vst [vmem:[#allocation2 + $0x20] sm:$0xff] %v604
    %720 = vst [vmem:[#allocation2 + $0x28] sm:$0xff] %v606
    %721 = vst [vmem:[#allocation2 + $0x30] sm:$0xff] %v677
    %722 = vst [vmem:[#allocation2 + $0x38] sm:$0xff] %v679
    %723 = vst [vmem:[#allocation2 + $0x40] sm:$0xff] %v462
    %724 = vst [vmem:[#allocation2 + $0x48] sm:$0xff] %v464
    %725 = vst [vmem:[#allocation2 + $0x50] sm:$0xff] %v535
    %726 = vst [vmem:[#allocation2 + $0x58] sm:$0xff] %v537
    %727 = vst [vmem:[#allocation2 + $0x60] sm:$0xff] %v608
    %728 = vst [vmem:[#allocation2 + $0x68] sm:$0xff] %v610
    %729 = vst [vmem:[#allocation2 + $0x70] sm:$0xff] %v681
    %730 = vst [vmem:[#allocation2 + $0x78] sm:$0xff] %v683
    %731 = vst [vmem:[#allocation2 + $0x80] sm:$0xff] %v468
    %732 = vst [vmem:[#allocation2 + $0x88] sm:$0xff] %v470
    %733 = vst [vmem:[#allocation2 + $0x90] sm:$0xff] %v541
    %734 = vst [vmem:[#allocation2 + $0x98] sm:$0xff] %v543
    %735 = vst [vmem:[#allocation2 + $0xa0] sm:$0xff] %v614
    %736 = vst [vmem:[#allocation2 + $0xa8] sm:$0xff] %v616
    %737 = vst [vmem:[#allocation2 + $0xb0] sm:$0xff] %v687
    %738 = vst [vmem:[#allocation2 + $0xb8] sm:$0xff] %v689
    %739 = vst [vmem:[#allocation2 + $0xc0] sm:$0xff] %v472
    %740 = vst [vmem:[#allocation2 + $0xc8] sm:$0xff] %v474
    %741 = vst [vmem:[#allocation2 + $0xd0] sm:$0xff] %v545
    %742 = vst [vmem:[#allocation2 + $0xd8] sm:$0xff] %v547
    %743 = vst [vmem:[#allocation2 + $0xe0] sm:$0xff] %v618
    %744 = vst [vmem:[#allocation2 + $0xe8] sm:$0xff] %v620
    %745 = vst [vmem:[#allocation2 + $0xf0] sm:$0xff] %v691
    %746 = vst [vmem:[#allocation2 + $0xf8] sm:$0xff] %v693
    %747 = vst [vmem:[#allocation2 + $0x100] sm:$0xff] %v478
    %748 = vst [vmem:[#allocation2 + $0x108] sm:$0xff] %v480
    %749 = vst [vmem:[#allocation2 + $0x110] sm:$0xff] %v551
    %750 = vst [vmem:[#allocation2 + $0x118] sm:$0xff] %v553
    %751 = vst [vmem:[#allocation2 + $0x120] sm:$0xff] %v624
    %752 = vst [vmem:[#allocation2 + $0x128] sm:$0xff] %v626
    %753 = vst [vmem:[#allocation2 + $0x130] sm:$0xff] %v697
    %754 = vst [vmem:[#allocation2 + $0x138] sm:$0xff] %v699
    %755 = vst [vmem:[#allocation2 + $0x140] sm:$0xff] %v482
    %756 = vst [vmem:[#allocation2 + $0x148] sm:$0xff] %v484
    %757 = vst [vmem:[#allocation2 + $0x150] sm:$0xff] %v555
    %758 = vst [vmem:[#allocation2 + $0x158] sm:$0xff] %v557
    %759 = vst [vmem:[#allocation2 + $0x160] sm:$0xff] %v628
    %760 = vst [vmem:[#allocation2 + $0x168] sm:$0xff] %v630
    %761 = vst [vmem:[#allocation2 + $0x170] sm:$0xff] %v701
    %762 = vst [vmem:[#allocation2 + $0x178] sm:$0xff] %v703
    %763 = vst [vmem:[#allocation2 + $0x180] sm:$0xff] %v488
    %764 = vst [vmem:[#allocation2 + $0x188] sm:$0xff] %v490
    %765 = vst [vmem:[#allocation2 + $0x190] sm:$0xff] %v561
    %766 = vst [vmem:[#allocation2 + $0x198] sm:$0xff] %v563
    %767 = vst [vmem:[#allocation2 + $0x1a0] sm:$0xff] %v634
    %768 = vst [vmem:[#allocation2 + $0x1a8] sm:$0xff] %v636
    %769 = vst [vmem:[#allocation2 + $0x1b0] sm:$0xff] %v707
    %770 = vst [vmem:[#allocation2 + $0x1b8] sm:$0xff] %v709
    %771 = vst [vmem:[#allocation2 + $0x1c0] sm:$0xff] %v492
    %772 = vst [vmem:[#allocation2 + $0x1c8] sm:$0xff] %v494
    %773 = vst [vmem:[#allocation2 + $0x1d0] sm:$0xff] %v565
    %774 = vst [vmem:[#allocation2 + $0x1d8] sm:$0xff] %v567
    %775 = vst [vmem:[#allocation2 + $0x1e0] sm:$0xff] %v638
    %776 = vst [vmem:[#allocation2 + $0x1e8] sm:$0xff] %v640
    %777 = vst [vmem:[#allocation2 + $0x1f0] sm:$0xff] %v711
    %778 = vst [vmem:[#allocation2 + $0x1f8] sm:$0xff] %v713
    %v779 = vld [vmem:[#allocation11] sm:$0xff]
    %v780 = vld [vmem:[#allocation11 + $0x8] sm:$0xff]
    %v781 = vld [vmem:[#allocation11 + $0x20] sm:$0xff]
    %v782 = vld [vmem:[#allocation11 + $0x28] sm:$0xff]
    %v783 = vld [vmem:[#allocation11 + $0x40] sm:$0xff]
    %v784 = vld [vmem:[#allocation11 + $0x48] sm:$0xff]
    %v785 = vld [vmem:[#allocation11 + $0x60] sm:$0xff]
    %v786 = vld [vmem:[#allocation11 + $0x68] sm:$0xff]
    %v787 = vld [vmem:[#allocation11 + $0x80] sm:$0xff]
    %v788 = vld [vmem:[#allocation11 + $0x88] sm:$0xff]
    %v789 = vld [vmem:[#allocation11 + $0xa0] sm:$0xff]
    %v790 = vld [vmem:[#allocation11 + $0xa8] sm:$0xff]
    %v791 = vld [vmem:[#allocation11 + $0xc0] sm:$0xff]
    %v792 = vld [vmem:[#allocation11 + $0xc8] sm:$0xff]
    %v793 = vld [vmem:[#allocation11 + $0xe0] sm:$0xff]
    %v794 = vld [vmem:[#allocation11 + $0xe8] sm:$0xff]
    %v795 = vld [vmem:[#allocation11 + $0x100] sm:$0xff]
    %v796 = vld [vmem:[#allocation11 + $0x108] sm:$0xff]
    %v797 = vld [vmem:[#allocation11 + $0x120] sm:$0xff]
    %v798 = vld [vmem:[#allocation11 + $0x128] sm:$0xff]
    %v799 = vld [vmem:[#allocation11 + $0x140] sm:$0xff]
    %v800 = vld [vmem:[#allocation11 + $0x148] sm:$0xff]
    %v801 = vld [vmem:[#allocation11 + $0x160] sm:$0xff]
    %v802 = vld [vmem:[#allocation11 + $0x168] sm:$0xff]
    %v803 = vld [vmem:[#allocation11 + $0x180] sm:$0xff]
    %v804 = vld [vmem:[#allocation11 + $0x188] sm:$0xff]
    %v805 = vld [vmem:[#allocation11 + $0x1a0] sm:$0xff]
    %v806 = vld [vmem:[#allocation11 + $0x1a8] sm:$0xff]
    %v807 = vld [vmem:[#allocation11 + $0x1c0] sm:$0xff]
    %v808 = vld [vmem:[#allocation11 + $0x1c8] sm:$0xff]
    %v809 = vld [vmem:[#allocation11 + $0x1e0] sm:$0xff]
    %v810 = vld [vmem:[#allocation11 + $0x1e8] sm:$0xff]
    %v811 = vld [vmem:[#allocation11 + $0x10] sm:$0xff]
    %v812 = vld [vmem:[#allocation11 + $0x18] sm:$0xff]
    %v813 = vld [vmem:[#allocation11 + $0x30] sm:$0xff]
    %v814 = vld [vmem:[#allocation11 + $0x38] sm:$0xff]
    %v815 = vld [vmem:[#allocation11 + $0x50] sm:$0xff]
    %v816 = vld [vmem:[#allocation11 + $0x58] sm:$0xff]
    %v817 = vld [vmem:[#allocation11 + $0x70] sm:$0xff]
    %v818 = vld [vmem:[#allocation11 + $0x78] sm:$0xff]
    %v819 = vld [vmem:[#allocation11 + $0x90] sm:$0xff]
    %v820 = vld [vmem:[#allocation11 + $0x98] sm:$0xff]
    %v821 = vld [vmem:[#allocation11 + $0xb0] sm:$0xff]
    %v822 = vld [vmem:[#allocation11 + $0xb8] sm:$0xff]
    %v823 = vld [vmem:[#allocation11 + $0xd0] sm:$0xff]
    %v824 = vld [vmem:[#allocation11 + $0xd8] sm:$0xff]
    %v825 = vld [vmem:[#allocation11 + $0xf0] sm:$0xff]
    %v826 = vld [vmem:[#allocation11 + $0xf8] sm:$0xff]
    %v827 = vld [vmem:[#allocation11 + $0x110] sm:$0xff]
    %v828 = vld [vmem:[#allocation11 + $0x118] sm:$0xff]
    %v829 = vld [vmem:[#allocation11 + $0x130] sm:$0xff]
    %v830 = vld [vmem:[#allocation11 + $0x138] sm:$0xff]
    %v831 = vld [vmem:[#allocation11 + $0x150] sm:$0xff]
    %v832 = vld [vmem:[#allocation11 + $0x158] sm:$0xff]
    %v833 = vld [vmem:[#allocation11 + $0x170] sm:$0xff]
    %v834 = vld [vmem:[#allocation11 + $0x178] sm:$0xff]
    %v835 = vld [vmem:[#allocation11 + $0x190] sm:$0xff]
    %v836 = vld [vmem:[#allocation11 + $0x198] sm:$0xff]
    %v837 = vld [vmem:[#allocation11 + $0x1b0] sm:$0xff]
    %v838 = vld [vmem:[#allocation11 + $0x1b8] sm:$0xff]
    %v839 = vld [vmem:[#allocation11 + $0x1d0] sm:$0xff]
    %v840 = vld [vmem:[#allocation11 + $0x1d8] sm:$0xff]
    %v841 = vld [vmem:[#allocation11 + $0x1f0] sm:$0xff]
    %v842 = vld [vmem:[#allocation11 + $0x1f8] sm:$0xff]
    %v843 = vld [vmem:[#allocation2] sm:$0xff]
    %v844 = vld [vmem:[#allocation2 + $0x8] sm:$0xff]
    %v845 = vld [vmem:[#allocation2 + $0x10] sm:$0xff]
    %v846 = vld [vmem:[#allocation2 + $0x18] sm:$0xff]
    %v879 = vunpack.c.l.b16 %v779
    %v880 = vunpack.c.h.b16 %v779
    %v881 = vunpack.c.l.b16 %v780
    %v882 = vunpack.c.h.b16 %v780
    %v883 = vunpack.c.l.b16 %v781
    %v884 = vunpack.c.h.b16 %v781
    %v885 = vunpack.c.l.b16 %v782
    %v886 = vunpack.c.h.b16 %v782
    %v887 = vunpack.c.l.b16 %v783
    %v888 = vunpack.c.h.b16 %v783
    %v889 = vunpack.c.l.b16 %v784
    %v890 = vunpack.c.h.b16 %v784
    %v891 = vunpack.c.l.b16 %v785
    %v892 = vunpack.c.h.b16 %v785
    %v893 = vunpack.c.l.b16 %v786
    %v894 = vunpack.c.h.b16 %v786
    %v895 = vunpack.c.l.b16 %v787
    %v896 = vunpack.c.h.b16 %v787
    %v897 = vunpack.c.l.b16 %v788
    %v898 = vunpack.c.h.b16 %v788
    %v899 = vunpack.c.l.b16 %v789
    %v900 = vunpack.c.h.b16 %v789
    %v901 = vunpack.c.l.b16 %v790
    %v902 = vunpack.c.h.b16 %v790
    %v903 = vunpack.c.l.b16 %v791
    %v904 = vunpack.c.h.b16 %v791
    %v905 = vunpack.c.l.b16 %v792
    %v906 = vunpack.c.h.b16 %v792
    %v907 = vunpack.c.l.b16 %v793
    %v908 = vunpack.c.h.b16 %v793
    %v909 = vunpack.c.l.b16 %v794
    %v910 = vunpack.c.h.b16 %v794
    %v911 = vunpack.c.l.b16 %v795
    %v912 = vunpack.c.h.b16 %v795
    %v913 = vunpack.c.l.b16 %v796
    %v914 = vunpack.c.h.b16 %v796
    %v915 = vunpack.c.l.b16 %v797
    %v916 = vunpack.c.h.b16 %v797
    %v917 = vunpack.c.l.b16 %v798
    %v918 = vunpack.c.h.b16 %v798
    %v919 = vunpack.c.l.b16 %v799
    %v920 = vunpack.c.h.b16 %v799
    %v921 = vunpack.c.l.b16 %v800
    %v922 = vunpack.c.h.b16 %v800
    %v923 = vunpack.c.l.b16 %v801
    %v924 = vunpack.c.h.b16 %v801
    %v925 = vunpack.c.l.b16 %v802
    %v926 = vunpack.c.h.b16 %v802
    %v927 = vunpack.c.l.b16 %v803
    %v928 = vunpack.c.h.b16 %v803
    %v929 = vunpack.c.l.b16 %v804
    %v930 = vunpack.c.h.b16 %v804
    %v931 = vunpack.c.l.b16 %v805
    %v932 = vunpack.c.h.b16 %v805
    %v933 = vunpack.c.l.b16 %v806
    %v934 = vunpack.c.h.b16 %v806
    %v935 = vunpack.c.l.b16 %v807
    %v936 = vunpack.c.h.b16 %v807
    %v937 = vunpack.c.l.b16 %v808
    %v938 = vunpack.c.h.b16 %v808
    %v939 = vunpack.c.l.b16 %v809
    %v940 = vunpack.c.h.b16 %v809
    %v941 = vunpack.c.l.b16 %v810
    %v942 = vunpack.c.h.b16 %v810
    %v943 = vpack.c.b16 %v883, %v879
    %v944 = vpack.c.b16 %v884, %v880
    %v945 = vpack.c.b16 %v885, %v881
    %v946 = vpack.c.b16 %v886, %v882
    %v947 = vpack.c.b16 %v891, %v887
    %v948 = vpack.c.b16 %v892, %v888
    %v949 = vpack.c.b16 %v893, %v889
    %v950 = vpack.c.b16 %v894, %v890
    %v951 = vpack.c.b16 %v899, %v895
    %v952 = vpack.c.b16 %v900, %v896
    %v953 = vpack.c.b16 %v901, %v897
    %v954 = vpack.c.b16 %v902, %v898
    %v955 = vpack.c.b16 %v907, %v903
    %v956 = vpack.c.b16 %v908, %v904
    %v957 = vpack.c.b16 %v909, %v905
    %v958 = vpack.c.b16 %v910, %v906
    %v959 = vpack.c.b16 %v915, %v911
    %v960 = vpack.c.b16 %v916, %v912
    %v961 = vpack.c.b16 %v917, %v913
    %v962 = vpack.c.b16 %v918, %v914
    %v963 = vpack.c.b16 %v923, %v919
    %v964 = vpack.c.b16 %v924, %v920
    %v965 = vpack.c.b16 %v925, %v921
    %v966 = vpack.c.b16 %v926, %v922
    %v967 = vpack.c.b16 %v931, %v927
    %v968 = vpack.c.b16 %v932, %v928
    %v969 = vpack.c.b16 %v933, %v929
    %v970 = vpack.c.b16 %v934, %v930
    %v971 = vpack.c.b16 %v939, %v935
    %v972 = vpack.c.b16 %v940, %v936
    %v973 = vpack.c.b16 %v941, %v937
    %v974 = vpack.c.b16 %v942, %v938
    %1007 = vmatprep.subr.bf16.mxu0 %v972
    %1008 = vmatpush1.bf16.msra.mxu0 %v971
    %1009 = vmatprep.subr.bf16.mxu0 %v968
    %1010 = vmatpush1.bf16.msra.mxu0 %v967
    %1011 = vmatprep.subr.bf16.mxu0 %v964
    %1012 = vmatpush1.bf16.msra.mxu0 %v963
    %1013 = vmatprep.subr.bf16.mxu0 %v960
    %1014 = vmatpush1.bf16.msra.mxu0 %v959
    %1015 = vmatprep.subr.bf16.mxu0 %v956
    %1016 = vmatpush1.bf16.msra.mxu0 %v955
    %1017 = vmatprep.subr.bf16.mxu0 %v952
    %1018 = vmatpush1.bf16.msra.mxu0 %v951
    %1019 = vmatprep.subr.bf16.mxu0 %v948
    %1020 = vmatpush1.bf16.msra.mxu0 %v947
    %1021 = vmatprep.subr.bf16.mxu0 %v944
    %1022 = vmatpush1.bf16.msra.mxu0 %v943
    %1023 = vmatprep.subr.bf16.mxu0 0
    %1024 = vmatpush2.bf16.msra.mxu0 0
    %1025 = vmatprep.subr.bf16.mxu0 0
    %1026 = vmatpush2.bf16.msra.mxu0 0
    %1027 = vmatprep.subr.bf16.mxu0 0
    %1028 = vmatpush2.bf16.msra.mxu0 0
    %1029 = vmatprep.subr.bf16.mxu0 0
    %1030 = vmatpush2.bf16.msra.mxu0 0
    %1031 = vmatprep.subr.bf16.mxu0 0
    %1032 = vmatpush2.bf16.msra.mxu0 0
    %1033 = vmatprep.subr.bf16.mxu0 0
    %1034 = vmatpush2.bf16.msra.mxu0 0
    %1035 = vmatprep.subr.bf16.mxu0 0
    %1036 = vmatpush2.bf16.msra.mxu0 0
    %1037 = vmatprep.subr.bf16.mxu0 0
    %1038 = vmatpush2.bf16.msra.mxu0 0
    %1039 = vmatprep.mubr.bf16.mxu0 0
    %1040 = vmatmul.mubr.bf16.gmra.mxu0 0
    %v1041 = vpop.f32.mrf.mxu0
    %v1042 = vadd.f32 0.0, %v1041
    %v1043 = vpop.f32.mrf.mxu0
    %v1044 = vadd.f32 0.0, %v1043
    %v1045 = vpop.f32.mrf.mxu0
    %v1046 = vpop.f32.mrf.mxu0
    %1047 = vdwg.mxu0
    %1048 = vmatprep.subr.bf16.mxu0 %v974
    %1049 = vmatpush1.bf16.msra.mxu0 %v973
    %1050 = vmatprep.subr.bf16.mxu0 %v970
    %1051 = vmatpush1.bf16.msra.mxu0 %v969
    %1052 = vmatprep.subr.bf16.mxu0 %v966
    %1053 = vmatpush1.bf16.msra.mxu0 %v965
    %1054 = vmatprep.subr.bf16.mxu0 %v962
    %1055 = vmatpush1.bf16.msra.mxu0 %v961
    %1056 = vmatprep.subr.bf16.mxu0 %v958
    %1057 = vmatpush1.bf16.msra.mxu0 %v957
    %1058 = vmatprep.subr.bf16.mxu0 %v954
    %1059 = vmatpush1.bf16.msra.mxu0 %v953
    %1060 = vmatprep.subr.bf16.mxu0 %v950
    %1061 = vmatpush1.bf16.msra.mxu0 %v949
    %1062 = vmatprep.subr.bf16.mxu0 %v946
    %1063 = vmatpush1.bf16.msra.mxu0 %v945
    %1064 = vmatprep.subr.bf16.mxu0 0
    %1065 = vmatpush2.bf16.msra.mxu0 0
    %1066 = vmatprep.subr.bf16.mxu0 0
    %1067 = vmatpush2.bf16.msra.mxu0 0
    %1068 = vmatprep.subr.bf16.mxu0 0
    %1069 = vmatpush2.bf16.msra.mxu0 0
    %1070 = vmatprep.subr.bf16.mxu0 0
    %1071 = vmatpush2.bf16.msra.mxu0 0
    %1072 = vmatprep.subr.bf16.mxu0 0
    %1073 = vmatpush2.bf16.msra.mxu0 0
    %1074 = vmatprep.subr.bf16.mxu0 0
    %1075 = vmatpush2.bf16.msra.mxu0 0
    %1076 = vmatprep.subr.bf16.mxu0 0
    %1077 = vmatpush2.bf16.msra.mxu0 0
    %1078 = vmatprep.subr.bf16.mxu0 0
    %1079 = vmatpush2.bf16.msra.mxu0 0
    %1080 = vmatprep.mubr.bf16.mxu0 0
    %1081 = vmatmul.mubr.bf16.gmra.mxu0 0
    %v1082 = vpop.f32.mrf.mxu0
    %v1083 = vadd.f32 0.0, %v1082
    %v1084 = vpop.f32.mrf.mxu0
    %v1085 = vadd.f32 0.0, %v1084
    %v1086 = vpop.f32.mrf.mxu0
    %v1087 = vpop.f32.mrf.mxu0
    %1088 = vdwg.mxu0
    %v1089 = vadd.f32 %v843, %v1042
    %v1090 = vadd.f32 %v844, %v1044
    %v1091 = vadd.f32 %v845, %v1083
    %v1092 = vadd.f32 %v846, %v1085
    %v1093 = vld [vmem:[#allocation2 + $0x1e0] sm:$0xff]
    %v1094 = vld [vmem:[#allocation2 + $0x1e8] sm:$0xff]
    %v1095 = vld [vmem:[#allocation2 + $0x1f0] sm:$0xff]
    %v1096 = vld [vmem:[#allocation2 + $0x1f8] sm:$0xff]
    %v1129 = vunpack.c.l.b16 %v811
    %v1130 = vunpack.c.h.b16 %v811
    %v1131 = vunpack.c.l.b16 %v812
    %v1132 = vunpack.c.h.b16 %v812
    %v1133 = vunpack.c.l.b16 %v813
    %v1134 = vunpack.c.h.b16 %v813
    %v1135 = vunpack.c.l.b16 %v814
    %v1136 = vunpack.c.h.b16 %v814
    %v1137 = vunpack.c.l.b16 %v815
    %v1138 = vunpack.c.h.b16 %v815
    %v1139 = vunpack.c.l.b16 %v816
    %v1140 = vunpack.c.h.b16 %v816
    %v1141 = vunpack.c.l.b16 %v817
    %v1142 = vunpack.c.h.b16 %v817
    %v1143 = vunpack.c.l.b16 %v818
    %v1144 = vunpack.c.h.b16 %v818
    %v1145 = vunpack.c.l.b16 %v819
    %v1146 = vunpack.c.h.b16 %v819
    %v1147 = vunpack.c.l.b16 %v820
    %v1148 = vunpack.c.h.b16 %v820
    %v1149 = vunpack.c.l.b16 %v821
    %v1150 = vunpack.c.h.b16 %v821
    %v1151 = vunpack.c.l.b16 %v822
    %v1152 = vunpack.c.h.b16 %v822
    %v1153 = vunpack.c.l.b16 %v823
    %v1154 = vunpack.c.h.b16 %v823
    %v1155 = vunpack.c.l.b16 %v824
    %v1156 = vunpack.c.h.b16 %v824
    %v1157 = vunpack.c.l.b16 %v825
    %v1158 = vunpack.c.h.b16 %v825
    %v1159 = vunpack.c.l.b16 %v826
    %v1160 = vunpack.c.h.b16 %v826
    %v1161 = vunpack.c.l.b16 %v827
    %v1162 = vunpack.c.h.b16 %v827
    %v1163 = vunpack.c.l.b16 %v828
    %v1164 = vunpack.c.h.b16 %v828
    %v1165 = vunpack.c.l.b16 %v829
    %v1166 = vunpack.c.h.b16 %v829
    %v1167 = vunpack.c.l.b16 %v830
    %v1168 = vunpack.c.h.b16 %v830
    %v1169 = vunpack.c.l.b16 %v831
    %v1170 = vunpack.c.h.b16 %v831
    %v1171 = vunpack.c.l.b16 %v832
    %v1172 = vunpack.c.h.b16 %v832
    %v1173 = vunpack.c.l.b16 %v833
    %v1174 = vunpack.c.h.b16 %v833
    %v1175 = vunpack.c.l.b16 %v834
    %v1176 = vunpack.c.h.b16 %v834
    %v1177 = vunpack.c.l.b16 %v835
    %v1178 = vunpack.c.h.b16 %v835
    %v1179 = vunpack.c.l.b16 %v836
    %v1180 = vunpack.c.h.b16 %v836
    %v1181 = vunpack.c.l.b16 %v837
    %v1182 = vunpack.c.h.b16 %v837
    %v1183 = vunpack.c.l.b16 %v838
    %v1184 = vunpack.c.h.b16 %v838
    %v1185 = vunpack.c.l.b16 %v839
    %v1186 = vunpack.c.h.b16 %v839
    %v1187 = vunpack.c.l.b16 %v840
    %v1188 = vunpack.c.h.b16 %v840
    %v1189 = vunpack.c.l.b16 %v841
    %v1190 = vunpack.c.h.b16 %v841
    %v1191 = vunpack.c.l.b16 %v842
    %v1192 = vunpack.c.h.b16 %v842
    %v1193 = vpack.c.b16 %v1133, %v1129
    %v1194 = vpack.c.b16 %v1134, %v1130
    %v1195 = vpack.c.b16 %v1135, %v1131
    %v1196 = vpack.c.b16 %v1136, %v1132
    %v1197 = vpack.c.b16 %v1141, %v1137
    %v1198 = vpack.c.b16 %v1142, %v1138
    %v1199 = vpack.c.b16 %v1143, %v1139
    %v1200 = vpack.c.b16 %v1144, %v1140
    %v1201 = vpack.c.b16 %v1149, %v1145
    %v1202 = vpack.c.b16 %v1150, %v1146
    %v1203 = vpack.c.b16 %v1151, %v1147
    %v1204 = vpack.c.b16 %v1152, %v1148
    %v1205 = vpack.c.b16 %v1157, %v1153
    %v1206 = vpack.c.b16 %v1158, %v1154
    %v1207 = vpack.c.b16 %v1159, %v1155
    %v1208 = vpack.c.b16 %v1160, %v1156
    %v1209 = vpack.c.b16 %v1165, %v1161
    %v1210 = vpack.c.b16 %v1166, %v1162
    %v1211 = vpack.c.b16 %v1167, %v1163
    %v1212 = vpack.c.b16 %v1168, %v1164
    %v1213 = vpack.c.b16 %v1173, %v1169
    %v1214 = vpack.c.b16 %v1174, %v1170
    %v1215 = vpack.c.b16 %v1175, %v1171
    %v1216 = vpack.c.b16 %v1176, %v1172
    %v1217 = vpack.c.b16 %v1181, %v1177
    %v1218 = vpack.c.b16 %v1182, %v1178
    %v1219 = vpack.c.b16 %v1183, %v1179
    %v1220 = vpack.c.b16 %v1184, %v1180
    %v1221 = vpack.c.b16 %v1189, %v1185
    %v1222 = vpack.c.b16 %v1190, %v1186
    %v1223 = vpack.c.b16 %v1191, %v1187
    %v1224 = vpack.c.b16 %v1192, %v1188
    %1257 = vmatprep.subr.bf16.mxu0 %v1222
    %1258 = vmatpush1.bf16.msra.mxu0 %v1221
    %1259 = vmatprep.subr.bf16.mxu0 %v1218
    %1260 = vmatpush1.bf16.msra.mxu0 %v1217
    %1261 = vmatprep.subr.bf16.mxu0 %v1214
    %1262 = vmatpush1.bf16.msra.mxu0 %v1213
    %1263 = vmatprep.subr.bf16.mxu0 %v1210
    %1264 = vmatpush1.bf16.msra.mxu0 %v1209
    %1265 = vmatprep.subr.bf16.mxu0 %v1206
    %1266 = vmatpush1.bf16.msra.mxu0 %v1205
    %1267 = vmatprep.subr.bf16.mxu0 %v1202
    %1268 = vmatpush1.bf16.msra.mxu0 %v1201
    %1269 = vmatprep.subr.bf16.mxu0 %v1198
    %1270 = vmatpush1.bf16.msra.mxu0 %v1197
    %1271 = vmatprep.subr.bf16.mxu0 %v1194
    %1272 = vmatpush1.bf16.msra.mxu0 %v1193
    %1273 = vmatprep.subr.bf16.mxu0 0
    %1274 = vmatpush2.bf16.msra.mxu0 0
    %1275 = vmatprep.subr.bf16.mxu0 0
    %1276 = vmatpush2.bf16.msra.mxu0 0
    %1277 = vmatprep.subr.bf16.mxu0 0
    %1278 = vmatpush2.bf16.msra.mxu0 0
    %1279 = vmatprep.subr.bf16.mxu0 0
    %1280 = vmatpush2.bf16.msra.mxu0 0
    %1281 = vmatprep.subr.bf16.mxu0 0
    %1282 = vmatpush2.bf16.msra.mxu0 0
    %1283 = vmatprep.subr.bf16.mxu0 0
    %1284 = vmatpush2.bf16.msra.mxu0 0
    %1285 = vmatprep.subr.bf16.mxu0 0
    %1286 = vmatpush2.bf16.msra.mxu0 0
    %1287 = vmatprep.subr.bf16.mxu0 0
    %1288 = vmatpush2.bf16.msra.mxu0 0
    %1289 = vmatprep.mubr.bf16.mxu0 0
    %1290 = vmatmul.mubr.bf16.gmra.mxu0 0
    %v1291 = vpop.f32.mrf.mxu0
    %v1292 = vadd.f32 0.0, %v1291
    %v1293 = vpop.f32.mrf.mxu0
    %v1294 = vadd.f32 0.0, %v1293
    %v1295 = vpop.f32.mrf.mxu0
    %v1296 = vpop.f32.mrf.mxu0
    %1297 = vdwg.mxu0
    %1298 = vmatprep.subr.bf16.mxu0 %v1224
    %1299 = vmatpush1.bf16.msra.mxu0 %v1223
    %1300 = vmatprep.subr.bf16.mxu0 %v1220
    %1301 = vmatpush1.bf16.msra.mxu0 %v1219
    %1302 = vmatprep.subr.bf16.mxu0 %v1216
    %1303 = vmatpush1.bf16.msra.mxu0 %v1215
    %1304 = vmatprep.subr.bf16.mxu0 %v1212
    %1305 = vmatpush1.bf16.msra.mxu0 %v1211
    %1306 = vmatprep.subr.bf16.mxu0 %v1208
    %1307 = vmatpush1.bf16.msra.mxu0 %v1207
    %1308 = vmatprep.subr.bf16.mxu0 %v1204
    %1309 = vmatpush1.bf16.msra.mxu0 %v1203
    %1310 = vmatprep.subr.bf16.mxu0 %v1200
    %1311 = vmatpush1.bf16.msra.mxu0 %v1199
    %1312 = vmatprep.subr.bf16.mxu0 %v1196
    %1313 = vmatpush1.bf16.msra.mxu0 %v1195
    %1314 = vmatprep.subr.bf16.mxu0 0
    %1315 = vmatpush2.bf16.msra.mxu0 0
    %1316 = vmatprep.subr.bf16.mxu0 0
    %1317 = vmatpush2.bf16.msra.mxu0 0
    %1318 = vmatprep.subr.bf16.mxu0 0
    %1319 = vmatpush2.bf16.msra.mxu0 0
    %1320 = vmatprep.subr.bf16.mxu0 0
    %1321 = vmatpush2.bf16.msra.mxu0 0
    %1322 = vmatprep.subr.bf16.mxu0 0
    %1323 = vmatpush2.bf16.msra.mxu0 0
    %1324 = vmatprep.subr.bf16.mxu0 0
    %1325 = vmatpush2.bf16.msra.mxu0 0
    %1326 = vmatprep.subr.bf16.mxu0 0
    %1327 = vmatpush2.bf16.msra.mxu0 0
    %1328 = vmatprep.subr.bf16.mxu0 0
    %1329 = vmatpush2.bf16.msra.mxu0 0
    %1330 = vmatprep.mubr.bf16.mxu0 0
    %1331 = vmatmul.mubr.bf16.gmra.mxu0 0
    %v1332 = vpop.f32.mrf.mxu0
    %v1333 = vadd.f32 0.0, %v1332
    %v1334 = vpop.f32.mrf.mxu0
    %v1335 = vadd.f32 0.0, %v1334
    %v1336 = vpop.f32.mrf.mxu0
    %v1337 = vpop.f32.mrf.mxu0
    %1338 = vdwg.mxu0
    %v1339 = vadd.f32 %v1093, %v1292
    %v1340 = vadd.f32 %v1094, %v1294
    %v1341 = vadd.f32 %v1095, %v1333
    %v1342 = vadd.f32 %v1096, %v1335
    %v1343 = vxor.u32 %v1089, 2147483648
    %v1344 = vxor.u32 %v1090, 2147483648
    %v1345 = vxor.u32 %v1091, 2147483648
    %v1346 = vmul.f32 %v1343, 1.442695
    %v1347 = vpow.pop %v1346
    %v1348 = vmul.f32 %v1344, 1.442695
    %v1349 = vpow.pop %v1348
    %v1350 = vmul.f32 %v1345, 1.442695
    %v1351 = vpow.pop %v1350
    %v1352 = vadd.f32 %v1347, 1.0
    %v1353 = vadd.f32 %v1349, 1.0
    %v1354 = vadd.f32 %v1351, 1.0
    %v1355 = vrcp.pop %v1352
    %v1356 = vmul.f32 1.0, %v1355
    %v1357 = vrcp.pop %v1353
    %v1358 = vmul.f32 1.0, %v1357
    %v1359 = vrcp.pop %v1354
    %v1360 = vmul.f32 1.0, %v1359
    %v1361 = vxor.u32 %v1339, 2147483648
    %v1362 = vxor.u32 %v1340, 2147483648
    %v1363 = vxor.u32 %v1341, 2147483648
    %v1364 = vmul.f32 %v1361, 1.442695
    %v1365 = vpow.pop %v1364
    %v1366 = vmul.f32 %v1362, 1.442695
    %v1367 = vpow.pop %v1366
    %v1368 = vmul.f32 %v1363, 1.442695
    %v1369 = vpow.pop %v1368
    %v1370 = vadd.f32 %v1365, 1.0
    %v1371 = vadd.f32 %v1367, 1.0
    %v1372 = vadd.f32 %v1369, 1.0
    %v1373 = vrcp.pop %v1370
    %v1374 = vmul.f32 1.0, %v1373
    %v1375 = vrcp.pop %v1371
    %v1376 = vmul.f32 1.0, %v1375
    %v1377 = vrcp.pop %v1372
    %v1378 = vmul.f32 1.0, %v1377
    %v1379 = vtanh.pop %v1092
    %v1380 = vtanh.pop %v1342
    %v1381 = vmul.f32 %v1358, 0.0
    %v1382 = vmul.f32 %v1356, %v1379
    %v1383 = vadd.f32 %v1381, %v1382
    %v1384 = vmul.f32 %v1376, 0.0
    %v1385 = vmul.f32 %v1374, %v1380
    %v1386 = vadd.f32 %v1384, %v1385
    %v1387 = vtanh.pop %v1383
    %v1388 = vmul.f32 %v1360, %v1387
    %v1389 = vtanh.pop %v1386
    %v1390 = vmul.f32 %v1378, %v1389
    %v1391 = vpack.c.bf16 %v1388, %v1388
    %v1392 = vpack.c.bf16 %v1390, %v1390
    %1393 = vst [vmem:[#allocation3] sm:$0xf] %v1391
    %1394 = vst [vmem:[#allocation3 + $0x3c] sm:$0xf] %v1392
    %v1395 = vld [vmem:[#allocation2 + $0x40] sm:$0xff]
    %v1396 = vld [vmem:[#allocation2 + $0x48] sm:$0xff]
    %v1397 = vld [vmem:[#allocation2 + $0x50] sm:$0xff]
    %v1398 = vld [vmem:[#allocation2 + $0x58] sm:$0xff]
    %1399 = vmatprep.subr.bf16.mxu0 %v972
    %1400 = vmatpush1.bf16.msra.mxu0 %v971
    %1401 = vmatprep.subr.bf16.mxu0 %v968
    %1402 = vmatpush1.bf16.msra.mxu0 %v967
    %1403 = vmatprep.subr.bf16.mxu0 %v964
    %1404 = vmatpush1.bf16.msra.mxu0 %v963
    %1405 = vmatprep.subr.bf16.mxu0 %v960
    %1406 = vmatpush1.bf16.msra.mxu0 %v959
    %1407 = vmatprep.subr.bf16.mxu0 %v956
    %1408 = vmatpush1.bf16.msra.mxu0 %v955
    %1409 = vmatprep.subr.bf16.mxu0 %v952
    %1410 = vmatpush1.bf16.msra.mxu0 %v951
    %1411 = vmatprep.subr.bf16.mxu0 %v948
    %1412 = vmatpush1.bf16.msra.mxu0 %v947
    %1413 = vmatprep.subr.bf16.mxu0 %v944
    %1414 = vmatpush1.bf16.msra.mxu0 %v943
    %1415 = vmatprep.subr.bf16.mxu0 0
    %1416 = vmatpush2.bf16.msra.mxu0 0
    %1417 = vmatprep.subr.bf16.mxu0 0
    %1418 = vmatpush2.bf16.msra.mxu0 0
    %1419 = vmatprep.subr.bf16.mxu0 0
    %1420 = vmatpush2.bf16.msra.mxu0 0
    %1421 = vmatprep.subr.bf16.mxu0 0
    %1422 = vmatpush2.bf16.msra.mxu0 0
    %1423 = vmatprep.subr.bf16.mxu0 0
    %1424 = vmatpush2.bf16.msra.mxu0 0
    %1425 = vmatprep.subr.bf16.mxu0 0
    %1426 = vmatpush2.bf16.msra.mxu0 0
    %1427 = vmatprep.subr.bf16.mxu0 0
    %1428 = vmatpush2.bf16.msra.mxu0 0
    %1429 = vmatprep.subr.bf16.mxu0 0
    %1430 = vmatpush2.bf16.msra.mxu0 0
    %1431 = vmatprep.mubr.bf16.mxu0 0
    %1432 = vmatmul.mubr.bf16.gmra.mxu0 %v1391
    %v1433 = vpop.f32.mrf.mxu0
    %v1434 = vadd.f32 0.0, %v1433
    %v1435 = vpop.f32.mrf.mxu0
    %v1436 = vadd.f32 0.0, %v1435
    %v1437 = vpop.f32.mrf.mxu0
    %v1438 = vpop.f32.mrf.mxu0
    %1439 = vdwg.mxu0
    %1440 = vmatprep.subr.bf16.mxu0 %v974
    %1441 = vmatpush1.bf16.msra.mxu0 %v973
    %1442 = vmatprep.subr.bf16.mxu0 %v970
    %1443 = vmatpush1.bf16.msra.mxu0 %v969
    %1444 = vmatprep.subr.bf16.mxu0 %v966
    %1445 = vmatpush1.bf16.msra.mxu0 %v965
    %1446 = vmatprep.subr.bf16.mxu0 %v962
    %1447 = vmatpush1.bf16.msra.mxu0 %v961
    %1448 = vmatprep.subr.bf16.mxu0 %v958
    %1449 = vmatpush1.bf16.msra.mxu0 %v957
    %1450 = vmatprep.subr.bf16.mxu0 %v954
    %1451 = vmatpush1.bf16.msra.mxu0 %v953
    %1452 = vmatprep.subr.bf16.mxu0 %v950
    %1453 = vmatpush1.bf16.msra.mxu0 %v949
    %1454 = vmatprep.subr.bf16.mxu0 %v946
    %1455 = vmatpush1.bf16.msra.mxu0 %v945
    %1456 = vmatprep.subr.bf16.mxu0 0
    %1457 = vmatpush2.bf16.msra.mxu0 0
    %1458 = vmatprep.subr.bf16.mxu0 0
    %1459 = vmatpush2.bf16.msra.mxu0 0
    %1460 = vmatprep.subr.bf16.mxu0 0
    %1461 = vmatpush2.bf16.msra.mxu0 0
    %1462 = vmatprep.subr.bf16.mxu0 0
    %1463 = vmatpush2.bf16.msra.mxu0 0
    %1464 = vmatprep.subr.bf16.mxu0 0
    %1465 = vmatpush2.bf16.msra.mxu0 0
    %1466 = vmatprep.subr.bf16.mxu0 0
    %1467 = vmatpush2.bf16.msra.mxu0 0
    %1468 = vmatprep.subr.bf16.mxu0 0
    %1469 = vmatpush2.bf16.msra.mxu0 0
    %1470 = vmatprep.subr.bf16.mxu0 0
    %1471 = vmatpush2.bf16.msra.mxu0 0
    %1472 = vmatprep.mubr.bf16.mxu0 0
    %1473 = vmatmul.mubr.bf16.gmra.mxu0 %v1391
    %v1474 = vpop.f32.mrf.mxu0
    %v1475 = vadd.f32 0.0, %v1474
    %v1476 = vpop.f32.mrf.mxu0
    %v1477 = vadd.f32 0.0, %v1476
    %v1478 = vpop.f32.mrf.mxu0
    %v1479 = vpop.f32.mrf.mxu0
    %1480 = vdwg.mxu0
    %v1481 = vadd.f32 %v1395, %v1434
    %v1482 = vadd.f32 %v1396, %v1436
    %v1483 = vadd.f32 %v1397, %v1475
    %v1484 = vadd.f32 %v1398, %v1477
    %v1485 = vld [vmem:[#allocation2 + $0x1a0] sm:$0xff]
    %v1486 = vld [vmem:[#allocation2 + $0x1a8] sm:$0xff]
    %v1487 = vld [vmem:[#allocation2 + $0x1b0] sm:$0xff]
    %v1488 = vld [vmem:[#allocation2 + $0x1b8] sm:$0xff]
    %1489 = vmatprep.subr.bf16.mxu0 %v1222
    %1490 = vmatpush1.bf16.msra.mxu0 %v1221
    %1491 = vmatprep.subr.bf16.mxu0 %v1218
    %1492 = vmatpush1.bf16.msra.mxu0 %v1217
    %1493 = vmatprep.subr.bf16.mxu0 %v1214
    %1494 = vmatpush1.bf16.msra.mxu0 %v1213
    %1495 = vmatprep.subr.bf16.mxu0 %v1210
    %1496 = vmatpush1.bf16.msra.mxu0 %v1209
    %1497 = vmatprep.subr.bf16.mxu0 %v1206
    %1498 = vmatpush1.bf16.msra.mxu0 %v1205
    %1499 = vmatprep.subr.bf16.mxu0 %v1202
    %1500 = vmatpush1.bf16.msra.mxu0 %v1201
    %1501 = vmatprep.subr.bf16.mxu0 %v1198
    %1502 = vmatpush1.bf16.msra.mxu0 %v1197
    %1503 = vmatprep.subr.bf16.mxu0 %v1194
    %1504 = vmatpush1.bf16.msra.mxu0 %v1193
    %1505 = vmatprep.subr.bf16.mxu0 0
    %1506 = vmatpush2.bf16.msra.mxu0 0
    %1507 = vmatprep.subr.bf16.mxu0 0
    %1508 = vmatpush2.bf16.msra.mxu0 0
    %1509 = vmatprep.subr.bf16.mxu0 0
    %1510 = vmatpush2.bf16.msra.mxu0 0
    %1511 = vmatprep.subr.bf16.mxu0 0
    %1512 = vmatpush2.bf16.msra.mxu0 0
    %1513 = vmatprep.subr.bf16.mxu0 0
    %1514 = vmatpush2.bf16.msra.mxu0 0
    %1515 = vmatprep.subr.bf16.mxu0 0
    %1516 = vmatpush2.bf16.msra.mxu0 0
    %1517 = vmatprep.subr.bf16.mxu0 0
    %1518 = vmatpush2.bf16.msra.mxu0 0
    %1519 = vmatprep.subr.bf16.mxu0 0
    %1520 = vmatpush2.bf16.msra.mxu0 0
    %1521 = vmatprep.mubr.bf16.mxu0 0
    %1522 = vmatmul.mubr.bf16.gmra.mxu0 %v1392
    %v1523 = vpop.f32.mrf.mxu0
    %v1524 = vadd.f32 0.0, %v1523
    %v1525 = vpop.f32.mrf.mxu0
    %v1526 = vadd.f32 0.0, %v1525
    %v1527 = vpop.f32.mrf.mxu0
    %v1528 = vpop.f32.mrf.mxu0
    %1529 = vdwg.mxu0
    %1530 = vmatprep.subr.bf16.mxu0 %v1224
    %1531 = vmatpush1.bf16.msra.mxu0 %v1223
    %1532 = vmatprep.subr.bf16.mxu0 %v1220
    %1533 = vmatpush1.bf16.msra.mxu0 %v1219
    %1534 = vmatprep.subr.bf16.mxu0 %v1216
    %1535 = vmatpush1.bf16.msra.mxu0 %v1215
    %1536 = vmatprep.subr.bf16.mxu0 %v1212
    %1537 = vmatpush1.bf16.msra.mxu0 %v1211
    %1538 = vmatprep.subr.bf16.mxu0 %v1208
    %1539 = vmatpush1.bf16.msra.mxu0 %v1207
    %1540 = vmatprep.subr.bf16.mxu0 %v1204
    %1541 = vmatpush1.bf16.msra.mxu0 %v1203
    %1542 = vmatprep.subr.bf16.mxu0 %v1200
    %1543 = vmatpush1.bf16.msra.mxu0 %v1199
    %1544 = vmatprep.subr.bf16.mxu0 %v1196
    %1545 = vmatpush1.bf16.msra.mxu0 %v1195
    %1546 = vmatprep.subr.bf16.mxu0 0
    %1547 = vmatpush2.bf16.msra.mxu0 0
    %1548 = vmatprep.subr.bf16.mxu0 0
    %1549 = vmatpush2.bf16.msra.mxu0 0
    %1550 = vmatprep.subr.bf16.mxu0 0
    %1551 = vmatpush2.bf16.msra.mxu0 0
    %1552 = vmatprep.subr.bf16.mxu0 0
    %1553 = vmatpush2.bf16.msra.mxu0 0
    %1554 = vmatprep.subr.bf16.mxu0 0
    %1555 = vmatpush2.bf16.msra.mxu0 0
    %1556 = vmatprep.subr.bf16.mxu0 0
    %1557 = vmatpush2.bf16.msra.mxu0 0
    %1558 = vmatprep.subr.bf16.mxu0 0
    %1559 = vmatpush2.bf16.msra.mxu0 0
    %1560 = vmatprep.subr.bf16.mxu0 0
    %1561 = vmatpush2.bf16.msra.mxu0 0
    %1562 = vmatprep.mubr.bf16.mxu0 0
    %1563 = vmatmul.mubr.bf16.gmra.mxu0 %v1392
    %v1564 = vpop.f32.mrf.mxu0
    %v1565 = vadd.f32 0.0, %v1564
    %v1566 = vpop.f32.mrf.mxu0
    %v1567 = vadd.f32 0.0, %v1566
    %v1568 = vpop.f32.mrf.mxu0
    %v1569 = vpop.f32.mrf.mxu0
    %1570 = vdwg.mxu0
    %v1571 = vadd.f32 %v1485, %v1524
    %v1572 = vadd.f32 %v1486, %v1526
    %v1573 = vadd.f32 %v1487, %v1565
    %v1574 = vadd.f32 %v1488, %v1567
    %v1575 = vxor.u32 %v1481, 2147483648
    %v1576 = vxor.u32 %v1482, 2147483648
    %v1577 = vxor.u32 %v1483, 2147483648
    %v1578 = vmul.f32 %v1575, 1.442695
    %v1579 = vpow.pop %v1578
    %v1580 = vmul.f32 %v1576, 1.442695
    %v1581 = vpow.pop %v1580
    %v1582 = vmul.f32 %v1577, 1.442695
    %v1583 = vpow.pop %v1582
    %v1584 = vadd.f32 %v1579, 1.0
    %v1585 = vadd.f32 %v1581, 1.0
    %v1586 = vadd.f32 %v1583, 1.0
    %v1587 = vrcp.pop %v1584
    %v1588 = vmul.f32 1.0, %v1587
    %v1589 = vrcp.pop %v1585
    %v1590 = vmul.f32 1.0, %v1589
    %v1591 = vrcp.pop %v1586
    %v1592 = vmul.f32 1.0, %v1591
    %v1593 = vxor.u32 %v1571, 2147483648
    %v1594 = vxor.u32 %v1572, 2147483648
    %v1595 = vxor.u32 %v1573, 2147483648
    %v1596 = vmul.f32 %v1593, 1.442695
    %v1597 = vpow.pop %v1596
    %v1598 = vmul.f32 %v1594, 1.442695
    %v1599 = vpow.pop %v1598
    %v1600 = vmul.f32 %v1595, 1.442695
    %v1601 = vpow.pop %v1600
    %v1602 = vadd.f32 %v1597, 1.0
    %v1603 = vadd.f32 %v1599, 1.0
    %v1604 = vadd.f32 %v1601, 1.0
    %v1605 = vrcp.pop %v1602
    %v1606 = vmul.f32 1.0, %v1605
    %v1607 = vrcp.pop %v1603
    %v1608 = vmul.f32 1.0, %v1607
    %v1609 = vrcp.pop %v1604
    %v1610 = vmul.f32 1.0, %v1609
    %v1611 = vtanh.pop %v1484
    %v1612 = vtanh.pop %v1574
    %v1613 = vmul.f32 %v1590, %v1383
    %v1614 = vmul.f32 %v1588, %v1611
    %v1615 = vadd.f32 %v1613, %v1614
    %v1616 = vmul.f32 %v1608, %v1386
    %v1617 = vmul.f32 %v1606, %v1612
    %v1618 = vadd.f32 %v1616, %v1617
    %v1619 = vtanh.pop %v1615
    %v1620 = vmul.f32 %v1592, %v1619
    %v1621 = vtanh.pop %v1618
    %v1622 = vmul.f32 %v1610, %v1621
    %v1623 = vpack.c.bf16 %v1620, %v1620
    %v1624 = vpack.c.bf16 %v1622, %v1622
    %1625 = vst [vmem:[#allocation3 + $0x8] sm:$0xf] %v1623
    %1626 = vst [vmem:[#allocation3 + $0x34] sm:$0xf] %v1624
    %v1627 = vld [vmem:[#allocation2 + $0x80] sm:$0xff]
    %v1628 = vld [vmem:[#allocation2 + $0x88] sm:$0xff]
    %v1629 = vld [vmem:[#allocation2 + $0x90] sm:$0xff]
    %v1630 = vld [vmem:[#allocation2 + $0x98] sm:$0xff]
    %1631 = vmatprep.subr.bf16.mxu0 %v972
    %1632 = vmatpush1.bf16.msra.mxu0 %v971
    %1633 = vmatprep.subr.bf16.mxu0 %v968
    %1634 = vmatpush1.bf16.msra.mxu0 %v967
    %1635 = vmatprep.subr.bf16.mxu0 %v964
    %1636 = vmatpush1.bf16.msra.mxu0 %v963
    %1637 = vmatprep.subr.bf16.mxu0 %v960
    %1638 = vmatpush1.bf16.msra.mxu0 %v959
    %1639 = vmatprep.subr.bf16.mxu0 %v956
    %1640 = vmatpush1.bf16.msra.mxu0 %v955
    %1641 = vmatprep.subr.bf16.mxu0 %v952
    %1642 = vmatpush1.bf16.msra.mxu0 %v951
    %1643 = vmatprep.subr.bf16.mxu0 %v948
    %1644 = vmatpush1.bf16.msra.mxu0 %v947
    %1645 = vmatprep.subr.bf16.mxu0 %v944
    %1646 = vmatpush1.bf16.msra.mxu0 %v943
    %1647 = vmatprep.subr.bf16.mxu0 0
    %1648 = vmatpush2.bf16.msra.mxu0 0
    %1649 = vmatprep.subr.bf16.mxu0 0
    %1650 = vmatpush2.bf16.msra.mxu0 0
    %1651 = vmatprep.subr.bf16.mxu0 0
    %1652 = vmatpush2.bf16.msra.mxu0 0
    %1653 = vmatprep.subr.bf16.mxu0 0
    %1654 = vmatpush2.bf16.msra.mxu0 0
    %1655 = vmatprep.subr.bf16.mxu0 0
    %1656 = vmatpush2.bf16.msra.mxu0 0
    %1657 = vmatprep.subr.bf16.mxu0 0
    %1658 = vmatpush2.bf16.msra.mxu0 0
    %1659 = vmatprep.subr.bf16.mxu0 0
    %1660 = vmatpush2.bf16.msra.mxu0 0
    %1661 = vmatprep.subr.bf16.mxu0 0
    %1662 = vmatpush2.bf16.msra.mxu0 0
    %1663 = vmatprep.mubr.bf16.mxu0 0
    %1664 = vmatmul.mubr.bf16.gmra.mxu0 %v1623
    %v1665 = vpop.f32.mrf.mxu0
    %v1666 = vadd.f32 0.0, %v1665
    %v1667 = vpop.f32.mrf.mxu0
    %v1668 = vadd.f32 0.0, %v1667
    %v1669 = vpop.f32.mrf.mxu0
    %v1670 = vpop.f32.mrf.mxu0
    %1671 = vdwg.mxu0
    %1672 = vmatprep.subr.bf16.mxu0 %v974
    %1673 = vmatpush1.bf16.msra.mxu0 %v973
    %1674 = vmatprep.subr.bf16.mxu0 %v970
    %1675 = vmatpush1.bf16.msra.mxu0 %v969
    %1676 = vmatprep.subr.bf16.mxu0 %v966
    %1677 = vmatpush1.bf16.msra.mxu0 %v965
    %1678 = vmatprep.subr.bf16.mxu0 %v962
    %1679 = vmatpush1.bf16.msra.mxu0 %v961
    %1680 = vmatprep.subr.bf16.mxu0 %v958
    %1681 = vmatpush1.bf16.msra.mxu0 %v957
    %1682 = vmatprep.subr.bf16.mxu0 %v954
    %1683 = vmatpush1.bf16.msra.mxu0 %v953
    %1684 = vmatprep.subr.bf16.mxu0 %v950
    %1685 = vmatpush1.bf16.msra.mxu0 %v949
    %1686 = vmatprep.subr.bf16.mxu0 %v946
    %1687 = vmatpush1.bf16.msra.mxu0 %v945
    %1688 = vmatprep.subr.bf16.mxu0 0
    %1689 = vmatpush2.bf16.msra.mxu0 0
    %1690 = vmatprep.subr.bf16.mxu0 0
    %1691 = vmatpush2.bf16.msra.mxu0 0
    %1692 = vmatprep.subr.bf16.mxu0 0
    %1693 = vmatpush2.bf16.msra.mxu0 0
    %1694 = vmatprep.subr.bf16.mxu0 0
    %1695 = vmatpush2.bf16.msra.mxu0 0
    %1696 = vmatprep.subr.bf16.mxu0 0
    %1697 = vmatpush2.bf16.msra.mxu0 0
    %1698 = vmatprep.subr.bf16.mxu0 0
    %1699 = vmatpush2.bf16.msra.mxu0 0
    %1700 = vmatprep.subr.bf16.mxu0 0
    %1701 = vmatpush2.bf16.msra.mxu0 0
    %1702 = vmatprep.subr.bf16.mxu0 0
    %1703 = vmatpush2.bf16.msra.mxu0 0
    %1704 = vmatprep.mubr.bf16.mxu0 0
    %1705 = vmatmul.mubr.bf16.gmra.mxu0 %v1623
    %v1706 = vpop.f32.mrf.mxu0
    %v1707 = vadd.f32 0.0, %v1706
    %v1708 = vpop.f32.mrf.mxu0
    %v1709 = vadd.f32 0.0, %v1708
    %v1710 = vpop.f32.mrf.mxu0
    %v1711 = vpop.f32.mrf.mxu0
    %1712 = vdwg.mxu0
    %v1713 = vadd.f32 %v1627, %v1666
    %v1714 = vadd.f32 %v1628, %v1668
    %v1715 = vadd.f32 %v1629, %v1707
    %v1716 = vadd.f32 %v1630, %v1709
    %v1717 = vld [vmem:[#allocation2 + $0x160] sm:$0xff]
    %v1718 = vld [vmem:[#allocation2 + $0x168] sm:$0xff]
    %v1719 = vld [vmem:[#allocation2 + $0x170] sm:$0xff]
    %v1720 = vld [vmem:[#allocation2 + $0x178] sm:$0xff]
    %1721 = vmatprep.subr.bf16.mxu0 %v1222
    %1722 = vmatpush1.bf16.msra.mxu0 %v1221
    %1723 = vmatprep.subr.bf16.mxu0 %v1218
    %1724 = vmatpush1.bf16.msra.mxu0 %v1217
    %1725 = vmatprep.subr.bf16.mxu0 %v1214
    %1726 = vmatpush1.bf16.msra.mxu0 %v1213
    %1727 = vmatprep.subr.bf16.mxu0 %v1210
    %1728 = vmatpush1.bf16.msra.mxu0 %v1209
    %1729 = vmatprep.subr.bf16.mxu0 %v1206
    %1730 = vmatpush1.bf16.msra.mxu0 %v1205
    %1731 = vmatprep.subr.bf16.mxu0 %v1202
    %1732 = vmatpush1.bf16.msra.mxu0 %v1201
    %1733 = vmatprep.subr.bf16.mxu0 %v1198
    %1734 = vmatpush1.bf16.msra.mxu0 %v1197
    %1735 = vmatprep.subr.bf16.mxu0 %v1194
    %1736 = vmatpush1.bf16.msra.mxu0 %v1193
    %1737 = vmatprep.subr.bf16.mxu0 0
    %1738 = vmatpush2.bf16.msra.mxu0 0
    %1739 = vmatprep.subr.bf16.mxu0 0
    %1740 = vmatpush2.bf16.msra.mxu0 0
    %1741 = vmatprep.subr.bf16.mxu0 0
    %1742 = vmatpush2.bf16.msra.mxu0 0
    %1743 = vmatprep.subr.bf16.mxu0 0
    %1744 = vmatpush2.bf16.msra.mxu0 0
    %1745 = vmatprep.subr.bf16.mxu0 0
    %1746 = vmatpush2.bf16.msra.mxu0 0
    %1747 = vmatprep.subr.bf16.mxu0 0
    %1748 = vmatpush2.bf16.msra.mxu0 0
    %1749 = vmatprep.subr.bf16.mxu0 0
    %1750 = vmatpush2.bf16.msra.mxu0 0
    %1751 = vmatprep.subr.bf16.mxu0 0
    %1752 = vmatpush2.bf16.msra.mxu0 0
    %1753 = vmatprep.mubr.bf16.mxu0 0
    %1754 = vmatmul.mubr.bf16.gmra.mxu0 %v1624
    %v1755 = vpop.f32.mrf.mxu0
    %v1756 = vadd.f32 0.0, %v1755
    %v1757 = vpop.f32.mrf.mxu0
    %v1758 = vadd.f32 0.0, %v1757
    %v1759 = vpop.f32.mrf.mxu0
    %v1760 = vpop.f32.mrf.mxu0
    %1761 = vdwg.mxu0
    %1762 = vmatprep.subr.bf16.mxu0 %v1224
    %1763 = vmatpush1.bf16.msra.mxu0 %v1223
    %1764 = vmatprep.subr.bf16.mxu0 %v1220
    %1765 = vmatpush1.bf16.msra.mxu0 %v1219
    %1766 = vmatprep.subr.bf16.mxu0 %v1216
    %1767 = vmatpush1.bf16.msra.mxu0 %v1215
    %1768 = vmatprep.subr.bf16.mxu0 %v1212
    %1769 = vmatpush1.bf16.msra.mxu0 %v1211
    %1770 = vmatprep.subr.bf16.mxu0 %v1208
    %1771 = vmatpush1.bf16.msra.mxu0 %v1207
    %1772 = vmatprep.subr.bf16.mxu0 %v1204
    %1773 = vmatpush1.bf16.msra.mxu0 %v1203
    %1774 = vmatprep.subr.bf16.mxu0 %v1200
    %1775 = vmatpush1.bf16.msra.mxu0 %v1199
    %1776 = vmatprep.subr.bf16.mxu0 %v1196
    %1777 = vmatpush1.bf16.msra.mxu0 %v1195
    %1778 = vmatprep.subr.bf16.mxu0 0
    %1779 = vmatpush2.bf16.msra.mxu0 0
    %1780 = vmatprep.subr.bf16.mxu0 0
    %1781 = vmatpush2.bf16.msra.mxu0 0
    %1782 = vmatprep.subr.bf16.mxu0 0
    %1783 = vmatpush2.bf16.msra.mxu0 0
    %1784 = vmatprep.subr.bf16.mxu0 0
    %1785 = vmatpush2.bf16.msra.mxu0 0
    %1786 = vmatprep.subr.bf16.mxu0 0
    %1787 = vmatpush2.bf16.msra.mxu0 0
    %1788 = vmatprep.subr.bf16.mxu0 0
    %1789 = vmatpush2.bf16.msra.mxu0 0
    %1790 = vmatprep.subr.bf16.mxu0 0
    %1791 = vmatpush2.bf16.msra.mxu0 0
    %1792 = vmatprep.subr.bf16.mxu0 0
    %1793 = vmatpush2.bf16.msra.mxu0 0
    %1794 = vmatprep.mubr.bf16.mxu0 0
    %1795 = vmatmul.mubr.bf16.gmra.mxu0 %v1624
    %v1796 = vpop.f32.mrf.mxu0
    %v1797 = vadd.f32 0.0, %v1796
    %v1798 = vpop.f32.mrf.mxu0
    %v1799 = vadd.f32 0.0, %v1798
    %v1800 = vpop.f32.mrf.mxu0
    %v1801 = vpop.f32.mrf.mxu0
    %1802 = vdwg.mxu0
    %v1803 = vadd.f32 %v1717, %v1756
    %v1804 = vadd.f32 %v1718, %v1758
    %v1805 = vadd.f32 %v1719, %v1797
    %v1806 = vadd.f32 %v1720, %v1799
    %v1807 = vxor.u32 %v1713, 2147483648
    %v1808 = vxor.u32 %v1714, 2147483648
    %v1809 = vxor.u32 %v1715, 2147483648
    %v1810 = vmul.f32 %v1807, 1.442695
    %v1811 = vpow.pop %v1810
    %v1812 = vmul.f32 %v1808, 1.442695
    %v1813 = vpow.pop %v1812
    %v1814 = vmul.f32 %v1809, 1.442695
    %v1815 = vpow.pop %v1814
    %v1816 = vadd.f32 %v1811, 1.0
    %v1817 = vadd.f32 %v1813, 1.0
    %v1818 = vadd.f32 %v1815, 1.0
    %v1819 = vrcp.pop %v1816
    %v1820 = vmul.f32 1.0, %v1819
    %v1821 = vrcp.pop %v1817
    %v1822 = vmul.f32 1.0, %v1821
    %v1823 = vrcp.pop %v1818
    %v1824 = vmul.f32 1.0, %v1823
    %v1825 = vxor.u32 %v1803, 2147483648
    %v1826 = vxor.u32 %v1804, 2147483648
    %v1827 = vxor.u32 %v1805, 2147483648
    %v1828 = vmul.f32 %v1825, 1.442695
    %v1829 = vpow.pop %v1828
    %v1830 = vmul.f32 %v1826, 1.442695
    %v1831 = vpow.pop %v1830
    %v1832 = vmul.f32 %v1827, 1.442695
    %v1833 = vpow.pop %v1832
    %v1834 = vadd.f32 %v1829, 1.0
    %v1835 = vadd.f32 %v1831, 1.0
    %v1836 = vadd.f32 %v1833, 1.0
    %v1837 = vrcp.pop %v1834
    %v1838 = vmul.f32 1.0, %v1837
    %v1839 = vrcp.pop %v1835
    %v1840 = vmul.f32 1.0, %v1839
    %v1841 = vrcp.pop %v1836
    %v1842 = vmul.f32 1.0, %v1841
    %v1843 = vtanh.pop %v1716
    %v1844 = vtanh.pop %v1806
    %v1845 = vmul.f32 %v1822, %v1615
    %v1846 = vmul.f32 %v1820, %v1843
    %v1847 = vadd.f32 %v1845, %v1846
    %v1848 = vmul.f32 %v1840, %v1618
    %v1849 = vmul.f32 %v1838, %v1844
    %v1850 = vadd.f32 %v1848, %v1849
    %v1851 = vtanh.pop %v1847
    %v1852 = vmul.f32 %v1824, %v1851
    %v1853 = vtanh.pop %v1850
    %v1854 = vmul.f32 %v1842, %v1853
    %v1855 = vpack.c.bf16 %v1852, %v1852
    %v1856 = vpack.c.bf16 %v1854, %v1854
    %1857 = vst [vmem:[#allocation3 + $0x10] sm:$0xf] %v1855
    %1858 = vst [vmem:[#allocation3 + $0x2c] sm:$0xf] %v1856
    %v1859 = vld [vmem:[#allocation2 + $0xc0] sm:$0xff]
    %v1860 = vld [vmem:[#allocation2 + $0xc8] sm:$0xff]
    %v1861 = vld [vmem:[#allocation2 + $0xd0] sm:$0xff]
    %v1862 = vld [vmem:[#allocation2 + $0xd8] sm:$0xff]
    %1863 = vmatprep.subr.bf16.mxu0 %v972
    %1864 = vmatpush1.bf16.msra.mxu0 %v971
    %1865 = vmatprep.subr.bf16.mxu0 %v968
    %1866 = vmatpush1.bf16.msra.mxu0 %v967
    %1867 = vmatprep.subr.bf16.mxu0 %v964
    %1868 = vmatpush1.bf16.msra.mxu0 %v963
    %1869 = vmatprep.subr.bf16.mxu0 %v960
    %1870 = vmatpush1.bf16.msra.mxu0 %v959
    %1871 = vmatprep.subr.bf16.mxu0 %v956
    %1872 = vmatpush1.bf16.msra.mxu0 %v955
    %1873 = vmatprep.subr.bf16.mxu0 %v952
    %1874 = vmatpush1.bf16.msra.mxu0 %v951
    %1875 = vmatprep.subr.bf16.mxu0 %v948
    %1876 = vmatpush1.bf16.msra.mxu0 %v947
    %1877 = vmatprep.subr.bf16.mxu0 %v944
    %1878 = vmatpush1.bf16.msra.mxu0 %v943
    %1879 = vmatprep.subr.bf16.mxu0 0
    %1880 = vmatpush2.bf16.msra.mxu0 0
    %1881 = vmatprep.subr.bf16.mxu0 0
    %1882 = vmatpush2.bf16.msra.mxu0 0
    %1883 = vmatprep.subr.bf16.mxu0 0
    %1884 = vmatpush2.bf16.msra.mxu0 0
    %1885 = vmatprep.subr.bf16.mxu0 0
    %1886 = vmatpush2.bf16.msra.mxu0 0
    %1887 = vmatprep.subr.bf16.mxu0 0
    %1888 = vmatpush2.bf16.msra.mxu0 0
    %1889 = vmatprep.subr.bf16.mxu0 0
    %1890 = vmatpush2.bf16.msra.mxu0 0
    %1891 = vmatprep.subr.bf16.mxu0 0
    %1892 = vmatpush2.bf16.msra.mxu0 0
    %1893 = vmatprep.subr.bf16.mxu0 0
    %1894 = vmatpush2.bf16.msra.mxu0 0
    %1895 = vmatprep.mubr.bf16.mxu0 0
    %1896 = vmatmul.mubr.bf16.gmra.mxu0 %v1855
    %v1897 = vpop.f32.mrf.mxu0
    %v1898 = vadd.f32 0.0, %v1897
    %v1899 = vpop.f32.mrf.mxu0
    %v1900 = vadd.f32 0.0, %v1899
    %v1901 = vpop.f32.mrf.mxu0
    %v1902 = vpop.f32.mrf.mxu0
    %1903 = vdwg.mxu0
    %1904 = vmatprep.subr.bf16.mxu0 %v974
    %1905 = vmatpush1.bf16.msra.mxu0 %v973
    %1906 = vmatprep.subr.bf16.mxu0 %v970
    %1907 = vmatpush1.bf16.msra.mxu0 %v969
    %1908 = vmatprep.subr.bf16.mxu0 %v966
    %1909 = vmatpush1.bf16.msra.mxu0 %v965
    %1910 = vmatprep.subr.bf16.mxu0 %v962
    %1911 = vmatpush1.bf16.msra.mxu0 %v961
    %1912 = vmatprep.subr.bf16.mxu0 %v958
    %1913 = vmatpush1.bf16.msra.mxu0 %v957
    %1914 = vmatprep.subr.bf16.mxu0 %v954
    %1915 = vmatpush1.bf16.msra.mxu0 %v953
    %1916 = vmatprep.subr.bf16.mxu0 %v950
    %1917 = vmatpush1.bf16.msra.mxu0 %v949
    %1918 = vmatprep.subr.bf16.mxu0 %v946
    %1919 = vmatpush1.bf16.msra.mxu0 %v945
    %1920 = vmatprep.subr.bf16.mxu0 0
    %1921 = vmatpush2.bf16.msra.mxu0 0
    %1922 = vmatprep.subr.bf16.mxu0 0
    %1923 = vmatpush2.bf16.msra.mxu0 0
    %1924 = vmatprep.subr.bf16.mxu0 0
    %1925 = vmatpush2.bf16.msra.mxu0 0
    %1926 = vmatprep.subr.bf16.mxu0 0
    %1927 = vmatpush2.bf16.msra.mxu0 0
    %1928 = vmatprep.subr.bf16.mxu0 0
    %1929 = vmatpush2.bf16.msra.mxu0 0
    %1930 = vmatprep.subr.bf16.mxu0 0
    %1931 = vmatpush2.bf16.msra.mxu0 0
    %1932 = vmatprep.subr.bf16.mxu0 0
    %1933 = vmatpush2.bf16.msra.mxu0 0
    %1934 = vmatprep.subr.bf16.mxu0 0
    %1935 = vmatpush2.bf16.msra.mxu0 0
    %1936 = vmatprep.mubr.bf16.mxu0 0
    %1937 = vmatmul.mubr.bf16.gmra.mxu0 %v1855
    %v1938 = vpop.f32.mrf.mxu0
    %v1939 = vadd.f32 0.0, %v1938
    %v1940 = vpop.f32.mrf.mxu0
    %v1941 = vadd.f32 0.0, %v1940
    %v1942 = vpop.f32.mrf.mxu0
    %v1943 = vpop.f32.mrf.mxu0
    %1944 = vdwg.mxu0
    %v1945 = vadd.f32 %v1859, %v1898
    %v1946 = vadd.f32 %v1860, %v1900
    %v1947 = vadd.f32 %v1861, %v1939
    %v1948 = vadd.f32 %v1862, %v1941
    %v1949 = vld [vmem:[#allocation2 + $0x120] sm:$0xff]
    %v1950 = vld [vmem:[#allocation2 + $0x128] sm:$0xff]
    %v1951 = vld [vmem:[#allocation2 + $0x130] sm:$0xff]
    %v1952 = vld [vmem:[#allocation2 + $0x138] sm:$0xff]
    %1953 = vmatprep.subr.bf16.mxu0 %v1222
    %1954 = vmatpush1.bf16.msra.mxu0 %v1221
    %1955 = vmatprep.subr.bf16.mxu0 %v1218
    %1956 = vmatpush1.bf16.msra.mxu0 %v1217
    %1957 = vmatprep.subr.bf16.mxu0 %v1214
    %1958 = vmatpush1.bf16.msra.mxu0 %v1213
    %1959 = vmatprep.subr.bf16.mxu0 %v1210
    %1960 = vmatpush1.bf16.msra.mxu0 %v1209
    %1961 = vmatprep.subr.bf16.mxu0 %v1206
    %1962 = vmatpush1.bf16.msra.mxu0 %v1205
    %1963 = vmatprep.subr.bf16.mxu0 %v1202
    %1964 = vmatpush1.bf16.msra.mxu0 %v1201
    %1965 = vmatprep.subr.bf16.mxu0 %v1198
    %1966 = vmatpush1.bf16.msra.mxu0 %v1197
    %1967 = vmatprep.subr.bf16.mxu0 %v1194
    %1968 = vmatpush1.bf16.msra.mxu0 %v1193
    %1969 = vmatprep.subr.bf16.mxu0 0
    %1970 = vmatpush2.bf16.msra.mxu0 0
    %1971 = vmatprep.subr.bf16.mxu0 0
    %1972 = vmatpush2.bf16.msra.mxu0 0
    %1973 = vmatprep.subr.bf16.mxu0 0
    %1974 = vmatpush2.bf16.msra.mxu0 0
    %1975 = vmatprep.subr.bf16.mxu0 0
    %1976 = vmatpush2.bf16.msra.mxu0 0
    %1977 = vmatprep.subr.bf16.mxu0 0
    %1978 = vmatpush2.bf16.msra.mxu0 0
    %1979 = vmatprep.subr.bf16.mxu0 0
    %1980 = vmatpush2.bf16.msra.mxu0 0
    %1981 = vmatprep.subr.bf16.mxu0 0
    %1982 = vmatpush2.bf16.msra.mxu0 0
    %1983 = vmatprep.subr.bf16.mxu0 0
    %1984 = vmatpush2.bf16.msra.mxu0 0
    %1985 = vmatprep.mubr.bf16.mxu0 0
    %1986 = vmatmul.mubr.bf16.gmra.mxu0 %v1856
    %v1987 = vpop.f32.mrf.mxu0
    %v1988 = vadd.f32 0.0, %v1987
    %v1989 = vpop.f32.mrf.mxu0
    %v1990 = vadd.f32 0.0, %v1989
    %v1991 = vpop.f32.mrf.mxu0
    %v1992 = vpop.f32.mrf.mxu0
    %1993 = vdwg.mxu0
    %1994 = vmatprep.subr.bf16.mxu0 %v1224
    %1995 = vmatpush1.bf16.msra.mxu0 %v1223
    %1996 = vmatprep.subr.bf16.mxu0 %v1220
    %1997 = vmatpush1.bf16.msra.mxu0 %v1219
    %1998 = vmatprep.subr.bf16.mxu0 %v1216
    %1999 = vmatpush1.bf16.msra.mxu0 %v1215
    %2000 = vmatprep.subr.bf16.mxu0 %v1212
    %2001 = vmatpush1.bf16.msra.mxu0 %v1211
    %2002 = vmatprep.subr.bf16.mxu0 %v1208
    %2003 = vmatpush1.bf16.msra.mxu0 %v1207
    %2004 = vmatprep.subr.bf16.mxu0 %v1204
    %2005 = vmatpush1.bf16.msra.mxu0 %v1203
    %2006 = vmatprep.subr.bf16.mxu0 %v1200
    %2007 = vmatpush1.bf16.msra.mxu0 %v1199
    %2008 = vmatprep.subr.bf16.mxu0 %v1196
    %2009 = vmatpush1.bf16.msra.mxu0 %v1195
    %2010 = vmatprep.subr.bf16.mxu0 0
    %2011 = vmatpush2.bf16.msra.mxu0 0
    %2012 = vmatprep.subr.bf16.mxu0 0
    %2013 = vmatpush2.bf16.msra.mxu0 0
    %2014 = vmatprep.subr.bf16.mxu0 0
    %2015 = vmatpush2.bf16.msra.mxu0 0
    %2016 = vmatprep.subr.bf16.mxu0 0
    %2017 = vmatpush2.bf16.msra.mxu0 0
    %2018 = vmatprep.subr.bf16.mxu0 0
    %2019 = vmatpush2.bf16.msra.mxu0 0
    %2020 = vmatprep.subr.bf16.mxu0 0
    %2021 = vmatpush2.bf16.msra.mxu0 0
    %2022 = vmatprep.subr.bf16.mxu0 0
    %2023 = vmatpush2.bf16.msra.mxu0 0
    %2024 = vmatprep.subr.bf16.mxu0 0
    %2025 = vmatpush2.bf16.msra.mxu0 0
    %2026 = vmatprep.mubr.bf16.mxu0 0
    %2027 = vmatmul.mubr.bf16.gmra.mxu0 %v1856
    %v2028 = vpop.f32.mrf.mxu0
    %v2029 = vadd.f32 0.0, %v2028
    %v2030 = vpop.f32.mrf.mxu0
    %v2031 = vadd.f32 0.0, %v2030
    %v2032 = vpop.f32.mrf.mxu0
    %v2033 = vpop.f32.mrf.mxu0
    %2034 = vdwg.mxu0
    %v2035 = vadd.f32 %v1949, %v1988
    %v2036 = vadd.f32 %v1950, %v1990
    %v2037 = vadd.f32 %v1951, %v2029
    %v2038 = vadd.f32 %v1952, %v2031
    %v2039 = vxor.u32 %v1945, 2147483648
    %v2040 = vxor.u32 %v1946, 2147483648
    %v2041 = vxor.u32 %v1947, 2147483648
    %v2042 = vmul.f32 %v2039, 1.442695
    %v2043 = vpow.pop %v2042
    %v2044 = vmul.f32 %v2040, 1.442695
    %v2045 = vpow.pop %v2044
    %v2046 = vmul.f32 %v2041, 1.442695
    %v2047 = vpow.pop %v2046
    %v2048 = vadd.f32 %v2043, 1.0
    %v2049 = vadd.f32 %v2045, 1.0
    %v2050 = vadd.f32 %v2047, 1.0
    %v2051 = vrcp.pop %v2048
    %v2052 = vmul.f32 1.0, %v2051
    %v2053 = vrcp.pop %v2049
    %v2054 = vmul.f32 1.0, %v2053
    %v2055 = vrcp.pop %v2050
    %v2056 = vmul.f32 1.0, %v2055
    %v2057 = vxor.u32 %v2035, 2147483648
    %v2058 = vxor.u32 %v2036, 2147483648
    %v2059 = vxor.u32 %v2037, 2147483648
    %v2060 = vmul.f32 %v2057, 1.442695
    %v2061 = vpow.pop %v2060
    %v2062 = vmul.f32 %v2058, 1.442695
    %v2063 = vpow.pop %v2062
    %v2064 = vmul.f32 %v2059, 1.442695
    %v2065 = vpow.pop %v2064
    %v2066 = vadd.f32 %v2061, 1.0
    %v2067 = vadd.f32 %v2063, 1.0
    %v2068 = vadd.f32 %v2065, 1.0
    %v2069 = vrcp.pop %v2066
    %v2070 = vmul.f32 1.0, %v2069
    %v2071 = vrcp.pop %v2067
    %v2072 = vmul.f32 1.0, %v2071
    %v2073 = vrcp.pop %v2068
    %v2074 = vmul.f32 1.0, %v2073
    %v2075 = vtanh.pop %v1948
    %v2076 = vtanh.pop %v2038
    %v2077 = vmul.f32 %v2054, %v1847
    %v2078 = vmul.f32 %v2052, %v2075
    %v2079 = vadd.f32 %v2077, %v2078
    %v2080 = vmul.f32 %v2072, %v1850
    %v2081 = vmul.f32 %v2070, %v2076
    %v2082 = vadd.f32 %v2080, %v2081
    %v2083 = vtanh.pop %v2079
    %v2084 = vmul.f32 %v2056, %v2083
    %v2085 = vtanh.pop %v2082
    %v2086 = vmul.f32 %v2074, %v2085
    %v2087 = vpack.c.bf16 %v2084, %v2084
    %v2088 = vpack.c.bf16 %v2086, %v2086
    %2089 = vst [vmem:[#allocation3 + $0x18] sm:$0xf] %v2087
    %2090 = vst [vmem:[#allocation3 + $0x24] sm:$0xf] %v2088
    %v2091 = vld [vmem:[#allocation2 + $0x100] sm:$0xff]
    %v2092 = vld [vmem:[#allocation2 + $0x108] sm:$0xff]
    %v2093 = vld [vmem:[#allocation2 + $0x110] sm:$0xff]
    %v2094 = vld [vmem:[#allocation2 + $0x118] sm:$0xff]
    %2095 = vmatprep.subr.bf16.mxu0 %v972
    %2096 = vmatpush1.bf16.msra.mxu0 %v971
    %2097 = vmatprep.subr.bf16.mxu0 %v968
    %2098 = vmatpush1.bf16.msra.mxu0 %v967
    %2099 = vmatprep.subr.bf16.mxu0 %v964
    %2100 = vmatpush1.bf16.msra.mxu0 %v963
    %2101 = vmatprep.subr.bf16.mxu0 %v960
    %2102 = vmatpush1.bf16.msra.mxu0 %v959
    %2103 = vmatprep.subr.bf16.mxu0 %v956
    %2104 = vmatpush1.bf16.msra.mxu0 %v955
    %2105 = vmatprep.subr.bf16.mxu0 %v952
    %2106 = vmatpush1.bf16.msra.mxu0 %v951
    %2107 = vmatprep.subr.bf16.mxu0 %v948
    %2108 = vmatpush1.bf16.msra.mxu0 %v947
    %2109 = vmatprep.subr.bf16.mxu0 %v944
    %2110 = vmatpush1.bf16.msra.mxu0 %v943
    %2111 = vmatprep.subr.bf16.mxu0 0
    %2112 = vmatpush2.bf16.msra.mxu0 0
    %2113 = vmatprep.subr.bf16.mxu0 0
    %2114 = vmatpush2.bf16.msra.mxu0 0
    %2115 = vmatprep.subr.bf16.mxu0 0
    %2116 = vmatpush2.bf16.msra.mxu0 0
    %2117 = vmatprep.subr.bf16.mxu0 0
    %2118 = vmatpush2.bf16.msra.mxu0 0
    %2119 = vmatprep.subr.bf16.mxu0 0
    %2120 = vmatpush2.bf16.msra.mxu0 0
    %2121 = vmatprep.subr.bf16.mxu0 0
    %2122 = vmatpush2.bf16.msra.mxu0 0
    %2123 = vmatprep.subr.bf16.mxu0 0
    %2124 = vmatpush2.bf16.msra.mxu0 0
    %2125 = vmatprep.subr.bf16.mxu0 0
    %2126 = vmatpush2.bf16.msra.mxu0 0
    %2127 = vmatprep.mubr.bf16.mxu0 0
    %2128 = vmatmul.mubr.bf16.gmra.mxu0 %v2087
    %v2129 = vpop.f32.mrf.mxu0
    %v2130 = vadd.f32 0.0, %v2129
    %v2131 = vpop.f32.mrf.mxu0
    %v2132 = vadd.f32 0.0, %v2131
    %v2133 = vpop.f32.mrf.mxu0
    %v2134 = vpop.f32.mrf.mxu0
    %2135 = vdwg.mxu0
    %2136 = vmatprep.subr.bf16.mxu0 %v974
    %2137 = vmatpush1.bf16.msra.mxu0 %v973
    %2138 = vmatprep.subr.bf16.mxu0 %v970
    %2139 = vmatpush1.bf16.msra.mxu0 %v969
    %2140 = vmatprep.subr.bf16.mxu0 %v966
    %2141 = vmatpush1.bf16.msra.mxu0 %v965
    %2142 = vmatprep.subr.bf16.mxu0 %v962
    %2143 = vmatpush1.bf16.msra.mxu0 %v961
    %2144 = vmatprep.subr.bf16.mxu0 %v958
    %2145 = vmatpush1.bf16.msra.mxu0 %v957
    %2146 = vmatprep.subr.bf16.mxu0 %v954
    %2147 = vmatpush1.bf16.msra.mxu0 %v953
    %2148 = vmatprep.subr.bf16.mxu0 %v950
    %2149 = vmatpush1.bf16.msra.mxu0 %v949
    %2150 = vmatprep.subr.bf16.mxu0 %v946
    %2151 = vmatpush1.bf16.msra.mxu0 %v945
    %2152 = vmatprep.subr.bf16.mxu0 0
    %2153 = vmatpush2.bf16.msra.mxu0 0
    %2154 = vmatprep.subr.bf16.mxu0 0
    %2155 = vmatpush2.bf16.msra.mxu0 0
    %2156 = vmatprep.subr.bf16.mxu0 0
    %2157 = vmatpush2.bf16.msra.mxu0 0
    %2158 = vmatprep.subr.bf16.mxu0 0
    %2159 = vmatpush2.bf16.msra.mxu0 0
    %2160 = vmatprep.subr.bf16.mxu0 0
    %2161 = vmatpush2.bf16.msra.mxu0 0
    %2162 = vmatprep.subr.bf16.mxu0 0
    %2163 = vmatpush2.bf16.msra.mxu0 0
    %2164 = vmatprep.subr.bf16.mxu0 0
    %2165 = vmatpush2.bf16.msra.mxu0 0
    %2166 = vmatprep.subr.bf16.mxu0 0
    %2167 = vmatpush2.bf16.msra.mxu0 0
    %2168 = vmatprep.mubr.bf16.mxu0 0
    %2169 = vmatmul.mubr.bf16.gmra.mxu0 %v2087
    %v2170 = vpop.f32.mrf.mxu0
    %v2171 = vadd.f32 0.0, %v2170
    %v2172 = vpop.f32.mrf.mxu0
    %v2173 = vadd.f32 0.0, %v2172
    %v2174 = vpop.f32.mrf.mxu0
    %v2175 = vpop.f32.mrf.mxu0
    %2176 = vdwg.mxu0
    %v2177 = vadd.f32 %v2091, %v2130
    %v2178 = vadd.f32 %v2092, %v2132
    %v2179 = vadd.f32 %v2093, %v2171
    %v2180 = vadd.f32 %v2094, %v2173
    %v2181 = vld [vmem:[#allocation2 + $0xe0] sm:$0xff]
    %v2182 = vld [vmem:[#allocation2 + $0xe8] sm:$0xff]
    %v2183 = vld [vmem:[#allocation2 + $0xf0] sm:$0xff]
    %v2184 = vld [vmem:[#allocation2 + $0xf8] sm:$0xff]
    %2185 = vmatprep.subr.bf16.mxu0 %v1222
    %2186 = vmatpush1.bf16.msra.mxu0 %v1221
    %2187 = vmatprep.subr.bf16.mxu0 %v1218
    %2188 = vmatpush1.bf16.msra.mxu0 %v1217
    %2189 = vmatprep.subr.bf16.mxu0 %v1214
    %2190 = vmatpush1.bf16.msra.mxu0 %v1213
    %2191 = vmatprep.subr.bf16.mxu0 %v1210
    %2192 = vmatpush1.bf16.msra.mxu0 %v1209
    %2193 = vmatprep.subr.bf16.mxu0 %v1206
    %2194 = vmatpush1.bf16.msra.mxu0 %v1205
    %2195 = vmatprep.subr.bf16.mxu0 %v1202
    %2196 = vmatpush1.bf16.msra.mxu0 %v1201
    %2197 = vmatprep.subr.bf16.mxu0 %v1198
    %2198 = vmatpush1.bf16.msra.mxu0 %v1197
    %2199 = vmatprep.subr.bf16.mxu0 %v1194
    %2200 = vmatpush1.bf16.msra.mxu0 %v1193
    %2201 = vmatprep.subr.bf16.mxu0 0
    %2202 = vmatpush2.bf16.msra.mxu0 0
    %2203 = vmatprep.subr.bf16.mxu0 0
    %2204 = vmatpush2.bf16.msra.mxu0 0
    %2205 = vmatprep.subr.bf16.mxu0 0
    %2206 = vmatpush2.bf16.msra.mxu0 0
    %2207 = vmatprep.subr.bf16.mxu0 0
    %2208 = vmatpush2.bf16.msra.mxu0 0
    %2209 = vmatprep.subr.bf16.mxu0 0
    %2210 = vmatpush2.bf16.msra.mxu0 0
    %2211 = vmatprep.subr.bf16.mxu0 0
    %2212 = vmatpush2.bf16.msra.mxu0 0
    %2213 = vmatprep.subr.bf16.mxu0 0
    %2214 = vmatpush2.bf16.msra.mxu0 0
    %2215 = vmatprep.subr.bf16.mxu0 0
    %2216 = vmatpush2.bf16.msra.mxu0 0
    %2217 = vmatprep.mubr.bf16.mxu0 0
    %2218 = vmatmul.mubr.bf16.gmra.mxu0 %v2088
    %v2219 = vpop.f32.mrf.mxu0
    %v2220 = vadd.f32 0.0, %v2219
    %v2221 = vpop.f32.mrf.mxu0
    %v2222 = vadd.f32 0.0, %v2221
    %v2223 = vpop.f32.mrf.mxu0
    %v2224 = vpop.f32.mrf.mxu0
    %2225 = vdwg.mxu0
    %2226 = vmatprep.subr.bf16.mxu0 %v1224
    %2227 = vmatpush1.bf16.msra.mxu0 %v1223
    %2228 = vmatprep.subr.bf16.mxu0 %v1220
    %2229 = vmatpush1.bf16.msra.mxu0 %v1219
    %2230 = vmatprep.subr.bf16.mxu0 %v1216
    %2231 = vmatpush1.bf16.msra.mxu0 %v1215
    %2232 = vmatprep.subr.bf16.mxu0 %v1212
    %2233 = vmatpush1.bf16.msra.mxu0 %v1211
    %2234 = vmatprep.subr.bf16.mxu0 %v1208
    %2235 = vmatpush1.bf16.msra.mxu0 %v1207
    %2236 = vmatprep.subr.bf16.mxu0 %v1204
    %2237 = vmatpush1.bf16.msra.mxu0 %v1203
    %2238 = vmatprep.subr.bf16.mxu0 %v1200
    %2239 = vmatpush1.bf16.msra.mxu0 %v1199
    %2240 = vmatprep.subr.bf16.mxu0 %v1196
    %2241 = vmatpush1.bf16.msra.mxu0 %v1195
    %2242 = vmatprep.subr.bf16.mxu0 0
    %2243 = vmatpush2.bf16.msra.mxu0 0
    %2244 = vmatprep.subr.bf16.mxu0 0
    %2245 = vmatpush2.bf16.msra.mxu0 0
    %2246 = vmatprep.subr.bf16.mxu0 0
    %2247 = vmatpush2.bf16.msra.mxu0 0
    %2248 = vmatprep.subr.bf16.mxu0 0
    %2249 = vmatpush2.bf16.msra.mxu0 0
    %2250 = vmatprep.subr.bf16.mxu0 0
    %2251 = vmatpush2.bf16.msra.mxu0 0
    %2252 = vmatprep.subr.bf16.mxu0 0
    %2253 = vmatpush2.bf16.msra.mxu0 0
    %2254 = vmatprep.subr.bf16.mxu0 0
    %2255 = vmatpush2.bf16.msra.mxu0 0
    %2256 = vmatprep.subr.bf16.mxu0 0
    %2257 = vmatpush2.bf16.msra.mxu0 0
    %2258 = vmatprep.mubr.bf16.mxu0 0
    %2259 = vmatmul.mubr.bf16.gmra.mxu0 %v2088
    %v2260 = vpop.f32.mrf.mxu0
    %v2261 = vadd.f32 0.0, %v2260
    %v2262 = vpop.f32.mrf.mxu0
    %v2263 = vadd.f32 0.0, %v2262
    %v2264 = vpop.f32.mrf.mxu0
    %v2265 = vpop.f32.mrf.mxu0
    %2266 = vdwg.mxu0
    %v2267 = vadd.f32 %v2181, %v2220
    %v2268 = vadd.f32 %v2182, %v2222
    %v2269 = vadd.f32 %v2183, %v2261
    %v2270 = vadd.f32 %v2184, %v2263
    %v2271 = vxor.u32 %v2177, 2147483648
    %v2272 = vxor.u32 %v2178, 2147483648
    %v2273 = vxor.u32 %v2179, 2147483648
    %v2274 = vmul.f32 %v2271, 1.442695
    %v2275 = vpow.pop %v2274
    %v2276 = vmul.f32 %v2272, 1.442695
    %v2277 = vpow.pop %v2276
    %v2278 = vmul.f32 %v2273, 1.442695
    %v2279 = vpow.pop %v2278
    %v2280 = vadd.f32 %v2275, 1.0
    %v2281 = vadd.f32 %v2277, 1.0
    %v2282 = vadd.f32 %v2279, 1.0
    %v2283 = vrcp.pop %v2280
    %v2284 = vmul.f32 1.0, %v2283
    %v2285 = vrcp.pop %v2281
    %v2286 = vmul.f32 1.0, %v2285
    %v2287 = vrcp.pop %v2282
    %v2288 = vmul.f32 1.0, %v2287
    %v2289 = vxor.u32 %v2267, 2147483648
    %v2290 = vxor.u32 %v2268, 2147483648
    %v2291 = vxor.u32 %v2269, 2147483648
    %v2292 = vmul.f32 %v2289, 1.442695
    %v2293 = vpow.pop %v2292
    %v2294 = vmul.f32 %v2290, 1.442695
    %v2295 = vpow.pop %v2294
    %v2296 = vmul.f32 %v2291, 1.442695
    %v2297 = vpow.pop %v2296
    %v2298 = vadd.f32 %v2293, 1.0
    %v2299 = vadd.f32 %v2295, 1.0
    %v2300 = vadd.f32 %v2297, 1.0
    %v2301 = vrcp.pop %v2298
    %v2302 = vmul.f32 1.0, %v2301
    %v2303 = vrcp.pop %v2299
    %v2304 = vmul.f32 1.0, %v2303
    %v2305 = vrcp.pop %v2300
    %v2306 = vmul.f32 1.0, %v2305
    %v2307 = vtanh.pop %v2180
    %v2308 = vtanh.pop %v2270
    %v2309 = vmul.f32 %v2286, %v2079
    %v2310 = vmul.f32 %v2284, %v2307
    %v2311 = vadd.f32 %v2309, %v2310
    %v2312 = vmul.f32 %v2304, %v2082
    %v2313 = vmul.f32 %v2302, %v2308
    %v2314 = vadd.f32 %v2312, %v2313
    %v2315 = vtanh.pop %v2311
    %v2316 = vmul.f32 %v2288, %v2315
    %v2317 = vtanh.pop %v2314
    %v2318 = vmul.f32 %v2306, %v2317
    %v2319 = vpack.c.bf16 %v2316, %v2316
    %v2320 = vpack.c.bf16 %v2318, %v2318
    %2321 = vst [vmem:[#allocation3 + $0x20] sm:$0xf] %v2319
    %2322 = vst [vmem:[#allocation3 + $0x1c] sm:$0xf] %v2320
    %v2323 = vld [vmem:[#allocation2 + $0x140] sm:$0xff]
    %v2324 = vld [vmem:[#allocation2 + $0x148] sm:$0xff]
    %v2325 = vld [vmem:[#allocation2 + $0x150] sm:$0xff]
    %v2326 = vld [vmem:[#allocation2 + $0x158] sm:$0xff]
    %2327 = vmatprep.subr.bf16.mxu0 %v972
    %2328 = vmatpush1.bf16.msra.mxu0 %v971
    %2329 = vmatprep.subr.bf16.mxu0 %v968
    %2330 = vmatpush1.bf16.msra.mxu0 %v967
    %2331 = vmatprep.subr.bf16.mxu0 %v964
    %2332 = vmatpush1.bf16.msra.mxu0 %v963
    %2333 = vmatprep.subr.bf16.mxu0 %v960
    %2334 = vmatpush1.bf16.msra.mxu0 %v959
    %2335 = vmatprep.subr.bf16.mxu0 %v956
    %2336 = vmatpush1.bf16.msra.mxu0 %v955
    %2337 = vmatprep.subr.bf16.mxu0 %v952
    %2338 = vmatpush1.bf16.msra.mxu0 %v951
    %2339 = vmatprep.subr.bf16.mxu0 %v948
    %2340 = vmatpush1.bf16.msra.mxu0 %v947
    %2341 = vmatprep.subr.bf16.mxu0 %v944
    %2342 = vmatpush1.bf16.msra.mxu0 %v943
    %2343 = vmatprep.subr.bf16.mxu0 0
    %2344 = vmatpush2.bf16.msra.mxu0 0
    %2345 = vmatprep.subr.bf16.mxu0 0
    %2346 = vmatpush2.bf16.msra.mxu0 0
    %2347 = vmatprep.subr.bf16.mxu0 0
    %2348 = vmatpush2.bf16.msra.mxu0 0
    %2349 = vmatprep.subr.bf16.mxu0 0
    %2350 = vmatpush2.bf16.msra.mxu0 0
    %2351 = vmatprep.subr.bf16.mxu0 0
    %2352 = vmatpush2.bf16.msra.mxu0 0
    %2353 = vmatprep.subr.bf16.mxu0 0
    %2354 = vmatpush2.bf16.msra.mxu0 0
    %2355 = vmatprep.subr.bf16.mxu0 0
    %2356 = vmatpush2.bf16.msra.mxu0 0
    %2357 = vmatprep.subr.bf16.mxu0 0
    %2358 = vmatpush2.bf16.msra.mxu0 0
    %2359 = vmatprep.mubr.bf16.mxu0 0
    %2360 = vmatmul.mubr.bf16.gmra.mxu0 %v2319
    %v2361 = vpop.f32.mrf.mxu0
    %v2362 = vadd.f32 0.0, %v2361
    %v2363 = vpop.f32.mrf.mxu0
    %v2364 = vadd.f32 0.0, %v2363
    %v2365 = vpop.f32.mrf.mxu0
    %v2366 = vpop.f32.mrf.mxu0
    %2367 = vdwg.mxu0
    %2368 = vmatprep.subr.bf16.mxu0 %v974
    %2369 = vmatpush1.bf16.msra.mxu0 %v973
    %2370 = vmatprep.subr.bf16.mxu0 %v970
    %2371 = vmatpush1.bf16.msra.mxu0 %v969
    %2372 = vmatprep.subr.bf16.mxu0 %v966
    %2373 = vmatpush1.bf16.msra.mxu0 %v965
    %2374 = vmatprep.subr.bf16.mxu0 %v962
    %2375 = vmatpush1.bf16.msra.mxu0 %v961
    %2376 = vmatprep.subr.bf16.mxu0 %v958
    %2377 = vmatpush1.bf16.msra.mxu0 %v957
    %2378 = vmatprep.subr.bf16.mxu0 %v954
    %2379 = vmatpush1.bf16.msra.mxu0 %v953
    %2380 = vmatprep.subr.bf16.mxu0 %v950
    %2381 = vmatpush1.bf16.msra.mxu0 %v949
    %2382 = vmatprep.subr.bf16.mxu0 %v946
    %2383 = vmatpush1.bf16.msra.mxu0 %v945
    %2384 = vmatprep.subr.bf16.mxu0 0
    %2385 = vmatpush2.bf16.msra.mxu0 0
    %2386 = vmatprep.subr.bf16.mxu0 0
    %2387 = vmatpush2.bf16.msra.mxu0 0
    %2388 = vmatprep.subr.bf16.mxu0 0
    %2389 = vmatpush2.bf16.msra.mxu0 0
    %2390 = vmatprep.subr.bf16.mxu0 0
    %2391 = vmatpush2.bf16.msra.mxu0 0
    %2392 = vmatprep.subr.bf16.mxu0 0
    %2393 = vmatpush2.bf16.msra.mxu0 0
    %2394 = vmatprep.subr.bf16.mxu0 0
    %2395 = vmatpush2.bf16.msra.mxu0 0
    %2396 = vmatprep.subr.bf16.mxu0 0
    %2397 = vmatpush2.bf16.msra.mxu0 0
    %2398 = vmatprep.subr.bf16.mxu0 0
    %2399 = vmatpush2.bf16.msra.mxu0 0
    %2400 = vmatprep.mubr.bf16.mxu0 0
    %2401 = vmatmul.mubr.bf16.gmra.mxu0 %v2319
    %v2402 = vpop.f32.mrf.mxu0
    %v2403 = vadd.f32 0.0, %v2402
    %v2404 = vpop.f32.mrf.mxu0
    %v2405 = vadd.f32 0.0, %v2404
    %v2406 = vpop.f32.mrf.mxu0
    %v2407 = vpop.f32.mrf.mxu0
    %2408 = vdwg.mxu0
    %v2409 = vadd.f32 %v2323, %v2362
    %v2410 = vadd.f32 %v2324, %v2364
    %v2411 = vadd.f32 %v2325, %v2403
    %v2412 = vadd.f32 %v2326, %v2405
    %v2413 = vld [vmem:[#allocation2 + $0xa0] sm:$0xff]
    %v2414 = vld [vmem:[#allocation2 + $0xa8] sm:$0xff]
    %v2415 = vld [vmem:[#allocation2 + $0xb0] sm:$0xff]
    %v2416 = vld [vmem:[#allocation2 + $0xb8] sm:$0xff]
    %2417 = vmatprep.subr.bf16.mxu0 %v1222
    %2418 = vmatpush1.bf16.msra.mxu0 %v1221
    %2419 = vmatprep.subr.bf16.mxu0 %v1218
    %2420 = vmatpush1.bf16.msra.mxu0 %v1217
    %2421 = vmatprep.subr.bf16.mxu0 %v1214
    %2422 = vmatpush1.bf16.msra.mxu0 %v1213
    %2423 = vmatprep.subr.bf16.mxu0 %v1210
    %2424 = vmatpush1.bf16.msra.mxu0 %v1209
    %2425 = vmatprep.subr.bf16.mxu0 %v1206
    %2426 = vmatpush1.bf16.msra.mxu0 %v1205
    %2427 = vmatprep.subr.bf16.mxu0 %v1202
    %2428 = vmatpush1.bf16.msra.mxu0 %v1201
    %2429 = vmatprep.subr.bf16.mxu0 %v1198
    %2430 = vmatpush1.bf16.msra.mxu0 %v1197
    %2431 = vmatprep.subr.bf16.mxu0 %v1194
    %2432 = vmatpush1.bf16.msra.mxu0 %v1193
    %2433 = vmatprep.subr.bf16.mxu0 0
    %2434 = vmatpush2.bf16.msra.mxu0 0
    %2435 = vmatprep.subr.bf16.mxu0 0
    %2436 = vmatpush2.bf16.msra.mxu0 0
    %2437 = vmatprep.subr.bf16.mxu0 0
    %2438 = vmatpush2.bf16.msra.mxu0 0
    %2439 = vmatprep.subr.bf16.mxu0 0
    %2440 = vmatpush2.bf16.msra.mxu0 0
    %2441 = vmatprep.subr.bf16.mxu0 0
    %2442 = vmatpush2.bf16.msra.mxu0 0
    %2443 = vmatprep.subr.bf16.mxu0 0
    %2444 = vmatpush2.bf16.msra.mxu0 0
    %2445 = vmatprep.subr.bf16.mxu0 0
    %2446 = vmatpush2.bf16.msra.mxu0 0
    %2447 = vmatprep.subr.bf16.mxu0 0
    %2448 = vmatpush2.bf16.msra.mxu0 0
    %2449 = vmatprep.mubr.bf16.mxu0 0
    %2450 = vmatmul.mubr.bf16.gmra.mxu0 %v2320
    %v2451 = vpop.f32.mrf.mxu0
    %v2452 = vadd.f32 0.0, %v2451
    %v2453 = vpop.f32.mrf.mxu0
    %v2454 = vadd.f32 0.0, %v2453
    %v2455 = vpop.f32.mrf.mxu0
    %v2456 = vpop.f32.mrf.mxu0
    %2457 = vdwg.mxu0
    %2458 = vmatprep.subr.bf16.mxu0 %v1224
    %2459 = vmatpush1.bf16.msra.mxu0 %v1223
    %2460 = vmatprep.subr.bf16.mxu0 %v1220
    %2461 = vmatpush1.bf16.msra.mxu0 %v1219
    %2462 = vmatprep.subr.bf16.mxu0 %v1216
    %2463 = vmatpush1.bf16.msra.mxu0 %v1215
    %2464 = vmatprep.subr.bf16.mxu0 %v1212
    %2465 = vmatpush1.bf16.msra.mxu0 %v1211
    %2466 = vmatprep.subr.bf16.mxu0 %v1208
    %2467 = vmatpush1.bf16.msra.mxu0 %v1207
    %2468 = vmatprep.subr.bf16.mxu0 %v1204
    %2469 = vmatpush1.bf16.msra.mxu0 %v1203
    %2470 = vmatprep.subr.bf16.mxu0 %v1200
    %2471 = vmatpush1.bf16.msra.mxu0 %v1199
    %2472 = vmatprep.subr.bf16.mxu0 %v1196
    %2473 = vmatpush1.bf16.msra.mxu0 %v1195
    %2474 = vmatprep.subr.bf16.mxu0 0
    %2475 = vmatpush2.bf16.msra.mxu0 0
    %2476 = vmatprep.subr.bf16.mxu0 0
    %2477 = vmatpush2.bf16.msra.mxu0 0
    %2478 = vmatprep.subr.bf16.mxu0 0
    %2479 = vmatpush2.bf16.msra.mxu0 0
    %2480 = vmatprep.subr.bf16.mxu0 0
    %2481 = vmatpush2.bf16.msra.mxu0 0
    %2482 = vmatprep.subr.bf16.mxu0 0
    %2483 = vmatpush2.bf16.msra.mxu0 0
    %2484 = vmatprep.subr.bf16.mxu0 0
    %2485 = vmatpush2.bf16.msra.mxu0 0
    %2486 = vmatprep.subr.bf16.mxu0 0
    %2487 = vmatpush2.bf16.msra.mxu0 0
    %2488 = vmatprep.subr.bf16.mxu0 0
    %2489 = vmatpush2.bf16.msra.mxu0 0
    %2490 = vmatprep.mubr.bf16.mxu0 0
    %2491 = vmatmul.mubr.bf16.gmra.mxu0 %v2320
    %v2492 = vpop.f32.mrf.mxu0
    %v2493 = vadd.f32 0.0, %v2492
    %v2494 = vpop.f32.mrf.mxu0
    %v2495 = vadd.f32 0.0, %v2494
    %v2496 = vpop.f32.mrf.mxu0
    %v2497 = vpop.f32.mrf.mxu0
    %2498 = vdwg.mxu0
    %v2499 = vadd.f32 %v2413, %v2452
    %v2500 = vadd.f32 %v2414, %v2454
    %v2501 = vadd.f32 %v2415, %v2493
    %v2502 = vadd.f32 %v2416, %v2495
    %v2503 = vxor.u32 %v2409, 2147483648
    %v2504 = vxor.u32 %v2410, 2147483648
    %v2505 = vxor.u32 %v2411, 2147483648
    %v2506 = vmul.f32 %v2503, 1.442695
    %v2507 = vpow.pop %v2506
    %v2508 = vmul.f32 %v2504, 1.442695
    %v2509 = vpow.pop %v2508
    %v2510 = vmul.f32 %v2505, 1.442695
    %v2511 = vpow.pop %v2510
    %v2512 = vadd.f32 %v2507, 1.0
    %v2513 = vadd.f32 %v2509, 1.0
    %v2514 = vadd.f32 %v2511, 1.0
    %v2515 = vrcp.pop %v2512
    %v2516 = vmul.f32 1.0, %v2515
    %v2517 = vrcp.pop %v2513
    %v2518 = vmul.f32 1.0, %v2517
    %v2519 = vrcp.pop %v2514
    %v2520 = vmul.f32 1.0, %v2519
    %v2521 = vxor.u32 %v2499, 2147483648
    %v2522 = vxor.u32 %v2500, 2147483648
    %v2523 = vxor.u32 %v2501, 2147483648
    %v2524 = vmul.f32 %v2521, 1.442695
    %v2525 = vpow.pop %v2524
    %v2526 = vmul.f32 %v2522, 1.442695
    %v2527 = vpow.pop %v2526
    %v2528 = vmul.f32 %v2523, 1.442695
    %v2529 = vpow.pop %v2528
    %v2530 = vadd.f32 %v2525, 1.0
    %v2531 = vadd.f32 %v2527, 1.0
    %v2532 = vadd.f32 %v2529, 1.0
    %v2533 = vrcp.pop %v2530
    %v2534 = vmul.f32 1.0, %v2533
    %v2535 = vrcp.pop %v2531
    %v2536 = vmul.f32 1.0, %v2535
    %v2537 = vrcp.pop %v2532
    %v2538 = vmul.f32 1.0, %v2537
    %v2539 = vtanh.pop %v2412
    %v2540 = vtanh.pop %v2502
    %v2541 = vmul.f32 %v2518, %v2311
    %v2542 = vmul.f32 %v2516, %v2539
    %v2543 = vadd.f32 %v2541, %v2542
    %v2544 = vmul.f32 %v2536, %v2314
    %v2545 = vmul.f32 %v2534, %v2540
    %v2546 = vadd.f32 %v2544, %v2545
    %v2547 = vtanh.pop %v2543
    %v2548 = vmul.f32 %v2520, %v2547
    %v2549 = vtanh.pop %v2546
    %v2550 = vmul.f32 %v2538, %v2549
    %v2551 = vpack.c.bf16 %v2548, %v2548
    %v2552 = vpack.c.bf16 %v2550, %v2550
    %2553 = vst [vmem:[#allocation3 + $0x28] sm:$0xf] %v2551
    %2554 = vst [vmem:[#allocation3 + $0x14] sm:$0xf] %v2552
    %v2555 = vld [vmem:[#allocation2 + $0x180] sm:$0xff]
    %v2556 = vld [vmem:[#allocation2 + $0x188] sm:$0xff]
    %v2557 = vld [vmem:[#allocation2 + $0x190] sm:$0xff]
    %v2558 = vld [vmem:[#allocation2 + $0x198] sm:$0xff]
    %2559 = vmatprep.subr.bf16.mxu0 %v972
    %2560 = vmatpush1.bf16.msra.mxu0 %v971
    %2561 = vmatprep.subr.bf16.mxu0 %v968
    %2562 = vmatpush1.bf16.msra.mxu0 %v967
    %2563 = vmatprep.subr.bf16.mxu0 %v964
    %2564 = vmatpush1.bf16.msra.mxu0 %v963
    %2565 = vmatprep.subr.bf16.mxu0 %v960
    %2566 = vmatpush1.bf16.msra.mxu0 %v959
    %2567 = vmatprep.subr.bf16.mxu0 %v956
    %2568 = vmatpush1.bf16.msra.mxu0 %v955
    %2569 = vmatprep.subr.bf16.mxu0 %v952
    %2570 = vmatpush1.bf16.msra.mxu0 %v951
    %2571 = vmatprep.subr.bf16.mxu0 %v948
    %2572 = vmatpush1.bf16.msra.mxu0 %v947
    %2573 = vmatprep.subr.bf16.mxu0 %v944
    %2574 = vmatpush1.bf16.msra.mxu0 %v943
    %2575 = vmatprep.subr.bf16.mxu0 0
    %2576 = vmatpush2.bf16.msra.mxu0 0
    %2577 = vmatprep.subr.bf16.mxu0 0
    %2578 = vmatpush2.bf16.msra.mxu0 0
    %2579 = vmatprep.subr.bf16.mxu0 0
    %2580 = vmatpush2.bf16.msra.mxu0 0
    %2581 = vmatprep.subr.bf16.mxu0 0
    %2582 = vmatpush2.bf16.msra.mxu0 0
    %2583 = vmatprep.subr.bf16.mxu0 0
    %2584 = vmatpush2.bf16.msra.mxu0 0
    %2585 = vmatprep.subr.bf16.mxu0 0
    %2586 = vmatpush2.bf16.msra.mxu0 0
    %2587 = vmatprep.subr.bf16.mxu0 0
    %2588 = vmatpush2.bf16.msra.mxu0 0
    %2589 = vmatprep.subr.bf16.mxu0 0
    %2590 = vmatpush2.bf16.msra.mxu0 0
    %2591 = vmatprep.mubr.bf16.mxu0 0
    %2592 = vmatmul.mubr.bf16.gmra.mxu0 %v2551
    %v2593 = vpop.f32.mrf.mxu0
    %v2594 = vadd.f32 0.0, %v2593
    %v2595 = vpop.f32.mrf.mxu0
    %v2596 = vadd.f32 0.0, %v2595
    %v2597 = vpop.f32.mrf.mxu0
    %v2598 = vpop.f32.mrf.mxu0
    %2599 = vdwg.mxu0
    %2600 = vmatprep.subr.bf16.mxu0 %v974
    %2601 = vmatpush1.bf16.msra.mxu0 %v973
    %2602 = vmatprep.subr.bf16.mxu0 %v970
    %2603 = vmatpush1.bf16.msra.mxu0 %v969
    %2604 = vmatprep.subr.bf16.mxu0 %v966
    %2605 = vmatpush1.bf16.msra.mxu0 %v965
    %2606 = vmatprep.subr.bf16.mxu0 %v962
    %2607 = vmatpush1.bf16.msra.mxu0 %v961
    %2608 = vmatprep.subr.bf16.mxu0 %v958
    %2609 = vmatpush1.bf16.msra.mxu0 %v957
    %2610 = vmatprep.subr.bf16.mxu0 %v954
    %2611 = vmatpush1.bf16.msra.mxu0 %v953
    %2612 = vmatprep.subr.bf16.mxu0 %v950
    %2613 = vmatpush1.bf16.msra.mxu0 %v949
    %2614 = vmatprep.subr.bf16.mxu0 %v946
    %2615 = vmatpush1.bf16.msra.mxu0 %v945
    %2616 = vmatprep.subr.bf16.mxu0 0
    %2617 = vmatpush2.bf16.msra.mxu0 0
    %2618 = vmatprep.subr.bf16.mxu0 0
    %2619 = vmatpush2.bf16.msra.mxu0 0
    %2620 = vmatprep.subr.bf16.mxu0 0
    %2621 = vmatpush2.bf16.msra.mxu0 0
    %2622 = vmatprep.subr.bf16.mxu0 0
    %2623 = vmatpush2.bf16.msra.mxu0 0
    %2624 = vmatprep.subr.bf16.mxu0 0
    %2625 = vmatpush2.bf16.msra.mxu0 0
    %2626 = vmatprep.subr.bf16.mxu0 0
    %2627 = vmatpush2.bf16.msra.mxu0 0
    %2628 = vmatprep.subr.bf16.mxu0 0
    %2629 = vmatpush2.bf16.msra.mxu0 0
    %2630 = vmatprep.subr.bf16.mxu0 0
    %2631 = vmatpush2.bf16.msra.mxu0 0
    %2632 = vmatprep.mubr.bf16.mxu0 0
    %2633 = vmatmul.mubr.bf16.gmra.mxu0 %v2551
    %v2634 = vpop.f32.mrf.mxu0
    %v2635 = vadd.f32 0.0, %v2634
    %v2636 = vpop.f32.mrf.mxu0
    %v2637 = vadd.f32 0.0, %v2636
    %v2638 = vpop.f32.mrf.mxu0
    %v2639 = vpop.f32.mrf.mxu0
    %2640 = vdwg.mxu0
    %v2641 = vadd.f32 %v2555, %v2594
    %v2642 = vadd.f32 %v2556, %v2596
    %v2643 = vadd.f32 %v2557, %v2635
    %v2644 = vadd.f32 %v2558, %v2637
    %v2645 = vld [vmem:[#allocation2 + $0x60] sm:$0xff]
    %v2646 = vld [vmem:[#allocation2 + $0x68] sm:$0xff]
    %v2647 = vld [vmem:[#allocation2 + $0x70] sm:$0xff]
    %v2648 = vld [vmem:[#allocation2 + $0x78] sm:$0xff]
    %2649 = vmatprep.subr.bf16.mxu0 %v1222
    %2650 = vmatpush1.bf16.msra.mxu0 %v1221
    %2651 = vmatprep.subr.bf16.mxu0 %v1218
    %2652 = vmatpush1.bf16.msra.mxu0 %v1217
    %2653 = vmatprep.subr.bf16.mxu0 %v1214
    %2654 = vmatpush1.bf16.msra.mxu0 %v1213
    %2655 = vmatprep.subr.bf16.mxu0 %v1210
    %2656 = vmatpush1.bf16.msra.mxu0 %v1209
    %2657 = vmatprep.subr.bf16.mxu0 %v1206
    %2658 = vmatpush1.bf16.msra.mxu0 %v1205
    %2659 = vmatprep.subr.bf16.mxu0 %v1202
    %2660 = vmatpush1.bf16.msra.mxu0 %v1201
    %2661 = vmatprep.subr.bf16.mxu0 %v1198
    %2662 = vmatpush1.bf16.msra.mxu0 %v1197
    %2663 = vmatprep.subr.bf16.mxu0 %v1194
    %2664 = vmatpush1.bf16.msra.mxu0 %v1193
    %2665 = vmatprep.subr.bf16.mxu0 0
    %2666 = vmatpush2.bf16.msra.mxu0 0
    %2667 = vmatprep.subr.bf16.mxu0 0
    %2668 = vmatpush2.bf16.msra.mxu0 0
    %2669 = vmatprep.subr.bf16.mxu0 0
    %2670 = vmatpush2.bf16.msra.mxu0 0
    %2671 = vmatprep.subr.bf16.mxu0 0
    %2672 = vmatpush2.bf16.msra.mxu0 0
    %2673 = vmatprep.subr.bf16.mxu0 0
    %2674 = vmatpush2.bf16.msra.mxu0 0
    %2675 = vmatprep.subr.bf16.mxu0 0
    %2676 = vmatpush2.bf16.msra.mxu0 0
    %2677 = vmatprep.subr.bf16.mxu0 0
    %2678 = vmatpush2.bf16.msra.mxu0 0
    %2679 = vmatprep.subr.bf16.mxu0 0
    %2680 = vmatpush2.bf16.msra.mxu0 0
    %2681 = vmatprep.mubr.bf16.mxu0 0
    %2682 = vmatmul.mubr.bf16.gmra.mxu0 %v2552
    %v2683 = vpop.f32.mrf.mxu0
    %v2684 = vadd.f32 0.0, %v2683
    %v2685 = vpop.f32.mrf.mxu0
    %v2686 = vadd.f32 0.0, %v2685
    %v2687 = vpop.f32.mrf.mxu0
    %v2688 = vpop.f32.mrf.mxu0
    %2689 = vdwg.mxu0
    %2690 = vmatprep.subr.bf16.mxu0 %v1224
    %2691 = vmatpush1.bf16.msra.mxu0 %v1223
    %2692 = vmatprep.subr.bf16.mxu0 %v1220
    %2693 = vmatpush1.bf16.msra.mxu0 %v1219
    %2694 = vmatprep.subr.bf16.mxu0 %v1216
    %2695 = vmatpush1.bf16.msra.mxu0 %v1215
    %2696 = vmatprep.subr.bf16.mxu0 %v1212
    %2697 = vmatpush1.bf16.msra.mxu0 %v1211
    %2698 = vmatprep.subr.bf16.mxu0 %v1208
    %2699 = vmatpush1.bf16.msra.mxu0 %v1207
    %2700 = vmatprep.subr.bf16.mxu0 %v1204
    %2701 = vmatpush1.bf16.msra.mxu0 %v1203
    %2702 = vmatprep.subr.bf16.mxu0 %v1200
    %2703 = vmatpush1.bf16.msra.mxu0 %v1199
    %2704 = vmatprep.subr.bf16.mxu0 %v1196
    %2705 = vmatpush1.bf16.msra.mxu0 %v1195
    %2706 = vmatprep.subr.bf16.mxu0 0
    %2707 = vmatpush2.bf16.msra.mxu0 0
    %2708 = vmatprep.subr.bf16.mxu0 0
    %2709 = vmatpush2.bf16.msra.mxu0 0
    %2710 = vmatprep.subr.bf16.mxu0 0
    %2711 = vmatpush2.bf16.msra.mxu0 0
    %2712 = vmatprep.subr.bf16.mxu0 0
    %2713 = vmatpush2.bf16.msra.mxu0 0
    %2714 = vmatprep.subr.bf16.mxu0 0
    %2715 = vmatpush2.bf16.msra.mxu0 0
    %2716 = vmatprep.subr.bf16.mxu0 0
    %2717 = vmatpush2.bf16.msra.mxu0 0
    %2718 = vmatprep.subr.bf16.mxu0 0
    %2719 = vmatpush2.bf16.msra.mxu0 0
    %2720 = vmatprep.subr.bf16.mxu0 0
    %2721 = vmatpush2.bf16.msra.mxu0 0
    %2722 = vmatprep.mubr.bf16.mxu0 0
    %2723 = vmatmul.mubr.bf16.gmra.mxu0 %v2552
    %v2724 = vpop.f32.mrf.mxu0
    %v2725 = vadd.f32 0.0, %v2724
    %v2726 = vpop.f32.mrf.mxu0
    %v2727 = vadd.f32 0.0, %v2726
    %v2728 = vpop.f32.mrf.mxu0
    %v2729 = vpop.f32.mrf.mxu0
    %2730 = vdwg.mxu0
    %v2731 = vadd.f32 %v2645, %v2684
    %v2732 = vadd.f32 %v2646, %v2686
    %v2733 = vadd.f32 %v2647, %v2725
    %v2734 = vadd.f32 %v2648, %v2727
    %v2735 = vxor.u32 %v2641, 2147483648
    %v2736 = vxor.u32 %v2642, 2147483648
    %v2737 = vxor.u32 %v2643, 2147483648
    %v2738 = vmul.f32 %v2735, 1.442695
    %v2739 = vpow.pop %v2738
    %v2740 = vmul.f32 %v2736, 1.442695
    %v2741 = vpow.pop %v2740
    %v2742 = vmul.f32 %v2737, 1.442695
    %v2743 = vpow.pop %v2742
    %v2744 = vadd.f32 %v2739, 1.0
    %v2745 = vadd.f32 %v2741, 1.0
    %v2746 = vadd.f32 %v2743, 1.0
    %v2747 = vrcp.pop %v2744
    %v2748 = vmul.f32 1.0, %v2747
    %v2749 = vrcp.pop %v2745
    %v2750 = vmul.f32 1.0, %v2749
    %v2751 = vrcp.pop %v2746
    %v2752 = vmul.f32 1.0, %v2751
    %v2753 = vxor.u32 %v2731, 2147483648
    %v2754 = vxor.u32 %v2732, 2147483648
    %v2755 = vxor.u32 %v2733, 2147483648
    %v2756 = vmul.f32 %v2753, 1.442695
    %v2757 = vpow.pop %v2756
    %v2758 = vmul.f32 %v2754, 1.442695
    %v2759 = vpow.pop %v2758
    %v2760 = vmul.f32 %v2755, 1.442695
    %v2761 = vpow.pop %v2760
    %v2762 = vadd.f32 %v2757, 1.0
    %v2763 = vadd.f32 %v2759, 1.0
    %v2764 = vadd.f32 %v2761, 1.0
    %v2765 = vrcp.pop %v2762
    %v2766 = vmul.f32 1.0, %v2765
    %v2767 = vrcp.pop %v2763
    %v2768 = vmul.f32 1.0, %v2767
    %v2769 = vrcp.pop %v2764
    %v2770 = vmul.f32 1.0, %v2769
    %v2771 = vtanh.pop %v2644
    %v2772 = vtanh.pop %v2734
    %v2773 = vmul.f32 %v2750, %v2543
    %v2774 = vmul.f32 %v2748, %v2771
    %v2775 = vadd.f32 %v2773, %v2774
    %v2776 = vmul.f32 %v2768, %v2546
    %v2777 = vmul.f32 %v2766, %v2772
    %v2778 = vadd.f32 %v2776, %v2777
    %v2779 = vtanh.pop %v2775
    %v2780 = vmul.f32 %v2752, %v2779
    %v2781 = vtanh.pop %v2778
    %v2782 = vmul.f32 %v2770, %v2781
    %v2783 = vpack.c.bf16 %v2780, %v2780
    %v2784 = vpack.c.bf16 %v2782, %v2782
    %2785 = vst [vmem:[#allocation3 + $0x30] sm:$0xf] %v2783
    %2786 = vst [vmem:[#allocation3 + $0xc] sm:$0xf] %v2784
    %v2787 = vld [vmem:[#allocation2 + $0x1c0] sm:$0xff]
    %v2788 = vld [vmem:[#allocation2 + $0x1c8] sm:$0xff]
    %v2789 = vld [vmem:[#allocation2 + $0x1d0] sm:$0xff]
    %v2790 = vld [vmem:[#allocation2 + $0x1d8] sm:$0xff]
    %2791 = vmatprep.subr.bf16.mxu0 %v972
    %2792 = vmatpush1.bf16.msra.mxu0 %v971
    %2793 = vmatprep.subr.bf16.mxu0 %v968
    %2794 = vmatpush1.bf16.msra.mxu0 %v967
    %2795 = vmatprep.subr.bf16.mxu0 %v964
    %2796 = vmatpush1.bf16.msra.mxu0 %v963
    %2797 = vmatprep.subr.bf16.mxu0 %v960
    %2798 = vmatpush1.bf16.msra.mxu0 %v959
    %2799 = vmatprep.subr.bf16.mxu0 %v956
    %2800 = vmatpush1.bf16.msra.mxu0 %v955
    %2801 = vmatprep.subr.bf16.mxu0 %v952
    %2802 = vmatpush1.bf16.msra.mxu0 %v951
    %2803 = vmatprep.subr.bf16.mxu0 %v948
    %2804 = vmatpush1.bf16.msra.mxu0 %v947
    %2805 = vmatprep.subr.bf16.mxu0 %v944
    %2806 = vmatpush1.bf16.msra.mxu0 %v943
    %2807 = vmatprep.subr.bf16.mxu0 0
    %2808 = vmatpush2.bf16.msra.mxu0 0
    %2809 = vmatprep.subr.bf16.mxu0 0
    %2810 = vmatpush2.bf16.msra.mxu0 0
    %2811 = vmatprep.subr.bf16.mxu0 0
    %2812 = vmatpush2.bf16.msra.mxu0 0
    %2813 = vmatprep.subr.bf16.mxu0 0
    %2814 = vmatpush2.bf16.msra.mxu0 0
    %2815 = vmatprep.subr.bf16.mxu0 0
    %2816 = vmatpush2.bf16.msra.mxu0 0
    %2817 = vmatprep.subr.bf16.mxu0 0
    %2818 = vmatpush2.bf16.msra.mxu0 0
    %2819 = vmatprep.subr.bf16.mxu0 0
    %2820 = vmatpush2.bf16.msra.mxu0 0
    %2821 = vmatprep.subr.bf16.mxu0 0
    %2822 = vmatpush2.bf16.msra.mxu0 0
    %2823 = vmatprep.mubr.bf16.mxu0 0
    %2824 = vmatmul.mubr.bf16.gmra.mxu0 %v2783
    %v2825 = vpop.f32.mrf.mxu0
    %v2826 = vadd.f32 0.0, %v2825
    %v2827 = vpop.f32.mrf.mxu0
    %v2828 = vadd.f32 0.0, %v2827
    %v2829 = vpop.f32.mrf.mxu0
    %v2830 = vpop.f32.mrf.mxu0
    %2831 = vdwg.mxu0
    %2832 = vmatprep.subr.bf16.mxu0 %v974
    %2833 = vmatpush1.bf16.msra.mxu0 %v973
    %2834 = vmatprep.subr.bf16.mxu0 %v970
    %2835 = vmatpush1.bf16.msra.mxu0 %v969
    %2836 = vmatprep.subr.bf16.mxu0 %v966
    %2837 = vmatpush1.bf16.msra.mxu0 %v965
    %2838 = vmatprep.subr.bf16.mxu0 %v962
    %2839 = vmatpush1.bf16.msra.mxu0 %v961
    %2840 = vmatprep.subr.bf16.mxu0 %v958
    %2841 = vmatpush1.bf16.msra.mxu0 %v957
    %2842 = vmatprep.subr.bf16.mxu0 %v954
    %2843 = vmatpush1.bf16.msra.mxu0 %v953
    %2844 = vmatprep.subr.bf16.mxu0 %v950
    %2845 = vmatpush1.bf16.msra.mxu0 %v949
    %2846 = vmatprep.subr.bf16.mxu0 %v946
    %2847 = vmatpush1.bf16.msra.mxu0 %v945
    %2848 = vmatprep.subr.bf16.mxu0 0
    %2849 = vmatpush2.bf16.msra.mxu0 0
    %2850 = vmatprep.subr.bf16.mxu0 0
    %2851 = vmatpush2.bf16.msra.mxu0 0
    %2852 = vmatprep.subr.bf16.mxu0 0
    %2853 = vmatpush2.bf16.msra.mxu0 0
    %2854 = vmatprep.subr.bf16.mxu0 0
    %2855 = vmatpush2.bf16.msra.mxu0 0
    %2856 = vmatprep.subr.bf16.mxu0 0
    %2857 = vmatpush2.bf16.msra.mxu0 0
    %2858 = vmatprep.subr.bf16.mxu0 0
    %2859 = vmatpush2.bf16.msra.mxu0 0
    %2860 = vmatprep.subr.bf16.mxu0 0
    %2861 = vmatpush2.bf16.msra.mxu0 0
    %2862 = vmatprep.subr.bf16.mxu0 0
    %2863 = vmatpush2.bf16.msra.mxu0 0
    %2864 = vmatprep.mubr.bf16.mxu0 0
    %2865 = vmatmul.mubr.bf16.gmra.mxu0 %v2783
    %v2866 = vpop.f32.mrf.mxu0
    %v2867 = vadd.f32 0.0, %v2866
    %v2868 = vpop.f32.mrf.mxu0
    %v2869 = vadd.f32 0.0, %v2868
    %v2870 = vpop.f32.mrf.mxu0
    %v2871 = vpop.f32.mrf.mxu0
    %2872 = vdwg.mxu0
    %v2873 = vadd.f32 %v2787, %v2826
    %v2874 = vadd.f32 %v2788, %v2828
    %v2875 = vadd.f32 %v2789, %v2867
    %v2876 = vadd.f32 %v2790, %v2869
    %v2877 = vld [vmem:[#allocation2 + $0x20] sm:$0xff]
    %v2878 = vld [vmem:[#allocation2 + $0x28] sm:$0xff]
    %v2879 = vld [vmem:[#allocation2 + $0x30] sm:$0xff]
    %v2880 = vld [vmem:[#allocation2 + $0x38] sm:$0xff]
    %2881 = vmatprep.subr.bf16.mxu0 %v1222
    %2882 = vmatpush1.bf16.msra.mxu0 %v1221
    %2883 = vmatprep.subr.bf16.mxu0 %v1218
    %2884 = vmatpush1.bf16.msra.mxu0 %v1217
    %2885 = vmatprep.subr.bf16.mxu0 %v1214
    %2886 = vmatpush1.bf16.msra.mxu0 %v1213
    %2887 = vmatprep.subr.bf16.mxu0 %v1210
    %2888 = vmatpush1.bf16.msra.mxu0 %v1209
    %2889 = vmatprep.subr.bf16.mxu0 %v1206
    %2890 = vmatpush1.bf16.msra.mxu0 %v1205
    %2891 = vmatprep.subr.bf16.mxu0 %v1202
    %2892 = vmatpush1.bf16.msra.mxu0 %v1201
    %2893 = vmatprep.subr.bf16.mxu0 %v1198
    %2894 = vmatpush1.bf16.msra.mxu0 %v1197
    %2895 = vmatprep.subr.bf16.mxu0 %v1194
    %2896 = vmatpush1.bf16.msra.mxu0 %v1193
    %2897 = vmatprep.subr.bf16.mxu0 0
    %2898 = vmatpush2.bf16.msra.mxu0 0
    %2899 = vmatprep.subr.bf16.mxu0 0
    %2900 = vmatpush2.bf16.msra.mxu0 0
    %2901 = vmatprep.subr.bf16.mxu0 0
    %2902 = vmatpush2.bf16.msra.mxu0 0
    %2903 = vmatprep.subr.bf16.mxu0 0
    %2904 = vmatpush2.bf16.msra.mxu0 0
    %2905 = vmatprep.subr.bf16.mxu0 0
    %2906 = vmatpush2.bf16.msra.mxu0 0
    %2907 = vmatprep.subr.bf16.mxu0 0
    %2908 = vmatpush2.bf16.msra.mxu0 0
    %2909 = vmatprep.subr.bf16.mxu0 0
    %2910 = vmatpush2.bf16.msra.mxu0 0
    %2911 = vmatprep.subr.bf16.mxu0 0
    %2912 = vmatpush2.bf16.msra.mxu0 0
    %2913 = vmatprep.mubr.bf16.mxu0 0
    %2914 = vmatmul.mubr.bf16.gmra.mxu0 %v2784
    %v2915 = vpop.f32.mrf.mxu0
    %v2916 = vadd.f32 0.0, %v2915
    %v2917 = vpop.f32.mrf.mxu0
    %v2918 = vadd.f32 0.0, %v2917
    %v2919 = vpop.f32.mrf.mxu0
    %v2920 = vpop.f32.mrf.mxu0
    %2921 = vdwg.mxu0
    %2922 = vmatprep.subr.bf16.mxu0 %v1224
    %2923 = vmatpush1.bf16.msra.mxu0 %v1223
    %2924 = vmatprep.subr.bf16.mxu0 %v1220
    %2925 = vmatpush1.bf16.msra.mxu0 %v1219
    %2926 = vmatprep.subr.bf16.mxu0 %v1216
    %2927 = vmatpush1.bf16.msra.mxu0 %v1215
    %2928 = vmatprep.subr.bf16.mxu0 %v1212
    %2929 = vmatpush1.bf16.msra.mxu0 %v1211
    %2930 = vmatprep.subr.bf16.mxu0 %v1208
    %2931 = vmatpush1.bf16.msra.mxu0 %v1207
    %2932 = vmatprep.subr.bf16.mxu0 %v1204
    %2933 = vmatpush1.bf16.msra.mxu0 %v1203
    %2934 = vmatprep.subr.bf16.mxu0 %v1200
    %2935 = vmatpush1.bf16.msra.mxu0 %v1199
    %2936 = vmatprep.subr.bf16.mxu0 %v1196
    %2937 = vmatpush1.bf16.msra.mxu0 %v1195
    %2938 = vmatprep.subr.bf16.mxu0 0
    %2939 = vmatpush2.bf16.msra.mxu0 0
    %2940 = vmatprep.subr.bf16.mxu0 0
    %2941 = vmatpush2.bf16.msra.mxu0 0
    %2942 = vmatprep.subr.bf16.mxu0 0
    %2943 = vmatpush2.bf16.msra.mxu0 0
    %2944 = vmatprep.subr.bf16.mxu0 0
    %2945 = vmatpush2.bf16.msra.mxu0 0
    %2946 = vmatprep.subr.bf16.mxu0 0
    %2947 = vmatpush2.bf16.msra.mxu0 0
    %2948 = vmatprep.subr.bf16.mxu0 0
    %2949 = vmatpush2.bf16.msra.mxu0 0
    %2950 = vmatprep.subr.bf16.mxu0 0
    %2951 = vmatpush2.bf16.msra.mxu0 0
    %2952 = vmatprep.subr.bf16.mxu0 0
    %2953 = vmatpush2.bf16.msra.mxu0 0
    %2954 = vmatprep.mubr.bf16.mxu0 0
    %2955 = vmatmul.mubr.bf16.gmra.mxu0 %v2784
    %v2956 = vpop.f32.mrf.mxu0
    %v2957 = vadd.f32 0.0, %v2956
    %v2958 = vpop.f32.mrf.mxu0
    %v2959 = vadd.f32 0.0, %v2958
    %v2960 = vpop.f32.mrf.mxu0
    %v2961 = vpop.f32.mrf.mxu0
    %2962 = vdwg.mxu0
    %v2963 = vadd.f32 %v2877, %v2916
    %v2964 = vadd.f32 %v2878, %v2918
    %v2965 = vadd.f32 %v2879, %v2957
    %v2966 = vadd.f32 %v2880, %v2959
    %v2967 = vxor.u32 %v2873, 2147483648
    %v2968 = vxor.u32 %v2874, 2147483648
    %v2969 = vxor.u32 %v2875, 2147483648
    %v2970 = vmul.f32 %v2967, 1.442695
    %v2971 = vpow.pop %v2970
    %v2972 = vmul.f32 %v2968, 1.442695
    %v2973 = vpow.pop %v2972
    %v2974 = vmul.f32 %v2969, 1.442695
    %v2975 = vpow.pop %v2974
    %v2976 = vadd.f32 %v2971, 1.0
    %v2977 = vadd.f32 %v2973, 1.0
    %v2978 = vadd.f32 %v2975, 1.0
    %v2979 = vrcp.pop %v2976
    %v2980 = vmul.f32 1.0, %v2979
    %v2981 = vrcp.pop %v2977
    %v2982 = vmul.f32 1.0, %v2981
    %v2983 = vrcp.pop %v2978
    %v2984 = vmul.f32 1.0, %v2983
    %v2985 = vxor.u32 %v2963, 2147483648
    %v2986 = vxor.u32 %v2964, 2147483648
    %v2987 = vxor.u32 %v2965, 2147483648
    %v2988 = vmul.f32 %v2985, 1.442695
    %v2989 = vpow.pop %v2988
    %v2990 = vmul.f32 %v2986, 1.442695
    %v2991 = vpow.pop %v2990
    %v2992 = vmul.f32 %v2987, 1.442695
    %v2993 = vpow.pop %v2992
    %v2994 = vadd.f32 %v2989, 1.0
    %v2995 = vadd.f32 %v2991, 1.0
    %v2996 = vadd.f32 %v2993, 1.0
    %v2997 = vrcp.pop %v2994
    %v2998 = vmul.f32 1.0, %v2997
    %v2999 = vrcp.pop %v2995
    %v3000 = vmul.f32 1.0, %v2999
    %v3001 = vrcp.pop %v2996
    %v3002 = vmul.f32 1.0, %v3001
    %v3003 = vtanh.pop %v2876
    %v3004 = vtanh.pop %v2966
    %v3005 = vmul.f32 %v2982, %v2775
    %v3006 = vmul.f32 %v2980, %v3003
    %v3007 = vadd.f32 %v3005, %v3006
    %v3008 = vmul.f32 %v3000, %v2778
    %v3009 = vmul.f32 %v2998, %v3004
    %v3010 = vadd.f32 %v3008, %v3009
    %v3011 = vtanh.pop %v3007
    %v3012 = vmul.f32 %v2984, %v3011
    %v3013 = vtanh.pop %v3010
    %v3014 = vmul.f32 %v3002, %v3013
    %v3015 = vpack.c.bf16 %v3012, %v3012
    %v3016 = vpack.c.bf16 %v3014, %v3014
    %3017 = vst [vmem:[#allocation3 + $0x38] sm:$0xf] %v3015
    %3018 = vst [vmem:[#allocation3 + $0x4] sm:$0xf] %v3016
    %s3019 = smul.u32 4, 32
    %s3020 = smul.u32 %s3019, 8
    %s3021 = sshll.u32 %s3020, 4
    %3022 = dma.done [#allocation8], %s3021
    %s3023 = smul.u32 4, 16
    %s3024 = smul.u32 %s3023, 8
    %s3025 = sshll.u32 %s3024, 4
    %3026 = dma.done %s109, %s3025
    %v3027 = vld [vmem:[#allocation3] sm:$0xff]
    %v3028 = vld [vmem:[#allocation3 + $0x8] sm:$0xff]
    %v3029 = vld [vmem:[#allocation3 + $0x10] sm:$0xff]
    %v3030 = vld [vmem:[#allocation3 + $0x18] sm:$0xff]
    %v3031 = vld [vmem:[#allocation3 + $0x20] sm:$0xff]
    %v3032 = vld [vmem:[#allocation3 + $0x28] sm:$0xff]
    %v3033 = vld [vmem:[#allocation3 + $0x30] sm:$0xff]
    %v3034 = vld [vmem:[#allocation3 + $0x38] sm:$0xff]
    %v3035 = vld [vmem:[#allocation5] sm:$0xff]
    %v3036 = vld [vmem:[#allocation5 + $0x8] sm:$0xff]
    %v3037 = vld [vmem:[#allocation5 + $0x10] sm:$0xff]
    %v3038 = vld [vmem:[#allocation5 + $0x18] sm:$0xff]
    %v3039 = vld [vmem:[#allocation5 + $0x20] sm:$0xff]
    %v3040 = vld [vmem:[#allocation5 + $0x28] sm:$0xff]
    %v3041 = vld [vmem:[#allocation5 + $0x30] sm:$0xff]
    %v3042 = vld [vmem:[#allocation5 + $0x38] sm:$0xff]
    %v3043 = vld [vmem:[#allocation5 + $0x40] sm:$0xff]
    %v3044 = vld [vmem:[#allocation5 + $0x48] sm:$0xff]
    %v3045 = vld [vmem:[#allocation5 + $0x50] sm:$0xff]
    %v3046 = vld [vmem:[#allocation5 + $0x58] sm:$0xff]
    %v3047 = vld [vmem:[#allocation5 + $0x60] sm:$0xff]
    %v3048 = vld [vmem:[#allocation5 + $0x68] sm:$0xff]
    %v3049 = vld [vmem:[#allocation5 + $0x70] sm:$0xff]
    %v3050 = vld [vmem:[#allocation5 + $0x78] sm:$0xff]
    %v3051 = vld [vmem:[#allocation5 + $0x80] sm:$0xff]
    %v3052 = vld [vmem:[#allocation5 + $0x88] sm:$0xff]
    %v3053 = vld [vmem:[#allocation5 + $0x90] sm:$0xff]
    %v3054 = vld [vmem:[#allocation5 + $0x98] sm:$0xff]
    %v3055 = vld [vmem:[#allocation5 + $0xa0] sm:$0xff]
    %v3056 = vld [vmem:[#allocation5 + $0xa8] sm:$0xff]
    %v3057 = vld [vmem:[#allocation5 + $0xb0] sm:$0xff]
    %v3058 = vld [vmem:[#allocation5 + $0xb8] sm:$0xff]
    %v3059 = vld [vmem:[#allocation5 + $0xc0] sm:$0xff]
    %v3060 = vld [vmem:[#allocation5 + $0xc8] sm:$0xff]
    %v3061 = vld [vmem:[#allocation5 + $0xd0] sm:$0xff]
    %v3062 = vld [vmem:[#allocation5 + $0xd8] sm:$0xff]
    %v3063 = vld [vmem:[#allocation5 + $0xe0] sm:$0xff]
    %v3064 = vld [vmem:[#allocation5 + $0xe8] sm:$0xff]
    %v3065 = vld [vmem:[#allocation5 + $0xf0] sm:$0xff]
    %v3066 = vld [vmem:[#allocation5 + $0xf8] sm:$0xff]
    %v3067 = vld [vmem:[#allocation5 + $0x100] sm:$0xff]
    %v3068 = vld [vmem:[#allocation5 + $0x108] sm:$0xff]
    %v3069 = vld [vmem:[#allocation5 + $0x110] sm:$0xff]
    %v3070 = vld [vmem:[#allocation5 + $0x118] sm:$0xff]
    %v3071 = vld [vmem:[#allocation5 + $0x120] sm:$0xff]
    %v3072 = vld [vmem:[#allocation5 + $0x128] sm:$0xff]
    %v3073 = vld [vmem:[#allocation5 + $0x130] sm:$0xff]
    %v3074 = vld [vmem:[#allocation5 + $0x138] sm:$0xff]
    %v3075 = vld [vmem:[#allocation5 + $0x140] sm:$0xff]
    %v3076 = vld [vmem:[#allocation5 + $0x148] sm:$0xff]
    %v3077 = vld [vmem:[#allocation5 + $0x150] sm:$0xff]
    %v3078 = vld [vmem:[#allocation5 + $0x158] sm:$0xff]
    %v3079 = vld [vmem:[#allocation5 + $0x160] sm:$0xff]
    %v3080 = vld [vmem:[#allocation5 + $0x168] sm:$0xff]
    %v3081 = vld [vmem:[#allocation5 + $0x170] sm:$0xff]
    %v3082 = vld [vmem:[#allocation5 + $0x178] sm:$0xff]
    %v3083 = vld [vmem:[#allocation5 + $0x180] sm:$0xff]
    %v3084 = vld [vmem:[#allocation5 + $0x188] sm:$0xff]
    %v3085 = vld [vmem:[#allocation5 + $0x190] sm:$0xff]
    %v3086 = vld [vmem:[#allocation5 + $0x198] sm:$0xff]
    %v3087 = vld [vmem:[#allocation5 + $0x1a0] sm:$0xff]
    %v3088 = vld [vmem:[#allocation5 + $0x1a8] sm:$0xff]
    %v3089 = vld [vmem:[#allocation5 + $0x1b0] sm:$0xff]
    %v3090 = vld [vmem:[#allocation5 + $0x1b8] sm:$0xff]
    %v3091 = vld [vmem:[#allocation5 + $0x1c0] sm:$0xff]
    %v3092 = vld [vmem:[#allocation5 + $0x1c8] sm:$0xff]
    %v3093 = vld [vmem:[#allocation5 + $0x1d0] sm:$0xff]
    %v3094 = vld [vmem:[#allocation5 + $0x1d8] sm:$0xff]
    %v3095 = vld [vmem:[#allocation5 + $0x1e0] sm:$0xff]
    %v3096 = vld [vmem:[#allocation5 + $0x1e8] sm:$0xff]
    %v3097 = vld [vmem:[#allocation5 + $0x1f0] sm:$0xff]
    %v3098 = vld [vmem:[#allocation5 + $0x1f8] sm:$0xff]
    %v3099 = vld [vmem:[#allocation5 + $0x200] sm:$0xff]
    %v3100 = vld [vmem:[#allocation5 + $0x208] sm:$0xff]
    %v3101 = vld [vmem:[#allocation5 + $0x210] sm:$0xff]
    %v3102 = vld [vmem:[#allocation5 + $0x218] sm:$0xff]
    %v3103 = vld [vmem:[#allocation5 + $0x220] sm:$0xff]
    %v3104 = vld [vmem:[#allocation5 + $0x228] sm:$0xff]
    %v3105 = vld [vmem:[#allocation5 + $0x230] sm:$0xff]
    %v3106 = vld [vmem:[#allocation5 + $0x238] sm:$0xff]
    %v3107 = vld [vmem:[#allocation5 + $0x240] sm:$0xff]
    %v3108 = vld [vmem:[#allocation5 + $0x248] sm:$0xff]
    %v3109 = vld [vmem:[#allocation5 + $0x250] sm:$0xff]
    %v3110 = vld [vmem:[#allocation5 + $0x258] sm:$0xff]
    %v3111 = vld [vmem:[#allocation5 + $0x260] sm:$0xff]
    %v3112 = vld [vmem:[#allocation5 + $0x268] sm:$0xff]
    %v3113 = vld [vmem:[#allocation5 + $0x270] sm:$0xff]
    %v3114 = vld [vmem:[#allocation5 + $0x278] sm:$0xff]
    %v3115 = vld [vmem:[#allocation5 + $0x280] sm:$0xff]
    %v3116 = vld [vmem:[#allocation5 + $0x288] sm:$0xff]
    %v3117 = vld [vmem:[#allocation5 + $0x290] sm:$0xff]
    %v3118 = vld [vmem:[#allocation5 + $0x298] sm:$0xff]
    %v3119 = vld [vmem:[#allocation5 + $0x2a0] sm:$0xff]
    %v3120 = vld [vmem:[#allocation5 + $0x2a8] sm:$0xff]
    %v3121 = vld [vmem:[#allocation5 + $0x2b0] sm:$0xff]
    %v3122 = vld [vmem:[#allocation5 + $0x2b8] sm:$0xff]
    %v3123 = vld [vmem:[#allocation5 + $0x2c0] sm:$0xff]
    %v3124 = vld [vmem:[#allocation5 + $0x2c8] sm:$0xff]
    %v3125 = vld [vmem:[#allocation5 + $0x2d0] sm:$0xff]
    %v3126 = vld [vmem:[#allocation5 + $0x2d8] sm:$0xff]
    %v3127 = vld [vmem:[#allocation5 + $0x2e0] sm:$0xff]
    %v3128 = vld [vmem:[#allocation5 + $0x2e8] sm:$0xff]
    %v3129 = vld [vmem:[#allocation5 + $0x2f0] sm:$0xff]
    %v3130 = vld [vmem:[#allocation5 + $0x2f8] sm:$0xff]
    %v3131 = vld [vmem:[#allocation5 + $0x300] sm:$0xff]
    %v3132 = vld [vmem:[#allocation5 + $0x308] sm:$0xff]
    %v3133 = vld [vmem:[#allocation5 + $0x310] sm:$0xff]
    %v3134 = vld [vmem:[#allocation5 + $0x318] sm:$0xff]
    %v3135 = vld [vmem:[#allocation5 + $0x320] sm:$0xff]
    %v3136 = vld [vmem:[#allocation5 + $0x328] sm:$0xff]
    %v3137 = vld [vmem:[#allocation5 + $0x330] sm:$0xff]
    %v3138 = vld [vmem:[#allocation5 + $0x338] sm:$0xff]
    %v3139 = vld [vmem:[#allocation5 + $0x340] sm:$0xff]
    %v3140 = vld [vmem:[#allocation5 + $0x348] sm:$0xff]
    %v3141 = vld [vmem:[#allocation5 + $0x350] sm:$0xff]
    %v3142 = vld [vmem:[#allocation5 + $0x358] sm:$0xff]
    %v3143 = vld [vmem:[#allocation5 + $0x360] sm:$0xff]
    %v3144 = vld [vmem:[#allocation5 + $0x368] sm:$0xff]
    %v3145 = vld [vmem:[#allocation5 + $0x370] sm:$0xff]
    %v3146 = vld [vmem:[#allocation5 + $0x378] sm:$0xff]
    %v3147 = vld [vmem:[#allocation5 + $0x380] sm:$0xff]
    %v3148 = vld [vmem:[#allocation5 + $0x388] sm:$0xff]
    %v3149 = vld [vmem:[#allocation5 + $0x390] sm:$0xff]
    %v3150 = vld [vmem:[#allocation5 + $0x398] sm:$0xff]
    %v3151 = vld [vmem:[#allocation5 + $0x3a0] sm:$0xff]
    %v3152 = vld [vmem:[#allocation5 + $0x3a8] sm:$0xff]
    %v3153 = vld [vmem:[#allocation5 + $0x3b0] sm:$0xff]
    %v3154 = vld [vmem:[#allocation5 + $0x3b8] sm:$0xff]
    %v3155 = vld [vmem:[#allocation5 + $0x3c0] sm:$0xff]
    %v3156 = vld [vmem:[#allocation5 + $0x3c8] sm:$0xff]
    %v3157 = vld [vmem:[#allocation5 + $0x3d0] sm:$0xff]
    %v3158 = vld [vmem:[#allocation5 + $0x3d8] sm:$0xff]
    %v3159 = vld [vmem:[#allocation5 + $0x3e0] sm:$0xff]
    %v3160 = vld [vmem:[#allocation5 + $0x3e8] sm:$0xff]
    %v3161 = vld [vmem:[#allocation5 + $0x3f0] sm:$0xff]
    %v3162 = vld [vmem:[#allocation5 + $0x3f8] sm:$0xff]
    %v3163 = vld [vmem:[#allocation13] sm:$0xff]
    %v3165 = vlaneseq
    %v3166 = vshrl.u32 %v3165, 7
    %v3167 = vsub.s32 0, %v3166
    %v3168 = vrot.slane %v3163, %v3167
    %v3169 = vlaneseq
    %v3170 = vshrl.u32 %v3169, 7
    %v3171 = vsub.s32 1, %v3170
    %v3172 = vrot.slane %v3163, %v3171
    %v3173 = vlaneseq
    %v3174 = vshrl.u32 %v3173, 7
    %v3175 = vsub.s32 2, %v3174
    %v3176 = vrot.slane %v3163, %v3175
    %v3177 = vlaneseq
    %v3178 = vshrl.u32 %v3177, 7
    %v3179 = vsub.s32 3, %v3178
    %v3180 = vrot.slane %v3163, %v3179
    %v3181 = vlaneseq
    %v3182 = vshrl.u32 %v3181, 7
    %v3183 = vsub.s32 4, %v3182
    %v3184 = vrot.slane %v3163, %v3183
    %v3185 = vlaneseq
    %v3186 = vshrl.u32 %v3185, 7
    %v3187 = vsub.s32 5, %v3186
    %v3188 = vrot.slane %v3163, %v3187
    %v3189 = vlaneseq
    %v3190 = vshrl.u32 %v3189, 7
    %v3191 = vsub.s32 6, %v3190
    %v3192 = vrot.slane %v3163, %v3191
    %v3193 = vlaneseq
    %v3194 = vshrl.u32 %v3193, 7
    %v3195 = vsub.s32 7, %v3194
    %v3196 = vrot.slane %v3163, %v3195
    %v3213 = vunpack.c.l.b16 %v3027
    %v3214 = vunpack.c.h.b16 %v3027
    %v3215 = vunpack.c.l.b16 %v3028
    %v3216 = vunpack.c.h.b16 %v3028
    %v3217 = vunpack.c.l.b16 %v3029
    %v3218 = vunpack.c.h.b16 %v3029
    %v3219 = vunpack.c.l.b16 %v3030
    %v3220 = vunpack.c.h.b16 %v3030
    %v3221 = vunpack.c.l.b16 %v3031
    %v3222 = vunpack.c.h.b16 %v3031
    %v3223 = vunpack.c.l.b16 %v3032
    %v3224 = vunpack.c.h.b16 %v3032
    %v3225 = vunpack.c.l.b16 %v3033
    %v3226 = vunpack.c.h.b16 %v3033
    %v3227 = vunpack.c.l.b16 %v3034
    %v3228 = vunpack.c.h.b16 %v3034
    %v3229 = vpack.c.b16 %v3215, %v3213
    %v3230 = vpack.c.b16 %v3216, %v3214
    %v3231 = vpack.c.b16 %v3219, %v3217
    %v3232 = vpack.c.b16 %v3220, %v3218
    %v3233 = vpack.c.b16 %v3223, %v3221
    %v3234 = vpack.c.b16 %v3224, %v3222
    %v3235 = vpack.c.b16 %v3227, %v3225
    %v3236 = vpack.c.b16 %v3228, %v3226
    %v3373 = vunpack.c.l.b16 %v3035
    %v3374 = vunpack.c.h.b16 %v3035
    %v3375 = vunpack.c.l.b16 %v3036
    %v3376 = vunpack.c.h.b16 %v3036
    %v3377 = vunpack.c.l.b16 %v3037
    %v3378 = vunpack.c.h.b16 %v3037
    %v3379 = vunpack.c.l.b16 %v3038
    %v3380 = vunpack.c.h.b16 %v3038
    %v3381 = vunpack.c.l.b16 %v3039
    %v3382 = vunpack.c.h.b16 %v3039
    %v3383 = vunpack.c.l.b16 %v3040
    %v3384 = vunpack.c.h.b16 %v3040
    %v3385 = vunpack.c.l.b16 %v3041
    %v3386 = vunpack.c.h.b16 %v3041
    %v3387 = vunpack.c.l.b16 %v3042
    %v3388 = vunpack.c.h.b16 %v3042
    %v3389 = vunpack.c.l.b16 %v3043
    %v3390 = vunpack.c.h.b16 %v3043
    %v3391 = vunpack.c.l.b16 %v3044
    %v3392 = vunpack.c.h.b16 %v3044
    %v3393 = vunpack.c.l.b16 %v3045
    %v3394 = vunpack.c.h.b16 %v3045
    %v3395 = vunpack.c.l.b16 %v3046
    %v3396 = vunpack.c.h.b16 %v3046
    %v3397 = vunpack.c.l.b16 %v3047
    %v3398 = vunpack.c.h.b16 %v3047
    %v3399 = vunpack.c.l.b16 %v3048
    %v3400 = vunpack.c.h.b16 %v3048
    %v3401 = vunpack.c.l.b16 %v3049
    %v3402 = vunpack.c.h.b16 %v3049
    %v3403 = vunpack.c.l.b16 %v3050
    %v3404 = vunpack.c.h.b16 %v3050
    %v3405 = vunpack.c.l.b16 %v3051
    %v3406 = vunpack.c.h.b16 %v3051
    %v3407 = vunpack.c.l.b16 %v3052
    %v3408 = vunpack.c.h.b16 %v3052
    %v3409 = vunpack.c.l.b16 %v3053
    %v3410 = vunpack.c.h.b16 %v3053
    %v3411 = vunpack.c.l.b16 %v3054
    %v3412 = vunpack.c.h.b16 %v3054
    %v3413 = vunpack.c.l.b16 %v3055
    %v3414 = vunpack.c.h.b16 %v3055
    %v3415 = vunpack.c.l.b16 %v3056
    %v3416 = vunpack.c.h.b16 %v3056
    %v3417 = vunpack.c.l.b16 %v3057
    %v3418 = vunpack.c.h.b16 %v3057
    %v3419 = vunpack.c.l.b16 %v3058
    %v3420 = vunpack.c.h.b16 %v3058
    %v3421 = vunpack.c.l.b16 %v3059
    %v3422 = vunpack.c.h.b16 %v3059
    %v3423 = vunpack.c.l.b16 %v3060
    %v3424 = vunpack.c.h.b16 %v3060
    %v3425 = vunpack.c.l.b16 %v3061
    %v3426 = vunpack.c.h.b16 %v3061
    %v3427 = vunpack.c.l.b16 %v3062
    %v3428 = vunpack.c.h.b16 %v3062
    %v3429 = vunpack.c.l.b16 %v3063
    %v3430 = vunpack.c.h.b16 %v3063
    %v3431 = vunpack.c.l.b16 %v3064
    %v3432 = vunpack.c.h.b16 %v3064
    %v3433 = vunpack.c.l.b16 %v3065
    %v3434 = vunpack.c.h.b16 %v3065
    %v3435 = vunpack.c.l.b16 %v3066
    %v3436 = vunpack.c.h.b16 %v3066
    %v3437 = vunpack.c.l.b16 %v3067
    %v3438 = vunpack.c.h.b16 %v3067
    %v3439 = vunpack.c.l.b16 %v3068
    %v3440 = vunpack.c.h.b16 %v3068
    %v3441 = vunpack.c.l.b16 %v3069
    %v3442 = vunpack.c.h.b16 %v3069
    %v3443 = vunpack.c.l.b16 %v3070
    %v3444 = vunpack.c.h.b16 %v3070
    %v3445 = vunpack.c.l.b16 %v3071
    %v3446 = vunpack.c.h.b16 %v3071
    %v3447 = vunpack.c.l.b16 %v3072
    %v3448 = vunpack.c.h.b16 %v3072
    %v3449 = vunpack.c.l.b16 %v3073
    %v3450 = vunpack.c.h.b16 %v3073
    %v3451 = vunpack.c.l.b16 %v3074
    %v3452 = vunpack.c.h.b16 %v3074
    %v3453 = vunpack.c.l.b16 %v3075
    %v3454 = vunpack.c.h.b16 %v3075
    %v3455 = vunpack.c.l.b16 %v3076
    %v3456 = vunpack.c.h.b16 %v3076
    %v3457 = vunpack.c.l.b16 %v3077
    %v3458 = vunpack.c.h.b16 %v3077
    %v3459 = vunpack.c.l.b16 %v3078
    %v3460 = vunpack.c.h.b16 %v3078
    %v3461 = vunpack.c.l.b16 %v3079
    %v3462 = vunpack.c.h.b16 %v3079
    %v3463 = vunpack.c.l.b16 %v3080
    %v3464 = vunpack.c.h.b16 %v3080
    %v3465 = vunpack.c.l.b16 %v3081
    %v3466 = vunpack.c.h.b16 %v3081
    %v3467 = vunpack.c.l.b16 %v3082
    %v3468 = vunpack.c.h.b16 %v3082
    %v3469 = vunpack.c.l.b16 %v3083
    %v3470 = vunpack.c.h.b16 %v3083
    %v3471 = vunpack.c.l.b16 %v3084
    %v3472 = vunpack.c.h.b16 %v3084
    %v3473 = vunpack.c.l.b16 %v3085
    %v3474 = vunpack.c.h.b16 %v3085
    %v3475 = vunpack.c.l.b16 %v3086
    %v3476 = vunpack.c.h.b16 %v3086
    %v3477 = vunpack.c.l.b16 %v3087
    %v3478 = vunpack.c.h.b16 %v3087
    %v3479 = vunpack.c.l.b16 %v3088
    %v3480 = vunpack.c.h.b16 %v3088
    %v3481 = vunpack.c.l.b16 %v3089
    %v3482 = vunpack.c.h.b16 %v3089
    %v3483 = vunpack.c.l.b16 %v3090
    %v3484 = vunpack.c.h.b16 %v3090
    %v3485 = vunpack.c.l.b16 %v3091
    %v3486 = vunpack.c.h.b16 %v3091
    %v3487 = vunpack.c.l.b16 %v3092
    %v3488 = vunpack.c.h.b16 %v3092
    %v3489 = vunpack.c.l.b16 %v3093
    %v3490 = vunpack.c.h.b16 %v3093
    %v3491 = vunpack.c.l.b16 %v3094
    %v3492 = vunpack.c.h.b16 %v3094
    %v3493 = vunpack.c.l.b16 %v3095
    %v3494 = vunpack.c.h.b16 %v3095
    %v3495 = vunpack.c.l.b16 %v3096
    %v3496 = vunpack.c.h.b16 %v3096
    %v3497 = vunpack.c.l.b16 %v3097
    %v3498 = vunpack.c.h.b16 %v3097
    %v3499 = vunpack.c.l.b16 %v3098
    %v3500 = vunpack.c.h.b16 %v3098
    %v3501 = vunpack.c.l.b16 %v3099
    %v3502 = vunpack.c.h.b16 %v3099
    %v3503 = vunpack.c.l.b16 %v3100
    %v3504 = vunpack.c.h.b16 %v3100
    %v3505 = vunpack.c.l.b16 %v3101
    %v3506 = vunpack.c.h.b16 %v3101
    %v3507 = vunpack.c.l.b16 %v3102
    %v3508 = vunpack.c.h.b16 %v3102
    %v3509 = vunpack.c.l.b16 %v3103
    %v3510 = vunpack.c.h.b16 %v3103
    %v3511 = vunpack.c.l.b16 %v3104
    %v3512 = vunpack.c.h.b16 %v3104
    %v3513 = vunpack.c.l.b16 %v3105
    %v3514 = vunpack.c.h.b16 %v3105
    %v3515 = vunpack.c.l.b16 %v3106
    %v3516 = vunpack.c.h.b16 %v3106
    %v3517 = vunpack.c.l.b16 %v3107
    %v3518 = vunpack.c.h.b16 %v3107
    %v3519 = vunpack.c.l.b16 %v3108
    %v3520 = vunpack.c.h.b16 %v3108
    %v3521 = vunpack.c.l.b16 %v3109
    %v3522 = vunpack.c.h.b16 %v3109
    %v3523 = vunpack.c.l.b16 %v3110
    %v3524 = vunpack.c.h.b16 %v3110
    %v3525 = vunpack.c.l.b16 %v3111
    %v3526 = vunpack.c.h.b16 %v3111
    %v3527 = vunpack.c.l.b16 %v3112
    %v3528 = vunpack.c.h.b16 %v3112
    %v3529 = vunpack.c.l.b16 %v3113
    %v3530 = vunpack.c.h.b16 %v3113
    %v3531 = vunpack.c.l.b16 %v3114
    %v3532 = vunpack.c.h.b16 %v3114
    %v3533 = vunpack.c.l.b16 %v3115
    %v3534 = vunpack.c.h.b16 %v3115
    %v3535 = vunpack.c.l.b16 %v3116
    %v3536 = vunpack.c.h.b16 %v3116
    %v3537 = vunpack.c.l.b16 %v3117
    %v3538 = vunpack.c.h.b16 %v3117
    %v3539 = vunpack.c.l.b16 %v3118
    %v3540 = vunpack.c.h.b16 %v3118
    %v3541 = vunpack.c.l.b16 %v3119
    %v3542 = vunpack.c.h.b16 %v3119
    %v3543 = vunpack.c.l.b16 %v3120
    %v3544 = vunpack.c.h.b16 %v3120
    %v3545 = vunpack.c.l.b16 %v3121
    %v3546 = vunpack.c.h.b16 %v3121
    %v3547 = vunpack.c.l.b16 %v3122
    %v3548 = vunpack.c.h.b16 %v3122
    %v3549 = vunpack.c.l.b16 %v3123
    %v3550 = vunpack.c.h.b16 %v3123
    %v3551 = vunpack.c.l.b16 %v3124
    %v3552 = vunpack.c.h.b16 %v3124
    %v3553 = vunpack.c.l.b16 %v3125
    %v3554 = vunpack.c.h.b16 %v3125
    %v3555 = vunpack.c.l.b16 %v3126
    %v3556 = vunpack.c.h.b16 %v3126
    %v3557 = vunpack.c.l.b16 %v3127
    %v3558 = vunpack.c.h.b16 %v3127
    %v3559 = vunpack.c.l.b16 %v3128
    %v3560 = vunpack.c.h.b16 %v3128
    %v3561 = vunpack.c.l.b16 %v3129
    %v3562 = vunpack.c.h.b16 %v3129
    %v3563 = vunpack.c.l.b16 %v3130
    %v3564 = vunpack.c.h.b16 %v3130
    %v3565 = vunpack.c.l.b16 %v3131
    %v3566 = vunpack.c.h.b16 %v3131
    %v3567 = vunpack.c.l.b16 %v3132
    %v3568 = vunpack.c.h.b16 %v3132
    %v3569 = vunpack.c.l.b16 %v3133
    %v3570 = vunpack.c.h.b16 %v3133
    %v3571 = vunpack.c.l.b16 %v3134
    %v3572 = vunpack.c.h.b16 %v3134
    %v3573 = vunpack.c.l.b16 %v3135
    %v3574 = vunpack.c.h.b16 %v3135
    %v3575 = vunpack.c.l.b16 %v3136
    %v3576 = vunpack.c.h.b16 %v3136
    %v3577 = vunpack.c.l.b16 %v3137
    %v3578 = vunpack.c.h.b16 %v3137
    %v3579 = vunpack.c.l.b16 %v3138
    %v3580 = vunpack.c.h.b16 %v3138
    %v3581 = vunpack.c.l.b16 %v3139
    %v3582 = vunpack.c.h.b16 %v3139
    %v3583 = vunpack.c.l.b16 %v3140
    %v3584 = vunpack.c.h.b16 %v3140
    %v3585 = vunpack.c.l.b16 %v3141
    %v3586 = vunpack.c.h.b16 %v3141
    %v3587 = vunpack.c.l.b16 %v3142
    %v3588 = vunpack.c.h.b16 %v3142
    %v3589 = vunpack.c.l.b16 %v3143
    %v3590 = vunpack.c.h.b16 %v3143
    %v3591 = vunpack.c.l.b16 %v3144
    %v3592 = vunpack.c.h.b16 %v3144
    %v3593 = vunpack.c.l.b16 %v3145
    %v3594 = vunpack.c.h.b16 %v3145
    %v3595 = vunpack.c.l.b16 %v3146
    %v3596 = vunpack.c.h.b16 %v3146
    %v3597 = vunpack.c.l.b16 %v3147
    %v3598 = vunpack.c.h.b16 %v3147
    %v3599 = vunpack.c.l.b16 %v3148
    %v3600 = vunpack.c.h.b16 %v3148
    %v3601 = vunpack.c.l.b16 %v3149
    %v3602 = vunpack.c.h.b16 %v3149
    %v3603 = vunpack.c.l.b16 %v3150
    %v3604 = vunpack.c.h.b16 %v3150
    %v3605 = vunpack.c.l.b16 %v3151
    %v3606 = vunpack.c.h.b16 %v3151
    %v3607 = vunpack.c.l.b16 %v3152
    %v3608 = vunpack.c.h.b16 %v3152
    %v3609 = vunpack.c.l.b16 %v3153
    %v3610 = vunpack.c.h.b16 %v3153
    %v3611 = vunpack.c.l.b16 %v3154
    %v3612 = vunpack.c.h.b16 %v3154
    %v3613 = vunpack.c.l.b16 %v3155
    %v3614 = vunpack.c.h.b16 %v3155
    %v3615 = vunpack.c.l.b16 %v3156
    %v3616 = vunpack.c.h.b16 %v3156
    %v3617 = vunpack.c.l.b16 %v3157
    %v3618 = vunpack.c.h.b16 %v3157
    %v3619 = vunpack.c.l.b16 %v3158
    %v3620 = vunpack.c.h.b16 %v3158
    %v3621 = vunpack.c.l.b16 %v3159
    %v3622 = vunpack.c.h.b16 %v3159
    %v3623 = vunpack.c.l.b16 %v3160
    %v3624 = vunpack.c.h.b16 %v3160
    %v3625 = vunpack.c.l.b16 %v3161
    %v3626 = vunpack.c.h.b16 %v3161
    %v3627 = vunpack.c.l.b16 %v3162
    %v3628 = vunpack.c.h.b16 %v3162
    %v3629 = vpack.c.b16 %v3381, %v3373
    %v3630 = vpack.c.b16 %v3382, %v3374
    %v3631 = vpack.c.b16 %v3383, %v3375
    %v3632 = vpack.c.b16 %v3384, %v3376
    %v3633 = vpack.c.b16 %v3385, %v3377
    %v3634 = vpack.c.b16 %v3386, %v3378
    %v3635 = vpack.c.b16 %v3387, %v3379
    %v3636 = vpack.c.b16 %v3388, %v3380
    %v3637 = vpack.c.b16 %v3397, %v3389
    %v3638 = vpack.c.b16 %v3398, %v3390
    %v3639 = vpack.c.b16 %v3399, %v3391
    %v3640 = vpack.c.b16 %v3400, %v3392
    %v3641 = vpack.c.b16 %v3401, %v3393
    %v3642 = vpack.c.b16 %v3402, %v3394
    %v3643 = vpack.c.b16 %v3403, %v3395
    %v3644 = vpack.c.b16 %v3404, %v3396
    %v3645 = vpack.c.b16 %v3413, %v3405
    %v3646 = vpack.c.b16 %v3414, %v3406
    %v3647 = vpack.c.b16 %v3415, %v3407
    %v3648 = vpack.c.b16 %v3416, %v3408
    %v3649 = vpack.c.b16 %v3417, %v3409
    %v3650 = vpack.c.b16 %v3418, %v3410
    %v3651 = vpack.c.b16 %v3419, %v3411
    %v3652 = vpack.c.b16 %v3420, %v3412
    %v3653 = vpack.c.b16 %v3429, %v3421
    %v3654 = vpack.c.b16 %v3430, %v3422
    %v3655 = vpack.c.b16 %v3431, %v3423
    %v3656 = vpack.c.b16 %v3432, %v3424
    %v3657 = vpack.c.b16 %v3433, %v3425
    %v3658 = vpack.c.b16 %v3434, %v3426
    %v3659 = vpack.c.b16 %v3435, %v3427
    %v3660 = vpack.c.b16 %v3436, %v3428
    %v3661 = vpack.c.b16 %v3445, %v3437
    %v3662 = vpack.c.b16 %v3446, %v3438
    %v3663 = vpack.c.b16 %v3447, %v3439
    %v3664 = vpack.c.b16 %v3448, %v3440
    %v3665 = vpack.c.b16 %v3449, %v3441
    %v3666 = vpack.c.b16 %v3450, %v3442
    %v3667 = vpack.c.b16 %v3451, %v3443
    %v3668 = vpack.c.b16 %v3452, %v3444
    %v3669 = vpack.c.b16 %v3461, %v3453
    %v3670 = vpack.c.b16 %v3462, %v3454
    %v3671 = vpack.c.b16 %v3463, %v3455
    %v3672 = vpack.c.b16 %v3464, %v3456
    %v3673 = vpack.c.b16 %v3465, %v3457
    %v3674 = vpack.c.b16 %v3466, %v3458
    %v3675 = vpack.c.b16 %v3467, %v3459
    %v3676 = vpack.c.b16 %v3468, %v3460
    %v3677 = vpack.c.b16 %v3477, %v3469
    %v3678 = vpack.c.b16 %v3478, %v3470
    %v3679 = vpack.c.b16 %v3479, %v3471
    %v3680 = vpack.c.b16 %v3480, %v3472
    %v3681 = vpack.c.b16 %v3481, %v3473
    %v3682 = vpack.c.b16 %v3482, %v3474
    %v3683 = vpack.c.b16 %v3483, %v3475
    %v3684 = vpack.c.b16 %v3484, %v3476
    %v3685 = vpack.c.b16 %v3493, %v3485
    %v3686 = vpack.c.b16 %v3494, %v3486
    %v3687 = vpack.c.b16 %v3495, %v3487
    %v3688 = vpack.c.b16 %v3496, %v3488
    %v3689 = vpack.c.b16 %v3497, %v3489
    %v3690 = vpack.c.b16 %v3498, %v3490
    %v3691 = vpack.c.b16 %v3499, %v3491
    %v3692 = vpack.c.b16 %v3500, %v3492
    %v3693 = vpack.c.b16 %v3509, %v3501
    %v3694 = vpack.c.b16 %v3510, %v3502
    %v3695 = vpack.c.b16 %v3511, %v3503
    %v3696 = vpack.c.b16 %v3512, %v3504
    %v3697 = vpack.c.b16 %v3513, %v3505
    %v3698 = vpack.c.b16 %v3514, %v3506
    %v3699 = vpack.c.b16 %v3515, %v3507
    %v3700 = vpack.c.b16 %v3516, %v3508
    %v3701 = vpack.c.b16 %v3525, %v3517
    %v3702 = vpack.c.b16 %v3526, %v3518
    %v3703 = vpack.c.b16 %v3527, %v3519
    %v3704 = vpack.c.b16 %v3528, %v3520
    %v3705 = vpack.c.b16 %v3529, %v3521
    %v3706 = vpack.c.b16 %v3530, %v3522
    %v3707 = vpack.c.b16 %v3531, %v3523
    %v3708 = vpack.c.b16 %v3532, %v3524
    %v3709 = vpack.c.b16 %v3541, %v3533
    %v3710 = vpack.c.b16 %v3542, %v3534
    %v3711 = vpack.c.b16 %v3543, %v3535
    %v3712 = vpack.c.b16 %v3544, %v3536
    %v3713 = vpack.c.b16 %v3545, %v3537
    %v3714 = vpack.c.b16 %v3546, %v3538
    %v3715 = vpack.c.b16 %v3547, %v3539
    %v3716 = vpack.c.b16 %v3548, %v3540
    %v3717 = vpack.c.b16 %v3557, %v3549
    %v3718 = vpack.c.b16 %v3558, %v3550
    %v3719 = vpack.c.b16 %v3559, %v3551
    %v3720 = vpack.c.b16 %v3560, %v3552
    %v3721 = vpack.c.b16 %v3561, %v3553
    %v3722 = vpack.c.b16 %v3562, %v3554
    %v3723 = vpack.c.b16 %v3563, %v3555
    %v3724 = vpack.c.b16 %v3564, %v3556
    %v3725 = vpack.c.b16 %v3573, %v3565
    %v3726 = vpack.c.b16 %v3574, %v3566
    %v3727 = vpack.c.b16 %v3575, %v3567
    %v3728 = vpack.c.b16 %v3576, %v3568
    %v3729 = vpack.c.b16 %v3577, %v3569
    %v3730 = vpack.c.b16 %v3578, %v3570
    %v3731 = vpack.c.b16 %v3579, %v3571
    %v3732 = vpack.c.b16 %v3580, %v3572
    %v3733 = vpack.c.b16 %v3589, %v3581
    %v3734 = vpack.c.b16 %v3590, %v3582
    %v3735 = vpack.c.b16 %v3591, %v3583
    %v3736 = vpack.c.b16 %v3592, %v3584
    %v3737 = vpack.c.b16 %v3593, %v3585
    %v3738 = vpack.c.b16 %v3594, %v3586
    %v3739 = vpack.c.b16 %v3595, %v3587
    %v3740 = vpack.c.b16 %v3596, %v3588
    %v3741 = vpack.c.b16 %v3605, %v3597
    %v3742 = vpack.c.b16 %v3606, %v3598
    %v3743 = vpack.c.b16 %v3607, %v3599
    %v3744 = vpack.c.b16 %v3608, %v3600
    %v3745 = vpack.c.b16 %v3609, %v3601
    %v3746 = vpack.c.b16 %v3610, %v3602
    %v3747 = vpack.c.b16 %v3611, %v3603
    %v3748 = vpack.c.b16 %v3612, %v3604
    %v3749 = vpack.c.b16 %v3621, %v3613
    %v3750 = vpack.c.b16 %v3622, %v3614
    %v3751 = vpack.c.b16 %v3623, %v3615
    %v3752 = vpack.c.b16 %v3624, %v3616
    %v3753 = vpack.c.b16 %v3625, %v3617
    %v3754 = vpack.c.b16 %v3626, %v3618
    %v3755 = vpack.c.b16 %v3627, %v3619
    %v3756 = vpack.c.b16 %v3628, %v3620
    %3885 = vmatprep.subr.bf16.mxu0 %v3686
    %3886 = vmatpush1.bf16.msra.mxu0 %v3685
    %3887 = vmatprep.subr.bf16.mxu0 %v3678
    %3888 = vmatpush1.bf16.msra.mxu0 %v3677
    %3889 = vmatprep.subr.bf16.mxu0 %v3670
    %3890 = vmatpush1.bf16.msra.mxu0 %v3669
    %3891 = vmatprep.subr.bf16.mxu0 %v3662
    %3892 = vmatpush1.bf16.msra.mxu0 %v3661
    %3893 = vmatprep.subr.bf16.mxu0 %v3654
    %3894 = vmatpush1.bf16.msra.mxu0 %v3653
    %3895 = vmatprep.subr.bf16.mxu0 %v3646
    %3896 = vmatpush1.bf16.msra.mxu0 %v3645
    %3897 = vmatprep.subr.bf16.mxu0 %v3638
    %3898 = vmatpush1.bf16.msra.mxu0 %v3637
    %3899 = vmatprep.subr.bf16.mxu0 %v3630
    %3900 = vmatpush1.bf16.msra.mxu0 %v3629
    %3901 = vmatprep.subr.bf16.mxu0 %v3750
    %3902 = vmatpush2.bf16.msra.mxu0 %v3749
    %3903 = vmatprep.subr.bf16.mxu0 %v3742
    %3904 = vmatpush2.bf16.msra.mxu0 %v3741
    %3905 = vmatprep.subr.bf16.mxu0 %v3734
    %3906 = vmatpush2.bf16.msra.mxu0 %v3733
    %3907 = vmatprep.subr.bf16.mxu0 %v3726
    %3908 = vmatpush2.bf16.msra.mxu0 %v3725
    %3909 = vmatprep.subr.bf16.mxu0 %v3718
    %3910 = vmatpush2.bf16.msra.mxu0 %v3717
    %3911 = vmatprep.subr.bf16.mxu0 %v3710
    %3912 = vmatpush2.bf16.msra.mxu0 %v3709
    %3913 = vmatprep.subr.bf16.mxu0 %v3702
    %3914 = vmatpush2.bf16.msra.mxu0 %v3701
    %3915 = vmatprep.subr.bf16.mxu0 %v3694
    %3916 = vmatpush2.bf16.msra.mxu0 %v3693
    %3917 = vmatprep.mubr.bf16.mxu0 %v3230
    %3918 = vmatmul.mubr.bf16.gmra.mxu0 %v3229
    %v3919 = vpop.f32.mrf.mxu0
    %v3920 = vadd.f32 %v3168, %v3919
    %v3921 = vpop.f32.mrf.mxu0
    %v3922 = vadd.f32 %v3172, %v3921
    %v3923 = vpop.f32.mrf.mxu0
    %v3924 = vadd.f32 %v3168, %v3923
    %v3925 = vpop.f32.mrf.mxu0
    %v3926 = vadd.f32 %v3172, %v3925
    %3927 = vmatprep.mubr.bf16.mxu0 %v3232
    %3928 = vmatmul.mubr.bf16.gmra.mxu0 %v3231
    %v3929 = vpop.f32.mrf.mxu0
    %v3930 = vadd.f32 %v3168, %v3929
    %v3931 = vpop.f32.mrf.mxu0
    %v3932 = vadd.f32 %v3172, %v3931
    %v3933 = vpop.f32.mrf.mxu0
    %v3934 = vadd.f32 %v3168, %v3933
    %v3935 = vpop.f32.mrf.mxu0
    %v3936 = vadd.f32 %v3172, %v3935
    %3937 = vmatprep.mubr.bf16.mxu0 %v3234
    %3938 = vmatmul.mubr.bf16.gmra.mxu0 %v3233
    %v3939 = vpop.f32.mrf.mxu0
    %v3940 = vadd.f32 %v3168, %v3939
    %v3941 = vpop.f32.mrf.mxu0
    %v3942 = vadd.f32 %v3172, %v3941
    %v3943 = vpop.f32.mrf.mxu0
    %v3944 = vadd.f32 %v3168, %v3943
    %v3945 = vpop.f32.mrf.mxu0
    %v3946 = vadd.f32 %v3172, %v3945
    %3947 = vmatprep.mubr.bf16.mxu0 %v3236
    %3948 = vmatmul.mubr.bf16.gmra.mxu0 %v3235
    %v3949 = vpop.f32.mrf.mxu0
    %v3950 = vadd.f32 %v3168, %v3949
    %v3951 = vpop.f32.mrf.mxu0
    %v3952 = vadd.f32 %v3172, %v3951
    %v3953 = vpop.f32.mrf.mxu0
    %v3954 = vadd.f32 %v3168, %v3953
    %v3955 = vpop.f32.mrf.mxu0
    %v3956 = vadd.f32 %v3172, %v3955
    %3957 = vdwg.mxu0
    %3958 = vmatprep.subr.bf16.mxu0 %v3688
    %3959 = vmatpush1.bf16.msra.mxu0 %v3687
    %3960 = vmatprep.subr.bf16.mxu0 %v3680
    %3961 = vmatpush1.bf16.msra.mxu0 %v3679
    %3962 = vmatprep.subr.bf16.mxu0 %v3672
    %3963 = vmatpush1.bf16.msra.mxu0 %v3671
    %3964 = vmatprep.subr.bf16.mxu0 %v3664
    %3965 = vmatpush1.bf16.msra.mxu0 %v3663
    %3966 = vmatprep.subr.bf16.mxu0 %v3656
    %3967 = vmatpush1.bf16.msra.mxu0 %v3655
    %3968 = vmatprep.subr.bf16.mxu0 %v3648
    %3969 = vmatpush1.bf16.msra.mxu0 %v3647
    %3970 = vmatprep.subr.bf16.mxu0 %v3640
    %3971 = vmatpush1.bf16.msra.mxu0 %v3639
    %3972 = vmatprep.subr.bf16.mxu0 %v3632
    %3973 = vmatpush1.bf16.msra.mxu0 %v3631
    %3974 = vmatprep.subr.bf16.mxu0 %v3752
    %3975 = vmatpush2.bf16.msra.mxu0 %v3751
    %3976 = vmatprep.subr.bf16.mxu0 %v3744
    %3977 = vmatpush2.bf16.msra.mxu0 %v3743
    %3978 = vmatprep.subr.bf16.mxu0 %v3736
    %3979 = vmatpush2.bf16.msra.mxu0 %v3735
    %3980 = vmatprep.subr.bf16.mxu0 %v3728
    %3981 = vmatpush2.bf16.msra.mxu0 %v3727
    %3982 = vmatprep.subr.bf16.mxu0 %v3720
    %3983 = vmatpush2.bf16.msra.mxu0 %v3719
    %3984 = vmatprep.subr.bf16.mxu0 %v3712
    %3985 = vmatpush2.bf16.msra.mxu0 %v3711
    %3986 = vmatprep.subr.bf16.mxu0 %v3704
    %3987 = vmatpush2.bf16.msra.mxu0 %v3703
    %3988 = vmatprep.subr.bf16.mxu0 %v3696
    %3989 = vmatpush2.bf16.msra.mxu0 %v3695
    %3990 = vmatprep.mubr.bf16.mxu0 %v3230
    %3991 = vmatmul.mubr.bf16.gmra.mxu0 %v3229
    %v3992 = vpop.f32.mrf.mxu0
    %v3993 = vadd.f32 %v3176, %v3992
    %v3994 = vpop.f32.mrf.mxu0
    %v3995 = vadd.f32 %v3180, %v3994
    %v3996 = vpop.f32.mrf.mxu0
    %v3997 = vadd.f32 %v3176, %v3996
    %v3998 = vpop.f32.mrf.mxu0
    %v3999 = vadd.f32 %v3180, %v3998
    %4000 = vmatprep.mubr.bf16.mxu0 %v3232
    %4001 = vmatmul.mubr.bf16.gmra.mxu0 %v3231
    %v4002 = vpop.f32.mrf.mxu0
    %v4003 = vadd.f32 %v3176, %v4002
    %v4004 = vpop.f32.mrf.mxu0
    %v4005 = vadd.f32 %v3180, %v4004
    %v4006 = vpop.f32.mrf.mxu0
    %v4007 = vadd.f32 %v3176, %v4006
    %v4008 = vpop.f32.mrf.mxu0
    %v4009 = vadd.f32 %v3180, %v4008
    %4010 = vmatprep.mubr.bf16.mxu0 %v3234
    %4011 = vmatmul.mubr.bf16.gmra.mxu0 %v3233
    %v4012 = vpop.f32.mrf.mxu0
    %v4013 = vadd.f32 %v3176, %v4012
    %v4014 = vpop.f32.mrf.mxu0
    %v4015 = vadd.f32 %v3180, %v4014
    %v4016 = vpop.f32.mrf.mxu0
    %v4017 = vadd.f32 %v3176, %v4016
    %v4018 = vpop.f32.mrf.mxu0
    %v4019 = vadd.f32 %v3180, %v4018
    %4020 = vmatprep.mubr.bf16.mxu0 %v3236
    %4021 = vmatmul.mubr.bf16.gmra.mxu0 %v3235
    %v4022 = vpop.f32.mrf.mxu0
    %v4023 = vadd.f32 %v3176, %v4022
    %v4024 = vpop.f32.mrf.mxu0
    %v4025 = vadd.f32 %v3180, %v4024
    %v4026 = vpop.f32.mrf.mxu0
    %v4027 = vadd.f32 %v3176, %v4026
    %v4028 = vpop.f32.mrf.mxu0
    %v4029 = vadd.f32 %v3180, %v4028
    %4030 = vdwg.mxu0
    %4031 = vmatprep.subr.bf16.mxu0 %v3690
    %4032 = vmatpush1.bf16.msra.mxu0 %v3689
    %4033 = vmatprep.subr.bf16.mxu0 %v3682
    %4034 = vmatpush1.bf16.msra.mxu0 %v3681
    %4035 = vmatprep.subr.bf16.mxu0 %v3674
    %4036 = vmatpush1.bf16.msra.mxu0 %v3673
    %4037 = vmatprep.subr.bf16.mxu0 %v3666
    %4038 = vmatpush1.bf16.msra.mxu0 %v3665
    %4039 = vmatprep.subr.bf16.mxu0 %v3658
    %4040 = vmatpush1.bf16.msra.mxu0 %v3657
    %4041 = vmatprep.subr.bf16.mxu0 %v3650
    %4042 = vmatpush1.bf16.msra.mxu0 %v3649
    %4043 = vmatprep.subr.bf16.mxu0 %v3642
    %4044 = vmatpush1.bf16.msra.mxu0 %v3641
    %4045 = vmatprep.subr.bf16.mxu0 %v3634
    %4046 = vmatpush1.bf16.msra.mxu0 %v3633
    %4047 = vmatprep.subr.bf16.mxu0 %v3754
    %4048 = vmatpush2.bf16.msra.mxu0 %v3753
    %4049 = vmatprep.subr.bf16.mxu0 %v3746
    %4050 = vmatpush2.bf16.msra.mxu0 %v3745
    %4051 = vmatprep.subr.bf16.mxu0 %v3738
    %4052 = vmatpush2.bf16.msra.mxu0 %v3737
    %4053 = vmatprep.subr.bf16.mxu0 %v3730
    %4054 = vmatpush2.bf16.msra.mxu0 %v3729
    %4055 = vmatprep.subr.bf16.mxu0 %v3722
    %4056 = vmatpush2.bf16.msra.mxu0 %v3721
    %4057 = vmatprep.subr.bf16.mxu0 %v3714
    %4058 = vmatpush2.bf16.msra.mxu0 %v3713
    %4059 = vmatprep.subr.bf16.mxu0 %v3706
    %4060 = vmatpush2.bf16.msra.mxu0 %v3705
    %4061 = vmatprep.subr.bf16.mxu0 %v3698
    %4062 = vmatpush2.bf16.msra.mxu0 %v3697
    %4063 = vmatprep.mubr.bf16.mxu0 %v3230
    %4064 = vmatmul.mubr.bf16.gmra.mxu0 %v3229
    %v4065 = vpop.f32.mrf.mxu0
    %v4066 = vadd.f32 %v3184, %v4065
    %v4067 = vpop.f32.mrf.mxu0
    %v4068 = vadd.f32 %v3188, %v4067
    %v4069 = vpop.f32.mrf.mxu0
    %v4070 = vadd.f32 %v3184, %v4069
    %v4071 = vpop.f32.mrf.mxu0
    %v4072 = vadd.f32 %v3188, %v4071
    %4073 = vmatprep.mubr.bf16.mxu0 %v3232
    %4074 = vmatmul.mubr.bf16.gmra.mxu0 %v3231
    %v4075 = vpop.f32.mrf.mxu0
    %v4076 = vadd.f32 %v3184, %v4075
    %v4077 = vpop.f32.mrf.mxu0
    %v4078 = vadd.f32 %v3188, %v4077
    %v4079 = vpop.f32.mrf.mxu0
    %v4080 = vadd.f32 %v3184, %v4079
    %v4081 = vpop.f32.mrf.mxu0
    %v4082 = vadd.f32 %v3188, %v4081
    %4083 = vmatprep.mubr.bf16.mxu0 %v3234
    %4084 = vmatmul.mubr.bf16.gmra.mxu0 %v3233
    %v4085 = vpop.f32.mrf.mxu0
    %v4086 = vadd.f32 %v3184, %v4085
    %v4087 = vpop.f32.mrf.mxu0
    %v4088 = vadd.f32 %v3188, %v4087
    %v4089 = vpop.f32.mrf.mxu0
    %v4090 = vadd.f32 %v3184, %v4089
    %v4091 = vpop.f32.mrf.mxu0
    %v4092 = vadd.f32 %v3188, %v4091
    %4093 = vmatprep.mubr.bf16.mxu0 %v3236
    %4094 = vmatmul.mubr.bf16.gmra.mxu0 %v3235
    %v4095 = vpop.f32.mrf.mxu0
    %v4096 = vadd.f32 %v3184, %v4095
    %v4097 = vpop.f32.mrf.mxu0
    %v4098 = vadd.f32 %v3188, %v4097
    %v4099 = vpop.f32.mrf.mxu0
    %v4100 = vadd.f32 %v3184, %v4099
    %v4101 = vpop.f32.mrf.mxu0
    %v4102 = vadd.f32 %v3188, %v4101
    %4103 = vdwg.mxu0
    %4104 = vmatprep.subr.bf16.mxu0 %v3692
    %4105 = vmatpush1.bf16.msra.mxu0 %v3691
    %4106 = vmatprep.subr.bf16.mxu0 %v3684
    %4107 = vmatpush1.bf16.msra.mxu0 %v3683
    %4108 = vmatprep.subr.bf16.mxu0 %v3676
    %4109 = vmatpush1.bf16.msra.mxu0 %v3675
    %4110 = vmatprep.subr.bf16.mxu0 %v3668
    %4111 = vmatpush1.bf16.msra.mxu0 %v3667
    %4112 = vmatprep.subr.bf16.mxu0 %v3660
    %4113 = vmatpush1.bf16.msra.mxu0 %v3659
    %4114 = vmatprep.subr.bf16.mxu0 %v3652
    %4115 = vmatpush1.bf16.msra.mxu0 %v3651
    %4116 = vmatprep.subr.bf16.mxu0 %v3644
    %4117 = vmatpush1.bf16.msra.mxu0 %v3643
    %4118 = vmatprep.subr.bf16.mxu0 %v3636
    %4119 = vmatpush1.bf16.msra.mxu0 %v3635
    %4120 = vmatprep.subr.bf16.mxu0 %v3756
    %4121 = vmatpush2.bf16.msra.mxu0 %v3755
    %4122 = vmatprep.subr.bf16.mxu0 %v3748
    %4123 = vmatpush2.bf16.msra.mxu0 %v3747
    %4124 = vmatprep.subr.bf16.mxu0 %v3740
    %4125 = vmatpush2.bf16.msra.mxu0 %v3739
    %4126 = vmatprep.subr.bf16.mxu0 %v3732
    %4127 = vmatpush2.bf16.msra.mxu0 %v3731
    %4128 = vmatprep.subr.bf16.mxu0 %v3724
    %4129 = vmatpush2.bf16.msra.mxu0 %v3723
    %4130 = vmatprep.subr.bf16.mxu0 %v3716
    %4131 = vmatpush2.bf16.msra.mxu0 %v3715
    %4132 = vmatprep.subr.bf16.mxu0 %v3708
    %4133 = vmatpush2.bf16.msra.mxu0 %v3707
    %4134 = vmatprep.subr.bf16.mxu0 %v3700
    %4135 = vmatpush2.bf16.msra.mxu0 %v3699
    %4136 = vmatprep.mubr.bf16.mxu0 %v3230
    %4137 = vmatmul.mubr.bf16.gmra.mxu0 %v3229
    %v4138 = vpop.f32.mrf.mxu0
    %v4139 = vadd.f32 %v3192, %v4138
    %v4140 = vpop.f32.mrf.mxu0
    %v4141 = vadd.f32 %v3196, %v4140
    %v4142 = vpop.f32.mrf.mxu0
    %v4143 = vadd.f32 %v3192, %v4142
    %v4144 = vpop.f32.mrf.mxu0
    %v4145 = vadd.f32 %v3196, %v4144
    %4146 = vmatprep.mubr.bf16.mxu0 %v3232
    %4147 = vmatmul.mubr.bf16.gmra.mxu0 %v3231
    %v4148 = vpop.f32.mrf.mxu0
    %v4149 = vadd.f32 %v3192, %v4148
    %v4150 = vpop.f32.mrf.mxu0
    %v4151 = vadd.f32 %v3196, %v4150
    %v4152 = vpop.f32.mrf.mxu0
    %v4153 = vadd.f32 %v3192, %v4152
    %v4154 = vpop.f32.mrf.mxu0
    %v4155 = vadd.f32 %v3196, %v4154
    %4156 = vmatprep.mubr.bf16.mxu0 %v3234
    %4157 = vmatmul.mubr.bf16.gmra.mxu0 %v3233
    %v4158 = vpop.f32.mrf.mxu0
    %v4159 = vadd.f32 %v3192, %v4158
    %v4160 = vpop.f32.mrf.mxu0
    %v4161 = vadd.f32 %v3196, %v4160
    %v4162 = vpop.f32.mrf.mxu0
    %v4163 = vadd.f32 %v3192, %v4162
    %v4164 = vpop.f32.mrf.mxu0
    %v4165 = vadd.f32 %v3196, %v4164
    %4166 = vmatprep.mubr.bf16.mxu0 %v3236
    %4167 = vmatmul.mubr.bf16.gmra.mxu0 %v3235
    %v4168 = vpop.f32.mrf.mxu0
    %v4169 = vadd.f32 %v3192, %v4168
    %v4170 = vpop.f32.mrf.mxu0
    %v4171 = vadd.f32 %v3196, %v4170
    %v4172 = vpop.f32.mrf.mxu0
    %v4173 = vadd.f32 %v3192, %v4172
    %v4174 = vpop.f32.mrf.mxu0
    %v4175 = vadd.f32 %v3196, %v4174
    %4176 = vdwg.mxu0
    %4177 = vst [vmem:[#allocation2] sm:$0xff] %v3920
    %4178 = vst [vmem:[#allocation2 + $0x8] sm:$0xff] %v3922
    %4179 = vst [vmem:[#allocation2 + $0x10] sm:$0xff] %v3993
    %4180 = vst [vmem:[#allocation2 + $0x18] sm:$0xff] %v3995
    %4181 = vst [vmem:[#allocation2 + $0x20] sm:$0xff] %v4066
    %4182 = vst [vmem:[#allocation2 + $0x28] sm:$0xff] %v4068
    %4183 = vst [vmem:[#allocation2 + $0x30] sm:$0xff] %v4139
    %4184 = vst [vmem:[#allocation2 + $0x38] sm:$0xff] %v4141
    %4185 = vst [vmem:[#allocation2 + $0x40] sm:$0xff] %v3924
    %4186 = vst [vmem:[#allocation2 + $0x48] sm:$0xff] %v3926
    %4187 = vst [vmem:[#allocation2 + $0x50] sm:$0xff] %v3997
    %4188 = vst [vmem:[#allocation2 + $0x58] sm:$0xff] %v3999
    %4189 = vst [vmem:[#allocation2 + $0x60] sm:$0xff] %v4070
    %4190 = vst [vmem:[#allocation2 + $0x68] sm:$0xff] %v4072
    %4191 = vst [vmem:[#allocation2 + $0x70] sm:$0xff] %v4143
    %4192 = vst [vmem:[#allocation2 + $0x78] sm:$0xff] %v4145
    %4193 = vst [vmem:[#allocation2 + $0x80] sm:$0xff] %v3930
    %4194 = vst [vmem:[#allocation2 + $0x88] sm:$0xff] %v3932
    %4195 = vst [vmem:[#allocation2 + $0x90] sm:$0xff] %v4003
    %4196 = vst [vmem:[#allocation2 + $0x98] sm:$0xff] %v4005
    %4197 = vst [vmem:[#allocation2 + $0xa0] sm:$0xff] %v4076
    %4198 = vst [vmem:[#allocation2 + $0xa8] sm:$0xff] %v4078
    %4199 = vst [vmem:[#allocation2 + $0xb0] sm:$0xff] %v4149
    %4200 = vst [vmem:[#allocation2 + $0xb8] sm:$0xff] %v4151
    %4201 = vst [vmem:[#allocation2 + $0xc0] sm:$0xff] %v3934
    %4202 = vst [vmem:[#allocation2 + $0xc8] sm:$0xff] %v3936
    %4203 = vst [vmem:[#allocation2 + $0xd0] sm:$0xff] %v4007
    %4204 = vst [vmem:[#allocation2 + $0xd8] sm:$0xff] %v4009
    %4205 = vst [vmem:[#allocation2 + $0xe0] sm:$0xff] %v4080
    %4206 = vst [vmem:[#allocation2 + $0xe8] sm:$0xff] %v4082
    %4207 = vst [vmem:[#allocation2 + $0xf0] sm:$0xff] %v4153
    %4208 = vst [vmem:[#allocation2 + $0xf8] sm:$0xff] %v4155
    %4209 = vst [vmem:[#allocation2 + $0x100] sm:$0xff] %v3940
    %4210 = vst [vmem:[#allocation2 + $0x108] sm:$0xff] %v3942
    %4211 = vst [vmem:[#allocation2 + $0x110] sm:$0xff] %v4013
    %4212 = vst [vmem:[#allocation2 + $0x118] sm:$0xff] %v4015
    %4213 = vst [vmem:[#allocation2 + $0x120] sm:$0xff] %v4086
    %4214 = vst [vmem:[#allocation2 + $0x128] sm:$0xff] %v4088
    %4215 = vst [vmem:[#allocation2 + $0x130] sm:$0xff] %v4159
    %4216 = vst [vmem:[#allocation2 + $0x138] sm:$0xff] %v4161
    %4217 = vst [vmem:[#allocation2 + $0x140] sm:$0xff] %v3944
    %4218 = vst [vmem:[#allocation2 + $0x148] sm:$0xff] %v3946
    %4219 = vst [vmem:[#allocation2 + $0x150] sm:$0xff] %v4017
    %4220 = vst [vmem:[#allocation2 + $0x158] sm:$0xff] %v4019
    %4221 = vst [vmem:[#allocation2 + $0x160] sm:$0xff] %v4090
    %4222 = vst [vmem:[#allocation2 + $0x168] sm:$0xff] %v4092
    %4223 = vst [vmem:[#allocation2 + $0x170] sm:$0xff] %v4163
    %4224 = vst [vmem:[#allocation2 + $0x178] sm:$0xff] %v4165
    %4225 = vst [vmem:[#allocation2 + $0x180] sm:$0xff] %v3950
    %4226 = vst [vmem:[#allocation2 + $0x188] sm:$0xff] %v3952
    %4227 = vst [vmem:[#allocation2 + $0x190] sm:$0xff] %v4023
    %4228 = vst [vmem:[#allocation2 + $0x198] sm:$0xff] %v4025
    %4229 = vst [vmem:[#allocation2 + $0x1a0] sm:$0xff] %v4096
    %4230 = vst [vmem:[#allocation2 + $0x1a8] sm:$0xff] %v4098
    %4231 = vst [vmem:[#allocation2 + $0x1b0] sm:$0xff] %v4169
    %4232 = vst [vmem:[#allocation2 + $0x1b8] sm:$0xff] %v4171
    %4233 = vst [vmem:[#allocation2 + $0x1c0] sm:$0xff] %v3954
    %4234 = vst [vmem:[#allocation2 + $0x1c8] sm:$0xff] %v3956
    %4235 = vst [vmem:[#allocation2 + $0x1d0] sm:$0xff] %v4027
    %4236 = vst [vmem:[#allocation2 + $0x1d8] sm:$0xff] %v4029
    %4237 = vst [vmem:[#allocation2 + $0x1e0] sm:$0xff] %v4100
    %4238 = vst [vmem:[#allocation2 + $0x1e8] sm:$0xff] %v4102
    %4239 = vst [vmem:[#allocation2 + $0x1f0] sm:$0xff] %v4173
    %4240 = vst [vmem:[#allocation2 + $0x1f8] sm:$0xff] %v4175
    %v4241 = vld [vmem:[#allocation6] sm:$0xff]
    %v4242 = vld [vmem:[#allocation6 + $0x8] sm:$0xff]
    %v4243 = vld [vmem:[#allocation6 + $0x20] sm:$0xff]
    %v4244 = vld [vmem:[#allocation6 + $0x28] sm:$0xff]
    %v4245 = vld [vmem:[#allocation6 + $0x40] sm:$0xff]
    %v4246 = vld [vmem:[#allocation6 + $0x48] sm:$0xff]
    %v4247 = vld [vmem:[#allocation6 + $0x60] sm:$0xff]
    %v4248 = vld [vmem:[#allocation6 + $0x68] sm:$0xff]
    %v4249 = vld [vmem:[#allocation6 + $0x80] sm:$0xff]
    %v4250 = vld [vmem:[#allocation6 + $0x88] sm:$0xff]
    %v4251 = vld [vmem:[#allocation6 + $0xa0] sm:$0xff]
    %v4252 = vld [vmem:[#allocation6 + $0xa8] sm:$0xff]
    %v4253 = vld [vmem:[#allocation6 + $0xc0] sm:$0xff]
    %v4254 = vld [vmem:[#allocation6 + $0xc8] sm:$0xff]
    %v4255 = vld [vmem:[#allocation6 + $0xe0] sm:$0xff]
    %v4256 = vld [vmem:[#allocation6 + $0xe8] sm:$0xff]
    %v4257 = vld [vmem:[#allocation6 + $0x100] sm:$0xff]
    %v4258 = vld [vmem:[#allocation6 + $0x108] sm:$0xff]
    %v4259 = vld [vmem:[#allocation6 + $0x120] sm:$0xff]
    %v4260 = vld [vmem:[#allocation6 + $0x128] sm:$0xff]
    %v4261 = vld [vmem:[#allocation6 + $0x140] sm:$0xff]
    %v4262 = vld [vmem:[#allocation6 + $0x148] sm:$0xff]
    %v4263 = vld [vmem:[#allocation6 + $0x160] sm:$0xff]
    %v4264 = vld [vmem:[#allocation6 + $0x168] sm:$0xff]
    %v4265 = vld [vmem:[#allocation6 + $0x180] sm:$0xff]
    %v4266 = vld [vmem:[#allocation6 + $0x188] sm:$0xff]
    %v4267 = vld [vmem:[#allocation6 + $0x1a0] sm:$0xff]
    %v4268 = vld [vmem:[#allocation6 + $0x1a8] sm:$0xff]
    %v4269 = vld [vmem:[#allocation6 + $0x1c0] sm:$0xff]
    %v4270 = vld [vmem:[#allocation6 + $0x1c8] sm:$0xff]
    %v4271 = vld [vmem:[#allocation6 + $0x1e0] sm:$0xff]
    %v4272 = vld [vmem:[#allocation6 + $0x1e8] sm:$0xff]
    %v4273 = vld [vmem:[#allocation6 + $0x10] sm:$0xff]
    %v4274 = vld [vmem:[#allocation6 + $0x18] sm:$0xff]
    %v4275 = vld [vmem:[#allocation6 + $0x30] sm:$0xff]
    %v4276 = vld [vmem:[#allocation6 + $0x38] sm:$0xff]
    %v4277 = vld [vmem:[#allocation6 + $0x50] sm:$0xff]
    %v4278 = vld [vmem:[#allocation6 + $0x58] sm:$0xff]
    %v4279 = vld [vmem:[#allocation6 + $0x70] sm:$0xff]
    %v4280 = vld [vmem:[#allocation6 + $0x78] sm:$0xff]
    %v4281 = vld [vmem:[#allocation6 + $0x90] sm:$0xff]
    %v4282 = vld [vmem:[#allocation6 + $0x98] sm:$0xff]
    %v4283 = vld [vmem:[#allocation6 + $0xb0] sm:$0xff]
    %v4284 = vld [vmem:[#allocation6 + $0xb8] sm:$0xff]
    %v4285 = vld [vmem:[#allocation6 + $0xd0] sm:$0xff]
    %v4286 = vld [vmem:[#allocation6 + $0xd8] sm:$0xff]
    %v4287 = vld [vmem:[#allocation6 + $0xf0] sm:$0xff]
    %v4288 = vld [vmem:[#allocation6 + $0xf8] sm:$0xff]
    %v4289 = vld [vmem:[#allocation6 + $0x110] sm:$0xff]
    %v4290 = vld [vmem:[#allocation6 + $0x118] sm:$0xff]
    %v4291 = vld [vmem:[#allocation6 + $0x130] sm:$0xff]
    %v4292 = vld [vmem:[#allocation6 + $0x138] sm:$0xff]
    %v4293 = vld [vmem:[#allocation6 + $0x150] sm:$0xff]
    %v4294 = vld [vmem:[#allocation6 + $0x158] sm:$0xff]
    %v4295 = vld [vmem:[#allocation6 + $0x170] sm:$0xff]
    %v4296 = vld [vmem:[#allocation6 + $0x178] sm:$0xff]
    %v4297 = vld [vmem:[#allocation6 + $0x190] sm:$0xff]
    %v4298 = vld [vmem:[#allocation6 + $0x198] sm:$0xff]
    %v4299 = vld [vmem:[#allocation6 + $0x1b0] sm:$0xff]
    %v4300 = vld [vmem:[#allocation6 + $0x1b8] sm:$0xff]
    %v4301 = vld [vmem:[#allocation6 + $0x1d0] sm:$0xff]
    %v4302 = vld [vmem:[#allocation6 + $0x1d8] sm:$0xff]
    %v4303 = vld [vmem:[#allocation6 + $0x1f0] sm:$0xff]
    %v4304 = vld [vmem:[#allocation6 + $0x1f8] sm:$0xff]
    %v4305 = vld [vmem:[#allocation2] sm:$0xff]
    %v4306 = vld [vmem:[#allocation2 + $0x8] sm:$0xff]
    %v4307 = vld [vmem:[#allocation2 + $0x10] sm:$0xff]
    %v4308 = vld [vmem:[#allocation2 + $0x18] sm:$0xff]
    %v4341 = vunpack.c.l.b16 %v4241
    %v4342 = vunpack.c.h.b16 %v4241
    %v4343 = vunpack.c.l.b16 %v4242
    %v4344 = vunpack.c.h.b16 %v4242
    %v4345 = vunpack.c.l.b16 %v4243
    %v4346 = vunpack.c.h.b16 %v4243
    %v4347 = vunpack.c.l.b16 %v4244
    %v4348 = vunpack.c.h.b16 %v4244
    %v4349 = vunpack.c.l.b16 %v4245
    %v4350 = vunpack.c.h.b16 %v4245
    %v4351 = vunpack.c.l.b16 %v4246
    %v4352 = vunpack.c.h.b16 %v4246
    %v4353 = vunpack.c.l.b16 %v4247
    %v4354 = vunpack.c.h.b16 %v4247
    %v4355 = vunpack.c.l.b16 %v4248
    %v4356 = vunpack.c.h.b16 %v4248
    %v4357 = vunpack.c.l.b16 %v4249
    %v4358 = vunpack.c.h.b16 %v4249
    %v4359 = vunpack.c.l.b16 %v4250
    %v4360 = vunpack.c.h.b16 %v4250
    %v4361 = vunpack.c.l.b16 %v4251
    %v4362 = vunpack.c.h.b16 %v4251
    %v4363 = vunpack.c.l.b16 %v4252
    %v4364 = vunpack.c.h.b16 %v4252
    %v4365 = vunpack.c.l.b16 %v4253
    %v4366 = vunpack.c.h.b16 %v4253
    %v4367 = vunpack.c.l.b16 %v4254
    %v4368 = vunpack.c.h.b16 %v4254
    %v4369 = vunpack.c.l.b16 %v4255
    %v4370 = vunpack.c.h.b16 %v4255
    %v4371 = vunpack.c.l.b16 %v4256
    %v4372 = vunpack.c.h.b16 %v4256
    %v4373 = vunpack.c.l.b16 %v4257
    %v4374 = vunpack.c.h.b16 %v4257
    %v4375 = vunpack.c.l.b16 %v4258
    %v4376 = vunpack.c.h.b16 %v4258
    %v4377 = vunpack.c.l.b16 %v4259
    %v4378 = vunpack.c.h.b16 %v4259
    %v4379 = vunpack.c.l.b16 %v4260
    %v4380 = vunpack.c.h.b16 %v4260
    %v4381 = vunpack.c.l.b16 %v4261
    %v4382 = vunpack.c.h.b16 %v4261
    %v4383 = vunpack.c.l.b16 %v4262
    %v4384 = vunpack.c.h.b16 %v4262
    %v4385 = vunpack.c.l.b16 %v4263
    %v4386 = vunpack.c.h.b16 %v4263
    %v4387 = vunpack.c.l.b16 %v4264
    %v4388 = vunpack.c.h.b16 %v4264
    %v4389 = vunpack.c.l.b16 %v4265
    %v4390 = vunpack.c.h.b16 %v4265
    %v4391 = vunpack.c.l.b16 %v4266
    %v4392 = vunpack.c.h.b16 %v4266
    %v4393 = vunpack.c.l.b16 %v4267
    %v4394 = vunpack.c.h.b16 %v4267
    %v4395 = vunpack.c.l.b16 %v4268
    %v4396 = vunpack.c.h.b16 %v4268
    %v4397 = vunpack.c.l.b16 %v4269
    %v4398 = vunpack.c.h.b16 %v4269
    %v4399 = vunpack.c.l.b16 %v4270
    %v4400 = vunpack.c.h.b16 %v4270
    %v4401 = vunpack.c.l.b16 %v4271
    %v4402 = vunpack.c.h.b16 %v4271
    %v4403 = vunpack.c.l.b16 %v4272
    %v4404 = vunpack.c.h.b16 %v4272
    %v4405 = vpack.c.b16 %v4345, %v4341
    %v4406 = vpack.c.b16 %v4346, %v4342
    %v4407 = vpack.c.b16 %v4347, %v4343
    %v4408 = vpack.c.b16 %v4348, %v4344
    %v4409 = vpack.c.b16 %v4353, %v4349
    %v4410 = vpack.c.b16 %v4354, %v4350
    %v4411 = vpack.c.b16 %v4355, %v4351
    %v4412 = vpack.c.b16 %v4356, %v4352
    %v4413 = vpack.c.b16 %v4361, %v4357
    %v4414 = vpack.c.b16 %v4362, %v4358
    %v4415 = vpack.c.b16 %v4363, %v4359
    %v4416 = vpack.c.b16 %v4364, %v4360
    %v4417 = vpack.c.b16 %v4369, %v4365
    %v4418 = vpack.c.b16 %v4370, %v4366
    %v4419 = vpack.c.b16 %v4371, %v4367
    %v4420 = vpack.c.b16 %v4372, %v4368
    %v4421 = vpack.c.b16 %v4377, %v4373
    %v4422 = vpack.c.b16 %v4378, %v4374
    %v4423 = vpack.c.b16 %v4379, %v4375
    %v4424 = vpack.c.b16 %v4380, %v4376
    %v4425 = vpack.c.b16 %v4385, %v4381
    %v4426 = vpack.c.b16 %v4386, %v4382
    %v4427 = vpack.c.b16 %v4387, %v4383
    %v4428 = vpack.c.b16 %v4388, %v4384
    %v4429 = vpack.c.b16 %v4393, %v4389
    %v4430 = vpack.c.b16 %v4394, %v4390
    %v4431 = vpack.c.b16 %v4395, %v4391
    %v4432 = vpack.c.b16 %v4396, %v4392
    %v4433 = vpack.c.b16 %v4401, %v4397
    %v4434 = vpack.c.b16 %v4402, %v4398
    %v4435 = vpack.c.b16 %v4403, %v4399
    %v4436 = vpack.c.b16 %v4404, %v4400
    %4469 = vmatprep.subr.bf16.mxu0 %v4434
    %4470 = vmatpush1.bf16.msra.mxu0 %v4433
    %4471 = vmatprep.subr.bf16.mxu0 %v4430
    %4472 = vmatpush1.bf16.msra.mxu0 %v4429
    %4473 = vmatprep.subr.bf16.mxu0 %v4426
    %4474 = vmatpush1.bf16.msra.mxu0 %v4425
    %4475 = vmatprep.subr.bf16.mxu0 %v4422
    %4476 = vmatpush1.bf16.msra.mxu0 %v4421
    %4477 = vmatprep.subr.bf16.mxu0 %v4418
    %4478 = vmatpush1.bf16.msra.mxu0 %v4417
    %4479 = vmatprep.subr.bf16.mxu0 %v4414
    %4480 = vmatpush1.bf16.msra.mxu0 %v4413
    %4481 = vmatprep.subr.bf16.mxu0 %v4410
    %4482 = vmatpush1.bf16.msra.mxu0 %v4409
    %4483 = vmatprep.subr.bf16.mxu0 %v4406
    %4484 = vmatpush1.bf16.msra.mxu0 %v4405
    %4485 = vmatprep.subr.bf16.mxu0 0
    %4486 = vmatpush2.bf16.msra.mxu0 0
    %4487 = vmatprep.subr.bf16.mxu0 0
    %4488 = vmatpush2.bf16.msra.mxu0 0
    %4489 = vmatprep.subr.bf16.mxu0 0
    %4490 = vmatpush2.bf16.msra.mxu0 0
    %4491 = vmatprep.subr.bf16.mxu0 0
    %4492 = vmatpush2.bf16.msra.mxu0 0
    %4493 = vmatprep.subr.bf16.mxu0 0
    %4494 = vmatpush2.bf16.msra.mxu0 0
    %4495 = vmatprep.subr.bf16.mxu0 0
    %4496 = vmatpush2.bf16.msra.mxu0 0
    %4497 = vmatprep.subr.bf16.mxu0 0
    %4498 = vmatpush2.bf16.msra.mxu0 0
    %4499 = vmatprep.subr.bf16.mxu0 0
    %4500 = vmatpush2.bf16.msra.mxu0 0
    %4501 = vmatprep.mubr.bf16.mxu0 0
    %4502 = vmatmul.mubr.bf16.gmra.mxu0 0
    %v4503 = vpop.f32.mrf.mxu0
    %v4504 = vadd.f32 0.0, %v4503
    %v4505 = vpop.f32.mrf.mxu0
    %v4506 = vadd.f32 0.0, %v4505
    %v4507 = vpop.f32.mrf.mxu0
    %v4508 = vpop.f32.mrf.mxu0
    %4509 = vdwg.mxu0
    %4510 = vmatprep.subr.bf16.mxu0 %v4436
    %4511 = vmatpush1.bf16.msra.mxu0 %v4435
    %4512 = vmatprep.subr.bf16.mxu0 %v4432
    %4513 = vmatpush1.bf16.msra.mxu0 %v4431
    %4514 = vmatprep.subr.bf16.mxu0 %v4428
    %4515 = vmatpush1.bf16.msra.mxu0 %v4427
    %4516 = vmatprep.subr.bf16.mxu0 %v4424
    %4517 = vmatpush1.bf16.msra.mxu0 %v4423
    %4518 = vmatprep.subr.bf16.mxu0 %v4420
    %4519 = vmatpush1.bf16.msra.mxu0 %v4419
    %4520 = vmatprep.subr.bf16.mxu0 %v4416
    %4521 = vmatpush1.bf16.msra.mxu0 %v4415
    %4522 = vmatprep.subr.bf16.mxu0 %v4412
    %4523 = vmatpush1.bf16.msra.mxu0 %v4411
    %4524 = vmatprep.subr.bf16.mxu0 %v4408
    %4525 = vmatpush1.bf16.msra.mxu0 %v4407
    %4526 = vmatprep.subr.bf16.mxu0 0
    %4527 = vmatpush2.bf16.msra.mxu0 0
    %4528 = vmatprep.subr.bf16.mxu0 0
    %4529 = vmatpush2.bf16.msra.mxu0 0
    %4530 = vmatprep.subr.bf16.mxu0 0
    %4531 = vmatpush2.bf16.msra.mxu0 0
    %4532 = vmatprep.subr.bf16.mxu0 0
    %4533 = vmatpush2.bf16.msra.mxu0 0
    %4534 = vmatprep.subr.bf16.mxu0 0
    %4535 = vmatpush2.bf16.msra.mxu0 0
    %4536 = vmatprep.subr.bf16.mxu0 0
    %4537 = vmatpush2.bf16.msra.mxu0 0
    %4538 = vmatprep.subr.bf16.mxu0 0
    %4539 = vmatpush2.bf16.msra.mxu0 0
    %4540 = vmatprep.subr.bf16.mxu0 0
    %4541 = vmatpush2.bf16.msra.mxu0 0
    %4542 = vmatprep.mubr.bf16.mxu0 0
    %4543 = vmatmul.mubr.bf16.gmra.mxu0 0
    %v4544 = vpop.f32.mrf.mxu0
    %v4545 = vadd.f32 0.0, %v4544
    %v4546 = vpop.f32.mrf.mxu0
    %v4547 = vadd.f32 0.0, %v4546
    %v4548 = vpop.f32.mrf.mxu0
    %v4549 = vpop.f32.mrf.mxu0
    %4550 = vdwg.mxu0
    %v4551 = vadd.f32 %v4305, %v4504
    %v4552 = vadd.f32 %v4306, %v4506
    %v4553 = vadd.f32 %v4307, %v4545
    %v4554 = vadd.f32 %v4308, %v4547
    %v4555 = vld [vmem:[#allocation2 + $0x1e0] sm:$0xff]
    %v4556 = vld [vmem:[#allocation2 + $0x1e8] sm:$0xff]
    %v4557 = vld [vmem:[#allocation2 + $0x1f0] sm:$0xff]
    %v4558 = vld [vmem:[#allocation2 + $0x1f8] sm:$0xff]
    %v4591 = vunpack.c.l.b16 %v4273
    %v4592 = vunpack.c.h.b16 %v4273
    %v4593 = vunpack.c.l.b16 %v4274
    %v4594 = vunpack.c.h.b16 %v4274
    %v4595 = vunpack.c.l.b16 %v4275
    %v4596 = vunpack.c.h.b16 %v4275
    %v4597 = vunpack.c.l.b16 %v4276
    %v4598 = vunpack.c.h.b16 %v4276
    %v4599 = vunpack.c.l.b16 %v4277
    %v4600 = vunpack.c.h.b16 %v4277
    %v4601 = vunpack.c.l.b16 %v4278
    %v4602 = vunpack.c.h.b16 %v4278
    %v4603 = vunpack.c.l.b16 %v4279
    %v4604 = vunpack.c.h.b16 %v4279
    %v4605 = vunpack.c.l.b16 %v4280
    %v4606 = vunpack.c.h.b16 %v4280
    %v4607 = vunpack.c.l.b16 %v4281
    %v4608 = vunpack.c.h.b16 %v4281
    %v4609 = vunpack.c.l.b16 %v4282
    %v4610 = vunpack.c.h.b16 %v4282
    %v4611 = vunpack.c.l.b16 %v4283
    %v4612 = vunpack.c.h.b16 %v4283
    %v4613 = vunpack.c.l.b16 %v4284
    %v4614 = vunpack.c.h.b16 %v4284
    %v4615 = vunpack.c.l.b16 %v4285
    %v4616 = vunpack.c.h.b16 %v4285
    %v4617 = vunpack.c.l.b16 %v4286
    %v4618 = vunpack.c.h.b16 %v4286
    %v4619 = vunpack.c.l.b16 %v4287
    %v4620 = vunpack.c.h.b16 %v4287
    %v4621 = vunpack.c.l.b16 %v4288
    %v4622 = vunpack.c.h.b16 %v4288
    %v4623 = vunpack.c.l.b16 %v4289
    %v4624 = vunpack.c.h.b16 %v4289
    %v4625 = vunpack.c.l.b16 %v4290
    %v4626 = vunpack.c.h.b16 %v4290
    %v4627 = vunpack.c.l.b16 %v4291
    %v4628 = vunpack.c.h.b16 %v4291
    %v4629 = vunpack.c.l.b16 %v4292
    %v4630 = vunpack.c.h.b16 %v4292
    %v4631 = vunpack.c.l.b16 %v4293
    %v4632 = vunpack.c.h.b16 %v4293
    %v4633 = vunpack.c.l.b16 %v4294
    %v4634 = vunpack.c.h.b16 %v4294
    %v4635 = vunpack.c.l.b16 %v4295
    %v4636 = vunpack.c.h.b16 %v4295
    %v4637 = vunpack.c.l.b16 %v4296
    %v4638 = vunpack.c.h.b16 %v4296
    %v4639 = vunpack.c.l.b16 %v4297
    %v4640 = vunpack.c.h.b16 %v4297
    %v4641 = vunpack.c.l.b16 %v4298
    %v4642 = vunpack.c.h.b16 %v4298
    %v4643 = vunpack.c.l.b16 %v4299
    %v4644 = vunpack.c.h.b16 %v4299
    %v4645 = vunpack.c.l.b16 %v4300
    %v4646 = vunpack.c.h.b16 %v4300
    %v4647 = vunpack.c.l.b16 %v4301
    %v4648 = vunpack.c.h.b16 %v4301
    %v4649 = vunpack.c.l.b16 %v4302
    %v4650 = vunpack.c.h.b16 %v4302
    %v4651 = vunpack.c.l.b16 %v4303
    %v4652 = vunpack.c.h.b16 %v4303
    %v4653 = vunpack.c.l.b16 %v4304
    %v4654 = vunpack.c.h.b16 %v4304
    %v4655 = vpack.c.b16 %v4595, %v4591
    %v4656 = vpack.c.b16 %v4596, %v4592
    %v4657 = vpack.c.b16 %v4597, %v4593
    %v4658 = vpack.c.b16 %v4598, %v4594
    %v4659 = vpack.c.b16 %v4603, %v4599
    %v4660 = vpack.c.b16 %v4604, %v4600
    %v4661 = vpack.c.b16 %v4605, %v4601
    %v4662 = vpack.c.b16 %v4606, %v4602
    %v4663 = vpack.c.b16 %v4611, %v4607
    %v4664 = vpack.c.b16 %v4612, %v4608
    %v4665 = vpack.c.b16 %v4613, %v4609
    %v4666 = vpack.c.b16 %v4614, %v4610
    %v4667 = vpack.c.b16 %v4619, %v4615
    %v4668 = vpack.c.b16 %v4620, %v4616
    %v4669 = vpack.c.b16 %v4621, %v4617
    %v4670 = vpack.c.b16 %v4622, %v4618
    %v4671 = vpack.c.b16 %v4627, %v4623
    %v4672 = vpack.c.b16 %v4628, %v4624
    %v4673 = vpack.c.b16 %v4629, %v4625
    %v4674 = vpack.c.b16 %v4630, %v4626
    %v4675 = vpack.c.b16 %v4635, %v4631
    %v4676 = vpack.c.b16 %v4636, %v4632
    %v4677 = vpack.c.b16 %v4637, %v4633
    %v4678 = vpack.c.b16 %v4638, %v4634
    %v4679 = vpack.c.b16 %v4643, %v4639
    %v4680 = vpack.c.b16 %v4644, %v4640
    %v4681 = vpack.c.b16 %v4645, %v4641
    %v4682 = vpack.c.b16 %v4646, %v4642
    %v4683 = vpack.c.b16 %v4651, %v4647
    %v4684 = vpack.c.b16 %v4652, %v4648
    %v4685 = vpack.c.b16 %v4653, %v4649
    %v4686 = vpack.c.b16 %v4654, %v4650
    %4719 = vmatprep.subr.bf16.mxu0 %v4684
    %4720 = vmatpush1.bf16.msra.mxu0 %v4683
    %4721 = vmatprep.subr.bf16.mxu0 %v4680
    %4722 = vmatpush1.bf16.msra.mxu0 %v4679
    %4723 = vmatprep.subr.bf16.mxu0 %v4676
    %4724 = vmatpush1.bf16.msra.mxu0 %v4675
    %4725 = vmatprep.subr.bf16.mxu0 %v4672
    %4726 = vmatpush1.bf16.msra.mxu0 %v4671
    %4727 = vmatprep.subr.bf16.mxu0 %v4668
    %4728 = vmatpush1.bf16.msra.mxu0 %v4667
    %4729 = vmatprep.subr.bf16.mxu0 %v4664
    %4730 = vmatpush1.bf16.msra.mxu0 %v4663
    %4731 = vmatprep.subr.bf16.mxu0 %v4660
    %4732 = vmatpush1.bf16.msra.mxu0 %v4659
    %4733 = vmatprep.subr.bf16.mxu0 %v4656
    %4734 = vmatpush1.bf16.msra.mxu0 %v4655
    %4735 = vmatprep.subr.bf16.mxu0 0
    %4736 = vmatpush2.bf16.msra.mxu0 0
    %4737 = vmatprep.subr.bf16.mxu0 0
    %4738 = vmatpush2.bf16.msra.mxu0 0
    %4739 = vmatprep.subr.bf16.mxu0 0
    %4740 = vmatpush2.bf16.msra.mxu0 0
    %4741 = vmatprep.subr.bf16.mxu0 0
    %4742 = vmatpush2.bf16.msra.mxu0 0
    %4743 = vmatprep.subr.bf16.mxu0 0
    %4744 = vmatpush2.bf16.msra.mxu0 0
    %4745 = vmatprep.subr.bf16.mxu0 0
    %4746 = vmatpush2.bf16.msra.mxu0 0
    %4747 = vmatprep.subr.bf16.mxu0 0
    %4748 = vmatpush2.bf16.msra.mxu0 0
    %4749 = vmatprep.subr.bf16.mxu0 0
    %4750 = vmatpush2.bf16.msra.mxu0 0
    %4751 = vmatprep.mubr.bf16.mxu0 0
    %4752 = vmatmul.mubr.bf16.gmra.mxu0 0
    %v4753 = vpop.f32.mrf.mxu0
    %v4754 = vadd.f32 0.0, %v4753
    %v4755 = vpop.f32.mrf.mxu0
    %v4756 = vadd.f32 0.0, %v4755
    %v4757 = vpop.f32.mrf.mxu0
    %v4758 = vpop.f32.mrf.mxu0
    %4759 = vdwg.mxu0
    %4760 = vmatprep.subr.bf16.mxu0 %v4686
    %4761 = vmatpush1.bf16.msra.mxu0 %v4685
    %4762 = vmatprep.subr.bf16.mxu0 %v4682
    %4763 = vmatpush1.bf16.msra.mxu0 %v4681
    %4764 = vmatprep.subr.bf16.mxu0 %v4678
    %4765 = vmatpush1.bf16.msra.mxu0 %v4677
    %4766 = vmatprep.subr.bf16.mxu0 %v4674
    %4767 = vmatpush1.bf16.msra.mxu0 %v4673
    %4768 = vmatprep.subr.bf16.mxu0 %v4670
    %4769 = vmatpush1.bf16.msra.mxu0 %v4669
    %4770 = vmatprep.subr.bf16.mxu0 %v4666
    %4771 = vmatpush1.bf16.msra.mxu0 %v4665
    %4772 = vmatprep.subr.bf16.mxu0 %v4662
    %4773 = vmatpush1.bf16.msra.mxu0 %v4661
    %4774 = vmatprep.subr.bf16.mxu0 %v4658
    %4775 = vmatpush1.bf16.msra.mxu0 %v4657
    %4776 = vmatprep.subr.bf16.mxu0 0
    %4777 = vmatpush2.bf16.msra.mxu0 0
    %4778 = vmatprep.subr.bf16.mxu0 0
    %4779 = vmatpush2.bf16.msra.mxu0 0
    %4780 = vmatprep.subr.bf16.mxu0 0
    %4781 = vmatpush2.bf16.msra.mxu0 0
    %4782 = vmatprep.subr.bf16.mxu0 0
    %4783 = vmatpush2.bf16.msra.mxu0 0
    %4784 = vmatprep.subr.bf16.mxu0 0
    %4785 = vmatpush2.bf16.msra.mxu0 0
    %4786 = vmatprep.subr.bf16.mxu0 0
    %4787 = vmatpush2.bf16.msra.mxu0 0
    %4788 = vmatprep.subr.bf16.mxu0 0
    %4789 = vmatpush2.bf16.msra.mxu0 0
    %4790 = vmatprep.subr.bf16.mxu0 0
    %4791 = vmatpush2.bf16.msra.mxu0 0
    %4792 = vmatprep.mubr.bf16.mxu0 0
    %4793 = vmatmul.mubr.bf16.gmra.mxu0 0
    %v4794 = vpop.f32.mrf.mxu0
    %v4795 = vadd.f32 0.0, %v4794
    %v4796 = vpop.f32.mrf.mxu0
    %v4797 = vadd.f32 0.0, %v4796
    %v4798 = vpop.f32.mrf.mxu0
    %v4799 = vpop.f32.mrf.mxu0
    %4800 = vdwg.mxu0
    %v4801 = vadd.f32 %v4555, %v4754
    %v4802 = vadd.f32 %v4556, %v4756
    %v4803 = vadd.f32 %v4557, %v4795
    %v4804 = vadd.f32 %v4558, %v4797
    %v4805 = vxor.u32 %v4551, 2147483648
    %v4806 = vxor.u32 %v4552, 2147483648
    %v4807 = vxor.u32 %v4553, 2147483648
    %v4808 = vmul.f32 %v4805, 1.442695
    %v4809 = vpow.pop %v4808
    %v4810 = vmul.f32 %v4806, 1.442695
    %v4811 = vpow.pop %v4810
    %v4812 = vmul.f32 %v4807, 1.442695
    %v4813 = vpow.pop %v4812
    %v4814 = vadd.f32 %v4809, 1.0
    %v4815 = vadd.f32 %v4811, 1.0
    %v4816 = vadd.f32 %v4813, 1.0
    %v4817 = vrcp.pop %v4814
    %v4818 = vmul.f32 1.0, %v4817
    %v4819 = vrcp.pop %v4815
    %v4820 = vmul.f32 1.0, %v4819
    %v4821 = vrcp.pop %v4816
    %v4822 = vmul.f32 1.0, %v4821
    %v4823 = vxor.u32 %v4801, 2147483648
    %v4824 = vxor.u32 %v4802, 2147483648
    %v4825 = vxor.u32 %v4803, 2147483648
    %v4826 = vmul.f32 %v4823, 1.442695
    %v4827 = vpow.pop %v4826
    %v4828 = vmul.f32 %v4824, 1.442695
    %v4829 = vpow.pop %v4828
    %v4830 = vmul.f32 %v4825, 1.442695
    %v4831 = vpow.pop %v4830
    %v4832 = vadd.f32 %v4827, 1.0
    %v4833 = vadd.f32 %v4829, 1.0
    %v4834 = vadd.f32 %v4831, 1.0
    %v4835 = vrcp.pop %v4832
    %v4836 = vmul.f32 1.0, %v4835
    %v4837 = vrcp.pop %v4833
    %v4838 = vmul.f32 1.0, %v4837
    %v4839 = vrcp.pop %v4834
    %v4840 = vmul.f32 1.0, %v4839
    %v4841 = vtanh.pop %v4554
    %v4842 = vtanh.pop %v4804
    %v4843 = vmul.f32 %v4820, 0.0
    %v4844 = vmul.f32 %v4818, %v4841
    %v4845 = vadd.f32 %v4843, %v4844
    %v4846 = vmul.f32 %v4838, 0.0
    %v4847 = vmul.f32 %v4836, %v4842
    %v4848 = vadd.f32 %v4846, %v4847
    %v4849 = vtanh.pop %v4845
    %v4850 = vmul.f32 %v4822, %v4849
    %v4851 = vtanh.pop %v4848
    %v4852 = vmul.f32 %v4840, %v4851
    %v4853 = vpack.c.bf16 %v4850, %v4850
    %v4854 = vpack.c.bf16 %v4852, %v4852
    %4855 = vst [vmem:[#allocation4] sm:$0xff] %v4850
    %s4856 = scalar_lea.vmem [#allocation4], 112
    %4857 = vst [vmem:[%s4856 + $0x8] sm:$0xff] %v4852
    %v4858 = vld [vmem:[#allocation2 + $0x40] sm:$0xff]
    %v4859 = vld [vmem:[#allocation2 + $0x48] sm:$0xff]
    %v4860 = vld [vmem:[#allocation2 + $0x50] sm:$0xff]
    %v4861 = vld [vmem:[#allocation2 + $0x58] sm:$0xff]
    %4862 = vmatprep.subr.bf16.mxu0 %v4434
    %4863 = vmatpush1.bf16.msra.mxu0 %v4433
    %4864 = vmatprep.subr.bf16.mxu0 %v4430
    %4865 = vmatpush1.bf16.msra.mxu0 %v4429
    %4866 = vmatprep.subr.bf16.mxu0 %v4426
    %4867 = vmatpush1.bf16.msra.mxu0 %v4425
    %4868 = vmatprep.subr.bf16.mxu0 %v4422
    %4869 = vmatpush1.bf16.msra.mxu0 %v4421
    %4870 = vmatprep.subr.bf16.mxu0 %v4418
    %4871 = vmatpush1.bf16.msra.mxu0 %v4417
    %4872 = vmatprep.subr.bf16.mxu0 %v4414
    %4873 = vmatpush1.bf16.msra.mxu0 %v4413
    %4874 = vmatprep.subr.bf16.mxu0 %v4410
    %4875 = vmatpush1.bf16.msra.mxu0 %v4409
    %4876 = vmatprep.subr.bf16.mxu0 %v4406
    %4877 = vmatpush1.bf16.msra.mxu0 %v4405
    %4878 = vmatprep.subr.bf16.mxu0 0
    %4879 = vmatpush2.bf16.msra.mxu0 0
    %4880 = vmatprep.subr.bf16.mxu0 0
    %4881 = vmatpush2.bf16.msra.mxu0 0
    %4882 = vmatprep.subr.bf16.mxu0 0
    %4883 = vmatpush2.bf16.msra.mxu0 0
    %4884 = vmatprep.subr.bf16.mxu0 0
    %4885 = vmatpush2.bf16.msra.mxu0 0
    %4886 = vmatprep.subr.bf16.mxu0 0
    %4887 = vmatpush2.bf16.msra.mxu0 0
    %4888 = vmatprep.subr.bf16.mxu0 0
    %4889 = vmatpush2.bf16.msra.mxu0 0
    %4890 = vmatprep.subr.bf16.mxu0 0
    %4891 = vmatpush2.bf16.msra.mxu0 0
    %4892 = vmatprep.subr.bf16.mxu0 0
    %4893 = vmatpush2.bf16.msra.mxu0 0
    %4894 = vmatprep.mubr.bf16.mxu0 0
    %4895 = vmatmul.mubr.bf16.gmra.mxu0 %v4853
    %v4896 = vpop.f32.mrf.mxu0
    %v4897 = vadd.f32 0.0, %v4896
    %v4898 = vpop.f32.mrf.mxu0
    %v4899 = vadd.f32 0.0, %v4898
    %v4900 = vpop.f32.mrf.mxu0
    %v4901 = vpop.f32.mrf.mxu0
    %4902 = vdwg.mxu0
    %4903 = vmatprep.subr.bf16.mxu0 %v4436
    %4904 = vmatpush1.bf16.msra.mxu0 %v4435
    %4905 = vmatprep.subr.bf16.mxu0 %v4432
    %4906 = vmatpush1.bf16.msra.mxu0 %v4431
    %4907 = vmatprep.subr.bf16.mxu0 %v4428
    %4908 = vmatpush1.bf16.msra.mxu0 %v4427
    %4909 = vmatprep.subr.bf16.mxu0 %v4424
    %4910 = vmatpush1.bf16.msra.mxu0 %v4423
    %4911 = vmatprep.subr.bf16.mxu0 %v4420
    %4912 = vmatpush1.bf16.msra.mxu0 %v4419
    %4913 = vmatprep.subr.bf16.mxu0 %v4416
    %4914 = vmatpush1.bf16.msra.mxu0 %v4415
    %4915 = vmatprep.subr.bf16.mxu0 %v4412
    %4916 = vmatpush1.bf16.msra.mxu0 %v4411
    %4917 = vmatprep.subr.bf16.mxu0 %v4408
    %4918 = vmatpush1.bf16.msra.mxu0 %v4407
    %4919 = vmatprep.subr.bf16.mxu0 0
    %4920 = vmatpush2.bf16.msra.mxu0 0
    %4921 = vmatprep.subr.bf16.mxu0 0
    %4922 = vmatpush2.bf16.msra.mxu0 0
    %4923 = vmatprep.subr.bf16.mxu0 0
    %4924 = vmatpush2.bf16.msra.mxu0 0
    %4925 = vmatprep.subr.bf16.mxu0 0
    %4926 = vmatpush2.bf16.msra.mxu0 0
    %4927 = vmatprep.subr.bf16.mxu0 0
    %4928 = vmatpush2.bf16.msra.mxu0 0
    %4929 = vmatprep.subr.bf16.mxu0 0
    %4930 = vmatpush2.bf16.msra.mxu0 0
    %4931 = vmatprep.subr.bf16.mxu0 0
    %4932 = vmatpush2.bf16.msra.mxu0 0
    %4933 = vmatprep.subr.bf16.mxu0 0
    %4934 = vmatpush2.bf16.msra.mxu0 0
    %4935 = vmatprep.mubr.bf16.mxu0 0
    %4936 = vmatmul.mubr.bf16.gmra.mxu0 %v4853
    %v4937 = vpop.f32.mrf.mxu0
    %v4938 = vadd.f32 0.0, %v4937
    %v4939 = vpop.f32.mrf.mxu0
    %v4940 = vadd.f32 0.0, %v4939
    %v4941 = vpop.f32.mrf.mxu0
    %v4942 = vpop.f32.mrf.mxu0
    %4943 = vdwg.mxu0
    %v4944 = vadd.f32 %v4858, %v4897
    %v4945 = vadd.f32 %v4859, %v4899
    %v4946 = vadd.f32 %v4860, %v4938
    %v4947 = vadd.f32 %v4861, %v4940
    %v4948 = vld [vmem:[#allocation2 + $0x1a0] sm:$0xff]
    %v4949 = vld [vmem:[#allocation2 + $0x1a8] sm:$0xff]
    %v4950 = vld [vmem:[#allocation2 + $0x1b0] sm:$0xff]
    %v4951 = vld [vmem:[#allocation2 + $0x1b8] sm:$0xff]
    %4952 = vmatprep.subr.bf16.mxu0 %v4684
    %4953 = vmatpush1.bf16.msra.mxu0 %v4683
    %4954 = vmatprep.subr.bf16.mxu0 %v4680
    %4955 = vmatpush1.bf16.msra.mxu0 %v4679
    %4956 = vmatprep.subr.bf16.mxu0 %v4676
    %4957 = vmatpush1.bf16.msra.mxu0 %v4675
    %4958 = vmatprep.subr.bf16.mxu0 %v4672
    %4959 = vmatpush1.bf16.msra.mxu0 %v4671
    %4960 = vmatprep.subr.bf16.mxu0 %v4668
    %4961 = vmatpush1.bf16.msra.mxu0 %v4667
    %4962 = vmatprep.subr.bf16.mxu0 %v4664
    %4963 = vmatpush1.bf16.msra.mxu0 %v4663
    %4964 = vmatprep.subr.bf16.mxu0 %v4660
    %4965 = vmatpush1.bf16.msra.mxu0 %v4659
    %4966 = vmatprep.subr.bf16.mxu0 %v4656
    %4967 = vmatpush1.bf16.msra.mxu0 %v4655
    %4968 = vmatprep.subr.bf16.mxu0 0
    %4969 = vmatpush2.bf16.msra.mxu0 0
    %4970 = vmatprep.subr.bf16.mxu0 0
    %4971 = vmatpush2.bf16.msra.mxu0 0
    %4972 = vmatprep.subr.bf16.mxu0 0
    %4973 = vmatpush2.bf16.msra.mxu0 0
    %4974 = vmatprep.subr.bf16.mxu0 0
    %4975 = vmatpush2.bf16.msra.mxu0 0
    %4976 = vmatprep.subr.bf16.mxu0 0
    %4977 = vmatpush2.bf16.msra.mxu0 0
    %4978 = vmatprep.subr.bf16.mxu0 0
    %4979 = vmatpush2.bf16.msra.mxu0 0
    %4980 = vmatprep.subr.bf16.mxu0 0
    %4981 = vmatpush2.bf16.msra.mxu0 0
    %4982 = vmatprep.subr.bf16.mxu0 0
    %4983 = vmatpush2.bf16.msra.mxu0 0
    %4984 = vmatprep.mubr.bf16.mxu0 0
    %4985 = vmatmul.mubr.bf16.gmra.mxu0 %v4854
    %v4986 = vpop.f32.mrf.mxu0
    %v4987 = vadd.f32 0.0, %v4986
    %v4988 = vpop.f32.mrf.mxu0
    %v4989 = vadd.f32 0.0, %v4988
    %v4990 = vpop.f32.mrf.mxu0
    %v4991 = vpop.f32.mrf.mxu0
    %4992 = vdwg.mxu0
    %4993 = vmatprep.subr.bf16.mxu0 %v4686
    %4994 = vmatpush1.bf16.msra.mxu0 %v4685
    %4995 = vmatprep.subr.bf16.mxu0 %v4682
    %4996 = vmatpush1.bf16.msra.mxu0 %v4681
    %4997 = vmatprep.subr.bf16.mxu0 %v4678
    %4998 = vmatpush1.bf16.msra.mxu0 %v4677
    %4999 = vmatprep.subr.bf16.mxu0 %v4674
    %5000 = vmatpush1.bf16.msra.mxu0 %v4673
    %5001 = vmatprep.subr.bf16.mxu0 %v4670
    %5002 = vmatpush1.bf16.msra.mxu0 %v4669
    %5003 = vmatprep.subr.bf16.mxu0 %v4666
    %5004 = vmatpush1.bf16.msra.mxu0 %v4665
    %5005 = vmatprep.subr.bf16.mxu0 %v4662
    %5006 = vmatpush1.bf16.msra.mxu0 %v4661
    %5007 = vmatprep.subr.bf16.mxu0 %v4658
    %5008 = vmatpush1.bf16.msra.mxu0 %v4657
    %5009 = vmatprep.subr.bf16.mxu0 0
    %5010 = vmatpush2.bf16.msra.mxu0 0
    %5011 = vmatprep.subr.bf16.mxu0 0
    %5012 = vmatpush2.bf16.msra.mxu0 0
    %5013 = vmatprep.subr.bf16.mxu0 0
    %5014 = vmatpush2.bf16.msra.mxu0 0
    %5015 = vmatprep.subr.bf16.mxu0 0
    %5016 = vmatpush2.bf16.msra.mxu0 0
    %5017 = vmatprep.subr.bf16.mxu0 0
    %5018 = vmatpush2.bf16.msra.mxu0 0
    %5019 = vmatprep.subr.bf16.mxu0 0
    %5020 = vmatpush2.bf16.msra.mxu0 0
    %5021 = vmatprep.subr.bf16.mxu0 0
    %5022 = vmatpush2.bf16.msra.mxu0 0
    %5023 = vmatprep.subr.bf16.mxu0 0
    %5024 = vmatpush2.bf16.msra.mxu0 0
    %5025 = vmatprep.mubr.bf16.mxu0 0
    %5026 = vmatmul.mubr.bf16.gmra.mxu0 %v4854
    %v5027 = vpop.f32.mrf.mxu0
    %v5028 = vadd.f32 0.0, %v5027
    %v5029 = vpop.f32.mrf.mxu0
    %v5030 = vadd.f32 0.0, %v5029
    %v5031 = vpop.f32.mrf.mxu0
    %v5032 = vpop.f32.mrf.mxu0
    %5033 = vdwg.mxu0
    %v5034 = vadd.f32 %v4948, %v4987
    %v5035 = vadd.f32 %v4949, %v4989
    %v5036 = vadd.f32 %v4950, %v5028
    %v5037 = vadd.f32 %v4951, %v5030
    %v5038 = vxor.u32 %v4944, 2147483648
    %v5039 = vxor.u32 %v4945, 2147483648
    %v5040 = vxor.u32 %v4946, 2147483648
    %v5041 = vmul.f32 %v5038, 1.442695
    %v5042 = vpow.pop %v5041
    %v5043 = vmul.f32 %v5039, 1.442695
    %v5044 = vpow.pop %v5043
    %v5045 = vmul.f32 %v5040, 1.442695
    %v5046 = vpow.pop %v5045
    %v5047 = vadd.f32 %v5042, 1.0
    %v5048 = vadd.f32 %v5044, 1.0
    %v5049 = vadd.f32 %v5046, 1.0
    %v5050 = vrcp.pop %v5047
    %v5051 = vmul.f32 1.0, %v5050
    %v5052 = vrcp.pop %v5048
    %v5053 = vmul.f32 1.0, %v5052
    %v5054 = vrcp.pop %v5049
    %v5055 = vmul.f32 1.0, %v5054
    %v5056 = vxor.u32 %v5034, 2147483648
    %v5057 = vxor.u32 %v5035, 2147483648
    %v5058 = vxor.u32 %v5036, 2147483648
    %v5059 = vmul.f32 %v5056, 1.442695
    %v5060 = vpow.pop %v5059
    %v5061 = vmul.f32 %v5057, 1.442695
    %v5062 = vpow.pop %v5061
    %v5063 = vmul.f32 %v5058, 1.442695
    %v5064 = vpow.pop %v5063
    %v5065 = vadd.f32 %v5060, 1.0
    %v5066 = vadd.f32 %v5062, 1.0
    %v5067 = vadd.f32 %v5064, 1.0
    %v5068 = vrcp.pop %v5065
    %v5069 = vmul.f32 1.0, %v5068
    %v5070 = vrcp.pop %v5066
    %v5071 = vmul.f32 1.0, %v5070
    %v5072 = vrcp.pop %v5067
    %v5073 = vmul.f32 1.0, %v5072
    %v5074 = vtanh.pop %v4947
    %v5075 = vtanh.pop %v5037
    %v5076 = vmul.f32 %v5053, %v4845
    %v5077 = vmul.f32 %v5051, %v5074
    %v5078 = vadd.f32 %v5076, %v5077
    %v5079 = vmul.f32 %v5071, %v4848
    %v5080 = vmul.f32 %v5069, %v5075
    %v5081 = vadd.f32 %v5079, %v5080
    %v5082 = vtanh.pop %v5078
    %v5083 = vmul.f32 %v5055, %v5082
    %v5084 = vtanh.pop %v5081
    %v5085 = vmul.f32 %v5073, %v5084
    %v5086 = vpack.c.bf16 %v5083, %v5083
    %v5087 = vpack.c.bf16 %v5085, %v5085
    %s5088 = scalar_lea.vmem [#allocation4], 16
    %5089 = vst [vmem:[%s5088] sm:$0xff] %v5083
    %s5090 = scalar_lea.vmem [#allocation4], 96
    %5091 = vst [vmem:[%s5090 + $0x8] sm:$0xff] %v5085
    %v5092 = vld [vmem:[#allocation2 + $0x80] sm:$0xff]
    %v5093 = vld [vmem:[#allocation2 + $0x88] sm:$0xff]
    %v5094 = vld [vmem:[#allocation2 + $0x90] sm:$0xff]
    %v5095 = vld [vmem:[#allocation2 + $0x98] sm:$0xff]
    %5096 = vmatprep.subr.bf16.mxu0 %v4434
    %5097 = vmatpush1.bf16.msra.mxu0 %v4433
    %5098 = vmatprep.subr.bf16.mxu0 %v4430
    %5099 = vmatpush1.bf16.msra.mxu0 %v4429
    %5100 = vmatprep.subr.bf16.mxu0 %v4426
    %5101 = vmatpush1.bf16.msra.mxu0 %v4425
    %5102 = vmatprep.subr.bf16.mxu0 %v4422
    %5103 = vmatpush1.bf16.msra.mxu0 %v4421
    %5104 = vmatprep.subr.bf16.mxu0 %v4418
    %5105 = vmatpush1.bf16.msra.mxu0 %v4417
    %5106 = vmatprep.subr.bf16.mxu0 %v4414
    %5107 = vmatpush1.bf16.msra.mxu0 %v4413
    %5108 = vmatprep.subr.bf16.mxu0 %v4410
    %5109 = vmatpush1.bf16.msra.mxu0 %v4409
    %5110 = vmatprep.subr.bf16.mxu0 %v4406
    %5111 = vmatpush1.bf16.msra.mxu0 %v4405
    %5112 = vmatprep.subr.bf16.mxu0 0
    %5113 = vmatpush2.bf16.msra.mxu0 0
    %5114 = vmatprep.subr.bf16.mxu0 0
    %5115 = vmatpush2.bf16.msra.mxu0 0
    %5116 = vmatprep.subr.bf16.mxu0 0
    %5117 = vmatpush2.bf16.msra.mxu0 0
    %5118 = vmatprep.subr.bf16.mxu0 0
    %5119 = vmatpush2.bf16.msra.mxu0 0
    %5120 = vmatprep.subr.bf16.mxu0 0
    %5121 = vmatpush2.bf16.msra.mxu0 0
    %5122 = vmatprep.subr.bf16.mxu0 0
    %5123 = vmatpush2.bf16.msra.mxu0 0
    %5124 = vmatprep.subr.bf16.mxu0 0
    %5125 = vmatpush2.bf16.msra.mxu0 0
    %5126 = vmatprep.subr.bf16.mxu0 0
    %5127 = vmatpush2.bf16.msra.mxu0 0
    %5128 = vmatprep.mubr.bf16.mxu0 0
    %5129 = vmatmul.mubr.bf16.gmra.mxu0 %v5086
    %v5130 = vpop.f32.mrf.mxu0
    %v5131 = vadd.f32 0.0, %v5130
    %v5132 = vpop.f32.mrf.mxu0
    %v5133 = vadd.f32 0.0, %v5132
    %v5134 = vpop.f32.mrf.mxu0
    %v5135 = vpop.f32.mrf.mxu0
    %5136 = vdwg.mxu0
    %5137 = vmatprep.subr.bf16.mxu0 %v4436
    %5138 = vmatpush1.bf16.msra.mxu0 %v4435
    %5139 = vmatprep.subr.bf16.mxu0 %v4432
    %5140 = vmatpush1.bf16.msra.mxu0 %v4431
    %5141 = vmatprep.subr.bf16.mxu0 %v4428
    %5142 = vmatpush1.bf16.msra.mxu0 %v4427
    %5143 = vmatprep.subr.bf16.mxu0 %v4424
    %5144 = vmatpush1.bf16.msra.mxu0 %v4423
    %5145 = vmatprep.subr.bf16.mxu0 %v4420
    %5146 = vmatpush1.bf16.msra.mxu0 %v4419
    %5147 = vmatprep.subr.bf16.mxu0 %v4416
    %5148 = vmatpush1.bf16.msra.mxu0 %v4415
    %5149 = vmatprep.subr.bf16.mxu0 %v4412
    %5150 = vmatpush1.bf16.msra.mxu0 %v4411
    %5151 = vmatprep.subr.bf16.mxu0 %v4408
    %5152 = vmatpush1.bf16.msra.mxu0 %v4407
    %5153 = vmatprep.subr.bf16.mxu0 0
    %5154 = vmatpush2.bf16.msra.mxu0 0
    %5155 = vmatprep.subr.bf16.mxu0 0
    %5156 = vmatpush2.bf16.msra.mxu0 0
    %5157 = vmatprep.subr.bf16.mxu0 0
    %5158 = vmatpush2.bf16.msra.mxu0 0
    %5159 = vmatprep.subr.bf16.mxu0 0
    %5160 = vmatpush2.bf16.msra.mxu0 0
    %5161 = vmatprep.subr.bf16.mxu0 0
    %5162 = vmatpush2.bf16.msra.mxu0 0
    %5163 = vmatprep.subr.bf16.mxu0 0
    %5164 = vmatpush2.bf16.msra.mxu0 0
    %5165 = vmatprep.subr.bf16.mxu0 0
    %5166 = vmatpush2.bf16.msra.mxu0 0
    %5167 = vmatprep.subr.bf16.mxu0 0
    %5168 = vmatpush2.bf16.msra.mxu0 0
    %5169 = vmatprep.mubr.bf16.mxu0 0
    %5170 = vmatmul.mubr.bf16.gmra.mxu0 %v5086
    %v5171 = vpop.f32.mrf.mxu0
    %v5172 = vadd.f32 0.0, %v5171
    %v5173 = vpop.f32.mrf.mxu0
    %v5174 = vadd.f32 0.0, %v5173
    %v5175 = vpop.f32.mrf.mxu0
    %v5176 = vpop.f32.mrf.mxu0
    %5177 = vdwg.mxu0
    %v5178 = vadd.f32 %v5092, %v5131
    %v5179 = vadd.f32 %v5093, %v5133
    %v5180 = vadd.f32 %v5094, %v5172
    %v5181 = vadd.f32 %v5095, %v5174
    %v5182 = vld [vmem:[#allocation2 + $0x160] sm:$0xff]
    %v5183 = vld [vmem:[#allocation2 + $0x168] sm:$0xff]
    %v5184 = vld [vmem:[#allocation2 + $0x170] sm:$0xff]
    %v5185 = vld [vmem:[#allocation2 + $0x178] sm:$0xff]
    %5186 = vmatprep.subr.bf16.mxu0 %v4684
    %5187 = vmatpush1.bf16.msra.mxu0 %v4683
    %5188 = vmatprep.subr.bf16.mxu0 %v4680
    %5189 = vmatpush1.bf16.msra.mxu0 %v4679
    %5190 = vmatprep.subr.bf16.mxu0 %v4676
    %5191 = vmatpush1.bf16.msra.mxu0 %v4675
    %5192 = vmatprep.subr.bf16.mxu0 %v4672
    %5193 = vmatpush1.bf16.msra.mxu0 %v4671
    %5194 = vmatprep.subr.bf16.mxu0 %v4668
    %5195 = vmatpush1.bf16.msra.mxu0 %v4667
    %5196 = vmatprep.subr.bf16.mxu0 %v4664
    %5197 = vmatpush1.bf16.msra.mxu0 %v4663
    %5198 = vmatprep.subr.bf16.mxu0 %v4660
    %5199 = vmatpush1.bf16.msra.mxu0 %v4659
    %5200 = vmatprep.subr.bf16.mxu0 %v4656
    %5201 = vmatpush1.bf16.msra.mxu0 %v4655
    %5202 = vmatprep.subr.bf16.mxu0 0
    %5203 = vmatpush2.bf16.msra.mxu0 0
    %5204 = vmatprep.subr.bf16.mxu0 0
    %5205 = vmatpush2.bf16.msra.mxu0 0
    %5206 = vmatprep.subr.bf16.mxu0 0
    %5207 = vmatpush2.bf16.msra.mxu0 0
    %5208 = vmatprep.subr.bf16.mxu0 0
    %5209 = vmatpush2.bf16.msra.mxu0 0
    %5210 = vmatprep.subr.bf16.mxu0 0
    %5211 = vmatpush2.bf16.msra.mxu0 0
    %5212 = vmatprep.subr.bf16.mxu0 0
    %5213 = vmatpush2.bf16.msra.mxu0 0
    %5214 = vmatprep.subr.bf16.mxu0 0
    %5215 = vmatpush2.bf16.msra.mxu0 0
    %5216 = vmatprep.subr.bf16.mxu0 0
    %5217 = vmatpush2.bf16.msra.mxu0 0
    %5218 = vmatprep.mubr.bf16.mxu0 0
    %5219 = vmatmul.mubr.bf16.gmra.mxu0 %v5087
    %v5220 = vpop.f32.mrf.mxu0
    %v5221 = vadd.f32 0.0, %v5220
    %v5222 = vpop.f32.mrf.mxu0
    %v5223 = vadd.f32 0.0, %v5222
    %v5224 = vpop.f32.mrf.mxu0
    %v5225 = vpop.f32.mrf.mxu0
    %5226 = vdwg.mxu0
    %5227 = vmatprep.subr.bf16.mxu0 %v4686
    %5228 = vmatpush1.bf16.msra.mxu0 %v4685
    %5229 = vmatprep.subr.bf16.mxu0 %v4682
    %5230 = vmatpush1.bf16.msra.mxu0 %v4681
    %5231 = vmatprep.subr.bf16.mxu0 %v4678
    %5232 = vmatpush1.bf16.msra.mxu0 %v4677
    %5233 = vmatprep.subr.bf16.mxu0 %v4674
    %5234 = vmatpush1.bf16.msra.mxu0 %v4673
    %5235 = vmatprep.subr.bf16.mxu0 %v4670
    %5236 = vmatpush1.bf16.msra.mxu0 %v4669
    %5237 = vmatprep.subr.bf16.mxu0 %v4666
    %5238 = vmatpush1.bf16.msra.mxu0 %v4665
    %5239 = vmatprep.subr.bf16.mxu0 %v4662
    %5240 = vmatpush1.bf16.msra.mxu0 %v4661
    %5241 = vmatprep.subr.bf16.mxu0 %v4658
    %5242 = vmatpush1.bf16.msra.mxu0 %v4657
    %5243 = vmatprep.subr.bf16.mxu0 0
    %5244 = vmatpush2.bf16.msra.mxu0 0
    %5245 = vmatprep.subr.bf16.mxu0 0
    %5246 = vmatpush2.bf16.msra.mxu0 0
    %5247 = vmatprep.subr.bf16.mxu0 0
    %5248 = vmatpush2.bf16.msra.mxu0 0
    %5249 = vmatprep.subr.bf16.mxu0 0
    %5250 = vmatpush2.bf16.msra.mxu0 0
    %5251 = vmatprep.subr.bf16.mxu0 0
    %5252 = vmatpush2.bf16.msra.mxu0 0
    %5253 = vmatprep.subr.bf16.mxu0 0
    %5254 = vmatpush2.bf16.msra.mxu0 0
    %5255 = vmatprep.subr.bf16.mxu0 0
    %5256 = vmatpush2.bf16.msra.mxu0 0
    %5257 = vmatprep.subr.bf16.mxu0 0
    %5258 = vmatpush2.bf16.msra.mxu0 0
    %5259 = vmatprep.mubr.bf16.mxu0 0
    %5260 = vmatmul.mubr.bf16.gmra.mxu0 %v5087
    %v5261 = vpop.f32.mrf.mxu0
    %v5262 = vadd.f32 0.0, %v5261
    %v5263 = vpop.f32.mrf.mxu0
    %v5264 = vadd.f32 0.0, %v5263
    %v5265 = vpop.f32.mrf.mxu0
    %v5266 = vpop.f32.mrf.mxu0
    %5267 = vdwg.mxu0
    %v5268 = vadd.f32 %v5182, %v5221
    %v5269 = vadd.f32 %v5183, %v5223
    %v5270 = vadd.f32 %v5184, %v5262
    %v5271 = vadd.f32 %v5185, %v5264
    %v5272 = vxor.u32 %v5178, 2147483648
    %v5273 = vxor.u32 %v5179, 2147483648
    %v5274 = vxor.u32 %v5180, 2147483648
    %v5275 = vmul.f32 %v5272, 1.442695
    %v5276 = vpow.pop %v5275
    %v5277 = vmul.f32 %v5273, 1.442695
    %v5278 = vpow.pop %v5277
    %v5279 = vmul.f32 %v5274, 1.442695
    %v5280 = vpow.pop %v5279
    %v5281 = vadd.f32 %v5276, 1.0
    %v5282 = vadd.f32 %v5278, 1.0
    %v5283 = vadd.f32 %v5280, 1.0
    %v5284 = vrcp.pop %v5281
    %v5285 = vmul.f32 1.0, %v5284
    %v5286 = vrcp.pop %v5282
    %v5287 = vmul.f32 1.0, %v5286
    %v5288 = vrcp.pop %v5283
    %v5289 = vmul.f32 1.0, %v5288
    %v5290 = vxor.u32 %v5268, 2147483648
    %v5291 = vxor.u32 %v5269, 2147483648
    %v5292 = vxor.u32 %v5270, 2147483648
    %v5293 = vmul.f32 %v5290, 1.442695
    %v5294 = vpow.pop %v5293
    %v5295 = vmul.f32 %v5291, 1.442695
    %v5296 = vpow.pop %v5295
    %v5297 = vmul.f32 %v5292, 1.442695
    %v5298 = vpow.pop %v5297
    %v5299 = vadd.f32 %v5294, 1.0
    %v5300 = vadd.f32 %v5296, 1.0
    %v5301 = vadd.f32 %v5298, 1.0
    %v5302 = vrcp.pop %v5299
    %v5303 = vmul.f32 1.0, %v5302
    %v5304 = vrcp.pop %v5300
    %v5305 = vmul.f32 1.0, %v5304
    %v5306 = vrcp.pop %v5301
    %v5307 = vmul.f32 1.0, %v5306
    %v5308 = vtanh.pop %v5181
    %v5309 = vtanh.pop %v5271
    %v5310 = vmul.f32 %v5287, %v5078
    %v5311 = vmul.f32 %v5285, %v5308
    %v5312 = vadd.f32 %v5310, %v5311
    %v5313 = vmul.f32 %v5305, %v5081
    %v5314 = vmul.f32 %v5303, %v5309
    %v5315 = vadd.f32 %v5313, %v5314
    %v5316 = vtanh.pop %v5312
    %v5317 = vmul.f32 %v5289, %v5316
    %v5318 = vtanh.pop %v5315
    %v5319 = vmul.f32 %v5307, %v5318
    %v5320 = vpack.c.bf16 %v5317, %v5317
    %v5321 = vpack.c.bf16 %v5319, %v5319
    %s5322 = scalar_lea.vmem [#allocation4], 32
    %5323 = vst [vmem:[%s5322] sm:$0xff] %v5317
    %s5324 = scalar_lea.vmem [#allocation4], 80
    %5325 = vst [vmem:[%s5324 + $0x8] sm:$0xff] %v5319
    %v5326 = vld [vmem:[#allocation2 + $0xc0] sm:$0xff]
    %v5327 = vld [vmem:[#allocation2 + $0xc8] sm:$0xff]
    %v5328 = vld [vmem:[#allocation2 + $0xd0] sm:$0xff]
    %v5329 = vld [vmem:[#allocation2 + $0xd8] sm:$0xff]
    %5330 = vmatprep.subr.bf16.mxu0 %v4434
    %5331 = vmatpush1.bf16.msra.mxu0 %v4433
    %5332 = vmatprep.subr.bf16.mxu0 %v4430
    %5333 = vmatpush1.bf16.msra.mxu0 %v4429
    %5334 = vmatprep.subr.bf16.mxu0 %v4426
    %5335 = vmatpush1.bf16.msra.mxu0 %v4425
    %5336 = vmatprep.subr.bf16.mxu0 %v4422
    %5337 = vmatpush1.bf16.msra.mxu0 %v4421
    %5338 = vmatprep.subr.bf16.mxu0 %v4418
    %5339 = vmatpush1.bf16.msra.mxu0 %v4417
    %5340 = vmatprep.subr.bf16.mxu0 %v4414
    %5341 = vmatpush1.bf16.msra.mxu0 %v4413
    %5342 = vmatprep.subr.bf16.mxu0 %v4410
    %5343 = vmatpush1.bf16.msra.mxu0 %v4409
    %5344 = vmatprep.subr.bf16.mxu0 %v4406
    %5345 = vmatpush1.bf16.msra.mxu0 %v4405
    %5346 = vmatprep.subr.bf16.mxu0 0
    %5347 = vmatpush2.bf16.msra.mxu0 0
    %5348 = vmatprep.subr.bf16.mxu0 0
    %5349 = vmatpush2.bf16.msra.mxu0 0
    %5350 = vmatprep.subr.bf16.mxu0 0
    %5351 = vmatpush2.bf16.msra.mxu0 0
    %5352 = vmatprep.subr.bf16.mxu0 0
    %5353 = vmatpush2.bf16.msra.mxu0 0
    %5354 = vmatprep.subr.bf16.mxu0 0
    %5355 = vmatpush2.bf16.msra.mxu0 0
    %5356 = vmatprep.subr.bf16.mxu0 0
    %5357 = vmatpush2.bf16.msra.mxu0 0
    %5358 = vmatprep.subr.bf16.mxu0 0
    %5359 = vmatpush2.bf16.msra.mxu0 0
    %5360 = vmatprep.subr.bf16.mxu0 0
    %5361 = vmatpush2.bf16.msra.mxu0 0
    %5362 = vmatprep.mubr.bf16.mxu0 0
    %5363 = vmatmul.mubr.bf16.gmra.mxu0 %v5320
    %v5364 = vpop.f32.mrf.mxu0
    %v5365 = vadd.f32 0.0, %v5364
    %v5366 = vpop.f32.mrf.mxu0
    %v5367 = vadd.f32 0.0, %v5366
    %v5368 = vpop.f32.mrf.mxu0
    %v5369 = vpop.f32.mrf.mxu0
    %5370 = vdwg.mxu0
    %5371 = vmatprep.subr.bf16.mxu0 %v4436
    %5372 = vmatpush1.bf16.msra.mxu0 %v4435
    %5373 = vmatprep.subr.bf16.mxu0 %v4432
    %5374 = vmatpush1.bf16.msra.mxu0 %v4431
    %5375 = vmatprep.subr.bf16.mxu0 %v4428
    %5376 = vmatpush1.bf16.msra.mxu0 %v4427
    %5377 = vmatprep.subr.bf16.mxu0 %v4424
    %5378 = vmatpush1.bf16.msra.mxu0 %v4423
    %5379 = vmatprep.subr.bf16.mxu0 %v4420
    %5380 = vmatpush1.bf16.msra.mxu0 %v4419
    %5381 = vmatprep.subr.bf16.mxu0 %v4416
    %5382 = vmatpush1.bf16.msra.mxu0 %v4415
    %5383 = vmatprep.subr.bf16.mxu0 %v4412
    %5384 = vmatpush1.bf16.msra.mxu0 %v4411
    %5385 = vmatprep.subr.bf16.mxu0 %v4408
    %5386 = vmatpush1.bf16.msra.mxu0 %v4407
    %5387 = vmatprep.subr.bf16.mxu0 0
    %5388 = vmatpush2.bf16.msra.mxu0 0
    %5389 = vmatprep.subr.bf16.mxu0 0
    %5390 = vmatpush2.bf16.msra.mxu0 0
    %5391 = vmatprep.subr.bf16.mxu0 0
    %5392 = vmatpush2.bf16.msra.mxu0 0
    %5393 = vmatprep.subr.bf16.mxu0 0
    %5394 = vmatpush2.bf16.msra.mxu0 0
    %5395 = vmatprep.subr.bf16.mxu0 0
    %5396 = vmatpush2.bf16.msra.mxu0 0
    %5397 = vmatprep.subr.bf16.mxu0 0
    %5398 = vmatpush2.bf16.msra.mxu0 0
    %5399 = vmatprep.subr.bf16.mxu0 0
    %5400 = vmatpush2.bf16.msra.mxu0 0
    %5401 = vmatprep.subr.bf16.mxu0 0
    %5402 = vmatpush2.bf16.msra.mxu0 0
    %5403 = vmatprep.mubr.bf16.mxu0 0
    %5404 = vmatmul.mubr.bf16.gmra.mxu0 %v5320
    %v5405 = vpop.f32.mrf.mxu0
    %v5406 = vadd.f32 0.0, %v5405
    %v5407 = vpop.f32.mrf.mxu0
    %v5408 = vadd.f32 0.0, %v5407
    %v5409 = vpop.f32.mrf.mxu0
    %v5410 = vpop.f32.mrf.mxu0
    %5411 = vdwg.mxu0
    %v5412 = vadd.f32 %v5326, %v5365
    %v5413 = vadd.f32 %v5327, %v5367
    %v5414 = vadd.f32 %v5328, %v5406
    %v5415 = vadd.f32 %v5329, %v5408
    %v5416 = vld [vmem:[#allocation2 + $0x120] sm:$0xff]
    %v5417 = vld [vmem:[#allocation2 + $0x128] sm:$0xff]
    %v5418 = vld [vmem:[#allocation2 + $0x130] sm:$0xff]
    %v5419 = vld [vmem:[#allocation2 + $0x138] sm:$0xff]
    %5420 = vmatprep.subr.bf16.mxu0 %v4684
    %5421 = vmatpush1.bf16.msra.mxu0 %v4683
    %5422 = vmatprep.subr.bf16.mxu0 %v4680
    %5423 = vmatpush1.bf16.msra.mxu0 %v4679
    %5424 = vmatprep.subr.bf16.mxu0 %v4676
    %5425 = vmatpush1.bf16.msra.mxu0 %v4675
    %5426 = vmatprep.subr.bf16.mxu0 %v4672
    %5427 = vmatpush1.bf16.msra.mxu0 %v4671
    %5428 = vmatprep.subr.bf16.mxu0 %v4668
    %5429 = vmatpush1.bf16.msra.mxu0 %v4667
    %5430 = vmatprep.subr.bf16.mxu0 %v4664
    %5431 = vmatpush1.bf16.msra.mxu0 %v4663
    %5432 = vmatprep.subr.bf16.mxu0 %v4660
    %5433 = vmatpush1.bf16.msra.mxu0 %v4659
    %5434 = vmatprep.subr.bf16.mxu0 %v4656
    %5435 = vmatpush1.bf16.msra.mxu0 %v4655
    %5436 = vmatprep.subr.bf16.mxu0 0
    %5437 = vmatpush2.bf16.msra.mxu0 0
    %5438 = vmatprep.subr.bf16.mxu0 0
    %5439 = vmatpush2.bf16.msra.mxu0 0
    %5440 = vmatprep.subr.bf16.mxu0 0
    %5441 = vmatpush2.bf16.msra.mxu0 0
    %5442 = vmatprep.subr.bf16.mxu0 0
    %5443 = vmatpush2.bf16.msra.mxu0 0
    %5444 = vmatprep.subr.bf16.mxu0 0
    %5445 = vmatpush2.bf16.msra.mxu0 0
    %5446 = vmatprep.subr.bf16.mxu0 0
    %5447 = vmatpush2.bf16.msra.mxu0 0
    %5448 = vmatprep.subr.bf16.mxu0 0
    %5449 = vmatpush2.bf16.msra.mxu0 0
    %5450 = vmatprep.subr.bf16.mxu0 0
    %5451 = vmatpush2.bf16.msra.mxu0 0
    %5452 = vmatprep.mubr.bf16.mxu0 0
    %5453 = vmatmul.mubr.bf16.gmra.mxu0 %v5321
    %v5454 = vpop.f32.mrf.mxu0
    %v5455 = vadd.f32 0.0, %v5454
    %v5456 = vpop.f32.mrf.mxu0
    %v5457 = vadd.f32 0.0, %v5456
    %v5458 = vpop.f32.mrf.mxu0
    %v5459 = vpop.f32.mrf.mxu0
    %5460 = vdwg.mxu0
    %5461 = vmatprep.subr.bf16.mxu0 %v4686
    %5462 = vmatpush1.bf16.msra.mxu0 %v4685
    %5463 = vmatprep.subr.bf16.mxu0 %v4682
    %5464 = vmatpush1.bf16.msra.mxu0 %v4681
    %5465 = vmatprep.subr.bf16.mxu0 %v4678
    %5466 = vmatpush1.bf16.msra.mxu0 %v4677
    %5467 = vmatprep.subr.bf16.mxu0 %v4674
    %5468 = vmatpush1.bf16.msra.mxu0 %v4673
    %5469 = vmatprep.subr.bf16.mxu0 %v4670
    %5470 = vmatpush1.bf16.msra.mxu0 %v4669
    %5471 = vmatprep.subr.bf16.mxu0 %v4666
    %5472 = vmatpush1.bf16.msra.mxu0 %v4665
    %5473 = vmatprep.subr.bf16.mxu0 %v4662
    %5474 = vmatpush1.bf16.msra.mxu0 %v4661
    %5475 = vmatprep.subr.bf16.mxu0 %v4658
    %5476 = vmatpush1.bf16.msra.mxu0 %v4657
    %5477 = vmatprep.subr.bf16.mxu0 0
    %5478 = vmatpush2.bf16.msra.mxu0 0
    %5479 = vmatprep.subr.bf16.mxu0 0
    %5480 = vmatpush2.bf16.msra.mxu0 0
    %5481 = vmatprep.subr.bf16.mxu0 0
    %5482 = vmatpush2.bf16.msra.mxu0 0
    %5483 = vmatprep.subr.bf16.mxu0 0
    %5484 = vmatpush2.bf16.msra.mxu0 0
    %5485 = vmatprep.subr.bf16.mxu0 0
    %5486 = vmatpush2.bf16.msra.mxu0 0
    %5487 = vmatprep.subr.bf16.mxu0 0
    %5488 = vmatpush2.bf16.msra.mxu0 0
    %5489 = vmatprep.subr.bf16.mxu0 0
    %5490 = vmatpush2.bf16.msra.mxu0 0
    %5491 = vmatprep.subr.bf16.mxu0 0
    %5492 = vmatpush2.bf16.msra.mxu0 0
    %5493 = vmatprep.mubr.bf16.mxu0 0
    %5494 = vmatmul.mubr.bf16.gmra.mxu0 %v5321
    %v5495 = vpop.f32.mrf.mxu0
    %v5496 = vadd.f32 0.0, %v5495
    %v5497 = vpop.f32.mrf.mxu0
    %v5498 = vadd.f32 0.0, %v5497
    %v5499 = vpop.f32.mrf.mxu0
    %v5500 = vpop.f32.mrf.mxu0
    %5501 = vdwg.mxu0
    %v5502 = vadd.f32 %v5416, %v5455
    %v5503 = vadd.f32 %v5417, %v5457
    %v5504 = vadd.f32 %v5418, %v5496
    %v5505 = vadd.f32 %v5419, %v5498
    %v5506 = vxor.u32 %v5412, 2147483648
    %v5507 = vxor.u32 %v5413, 2147483648
    %v5508 = vxor.u32 %v5414, 2147483648
    %v5509 = vmul.f32 %v5506, 1.442695
    %v5510 = vpow.pop %v5509
    %v5511 = vmul.f32 %v5507, 1.442695
    %v5512 = vpow.pop %v5511
    %v5513 = vmul.f32 %v5508, 1.442695
    %v5514 = vpow.pop %v5513
    %v5515 = vadd.f32 %v5510, 1.0
    %v5516 = vadd.f32 %v5512, 1.0
    %v5517 = vadd.f32 %v5514, 1.0
    %v5518 = vrcp.pop %v5515
    %v5519 = vmul.f32 1.0, %v5518
    %v5520 = vrcp.pop %v5516
    %v5521 = vmul.f32 1.0, %v5520
    %v5522 = vrcp.pop %v5517
    %v5523 = vmul.f32 1.0, %v5522
    %v5524 = vxor.u32 %v5502, 2147483648
    %v5525 = vxor.u32 %v5503, 2147483648
    %v5526 = vxor.u32 %v5504, 2147483648
    %v5527 = vmul.f32 %v5524, 1.442695
    %v5528 = vpow.pop %v5527
    %v5529 = vmul.f32 %v5525, 1.442695
    %v5530 = vpow.pop %v5529
    %v5531 = vmul.f32 %v5526, 1.442695
    %v5532 = vpow.pop %v5531
    %v5533 = vadd.f32 %v5528, 1.0
    %v5534 = vadd.f32 %v5530, 1.0
    %v5535 = vadd.f32 %v5532, 1.0
    %v5536 = vrcp.pop %v5533
    %v5537 = vmul.f32 1.0, %v5536
    %v5538 = vrcp.pop %v5534
    %v5539 = vmul.f32 1.0, %v5538
    %v5540 = vrcp.pop %v5535
    %v5541 = vmul.f32 1.0, %v5540
    %v5542 = vtanh.pop %v5415
    %v5543 = vtanh.pop %v5505
    %v5544 = vmul.f32 %v5521, %v5312
    %v5545 = vmul.f32 %v5519, %v5542
    %v5546 = vadd.f32 %v5544, %v5545
    %v5547 = vmul.f32 %v5539, %v5315
    %v5548 = vmul.f32 %v5537, %v5543
    %v5549 = vadd.f32 %v5547, %v5548
    %v5550 = vtanh.pop %v5546
    %v5551 = vmul.f32 %v5523, %v5550
    %v5552 = vtanh.pop %v5549
    %v5553 = vmul.f32 %v5541, %v5552
    %v5554 = vpack.c.bf16 %v5551, %v5551
    %v5555 = vpack.c.bf16 %v5553, %v5553
    %s5556 = scalar_lea.vmem [#allocation4], 48
    %5557 = vst [vmem:[%s5556] sm:$0xff] %v5551
    %s5558 = scalar_lea.vmem [#allocation4], 64
    %5559 = vst [vmem:[%s5558 + $0x8] sm:$0xff] %v5553
    %v5560 = vld [vmem:[#allocation2 + $0x100] sm:$0xff]
    %v5561 = vld [vmem:[#allocation2 + $0x108] sm:$0xff]
    %v5562 = vld [vmem:[#allocation2 + $0x110] sm:$0xff]
    %v5563 = vld [vmem:[#allocation2 + $0x118] sm:$0xff]
    %5564 = vmatprep.subr.bf16.mxu0 %v4434
    %5565 = vmatpush1.bf16.msra.mxu0 %v4433
    %5566 = vmatprep.subr.bf16.mxu0 %v4430
    %5567 = vmatpush1.bf16.msra.mxu0 %v4429
    %5568 = vmatprep.subr.bf16.mxu0 %v4426
    %5569 = vmatpush1.bf16.msra.mxu0 %v4425
    %5570 = vmatprep.subr.bf16.mxu0 %v4422
    %5571 = vmatpush1.bf16.msra.mxu0 %v4421
    %5572 = vmatprep.subr.bf16.mxu0 %v4418
    %5573 = vmatpush1.bf16.msra.mxu0 %v4417
    %5574 = vmatprep.subr.bf16.mxu0 %v4414
    %5575 = vmatpush1.bf16.msra.mxu0 %v4413
    %5576 = vmatprep.subr.bf16.mxu0 %v4410
    %5577 = vmatpush1.bf16.msra.mxu0 %v4409
    %5578 = vmatprep.subr.bf16.mxu0 %v4406
    %5579 = vmatpush1.bf16.msra.mxu0 %v4405
    %5580 = vmatprep.subr.bf16.mxu0 0
    %5581 = vmatpush2.bf16.msra.mxu0 0
    %5582 = vmatprep.subr.bf16.mxu0 0
    %5583 = vmatpush2.bf16.msra.mxu0 0
    %5584 = vmatprep.subr.bf16.mxu0 0
    %5585 = vmatpush2.bf16.msra.mxu0 0
    %5586 = vmatprep.subr.bf16.mxu0 0
    %5587 = vmatpush2.bf16.msra.mxu0 0
    %5588 = vmatprep.subr.bf16.mxu0 0
    %5589 = vmatpush2.bf16.msra.mxu0 0
    %5590 = vmatprep.subr.bf16.mxu0 0
    %5591 = vmatpush2.bf16.msra.mxu0 0
    %5592 = vmatprep.subr.bf16.mxu0 0
    %5593 = vmatpush2.bf16.msra.mxu0 0
    %5594 = vmatprep.subr.bf16.mxu0 0
    %5595 = vmatpush2.bf16.msra.mxu0 0
    %5596 = vmatprep.mubr.bf16.mxu0 0
    %5597 = vmatmul.mubr.bf16.gmra.mxu0 %v5554
    %v5598 = vpop.f32.mrf.mxu0
    %v5599 = vadd.f32 0.0, %v5598
    %v5600 = vpop.f32.mrf.mxu0
    %v5601 = vadd.f32 0.0, %v5600
    %v5602 = vpop.f32.mrf.mxu0
    %v5603 = vpop.f32.mrf.mxu0
    %5604 = vdwg.mxu0
    %5605 = vmatprep.subr.bf16.mxu0 %v4436
    %5606 = vmatpush1.bf16.msra.mxu0 %v4435
    %5607 = vmatprep.subr.bf16.mxu0 %v4432
    %5608 = vmatpush1.bf16.msra.mxu0 %v4431
    %5609 = vmatprep.subr.bf16.mxu0 %v4428
    %5610 = vmatpush1.bf16.msra.mxu0 %v4427
    %5611 = vmatprep.subr.bf16.mxu0 %v4424
    %5612 = vmatpush1.bf16.msra.mxu0 %v4423
    %5613 = vmatprep.subr.bf16.mxu0 %v4420
    %5614 = vmatpush1.bf16.msra.mxu0 %v4419
    %5615 = vmatprep.subr.bf16.mxu0 %v4416
    %5616 = vmatpush1.bf16.msra.mxu0 %v4415
    %5617 = vmatprep.subr.bf16.mxu0 %v4412
    %5618 = vmatpush1.bf16.msra.mxu0 %v4411
    %5619 = vmatprep.subr.bf16.mxu0 %v4408
    %5620 = vmatpush1.bf16.msra.mxu0 %v4407
    %5621 = vmatprep.subr.bf16.mxu0 0
    %5622 = vmatpush2.bf16.msra.mxu0 0
    %5623 = vmatprep.subr.bf16.mxu0 0
    %5624 = vmatpush2.bf16.msra.mxu0 0
    %5625 = vmatprep.subr.bf16.mxu0 0
    %5626 = vmatpush2.bf16.msra.mxu0 0
    %5627 = vmatprep.subr.bf16.mxu0 0
    %5628 = vmatpush2.bf16.msra.mxu0 0
    %5629 = vmatprep.subr.bf16.mxu0 0
    %5630 = vmatpush2.bf16.msra.mxu0 0
    %5631 = vmatprep.subr.bf16.mxu0 0
    %5632 = vmatpush2.bf16.msra.mxu0 0
    %5633 = vmatprep.subr.bf16.mxu0 0
    %5634 = vmatpush2.bf16.msra.mxu0 0
    %5635 = vmatprep.subr.bf16.mxu0 0
    %5636 = vmatpush2.bf16.msra.mxu0 0
    %5637 = vmatprep.mubr.bf16.mxu0 0
    %5638 = vmatmul.mubr.bf16.gmra.mxu0 %v5554
    %v5639 = vpop.f32.mrf.mxu0
    %v5640 = vadd.f32 0.0, %v5639
    %v5641 = vpop.f32.mrf.mxu0
    %v5642 = vadd.f32 0.0, %v5641
    %v5643 = vpop.f32.mrf.mxu0
    %v5644 = vpop.f32.mrf.mxu0
    %5645 = vdwg.mxu0
    %v5646 = vadd.f32 %v5560, %v5599
    %v5647 = vadd.f32 %v5561, %v5601
    %v5648 = vadd.f32 %v5562, %v5640
    %v5649 = vadd.f32 %v5563, %v5642
    %v5650 = vld [vmem:[#allocation2 + $0xe0] sm:$0xff]
    %v5651 = vld [vmem:[#allocation2 + $0xe8] sm:$0xff]
    %v5652 = vld [vmem:[#allocation2 + $0xf0] sm:$0xff]
    %v5653 = vld [vmem:[#allocation2 + $0xf8] sm:$0xff]
    %5654 = vmatprep.subr.bf16.mxu0 %v4684
    %5655 = vmatpush1.bf16.msra.mxu0 %v4683
    %5656 = vmatprep.subr.bf16.mxu0 %v4680
    %5657 = vmatpush1.bf16.msra.mxu0 %v4679
    %5658 = vmatprep.subr.bf16.mxu0 %v4676
    %5659 = vmatpush1.bf16.msra.mxu0 %v4675
    %5660 = vmatprep.subr.bf16.mxu0 %v4672
    %5661 = vmatpush1.bf16.msra.mxu0 %v4671
    %5662 = vmatprep.subr.bf16.mxu0 %v4668
    %5663 = vmatpush1.bf16.msra.mxu0 %v4667
    %5664 = vmatprep.subr.bf16.mxu0 %v4664
    %5665 = vmatpush1.bf16.msra.mxu0 %v4663
    %5666 = vmatprep.subr.bf16.mxu0 %v4660
    %5667 = vmatpush1.bf16.msra.mxu0 %v4659
    %5668 = vmatprep.subr.bf16.mxu0 %v4656
    %5669 = vmatpush1.bf16.msra.mxu0 %v4655
    %5670 = vmatprep.subr.bf16.mxu0 0
    %5671 = vmatpush2.bf16.msra.mxu0 0
    %5672 = vmatprep.subr.bf16.mxu0 0
    %5673 = vmatpush2.bf16.msra.mxu0 0
    %5674 = vmatprep.subr.bf16.mxu0 0
    %5675 = vmatpush2.bf16.msra.mxu0 0
    %5676 = vmatprep.subr.bf16.mxu0 0
    %5677 = vmatpush2.bf16.msra.mxu0 0
    %5678 = vmatprep.subr.bf16.mxu0 0
    %5679 = vmatpush2.bf16.msra.mxu0 0
    %5680 = vmatprep.subr.bf16.mxu0 0
    %5681 = vmatpush2.bf16.msra.mxu0 0
    %5682 = vmatprep.subr.bf16.mxu0 0
    %5683 = vmatpush2.bf16.msra.mxu0 0
    %5684 = vmatprep.subr.bf16.mxu0 0
    %5685 = vmatpush2.bf16.msra.mxu0 0
    %5686 = vmatprep.mubr.bf16.mxu0 0
    %5687 = vmatmul.mubr.bf16.gmra.mxu0 %v5555
    %v5688 = vpop.f32.mrf.mxu0
    %v5689 = vadd.f32 0.0, %v5688
    %v5690 = vpop.f32.mrf.mxu0
    %v5691 = vadd.f32 0.0, %v5690
    %v5692 = vpop.f32.mrf.mxu0
    %v5693 = vpop.f32.mrf.mxu0
    %5694 = vdwg.mxu0
    %5695 = vmatprep.subr.bf16.mxu0 %v4686
    %5696 = vmatpush1.bf16.msra.mxu0 %v4685
    %5697 = vmatprep.subr.bf16.mxu0 %v4682
    %5698 = vmatpush1.bf16.msra.mxu0 %v4681
    %5699 = vmatprep.subr.bf16.mxu0 %v4678
    %5700 = vmatpush1.bf16.msra.mxu0 %v4677
    %5701 = vmatprep.subr.bf16.mxu0 %v4674
    %5702 = vmatpush1.bf16.msra.mxu0 %v4673
    %5703 = vmatprep.subr.bf16.mxu0 %v4670
    %5704 = vmatpush1.bf16.msra.mxu0 %v4669
    %5705 = vmatprep.subr.bf16.mxu0 %v4666
    %5706 = vmatpush1.bf16.msra.mxu0 %v4665
    %5707 = vmatprep.subr.bf16.mxu0 %v4662
    %5708 = vmatpush1.bf16.msra.mxu0 %v4661
    %5709 = vmatprep.subr.bf16.mxu0 %v4658
    %5710 = vmatpush1.bf16.msra.mxu0 %v4657
    %5711 = vmatprep.subr.bf16.mxu0 0
    %5712 = vmatpush2.bf16.msra.mxu0 0
    %5713 = vmatprep.subr.bf16.mxu0 0
    %5714 = vmatpush2.bf16.msra.mxu0 0
    %5715 = vmatprep.subr.bf16.mxu0 0
    %5716 = vmatpush2.bf16.msra.mxu0 0
    %5717 = vmatprep.subr.bf16.mxu0 0
    %5718 = vmatpush2.bf16.msra.mxu0 0
    %5719 = vmatprep.subr.bf16.mxu0 0
    %5720 = vmatpush2.bf16.msra.mxu0 0
    %5721 = vmatprep.subr.bf16.mxu0 0
    %5722 = vmatpush2.bf16.msra.mxu0 0
    %5723 = vmatprep.subr.bf16.mxu0 0
    %5724 = vmatpush2.bf16.msra.mxu0 0
    %5725 = vmatprep.subr.bf16.mxu0 0
    %5726 = vmatpush2.bf16.msra.mxu0 0
    %5727 = vmatprep.mubr.bf16.mxu0 0
    %5728 = vmatmul.mubr.bf16.gmra.mxu0 %v5555
    %v5729 = vpop.f32.mrf.mxu0
    %v5730 = vadd.f32 0.0, %v5729
    %v5731 = vpop.f32.mrf.mxu0
    %v5732 = vadd.f32 0.0, %v5731
    %v5733 = vpop.f32.mrf.mxu0
    %v5734 = vpop.f32.mrf.mxu0
    %5735 = vdwg.mxu0
    %v5736 = vadd.f32 %v5650, %v5689
    %v5737 = vadd.f32 %v5651, %v5691
    %v5738 = vadd.f32 %v5652, %v5730
    %v5739 = vadd.f32 %v5653, %v5732
    %v5740 = vxor.u32 %v5646, 2147483648
    %v5741 = vxor.u32 %v5647, 2147483648
    %v5742 = vxor.u32 %v5648, 2147483648
    %v5743 = vmul.f32 %v5740, 1.442695
    %v5744 = vpow.pop %v5743
    %v5745 = vmul.f32 %v5741, 1.442695
    %v5746 = vpow.pop %v5745
    %v5747 = vmul.f32 %v5742, 1.442695
    %v5748 = vpow.pop %v5747
    %v5749 = vadd.f32 %v5744, 1.0
    %v5750 = vadd.f32 %v5746, 1.0
    %v5751 = vadd.f32 %v5748, 1.0
    %v5752 = vrcp.pop %v5749
    %v5753 = vmul.f32 1.0, %v5752
    %v5754 = vrcp.pop %v5750
    %v5755 = vmul.f32 1.0, %v5754
    %v5756 = vrcp.pop %v5751
    %v5757 = vmul.f32 1.0, %v5756
    %v5758 = vxor.u32 %v5736, 2147483648
    %v5759 = vxor.u32 %v5737, 2147483648
    %v5760 = vxor.u32 %v5738, 2147483648
    %v5761 = vmul.f32 %v5758, 1.442695
    %v5762 = vpow.pop %v5761
    %v5763 = vmul.f32 %v5759, 1.442695
    %v5764 = vpow.pop %v5763
    %v5765 = vmul.f32 %v5760, 1.442695
    %v5766 = vpow.pop %v5765
    %v5767 = vadd.f32 %v5762, 1.0
    %v5768 = vadd.f32 %v5764, 1.0
    %v5769 = vadd.f32 %v5766, 1.0
    %v5770 = vrcp.pop %v5767
    %v5771 = vmul.f32 1.0, %v5770
    %v5772 = vrcp.pop %v5768
    %v5773 = vmul.f32 1.0, %v5772
    %v5774 = vrcp.pop %v5769
    %v5775 = vmul.f32 1.0, %v5774
    %v5776 = vtanh.pop %v5649
    %v5777 = vtanh.pop %v5739
    %v5778 = vmul.f32 %v5755, %v5546
    %v5779 = vmul.f32 %v5753, %v5776
    %v5780 = vadd.f32 %v5778, %v5779
    %v5781 = vmul.f32 %v5773, %v5549
    %v5782 = vmul.f32 %v5771, %v5777
    %v5783 = vadd.f32 %v5781, %v5782
    %v5784 = vtanh.pop %v5780
    %v5785 = vmul.f32 %v5757, %v5784
    %v5786 = vtanh.pop %v5783
    %v5787 = vmul.f32 %v5775, %v5786
    %v5788 = vpack.c.bf16 %v5785, %v5785
    %v5789 = vpack.c.bf16 %v5787, %v5787
    %5790 = vst [vmem:[%s5558] sm:$0xff] %v5785
    %5791 = vst [vmem:[%s5556 + $0x8] sm:$0xff] %v5787
    %v5792 = vld [vmem:[#allocation2 + $0x140] sm:$0xff]
    %v5793 = vld [vmem:[#allocation2 + $0x148] sm:$0xff]
    %v5794 = vld [vmem:[#allocation2 + $0x150] sm:$0xff]
    %v5795 = vld [vmem:[#allocation2 + $0x158] sm:$0xff]
    %5796 = vmatprep.subr.bf16.mxu0 %v4434
    %5797 = vmatpush1.bf16.msra.mxu0 %v4433
    %5798 = vmatprep.subr.bf16.mxu0 %v4430
    %5799 = vmatpush1.bf16.msra.mxu0 %v4429
    %5800 = vmatprep.subr.bf16.mxu0 %v4426
    %5801 = vmatpush1.bf16.msra.mxu0 %v4425
    %5802 = vmatprep.subr.bf16.mxu0 %v4422
    %5803 = vmatpush1.bf16.msra.mxu0 %v4421
    %5804 = vmatprep.subr.bf16.mxu0 %v4418
    %5805 = vmatpush1.bf16.msra.mxu0 %v4417
    %5806 = vmatprep.subr.bf16.mxu0 %v4414
    %5807 = vmatpush1.bf16.msra.mxu0 %v4413
    %5808 = vmatprep.subr.bf16.mxu0 %v4410
    %5809 = vmatpush1.bf16.msra.mxu0 %v4409
    %5810 = vmatprep.subr.bf16.mxu0 %v4406
    %5811 = vmatpush1.bf16.msra.mxu0 %v4405
    %5812 = vmatprep.subr.bf16.mxu0 0
    %5813 = vmatpush2.bf16.msra.mxu0 0
    %5814 = vmatprep.subr.bf16.mxu0 0
    %5815 = vmatpush2.bf16.msra.mxu0 0
    %5816 = vmatprep.subr.bf16.mxu0 0
    %5817 = vmatpush2.bf16.msra.mxu0 0
    %5818 = vmatprep.subr.bf16.mxu0 0
    %5819 = vmatpush2.bf16.msra.mxu0 0
    %5820 = vmatprep.subr.bf16.mxu0 0
    %5821 = vmatpush2.bf16.msra.mxu0 0
    %5822 = vmatprep.subr.bf16.mxu0 0
    %5823 = vmatpush2.bf16.msra.mxu0 0
    %5824 = vmatprep.subr.bf16.mxu0 0
    %5825 = vmatpush2.bf16.msra.mxu0 0
    %5826 = vmatprep.subr.bf16.mxu0 0
    %5827 = vmatpush2.bf16.msra.mxu0 0
    %5828 = vmatprep.mubr.bf16.mxu0 0
    %5829 = vmatmul.mubr.bf16.gmra.mxu0 %v5788
    %v5830 = vpop.f32.mrf.mxu0
    %v5831 = vadd.f32 0.0, %v5830
    %v5832 = vpop.f32.mrf.mxu0
    %v5833 = vadd.f32 0.0, %v5832
    %v5834 = vpop.f32.mrf.mxu0
    %v5835 = vpop.f32.mrf.mxu0
    %5836 = vdwg.mxu0
    %5837 = vmatprep.subr.bf16.mxu0 %v4436
    %5838 = vmatpush1.bf16.msra.mxu0 %v4435
    %5839 = vmatprep.subr.bf16.mxu0 %v4432
    %5840 = vmatpush1.bf16.msra.mxu0 %v4431
    %5841 = vmatprep.subr.bf16.mxu0 %v4428
    %5842 = vmatpush1.bf16.msra.mxu0 %v4427
    %5843 = vmatprep.subr.bf16.mxu0 %v4424
    %5844 = vmatpush1.bf16.msra.mxu0 %v4423
    %5845 = vmatprep.subr.bf16.mxu0 %v4420
    %5846 = vmatpush1.bf16.msra.mxu0 %v4419
    %5847 = vmatprep.subr.bf16.mxu0 %v4416
    %5848 = vmatpush1.bf16.msra.mxu0 %v4415
    %5849 = vmatprep.subr.bf16.mxu0 %v4412
    %5850 = vmatpush1.bf16.msra.mxu0 %v4411
    %5851 = vmatprep.subr.bf16.mxu0 %v4408
    %5852 = vmatpush1.bf16.msra.mxu0 %v4407
    %5853 = vmatprep.subr.bf16.mxu0 0
    %5854 = vmatpush2.bf16.msra.mxu0 0
    %5855 = vmatprep.subr.bf16.mxu0 0
    %5856 = vmatpush2.bf16.msra.mxu0 0
    %5857 = vmatprep.subr.bf16.mxu0 0
    %5858 = vmatpush2.bf16.msra.mxu0 0
    %5859 = vmatprep.subr.bf16.mxu0 0
    %5860 = vmatpush2.bf16.msra.mxu0 0
    %5861 = vmatprep.subr.bf16.mxu0 0
    %5862 = vmatpush2.bf16.msra.mxu0 0
    %5863 = vmatprep.subr.bf16.mxu0 0
    %5864 = vmatpush2.bf16.msra.mxu0 0
    %5865 = vmatprep.subr.bf16.mxu0 0
    %5866 = vmatpush2.bf16.msra.mxu0 0
    %5867 = vmatprep.subr.bf16.mxu0 0
    %5868 = vmatpush2.bf16.msra.mxu0 0
    %5869 = vmatprep.mubr.bf16.mxu0 0
    %5870 = vmatmul.mubr.bf16.gmra.mxu0 %v5788
    %v5871 = vpop.f32.mrf.mxu0
    %v5872 = vadd.f32 0.0, %v5871
    %v5873 = vpop.f32.mrf.mxu0
    %v5874 = vadd.f32 0.0, %v5873
    %v5875 = vpop.f32.mrf.mxu0
    %v5876 = vpop.f32.mrf.mxu0
    %5877 = vdwg.mxu0
    %v5878 = vadd.f32 %v5792, %v5831
    %v5879 = vadd.f32 %v5793, %v5833
    %v5880 = vadd.f32 %v5794, %v5872
    %v5881 = vadd.f32 %v5795, %v5874
    %v5882 = vld [vmem:[#allocation2 + $0xa0] sm:$0xff]
    %v5883 = vld [vmem:[#allocation2 + $0xa8] sm:$0xff]
    %v5884 = vld [vmem:[#allocation2 + $0xb0] sm:$0xff]
    %v5885 = vld [vmem:[#allocation2 + $0xb8] sm:$0xff]
    %5886 = vmatprep.subr.bf16.mxu0 %v4684
    %5887 = vmatpush1.bf16.msra.mxu0 %v4683
    %5888 = vmatprep.subr.bf16.mxu0 %v4680
    %5889 = vmatpush1.bf16.msra.mxu0 %v4679
    %5890 = vmatprep.subr.bf16.mxu0 %v4676
    %5891 = vmatpush1.bf16.msra.mxu0 %v4675
    %5892 = vmatprep.subr.bf16.mxu0 %v4672
    %5893 = vmatpush1.bf16.msra.mxu0 %v4671
    %5894 = vmatprep.subr.bf16.mxu0 %v4668
    %5895 = vmatpush1.bf16.msra.mxu0 %v4667
    %5896 = vmatprep.subr.bf16.mxu0 %v4664
    %5897 = vmatpush1.bf16.msra.mxu0 %v4663
    %5898 = vmatprep.subr.bf16.mxu0 %v4660
    %5899 = vmatpush1.bf16.msra.mxu0 %v4659
    %5900 = vmatprep.subr.bf16.mxu0 %v4656
    %5901 = vmatpush1.bf16.msra.mxu0 %v4655
    %5902 = vmatprep.subr.bf16.mxu0 0
    %5903 = vmatpush2.bf16.msra.mxu0 0
    %5904 = vmatprep.subr.bf16.mxu0 0
    %5905 = vmatpush2.bf16.msra.mxu0 0
    %5906 = vmatprep.subr.bf16.mxu0 0
    %5907 = vmatpush2.bf16.msra.mxu0 0
    %5908 = vmatprep.subr.bf16.mxu0 0
    %5909 = vmatpush2.bf16.msra.mxu0 0
    %5910 = vmatprep.subr.bf16.mxu0 0
    %5911 = vmatpush2.bf16.msra.mxu0 0
    %5912 = vmatprep.subr.bf16.mxu0 0
    %5913 = vmatpush2.bf16.msra.mxu0 0
    %5914 = vmatprep.subr.bf16.mxu0 0
    %5915 = vmatpush2.bf16.msra.mxu0 0
    %5916 = vmatprep.subr.bf16.mxu0 0
    %5917 = vmatpush2.bf16.msra.mxu0 0
    %5918 = vmatprep.mubr.bf16.mxu0 0
    %5919 = vmatmul.mubr.bf16.gmra.mxu0 %v5789
    %v5920 = vpop.f32.mrf.mxu0
    %v5921 = vadd.f32 0.0, %v5920
    %v5922 = vpop.f32.mrf.mxu0
    %v5923 = vadd.f32 0.0, %v5922
    %v5924 = vpop.f32.mrf.mxu0
    %v5925 = vpop.f32.mrf.mxu0
    %5926 = vdwg.mxu0
    %5927 = vmatprep.subr.bf16.mxu0 %v4686
    %5928 = vmatpush1.bf16.msra.mxu0 %v4685
    %5929 = vmatprep.subr.bf16.mxu0 %v4682
    %5930 = vmatpush1.bf16.msra.mxu0 %v4681
    %5931 = vmatprep.subr.bf16.mxu0 %v4678
    %5932 = vmatpush1.bf16.msra.mxu0 %v4677
    %5933 = vmatprep.subr.bf16.mxu0 %v4674
    %5934 = vmatpush1.bf16.msra.mxu0 %v4673
    %5935 = vmatprep.subr.bf16.mxu0 %v4670
    %5936 = vmatpush1.bf16.msra.mxu0 %v4669
    %5937 = vmatprep.subr.bf16.mxu0 %v4666
    %5938 = vmatpush1.bf16.msra.mxu0 %v4665
    %5939 = vmatprep.subr.bf16.mxu0 %v4662
    %5940 = vmatpush1.bf16.msra.mxu0 %v4661
    %5941 = vmatprep.subr.bf16.mxu0 %v4658
    %5942 = vmatpush1.bf16.msra.mxu0 %v4657
    %5943 = vmatprep.subr.bf16.mxu0 0
    %5944 = vmatpush2.bf16.msra.mxu0 0
    %5945 = vmatprep.subr.bf16.mxu0 0
    %5946 = vmatpush2.bf16.msra.mxu0 0
    %5947 = vmatprep.subr.bf16.mxu0 0
    %5948 = vmatpush2.bf16.msra.mxu0 0
    %5949 = vmatprep.subr.bf16.mxu0 0
    %5950 = vmatpush2.bf16.msra.mxu0 0
    %5951 = vmatprep.subr.bf16.mxu0 0
    %5952 = vmatpush2.bf16.msra.mxu0 0
    %5953 = vmatprep.subr.bf16.mxu0 0
    %5954 = vmatpush2.bf16.msra.mxu0 0
    %5955 = vmatprep.subr.bf16.mxu0 0
    %5956 = vmatpush2.bf16.msra.mxu0 0
    %5957 = vmatprep.subr.bf16.mxu0 0
    %5958 = vmatpush2.bf16.msra.mxu0 0
    %5959 = vmatprep.mubr.bf16.mxu0 0
    %5960 = vmatmul.mubr.bf16.gmra.mxu0 %v5789
    %v5961 = vpop.f32.mrf.mxu0
    %v5962 = vadd.f32 0.0, %v5961
    %v5963 = vpop.f32.mrf.mxu0
    %v5964 = vadd.f32 0.0, %v5963
    %v5965 = vpop.f32.mrf.mxu0
    %v5966 = vpop.f32.mrf.mxu0
    %5967 = vdwg.mxu0
    %v5968 = vadd.f32 %v5882, %v5921
    %v5969 = vadd.f32 %v5883, %v5923
    %v5970 = vadd.f32 %v5884, %v5962
    %v5971 = vadd.f32 %v5885, %v5964
    %v5972 = vxor.u32 %v5878, 2147483648
    %v5973 = vxor.u32 %v5879, 2147483648
    %v5974 = vxor.u32 %v5880, 2147483648
    %v5975 = vmul.f32 %v5972, 1.442695
    %v5976 = vpow.pop %v5975
    %v5977 = vmul.f32 %v5973, 1.442695
    %v5978 = vpow.pop %v5977
    %v5979 = vmul.f32 %v5974, 1.442695
    %v5980 = vpow.pop %v5979
    %v5981 = vadd.f32 %v5976, 1.0
    %v5982 = vadd.f32 %v5978, 1.0
    %v5983 = vadd.f32 %v5980, 1.0
    %v5984 = vrcp.pop %v5981
    %v5985 = vmul.f32 1.0, %v5984
    %v5986 = vrcp.pop %v5982
    %v5987 = vmul.f32 1.0, %v5986
    %v5988 = vrcp.pop %v5983
    %v5989 = vmul.f32 1.0, %v5988
    %v5990 = vxor.u32 %v5968, 2147483648
    %v5991 = vxor.u32 %v5969, 2147483648
    %v5992 = vxor.u32 %v5970, 2147483648
    %v5993 = vmul.f32 %v5990, 1.442695
    %v5994 = vpow.pop %v5993
    %v5995 = vmul.f32 %v5991, 1.442695
    %v5996 = vpow.pop %v5995
    %v5997 = vmul.f32 %v5992, 1.442695
    %v5998 = vpow.pop %v5997
    %v5999 = vadd.f32 %v5994, 1.0
    %v6000 = vadd.f32 %v5996, 1.0
    %v6001 = vadd.f32 %v5998, 1.0
    %v6002 = vrcp.pop %v5999
    %v6003 = vmul.f32 1.0, %v6002
    %v6004 = vrcp.pop %v6000
    %v6005 = vmul.f32 1.0, %v6004
    %v6006 = vrcp.pop %v6001
    %v6007 = vmul.f32 1.0, %v6006
    %v6008 = vtanh.pop %v5881
    %v6009 = vtanh.pop %v5971
    %v6010 = vmul.f32 %v5987, %v5780
    %v6011 = vmul.f32 %v5985, %v6008
    %v6012 = vadd.f32 %v6010, %v6011
    %v6013 = vmul.f32 %v6005, %v5783
    %v6014 = vmul.f32 %v6003, %v6009
    %v6015 = vadd.f32 %v6013, %v6014
    %v6016 = vtanh.pop %v6012
    %v6017 = vmul.f32 %v5989, %v6016
    %v6018 = vtanh.pop %v6015
    %v6019 = vmul.f32 %v6007, %v6018
    %v6020 = vpack.c.bf16 %v6017, %v6017
    %v6021 = vpack.c.bf16 %v6019, %v6019
    %6022 = vst [vmem:[%s5324] sm:$0xff] %v6017
    %6023 = vst [vmem:[%s5322 + $0x8] sm:$0xff] %v6019
    %v6024 = vld [vmem:[#allocation2 + $0x180] sm:$0xff]
    %v6025 = vld [vmem:[#allocation2 + $0x188] sm:$0xff]
    %v6026 = vld [vmem:[#allocation2 + $0x190] sm:$0xff]
    %v6027 = vld [vmem:[#allocation2 + $0x198] sm:$0xff]
    %6028 = vmatprep.subr.bf16.mxu0 %v4434
    %6029 = vmatpush1.bf16.msra.mxu0 %v4433
    %6030 = vmatprep.subr.bf16.mxu0 %v4430
    %6031 = vmatpush1.bf16.msra.mxu0 %v4429
    %6032 = vmatprep.subr.bf16.mxu0 %v4426
    %6033 = vmatpush1.bf16.msra.mxu0 %v4425
    %6034 = vmatprep.subr.bf16.mxu0 %v4422
    %6035 = vmatpush1.bf16.msra.mxu0 %v4421
    %6036 = vmatprep.subr.bf16.mxu0 %v4418
    %6037 = vmatpush1.bf16.msra.mxu0 %v4417
    %6038 = vmatprep.subr.bf16.mxu0 %v4414
    %6039 = vmatpush1.bf16.msra.mxu0 %v4413
    %6040 = vmatprep.subr.bf16.mxu0 %v4410
    %6041 = vmatpush1.bf16.msra.mxu0 %v4409
    %6042 = vmatprep.subr.bf16.mxu0 %v4406
    %6043 = vmatpush1.bf16.msra.mxu0 %v4405
    %6044 = vmatprep.subr.bf16.mxu0 0
    %6045 = vmatpush2.bf16.msra.mxu0 0
    %6046 = vmatprep.subr.bf16.mxu0 0
    %6047 = vmatpush2.bf16.msra.mxu0 0
    %6048 = vmatprep.subr.bf16.mxu0 0
    %6049 = vmatpush2.bf16.msra.mxu0 0
    %6050 = vmatprep.subr.bf16.mxu0 0
    %6051 = vmatpush2.bf16.msra.mxu0 0
    %6052 = vmatprep.subr.bf16.mxu0 0
    %6053 = vmatpush2.bf16.msra.mxu0 0
    %6054 = vmatprep.subr.bf16.mxu0 0
    %6055 = vmatpush2.bf16.msra.mxu0 0
    %6056 = vmatprep.subr.bf16.mxu0 0
    %6057 = vmatpush2.bf16.msra.mxu0 0
    %6058 = vmatprep.subr.bf16.mxu0 0
    %6059 = vmatpush2.bf16.msra.mxu0 0
    %6060 = vmatprep.mubr.bf16.mxu0 0
    %6061 = vmatmul.mubr.bf16.gmra.mxu0 %v6020
    %v6062 = vpop.f32.mrf.mxu0
    %v6063 = vadd.f32 0.0, %v6062
    %v6064 = vpop.f32.mrf.mxu0
    %v6065 = vadd.f32 0.0, %v6064
    %v6066 = vpop.f32.mrf.mxu0
    %v6067 = vpop.f32.mrf.mxu0
    %6068 = vdwg.mxu0
    %6069 = vmatprep.subr.bf16.mxu0 %v4436
    %6070 = vmatpush1.bf16.msra.mxu0 %v4435
    %6071 = vmatprep.subr.bf16.mxu0 %v4432
    %6072 = vmatpush1.bf16.msra.mxu0 %v4431
    %6073 = vmatprep.subr.bf16.mxu0 %v4428
    %6074 = vmatpush1.bf16.msra.mxu0 %v4427
    %6075 = vmatprep.subr.bf16.mxu0 %v4424
    %6076 = vmatpush1.bf16.msra.mxu0 %v4423
    %6077 = vmatprep.subr.bf16.mxu0 %v4420
    %6078 = vmatpush1.bf16.msra.mxu0 %v4419
    %6079 = vmatprep.subr.bf16.mxu0 %v4416
    %6080 = vmatpush1.bf16.msra.mxu0 %v4415
    %6081 = vmatprep.subr.bf16.mxu0 %v4412
    %6082 = vmatpush1.bf16.msra.mxu0 %v4411
    %6083 = vmatprep.subr.bf16.mxu0 %v4408
    %6084 = vmatpush1.bf16.msra.mxu0 %v4407
    %6085 = vmatprep.subr.bf16.mxu0 0
    %6086 = vmatpush2.bf16.msra.mxu0 0
    %6087 = vmatprep.subr.bf16.mxu0 0
    %6088 = vmatpush2.bf16.msra.mxu0 0
    %6089 = vmatprep.subr.bf16.mxu0 0
    %6090 = vmatpush2.bf16.msra.mxu0 0
    %6091 = vmatprep.subr.bf16.mxu0 0
    %6092 = vmatpush2.bf16.msra.mxu0 0
    %6093 = vmatprep.subr.bf16.mxu0 0
    %6094 = vmatpush2.bf16.msra.mxu0 0
    %6095 = vmatprep.subr.bf16.mxu0 0
    %6096 = vmatpush2.bf16.msra.mxu0 0
    %6097 = vmatprep.subr.bf16.mxu0 0
    %6098 = vmatpush2.bf16.msra.mxu0 0
    %6099 = vmatprep.subr.bf16.mxu0 0
    %6100 = vmatpush2.bf16.msra.mxu0 0
    %6101 = vmatprep.mubr.bf16.mxu0 0
    %6102 = vmatmul.mubr.bf16.gmra.mxu0 %v6020
    %v6103 = vpop.f32.mrf.mxu0
    %v6104 = vadd.f32 0.0, %v6103
    %v6105 = vpop.f32.mrf.mxu0
    %v6106 = vadd.f32 0.0, %v6105
    %v6107 = vpop.f32.mrf.mxu0
    %v6108 = vpop.f32.mrf.mxu0
    %6109 = vdwg.mxu0
    %v6110 = vadd.f32 %v6024, %v6063
    %v6111 = vadd.f32 %v6025, %v6065
    %v6112 = vadd.f32 %v6026, %v6104
    %v6113 = vadd.f32 %v6027, %v6106
    %v6114 = vld [vmem:[#allocation2 + $0x60] sm:$0xff]
    %v6115 = vld [vmem:[#allocation2 + $0x68] sm:$0xff]
    %v6116 = vld [vmem:[#allocation2 + $0x70] sm:$0xff]
    %v6117 = vld [vmem:[#allocation2 + $0x78] sm:$0xff]
    %6118 = vmatprep.subr.bf16.mxu0 %v4684
    %6119 = vmatpush1.bf16.msra.mxu0 %v4683
    %6120 = vmatprep.subr.bf16.mxu0 %v4680
    %6121 = vmatpush1.bf16.msra.mxu0 %v4679
    %6122 = vmatprep.subr.bf16.mxu0 %v4676
    %6123 = vmatpush1.bf16.msra.mxu0 %v4675
    %6124 = vmatprep.subr.bf16.mxu0 %v4672
    %6125 = vmatpush1.bf16.msra.mxu0 %v4671
    %6126 = vmatprep.subr.bf16.mxu0 %v4668
    %6127 = vmatpush1.bf16.msra.mxu0 %v4667
    %6128 = vmatprep.subr.bf16.mxu0 %v4664
    %6129 = vmatpush1.bf16.msra.mxu0 %v4663
    %6130 = vmatprep.subr.bf16.mxu0 %v4660
    %6131 = vmatpush1.bf16.msra.mxu0 %v4659
    %6132 = vmatprep.subr.bf16.mxu0 %v4656
    %6133 = vmatpush1.bf16.msra.mxu0 %v4655
    %6134 = vmatprep.subr.bf16.mxu0 0
    %6135 = vmatpush2.bf16.msra.mxu0 0
    %6136 = vmatprep.subr.bf16.mxu0 0
    %6137 = vmatpush2.bf16.msra.mxu0 0
    %6138 = vmatprep.subr.bf16.mxu0 0
    %6139 = vmatpush2.bf16.msra.mxu0 0
    %6140 = vmatprep.subr.bf16.mxu0 0
    %6141 = vmatpush2.bf16.msra.mxu0 0
    %6142 = vmatprep.subr.bf16.mxu0 0
    %6143 = vmatpush2.bf16.msra.mxu0 0
    %6144 = vmatprep.subr.bf16.mxu0 0
    %6145 = vmatpush2.bf16.msra.mxu0 0
    %6146 = vmatprep.subr.bf16.mxu0 0
    %6147 = vmatpush2.bf16.msra.mxu0 0
    %6148 = vmatprep.subr.bf16.mxu0 0
    %6149 = vmatpush2.bf16.msra.mxu0 0
    %6150 = vmatprep.mubr.bf16.mxu0 0
    %6151 = vmatmul.mubr.bf16.gmra.mxu0 %v6021
    %v6152 = vpop.f32.mrf.mxu0
    %v6153 = vadd.f32 0.0, %v6152
    %v6154 = vpop.f32.mrf.mxu0
    %v6155 = vadd.f32 0.0, %v6154
    %v6156 = vpop.f32.mrf.mxu0
    %v6157 = vpop.f32.mrf.mxu0
    %6158 = vdwg.mxu0
    %6159 = vmatprep.subr.bf16.mxu0 %v4686
    %6160 = vmatpush1.bf16.msra.mxu0 %v4685
    %6161 = vmatprep.subr.bf16.mxu0 %v4682
    %6162 = vmatpush1.bf16.msra.mxu0 %v4681
    %6163 = vmatprep.subr.bf16.mxu0 %v4678
    %6164 = vmatpush1.bf16.msra.mxu0 %v4677
    %6165 = vmatprep.subr.bf16.mxu0 %v4674
    %6166 = vmatpush1.bf16.msra.mxu0 %v4673
    %6167 = vmatprep.subr.bf16.mxu0 %v4670
    %6168 = vmatpush1.bf16.msra.mxu0 %v4669
    %6169 = vmatprep.subr.bf16.mxu0 %v4666
    %6170 = vmatpush1.bf16.msra.mxu0 %v4665
    %6171 = vmatprep.subr.bf16.mxu0 %v4662
    %6172 = vmatpush1.bf16.msra.mxu0 %v4661
    %6173 = vmatprep.subr.bf16.mxu0 %v4658
    %6174 = vmatpush1.bf16.msra.mxu0 %v4657
    %6175 = vmatprep.subr.bf16.mxu0 0
    %6176 = vmatpush2.bf16.msra.mxu0 0
    %6177 = vmatprep.subr.bf16.mxu0 0
    %6178 = vmatpush2.bf16.msra.mxu0 0
    %6179 = vmatprep.subr.bf16.mxu0 0
    %6180 = vmatpush2.bf16.msra.mxu0 0
    %6181 = vmatprep.subr.bf16.mxu0 0
    %6182 = vmatpush2.bf16.msra.mxu0 0
    %6183 = vmatprep.subr.bf16.mxu0 0
    %6184 = vmatpush2.bf16.msra.mxu0 0
    %6185 = vmatprep.subr.bf16.mxu0 0
    %6186 = vmatpush2.bf16.msra.mxu0 0
    %6187 = vmatprep.subr.bf16.mxu0 0
    %6188 = vmatpush2.bf16.msra.mxu0 0
    %6189 = vmatprep.subr.bf16.mxu0 0
    %6190 = vmatpush2.bf16.msra.mxu0 0
    %6191 = vmatprep.mubr.bf16.mxu0 0
    %6192 = vmatmul.mubr.bf16.gmra.mxu0 %v6021
    %v6193 = vpop.f32.mrf.mxu0
    %v6194 = vadd.f32 0.0, %v6193
    %v6195 = vpop.f32.mrf.mxu0
    %v6196 = vadd.f32 0.0, %v6195
    %v6197 = vpop.f32.mrf.mxu0
    %v6198 = vpop.f32.mrf.mxu0
    %6199 = vdwg.mxu0
    %v6200 = vadd.f32 %v6114, %v6153
    %v6201 = vadd.f32 %v6115, %v6155
    %v6202 = vadd.f32 %v6116, %v6194
    %v6203 = vadd.f32 %v6117, %v6196
    %v6204 = vxor.u32 %v6110, 2147483648
    %v6205 = vxor.u32 %v6111, 2147483648
    %v6206 = vxor.u32 %v6112, 2147483648
    %v6207 = vmul.f32 %v6204, 1.442695
    %v6208 = vpow.pop %v6207
    %v6209 = vmul.f32 %v6205, 1.442695
    %v6210 = vpow.pop %v6209
    %v6211 = vmul.f32 %v6206, 1.442695
    %v6212 = vpow.pop %v6211
    %v6213 = vadd.f32 %v6208, 1.0
    %v6214 = vadd.f32 %v6210, 1.0
    %v6215 = vadd.f32 %v6212, 1.0
    %v6216 = vrcp.pop %v6213
    %v6217 = vmul.f32 1.0, %v6216
    %v6218 = vrcp.pop %v6214
    %v6219 = vmul.f32 1.0, %v6218
    %v6220 = vrcp.pop %v6215
    %v6221 = vmul.f32 1.0, %v6220
    %v6222 = vxor.u32 %v6200, 2147483648
    %v6223 = vxor.u32 %v6201, 2147483648
    %v6224 = vxor.u32 %v6202, 2147483648
    %v6225 = vmul.f32 %v6222, 1.442695
    %v6226 = vpow.pop %v6225
    %v6227 = vmul.f32 %v6223, 1.442695
    %v6228 = vpow.pop %v6227
    %v6229 = vmul.f32 %v6224, 1.442695
    %v6230 = vpow.pop %v6229
    %v6231 = vadd.f32 %v6226, 1.0
    %v6232 = vadd.f32 %v6228, 1.0
    %v6233 = vadd.f32 %v6230, 1.0
    %v6234 = vrcp.pop %v6231
    %v6235 = vmul.f32 1.0, %v6234
    %v6236 = vrcp.pop %v6232
    %v6237 = vmul.f32 1.0, %v6236
    %v6238 = vrcp.pop %v6233
    %v6239 = vmul.f32 1.0, %v6238
    %v6240 = vtanh.pop %v6113
    %v6241 = vtanh.pop %v6203
    %v6242 = vmul.f32 %v6219, %v6012
    %v6243 = vmul.f32 %v6217, %v6240
    %v6244 = vadd.f32 %v6242, %v6243
    %v6245 = vmul.f32 %v6237, %v6015
    %v6246 = vmul.f32 %v6235, %v6241
    %v6247 = vadd.f32 %v6245, %v6246
    %v6248 = vtanh.pop %v6244
    %v6249 = vmul.f32 %v6221, %v6248
    %v6250 = vtanh.pop %v6247
    %v6251 = vmul.f32 %v6239, %v6250
    %v6252 = vpack.c.bf16 %v6249, %v6249
    %v6253 = vpack.c.bf16 %v6251, %v6251
    %6254 = vst [vmem:[%s5090] sm:$0xff] %v6249
    %6255 = vst [vmem:[%s5088 + $0x8] sm:$0xff] %v6251
    %v6256 = vld [vmem:[#allocation2 + $0x1c0] sm:$0xff]
    %v6257 = vld [vmem:[#allocation2 + $0x1c8] sm:$0xff]
    %v6258 = vld [vmem:[#allocation2 + $0x1d0] sm:$0xff]
    %v6259 = vld [vmem:[#allocation2 + $0x1d8] sm:$0xff]
    %6260 = vmatprep.subr.bf16.mxu0 %v4434
    %6261 = vmatpush1.bf16.msra.mxu0 %v4433
    %6262 = vmatprep.subr.bf16.mxu0 %v4430
    %6263 = vmatpush1.bf16.msra.mxu0 %v4429
    %6264 = vmatprep.subr.bf16.mxu0 %v4426
    %6265 = vmatpush1.bf16.msra.mxu0 %v4425
    %6266 = vmatprep.subr.bf16.mxu0 %v4422
    %6267 = vmatpush1.bf16.msra.mxu0 %v4421
    %6268 = vmatprep.subr.bf16.mxu0 %v4418
    %6269 = vmatpush1.bf16.msra.mxu0 %v4417
    %6270 = vmatprep.subr.bf16.mxu0 %v4414
    %6271 = vmatpush1.bf16.msra.mxu0 %v4413
    %6272 = vmatprep.subr.bf16.mxu0 %v4410
    %6273 = vmatpush1.bf16.msra.mxu0 %v4409
    %6274 = vmatprep.subr.bf16.mxu0 %v4406
    %6275 = vmatpush1.bf16.msra.mxu0 %v4405
    %6276 = vmatprep.subr.bf16.mxu0 0
    %6277 = vmatpush2.bf16.msra.mxu0 0
    %6278 = vmatprep.subr.bf16.mxu0 0
    %6279 = vmatpush2.bf16.msra.mxu0 0
    %6280 = vmatprep.subr.bf16.mxu0 0
    %6281 = vmatpush2.bf16.msra.mxu0 0
    %6282 = vmatprep.subr.bf16.mxu0 0
    %6283 = vmatpush2.bf16.msra.mxu0 0
    %6284 = vmatprep.subr.bf16.mxu0 0
    %6285 = vmatpush2.bf16.msra.mxu0 0
    %6286 = vmatprep.subr.bf16.mxu0 0
    %6287 = vmatpush2.bf16.msra.mxu0 0
    %6288 = vmatprep.subr.bf16.mxu0 0
    %6289 = vmatpush2.bf16.msra.mxu0 0
    %6290 = vmatprep.subr.bf16.mxu0 0
    %6291 = vmatpush2.bf16.msra.mxu0 0
    %6292 = vmatprep.mubr.bf16.mxu0 0
    %6293 = vmatmul.mubr.bf16.gmra.mxu0 %v6252
    %v6294 = vpop.f32.mrf.mxu0
    %v6295 = vadd.f32 0.0, %v6294
    %v6296 = vpop.f32.mrf.mxu0
    %v6297 = vadd.f32 0.0, %v6296
    %v6298 = vpop.f32.mrf.mxu0
    %v6299 = vpop.f32.mrf.mxu0
    %6300 = vdwg.mxu0
    %6301 = vmatprep.subr.bf16.mxu0 %v4436
    %6302 = vmatpush1.bf16.msra.mxu0 %v4435
    %6303 = vmatprep.subr.bf16.mxu0 %v4432
    %6304 = vmatpush1.bf16.msra.mxu0 %v4431
    %6305 = vmatprep.subr.bf16.mxu0 %v4428
    %6306 = vmatpush1.bf16.msra.mxu0 %v4427
    %6307 = vmatprep.subr.bf16.mxu0 %v4424
    %6308 = vmatpush1.bf16.msra.mxu0 %v4423
    %6309 = vmatprep.subr.bf16.mxu0 %v4420
    %6310 = vmatpush1.bf16.msra.mxu0 %v4419
    %6311 = vmatprep.subr.bf16.mxu0 %v4416
    %6312 = vmatpush1.bf16.msra.mxu0 %v4415
    %6313 = vmatprep.subr.bf16.mxu0 %v4412
    %6314 = vmatpush1.bf16.msra.mxu0 %v4411
    %6315 = vmatprep.subr.bf16.mxu0 %v4408
    %6316 = vmatpush1.bf16.msra.mxu0 %v4407
    %6317 = vmatprep.subr.bf16.mxu0 0
    %6318 = vmatpush2.bf16.msra.mxu0 0
    %6319 = vmatprep.subr.bf16.mxu0 0
    %6320 = vmatpush2.bf16.msra.mxu0 0
    %6321 = vmatprep.subr.bf16.mxu0 0
    %6322 = vmatpush2.bf16.msra.mxu0 0
    %6323 = vmatprep.subr.bf16.mxu0 0
    %6324 = vmatpush2.bf16.msra.mxu0 0
    %6325 = vmatprep.subr.bf16.mxu0 0
    %6326 = vmatpush2.bf16.msra.mxu0 0
    %6327 = vmatprep.subr.bf16.mxu0 0
    %6328 = vmatpush2.bf16.msra.mxu0 0
    %6329 = vmatprep.subr.bf16.mxu0 0
    %6330 = vmatpush2.bf16.msra.mxu0 0
    %6331 = vmatprep.subr.bf16.mxu0 0
    %6332 = vmatpush2.bf16.msra.mxu0 0
    %6333 = vmatprep.mubr.bf16.mxu0 0
    %6334 = vmatmul.mubr.bf16.gmra.mxu0 %v6252
    %v6335 = vpop.f32.mrf.mxu0
    %v6336 = vadd.f32 0.0, %v6335
    %v6337 = vpop.f32.mrf.mxu0
    %v6338 = vadd.f32 0.0, %v6337
    %v6339 = vpop.f32.mrf.mxu0
    %v6340 = vpop.f32.mrf.mxu0
    %6341 = vdwg.mxu0
    %v6342 = vadd.f32 %v6256, %v6295
    %v6343 = vadd.f32 %v6257, %v6297
    %v6344 = vadd.f32 %v6258, %v6336
    %v6345 = vadd.f32 %v6259, %v6338
    %v6346 = vld [vmem:[#allocation2 + $0x20] sm:$0xff]
    %v6347 = vld [vmem:[#allocation2 + $0x28] sm:$0xff]
    %v6348 = vld [vmem:[#allocation2 + $0x30] sm:$0xff]
    %v6349 = vld [vmem:[#allocation2 + $0x38] sm:$0xff]
    %6350 = vmatprep.subr.bf16.mxu0 %v4684
    %6351 = vmatpush1.bf16.msra.mxu0 %v4683
    %6352 = vmatprep.subr.bf16.mxu0 %v4680
    %6353 = vmatpush1.bf16.msra.mxu0 %v4679
    %6354 = vmatprep.subr.bf16.mxu0 %v4676
    %6355 = vmatpush1.bf16.msra.mxu0 %v4675
    %6356 = vmatprep.subr.bf16.mxu0 %v4672
    %6357 = vmatpush1.bf16.msra.mxu0 %v4671
    %6358 = vmatprep.subr.bf16.mxu0 %v4668
    %6359 = vmatpush1.bf16.msra.mxu0 %v4667
    %6360 = vmatprep.subr.bf16.mxu0 %v4664
    %6361 = vmatpush1.bf16.msra.mxu0 %v4663
    %6362 = vmatprep.subr.bf16.mxu0 %v4660
    %6363 = vmatpush1.bf16.msra.mxu0 %v4659
    %6364 = vmatprep.subr.bf16.mxu0 %v4656
    %6365 = vmatpush1.bf16.msra.mxu0 %v4655
    %6366 = vmatprep.subr.bf16.mxu0 0
    %6367 = vmatpush2.bf16.msra.mxu0 0
    %6368 = vmatprep.subr.bf16.mxu0 0
    %6369 = vmatpush2.bf16.msra.mxu0 0
    %6370 = vmatprep.subr.bf16.mxu0 0
    %6371 = vmatpush2.bf16.msra.mxu0 0
    %6372 = vmatprep.subr.bf16.mxu0 0
    %6373 = vmatpush2.bf16.msra.mxu0 0
    %6374 = vmatprep.subr.bf16.mxu0 0
    %6375 = vmatpush2.bf16.msra.mxu0 0
    %6376 = vmatprep.subr.bf16.mxu0 0
    %6377 = vmatpush2.bf16.msra.mxu0 0
    %6378 = vmatprep.subr.bf16.mxu0 0
    %6379 = vmatpush2.bf16.msra.mxu0 0
    %6380 = vmatprep.subr.bf16.mxu0 0
    %6381 = vmatpush2.bf16.msra.mxu0 0
    %6382 = vmatprep.mubr.bf16.mxu0 0
    %6383 = vmatmul.mubr.bf16.gmra.mxu0 %v6253
    %v6384 = vpop.f32.mrf.mxu0
    %v6385 = vadd.f32 0.0, %v6384
    %v6386 = vpop.f32.mrf.mxu0
    %v6387 = vadd.f32 0.0, %v6386
    %v6388 = vpop.f32.mrf.mxu0
    %v6389 = vpop.f32.mrf.mxu0
    %6390 = vdwg.mxu0
    %6391 = vmatprep.subr.bf16.mxu0 %v4686
    %6392 = vmatpush1.bf16.msra.mxu0 %v4685
    %6393 = vmatprep.subr.bf16.mxu0 %v4682
    %6394 = vmatpush1.bf16.msra.mxu0 %v4681
    %6395 = vmatprep.subr.bf16.mxu0 %v4678
    %6396 = vmatpush1.bf16.msra.mxu0 %v4677
    %6397 = vmatprep.subr.bf16.mxu0 %v4674
    %6398 = vmatpush1.bf16.msra.mxu0 %v4673
    %6399 = vmatprep.subr.bf16.mxu0 %v4670
    %6400 = vmatpush1.bf16.msra.mxu0 %v4669
    %6401 = vmatprep.subr.bf16.mxu0 %v4666
    %6402 = vmatpush1.bf16.msra.mxu0 %v4665
    %6403 = vmatprep.subr.bf16.mxu0 %v4662
    %6404 = vmatpush1.bf16.msra.mxu0 %v4661
    %6405 = vmatprep.subr.bf16.mxu0 %v4658
    %6406 = vmatpush1.bf16.msra.mxu0 %v4657
    %6407 = vmatprep.subr.bf16.mxu0 0
    %6408 = vmatpush2.bf16.msra.mxu0 0
    %6409 = vmatprep.subr.bf16.mxu0 0
    %6410 = vmatpush2.bf16.msra.mxu0 0
    %6411 = vmatprep.subr.bf16.mxu0 0
    %6412 = vmatpush2.bf16.msra.mxu0 0
    %6413 = vmatprep.subr.bf16.mxu0 0
    %6414 = vmatpush2.bf16.msra.mxu0 0
    %6415 = vmatprep.subr.bf16.mxu0 0
    %6416 = vmatpush2.bf16.msra.mxu0 0
    %6417 = vmatprep.subr.bf16.mxu0 0
    %6418 = vmatpush2.bf16.msra.mxu0 0
    %6419 = vmatprep.subr.bf16.mxu0 0
    %6420 = vmatpush2.bf16.msra.mxu0 0
    %6421 = vmatprep.subr.bf16.mxu0 0
    %6422 = vmatpush2.bf16.msra.mxu0 0
    %6423 = vmatprep.mubr.bf16.mxu0 0
    %6424 = vmatmul.mubr.bf16.gmra.mxu0 %v6253
    %v6425 = vpop.f32.mrf.mxu0
    %v6426 = vadd.f32 0.0, %v6425
    %v6427 = vpop.f32.mrf.mxu0
    %v6428 = vadd.f32 0.0, %v6427
    %v6429 = vpop.f32.mrf.mxu0
    %v6430 = vpop.f32.mrf.mxu0
    %6431 = vdwg.mxu0
    %v6432 = vadd.f32 %v6346, %v6385
    %v6433 = vadd.f32 %v6347, %v6387
    %v6434 = vadd.f32 %v6348, %v6426
    %v6435 = vadd.f32 %v6349, %v6428
    %v6436 = vxor.u32 %v6342, 2147483648
    %v6437 = vxor.u32 %v6343, 2147483648
    %v6438 = vxor.u32 %v6344, 2147483648
    %v6439 = vmul.f32 %v6436, 1.442695
    %v6440 = vpow.pop %v6439
    %v6441 = vmul.f32 %v6437, 1.442695
    %v6442 = vpow.pop %v6441
    %v6443 = vmul.f32 %v6438, 1.442695
    %v6444 = vpow.pop %v6443
    %v6445 = vadd.f32 %v6440, 1.0
    %v6446 = vadd.f32 %v6442, 1.0
    %v6447 = vadd.f32 %v6444, 1.0
    %v6448 = vrcp.pop %v6445
    %v6449 = vmul.f32 1.0, %v6448
    %v6450 = vrcp.pop %v6446
    %v6451 = vmul.f32 1.0, %v6450
    %v6452 = vrcp.pop %v6447
    %v6453 = vmul.f32 1.0, %v6452
    %v6454 = vxor.u32 %v6432, 2147483648
    %v6455 = vxor.u32 %v6433, 2147483648
    %v6456 = vxor.u32 %v6434, 2147483648
    %v6457 = vmul.f32 %v6454, 1.442695
    %v6458 = vpow.pop %v6457
    %v6459 = vmul.f32 %v6455, 1.442695
    %v6460 = vpow.pop %v6459
    %v6461 = vmul.f32 %v6456, 1.442695
    %v6462 = vpow.pop %v6461
    %v6463 = vadd.f32 %v6458, 1.0
    %v6464 = vadd.f32 %v6460, 1.0
    %v6465 = vadd.f32 %v6462, 1.0
    %v6466 = vrcp.pop %v6463
    %v6467 = vmul.f32 1.0, %v6466
    %v6468 = vrcp.pop %v6464
    %v6469 = vmul.f32 1.0, %v6468
    %v6470 = vrcp.pop %v6465
    %v6471 = vmul.f32 1.0, %v6470
    %v6472 = vtanh.pop %v6345
    %v6473 = vtanh.pop %v6435
    %v6474 = vmul.f32 %v6451, %v6244
    %v6475 = vmul.f32 %v6449, %v6472
    %v6476 = vadd.f32 %v6474, %v6475
    %v6477 = vmul.f32 %v6469, %v6247
    %v6478 = vmul.f32 %v6467, %v6473
    %v6479 = vadd.f32 %v6477, %v6478
    %v6480 = vtanh.pop %v6476
    %v6481 = vmul.f32 %v6453, %v6480
    %v6482 = vtanh.pop %v6479
    %v6483 = vmul.f32 %v6471, %v6482
    %6484 = vst [vmem:[%s4856] sm:$0xff] %v6481
    %6485 = vst [vmem:[#allocation4 + $0x8] sm:$0xff] %v6483
    %v6486 = vld [vmem:[#allocation4] sm:$0xff]
    %v6487 = vld [vmem:[#allocation4 + $0x8] sm:$0xff]
    %v6488 = vld [vmem:[#allocation4 + $0x10] sm:$0xff]
    %v6489 = vld [vmem:[#allocation4 + $0x18] sm:$0xff]
    %v6490 = vld [vmem:[#allocation4 + $0x20] sm:$0xff]
    %v6491 = vld [vmem:[#allocation4 + $0x28] sm:$0xff]
    %v6492 = vld [vmem:[#allocation4 + $0x30] sm:$0xff]
    %v6493 = vld [vmem:[#allocation4 + $0x38] sm:$0xff]
    %v6494 = vld [vmem:[#allocation4 + $0x40] sm:$0xff]
    %v6495 = vld [vmem:[#allocation4 + $0x48] sm:$0xff]
    %v6496 = vld [vmem:[#allocation4 + $0x50] sm:$0xff]
    %v6497 = vld [vmem:[#allocation4 + $0x58] sm:$0xff]
    %v6498 = vld [vmem:[#allocation4 + $0x60] sm:$0xff]
    %v6499 = vld [vmem:[#allocation4 + $0x68] sm:$0xff]
    %v6500 = vld [vmem:[#allocation4 + $0x70] sm:$0xff]
    %v6501 = vld [vmem:[#allocation4 + $0x78] sm:$0xff]
    %v6502 = vld [vmem:[%s5] sm:$0x3]
    %v6504 = vlaneseq
    %v6505 = vshrl.u32 %v6504, 7
    %v6506 = vsub.s32 0, %v6505
    %v6507 = vrot.slane %v6502, %v6506
    %v6508 = vlaneseq
    %v6509 = vshrl.u32 %v6508, 7
    %v6510 = vsub.s32 1, %v6509
    %v6511 = vrot.slane %v6502, %v6510
    %v6514 = vmul.f32 %v6486, %v6507
    %v6515 = vmul.f32 %v6487, %v6511
    %v6516 = vmul.f32 %v6488, %v6507
    %v6517 = vmul.f32 %v6489, %v6511
    %v6518 = vmul.f32 %v6490, %v6507
    %v6519 = vmul.f32 %v6491, %v6511
    %v6520 = vmul.f32 %v6492, %v6507
    %v6521 = vmul.f32 %v6493, %v6511
    %v6522 = vmul.f32 %v6494, %v6507
    %v6523 = vmul.f32 %v6495, %v6511
    %v6524 = vmul.f32 %v6496, %v6507
    %v6525 = vmul.f32 %v6497, %v6511
    %v6526 = vmul.f32 %v6498, %v6507
    %v6527 = vmul.f32 %v6499, %v6511
    %v6528 = vmul.f32 %v6500, %v6507
    %v6529 = vmul.f32 %v6501, %v6511
    %v6530 = vadd.f32 %v6514, %v6515
    %6531 = vadd.xlane.f32.xlu0 %v6530
    %v6532 = vpop.xlane.xlu0 %6531
    %v6533 = vadd.f32 %v6516, %v6517
    %6534 = vadd.xlane.f32.xlu0 %v6533
    %v6535 = vpop.xlane.xlu0 %6534
    %v6536 = vadd.f32 %v6518, %v6519
    %6537 = vadd.xlane.f32.xlu0 %v6536
    %v6538 = vpop.xlane.xlu0 %6537
    %v6539 = vadd.f32 %v6520, %v6521
    %6540 = vadd.xlane.f32.xlu0 %v6539
    %v6541 = vpop.xlane.xlu0 %6540
    %v6542 = vadd.f32 %v6522, %v6523
    %6543 = vadd.xlane.f32.xlu0 %v6542
    %v6544 = vpop.xlane.xlu0 %6543
    %v6545 = vadd.f32 %v6524, %v6525
    %6546 = vadd.xlane.f32.xlu0 %v6545
    %v6547 = vpop.xlane.xlu0 %6546
    %v6548 = vadd.f32 %v6526, %v6527
    %6549 = vadd.xlane.f32.xlu0 %v6548
    %v6550 = vpop.xlane.xlu0 %6549
    %v6551 = vadd.f32 %v6528, %v6529
    %6552 = vadd.xlane.f32.xlu0 %v6551
    %v6553 = vpop.xlane.xlu0 %6552
    %v6554 = vmax.f32 %v6532, %v6544
    %v6555 = vmax.f32 %v6535, %v6547
    %v6556 = vmax.f32 %v6538, %v6550
    %v6557 = vmax.f32 %v6541, %v6553
    %v6558 = vmax.f32 %v6554, %v6555
    %v6559 = vmax.f32 %v6556, %v6557
    %v6560 = vmax.f32 %v6558, %v6559
    %v6561 = vsub.f32 %v6532, %v6560
    %v6562 = vsub.f32 %v6535, %v6560
    %v6563 = vsub.f32 %v6538, %v6560
    %v6564 = vsub.f32 %v6541, %v6560
    %v6565 = vsub.f32 %v6544, %v6560
    %v6566 = vsub.f32 %v6547, %v6560
    %v6567 = vsub.f32 %v6550, %v6560
    %v6568 = vsub.f32 %v6553, %v6560
    %v6569 = vmul.f32 %v6561, 1.442695
    %v6570 = vpow.pop %v6569
    %v6571 = vmul.f32 %v6562, 1.442695
    %v6572 = vpow.pop %v6571
    %v6573 = vmul.f32 %v6563, 1.442695
    %v6574 = vpow.pop %v6573
    %v6575 = vmul.f32 %v6564, 1.442695
    %v6576 = vpow.pop %v6575
    %v6577 = vmul.f32 %v6565, 1.442695
    %v6578 = vpow.pop %v6577
    %v6579 = vmul.f32 %v6566, 1.442695
    %v6580 = vpow.pop %v6579
    %v6581 = vmul.f32 %v6567, 1.442695
    %v6582 = vpow.pop %v6581
    %v6583 = vmul.f32 %v6568, 1.442695
    %v6584 = vpow.pop %v6583
    %v6585 = vadd.f32 %v6570, %v6572
    %v6586 = vadd.f32 %v6585, %v6574
    %v6587 = vadd.f32 %v6586, %v6576
    %v6588 = vadd.f32 %v6587, %v6578
    %v6589 = vadd.f32 %v6588, %v6580
    %v6590 = vadd.f32 %v6589, %v6582
    %v6591 = vadd.f32 %v6590, %v6584
    %v6592 = vrcp.pop %v6591
    %v6593 = vmul.f32 %v6570, %v6592
    %v6594 = vmul.f32 %v6572, %v6592
    %v6595 = vmul.f32 %v6574, %v6592
    %v6596 = vmul.f32 %v6576, %v6592
    %v6597 = vmul.f32 %v6578, %v6592
    %v6598 = vmul.f32 %v6580, %v6592
    %v6599 = vmul.f32 %v6582, %v6592
    %v6600 = vmul.f32 %v6584, %v6592
    %v6601 = vmul.f32 %v6593, %v6486
    %v6602 = vmul.f32 %v6593, %v6487
    %v6603 = vmul.f32 %v6594, %v6488
    %v6604 = vmul.f32 %v6594, %v6489
    %v6605 = vmul.f32 %v6595, %v6490
    %v6606 = vmul.f32 %v6595, %v6491
    %v6607 = vmul.f32 %v6596, %v6492
    %v6608 = vmul.f32 %v6596, %v6493
    %v6609 = vmul.f32 %v6597, %v6494
    %v6610 = vmul.f32 %v6597, %v6495
    %v6611 = vmul.f32 %v6598, %v6496
    %v6612 = vmul.f32 %v6598, %v6497
    %v6613 = vmul.f32 %v6599, %v6498
    %v6614 = vmul.f32 %v6599, %v6499
    %v6615 = vmul.f32 %v6600, %v6500
    %v6616 = vmul.f32 %v6600, %v6501
    %v6617 = vadd.f32 %v6601, %v6603
    %v6618 = vadd.f32 %v6617, %v6605
    %v6619 = vadd.f32 %v6618, %v6607
    %v6620 = vadd.f32 %v6619, %v6609
    %v6621 = vadd.f32 %v6620, %v6611
    %v6622 = vadd.f32 %v6621, %v6613
    %v6623 = vadd.f32 %v6622, %v6615
    %v6624 = vadd.f32 %v6602, %v6604
    %v6625 = vadd.f32 %v6624, %v6606
    %v6626 = vadd.f32 %v6625, %v6608
    %v6627 = vadd.f32 %v6626, %v6610
    %v6628 = vadd.f32 %v6627, %v6612
    %v6629 = vadd.f32 %v6628, %v6614
    %v6630 = vadd.f32 %v6629, %v6616
    %v6631 = vadd.f32 %v6623, %v6630
    %6632 = vadd.xlane.f32.xlu0 %v6631
    %v6633 = vpop.xlane.xlu0 %6632
    %v6634 = vrcp.pop 256.0
    %v6635 = vmul.f32 %v6633, %v6634
    %v6636 = vsub.f32 %v6623, %v6635
    %v6637 = vsub.f32 %v6630, %v6635
    %v6638 = vmul.f32 %v6636, %v6636
    %v6639 = vmul.f32 %v6637, %v6637
    %v6640 = vadd.f32 %v6638, %v6639
    %6641 = vadd.xlane.f32.xlu0 %v6640
    %v6642 = vpop.xlane.xlu0 %6641
    %v6643 = vmul.f32 %v6642, %v6634
    %v6644 = vadd.f32 %v6643, 1e-05
    %v6645 = vrsqrt.pop %v6644
    %v6646 = vmul.f32 %v6636, %v6645
    %v6647 = vmul.f32 %v6637, %v6645
    %v6648 = vld [vmem:[%s6] sm:$0x3]
    %v6650 = vlaneseq
    %v6651 = vshrl.u32 %v6650, 7
    %v6652 = vsub.s32 0, %v6651
    %v6653 = vrot.slane %v6648, %v6652
    %v6654 = vlaneseq
    %v6655 = vshrl.u32 %v6654, 7
    %v6656 = vsub.s32 1, %v6655
    %v6657 = vrot.slane %v6648, %v6656
    %v6660 = vmul.f32 %v6646, %v6653
    %v6661 = vmul.f32 %v6647, %v6657
    %v6662 = vld [vmem:[#allocation14] sm:$0x3]
    %v6664 = vlaneseq
    %v6665 = vshrl.u32 %v6664, 7
    %v6666 = vsub.s32 0, %v6665
    %v6667 = vrot.slane %v6662, %v6666
    %v6668 = vlaneseq
    %v6669 = vshrl.u32 %v6668, 7
    %v6670 = vsub.s32 1, %v6669
    %v6671 = vrot.slane %v6662, %v6670
    %v6674 = vadd.f32 %v6660, %v6667
    %v6675 = vadd.f32 %v6661, %v6671
    %s6676 = smul.u32 %s3019, 1
    %s6677 = sshll.u32 %s6676, 4
    %6678 = dma.done %s121, %s6677
    %v6679 = vpack.c.bf16 %v6674, %v6674
    %v6680 = vpack.c.bf16 %v6675, %v6675
    %v6681 = vld [vmem:[#allocation7] sm:$0xf]
    %v6682 = vld [vmem:[#allocation7 + $0x4] sm:$0xf]
    %v6683 = vld [vmem:[#allocation7 + $0x8] sm:$0xf]
    %v6684 = vld [vmem:[#allocation7 + $0xc] sm:$0xf]
    %v6685 = vld [vmem:[#allocation7 + $0x10] sm:$0xf]
    %v6686 = vld [vmem:[#allocation7 + $0x14] sm:$0xf]
    %v6687 = vld [vmem:[#allocation7 + $0x18] sm:$0xf]
    %v6688 = vld [vmem:[#allocation7 + $0x1c] sm:$0xf]
    %v6689 = vld [vmem:[#allocation7 + $0x20] sm:$0xf]
    %v6690 = vld [vmem:[#allocation7 + $0x24] sm:$0xf]
    %v6691 = vld [vmem:[#allocation7 + $0x28] sm:$0xf]
    %v6692 = vld [vmem:[#allocation7 + $0x2c] sm:$0xf]
    %v6693 = vld [vmem:[#allocation7 + $0x30] sm:$0xf]
    %v6694 = vld [vmem:[#allocation7 + $0x34] sm:$0xf]
    %v6695 = vld [vmem:[#allocation7 + $0x38] sm:$0xf]
    %v6696 = vld [vmem:[#allocation7 + $0x3c] sm:$0xf]
    %v6697 = vld [vmem:[#allocation7 + $0x40] sm:$0xf]
    %v6698 = vld [vmem:[#allocation7 + $0x44] sm:$0xf]
    %v6699 = vld [vmem:[#allocation7 + $0x48] sm:$0xf]
    %v6700 = vld [vmem:[#allocation7 + $0x4c] sm:$0xf]
    %v6701 = vld [vmem:[#allocation7 + $0x50] sm:$0xf]
    %v6702 = vld [vmem:[#allocation7 + $0x54] sm:$0xf]
    %v6703 = vld [vmem:[#allocation7 + $0x58] sm:$0xf]
    %v6704 = vld [vmem:[#allocation7 + $0x5c] sm:$0xf]
    %v6705 = vld [vmem:[#allocation7 + $0x60] sm:$0xf]
    %v6706 = vld [vmem:[#allocation7 + $0x64] sm:$0xf]
    %v6707 = vld [vmem:[#allocation7 + $0x68] sm:$0xf]
    %v6708 = vld [vmem:[#allocation7 + $0x6c] sm:$0xf]
    %v6709 = vld [vmem:[#allocation7 + $0x70] sm:$0xf]
    %v6710 = vld [vmem:[#allocation7 + $0x74] sm:$0xf]
    %v6711 = vld [vmem:[#allocation7 + $0x78] sm:$0xf]
    %v6712 = vld [vmem:[#allocation7 + $0x7c] sm:$0xf]
    %v6713 = vld [vmem:[#allocation16] sm:$0x1]
    %v6715 = vlaneseq
    %v6716 = vshrl.u32 %v6715, 7
    %v6717 = vsub.s32 0, %v6716
    %v6718 = vrot.slane %v6713, %v6717
    %v6752 = vunpack.c.l.b16 %v6681
    %v6753 = vunpack.c.l.b16 %v6682
    %v6754 = vunpack.c.l.b16 %v6683
    %v6755 = vunpack.c.l.b16 %v6684
    %v6756 = vunpack.c.l.b16 %v6685
    %v6757 = vunpack.c.l.b16 %v6686
    %v6758 = vunpack.c.l.b16 %v6687
    %v6759 = vunpack.c.l.b16 %v6688
    %v6760 = vunpack.c.l.b16 %v6689
    %v6761 = vunpack.c.l.b16 %v6690
    %v6762 = vunpack.c.l.b16 %v6691
    %v6763 = vunpack.c.l.b16 %v6692
    %v6764 = vunpack.c.l.b16 %v6693
    %v6765 = vunpack.c.l.b16 %v6694
    %v6766 = vunpack.c.l.b16 %v6695
    %v6767 = vunpack.c.l.b16 %v6696
    %v6768 = vunpack.c.l.b16 %v6697
    %v6769 = vunpack.c.l.b16 %v6698
    %v6770 = vunpack.c.l.b16 %v6699
    %v6771 = vunpack.c.l.b16 %v6700
    %v6772 = vunpack.c.l.b16 %v6701
    %v6773 = vunpack.c.l.b16 %v6702
    %v6774 = vunpack.c.l.b16 %v6703
    %v6775 = vunpack.c.l.b16 %v6704
    %v6776 = vunpack.c.l.b16 %v6705
    %v6777 = vunpack.c.l.b16 %v6706
    %v6778 = vunpack.c.l.b16 %v6707
    %v6779 = vunpack.c.l.b16 %v6708
    %v6780 = vunpack.c.l.b16 %v6709
    %v6781 = vunpack.c.l.b16 %v6710
    %v6782 = vunpack.c.l.b16 %v6711
    %v6783 = vunpack.c.l.b16 %v6712
    %v6784 = vpack.c.b16 %v6753, %v6752
    %v6785 = vpack.c.b16 %v6755, %v6754
    %v6786 = vpack.c.b16 %v6757, %v6756
    %v6787 = vpack.c.b16 %v6759, %v6758
    %v6788 = vpack.c.b16 %v6761, %v6760
    %v6789 = vpack.c.b16 %v6763, %v6762
    %v6790 = vpack.c.b16 %v6765, %v6764
    %v6791 = vpack.c.b16 %v6767, %v6766
    %v6792 = vpack.c.b16 %v6769, %v6768
    %v6793 = vpack.c.b16 %v6771, %v6770
    %v6794 = vpack.c.b16 %v6773, %v6772
    %v6795 = vpack.c.b16 %v6775, %v6774
    %v6796 = vpack.c.b16 %v6777, %v6776
    %v6797 = vpack.c.b16 %v6779, %v6778
    %v6798 = vpack.c.b16 %v6781, %v6780
    %v6799 = vpack.c.b16 %v6783, %v6782
    %6816 = vmatprep.subr.bf16.mxu0 0
    %6817 = vmatpush1.bf16.msra.mxu0 %v6791
    %6818 = vmatprep.subr.bf16.mxu0 0
    %6819 = vmatpush1.bf16.msra.mxu0 %v6790
    %6820 = vmatprep.subr.bf16.mxu0 0
    %6821 = vmatpush1.bf16.msra.mxu0 %v6789
    %6822 = vmatprep.subr.bf16.mxu0 0
    %6823 = vmatpush1.bf16.msra.mxu0 %v6788
    %6824 = vmatprep.subr.bf16.mxu0 0
    %6825 = vmatpush1.bf16.msra.mxu0 %v6787
    %6826 = vmatprep.subr.bf16.mxu0 0
    %6827 = vmatpush1.bf16.msra.mxu0 %v6786
    %6828 = vmatprep.subr.bf16.mxu0 0
    %6829 = vmatpush1.bf16.msra.mxu0 %v6785
    %6830 = vmatprep.subr.bf16.mxu0 0
    %6831 = vmatpush1.bf16.msra.mxu0 %v6784
    %6832 = vmatprep.subr.bf16.mxu0 0
    %6833 = vmatpush2.bf16.msra.mxu0 %v6799
    %6834 = vmatprep.subr.bf16.mxu0 0
    %6835 = vmatpush2.bf16.msra.mxu0 %v6798
    %6836 = vmatprep.subr.bf16.mxu0 0
    %6837 = vmatpush2.bf16.msra.mxu0 %v6797
    %6838 = vmatprep.subr.bf16.mxu0 0
    %6839 = vmatpush2.bf16.msra.mxu0 %v6796
    %6840 = vmatprep.subr.bf16.mxu0 0
    %6841 = vmatpush2.bf16.msra.mxu0 %v6795
    %6842 = vmatprep.subr.bf16.mxu0 0
    %6843 = vmatpush2.bf16.msra.mxu0 %v6794
    %6844 = vmatprep.subr.bf16.mxu0 0
    %6845 = vmatpush2.bf16.msra.mxu0 %v6793
    %6846 = vmatprep.subr.bf16.mxu0 0
    %6847 = vmatpush2.bf16.msra.mxu0 %v6792
    %6848 = vmatprep.mubr.bf16.mxu0 %v6680
    %6849 = vmatmul.mubr.bf16.gmra.mxu0 %v6679
    %v6850 = vpop.f32.mrf.mxu0
    %v6851 = vadd.f32 %v6718, %v6850
    %v6852 = vpop.f32.mrf.mxu0
    %v6853 = vpop.f32.mrf.mxu0
    %v6854 = vpop.f32.mrf.mxu0
    %6855 = vdwg.mxu0
    %6856 = vst [vmem:[%s12] sm:$0xff] %v6851
    // Predicated region
    $region100: #{lstm_classifier_forward.1} parent=1 // pred_check
      _
    $region101: #{lstm_classifier_forward.1} parent=1 // pred_check_branch
      %6858 = sbr.rel (0) target = $region103
    $region102: #{lstm_classifier_forward.1} parent=1 // pred_region
      _
    $region103: #{lstm_classifier_forward.1} parent=1 // pred_fallthru
      _
    // Predicated region
    $region104: #{lstm_classifier_forward.1} parent=1 // pred_check
      _
    $region105: #{lstm_classifier_forward.1} parent=1 // pred_check_branch
      %6860 = sbr.rel (0) target = $region107
    $region106: #{lstm_classifier_forward.1} parent=1 // pred_region
      _
    $region107: #{lstm_classifier_forward.1} parent=1 // pred_fallthru
      _
    %6861 = vsyncpa [#allocation10], 1
    %6862 = vsyncpa [#allocation12], 1
    %6863 = vsyncpa [#allocation15], 1
  %6864 = vsyncmov [#allocation8]
  %s6865 = vpop.sfrf %6864
  %p6866 = scmp.eq.s32.totalorder %s6865, 0
  %p6867 = pneg %p6866
  %6869 = shalt.err (%p6867)
  %s6870 = scalar_lea.sflag [#allocation8], 1
  %6871 = vsyncmov %s6870
  %s6872 = vpop.sfrf %6871
  %p6873 = scmp.eq.s32.totalorder %s6872, 0
  %p6874 = pneg %p6873
  %6876 = shalt.err (%p6874)
  %s6877 = scalar_lea.sflag [#allocation8], 2
  %6878 = vsyncmov %s6877
  %s6879 = vpop.sfrf %6878
  %p6880 = scmp.eq.s32.totalorder %s6879, 0
  %p6881 = pneg %p6880
  %6883 = shalt.err (%p6881)

</llo_original>
